<compile_context>
chip_gen: v6e
topology: v6e:2x2x1
jax: 0.10.0
libtpu: 0.0.40
codegen_flags: <defaults>
</compile_context>

<pallas_src>
import functools

import jax
import jax.numpy as jnp
from jax import lax
from jax.experimental import pallas as pl
from jax.experimental.pallas import tpu as pltpu

_BN_EPS = 1e-5


# ------------------------------ helpers ------------------------------------ #

def _round_up(x, m):
    return (x + m - 1) // m * m


def _shift_rows(x, off):
    """Cyclic row shift of a 2D value: result[p] = x[(p + off) % R].

    `off` is a Python int.  Implemented as two static slices + a concatenate
    along the sublane axis.  Wrap-around only pollutes padding-border rows,
    which are masked / discarded.
    """
    r = x.shape[0]
    off = off % r
    if off == 0:
        return x
    return jnp.concatenate([x[off:], x[:off]], axis=0)


# ------------------------------ Pallas kernel ------------------------------ #

def _basic_block_kernel(x_ref, w1_ref, b1_ref, w2_ref, ws_ref, bo_ref, m_ref,
                        o_ref, *, wp):
    """Fused BasicBlock forward for one batch element.

    x_ref : (1, R, Cin_p)   bf16, R = (H+2)*(W+2), zero-padded + flattened NHWC
    w1_ref: (9, Cin_p, Cout_p)  bf16, BN1 scale folded in
    b1_ref: (1, Cout_p)     f32, folded BN1 bias
    w2_ref: (9, Cout_p, Cout_p) bf16, BN2 scale folded in
    ws_ref: (Cin_p, Cout_p) bf16, 1x1 shortcut (scale folded) or identity
    bo_ref: (1, Cout_p)     f32, folded BN2 bias (+ shortcut BN bias)
    m_ref : (R, 1)          f32, 1.0 on interior rows, 0.0 on the padding ring
    o_ref : (1, R, Cout_p)  f32
    """
    x = x_ref[0]                                  # (R, Cin_p) bf16
    r = x.shape[0]
    cout_p = o_ref.shape[-1]

    # --- conv1 (+ folded BN1 scale): 9 accumulating MXU matmuls -------------
    acc = jnp.zeros((r, cout_p), jnp.float32)
    for ky in range(3):
        for kx in range(3):
            off = (ky - 1) * wp + (kx - 1)
            acc = acc + jnp.dot(_shift_rows(x, off), w1_ref[ky * 3 + kx],
                                preferred_element_type=jnp.float32)

    # BN1 bias + ReLU in f32, zero the padding ring (conv2 expects true zero
    # padding around h1), cast back to bf16 for the second set of MXU passes.
    h1 = (jnp.maximum(acc + b1_ref[...], 0.0) * m_ref[...]).astype(jnp.bfloat16)

    # --- conv2 (+ folded BN2 scale) -----------------------------------------
    acc = jnp.zeros((r, cout_p), jnp.float32)
    for ky in range(3):
        for kx in range(3):
            off = (ky - 1) * wp + (kx - 1)
            acc = acc + jnp.dot(_shift_rows(h1, off), w2_ref[ky * 3 + kx],
                                preferred_element_type=jnp.float32)

    # --- shortcut (projection conv1x1+BN, or identity expressed as eye) -----
    sc = jnp.dot(x, ws_ref[...], preferred_element_type=jnp.float32)

    # --- residual add + bias + final ReLU (all f32) --------------------------
    o_ref[0] = jnp.maximum(acc + sc + bo_ref[...], 0.0).astype(o_ref.dtype)


# ------------------------------ JAX wrapper --------------------------------- #

def _fold_bn(gamma, beta, mean, var):
    scale = gamma / jnp.sqrt(var + _BN_EPS)
    return scale, beta - mean * scale


def _conv3x3_to_taps(w, scale, cin_p, cout_p):
    """PyTorch (Cout, Cin, 3, 3) -> (9, Cin_p, Cout_p) bf16, BN scale folded."""
    cout, cin = w.shape[0], w.shape[1]
    taps = jnp.transpose(w, (2, 3, 1, 0)).reshape(9, cin, cout)
    taps = taps * scale[None, None, :]
    taps = jnp.pad(taps, ((0, 0), (0, cin_p - cin), (0, cout_p - cout)))
    return taps.astype(jnp.bfloat16)


def basic_block_forward(x_nchw, params, stride=1):
    """Forward of BasicBlock(in_channels, out_channels, stride) on NCHW input."""
    if stride != 1:
        # TODO(synk): strided im2col / output gather not implemented.
        raise NotImplementedError("stride != 1 is not implemented")

    n, cin, h, w = x_nchw.shape
    cout = params["w1"].shape[0]
    hp, wp = h + 2, w + 2
    r = hp * wp
    cin_p = _round_up(cin, 8)        # contraction channels -> sublane multiple
    cout_p = _round_up(cout, 128)    # output channels -> lane-dense stores

    # NCHW -> NHWC, zero-pad the 1-pixel conv halo + channel tail, flatten
    # spatial to rows, cast to bf16 for the MXU.
    # TODO(synk): accepting NHWC I/O directly would remove these layout passes.
    x = jnp.transpose(x_nchw, (0, 2, 3, 1)).astype(jnp.float32)
    x = jnp.pad(x, ((0, 0), (1, 1), (1, 1), (0, cin_p - cin)))
    x_flat = x.reshape(n, r, cin_p).astype(jnp.bfloat16)

    # Fold eval-mode BN scales into the conv weights, biases stay f32.
    s1, b1 = _fold_bn(params["bn1_gamma"], params["bn1_beta"],
                      params["bn1_mean"], params["bn1_var"])
    s2, b2 = _fold_bn(params["bn2_gamma"], params["bn2_beta"],
                      params["bn2_mean"], params["bn2_var"])
    w1_t = _conv3x3_to_taps(params["w1"], s1, cin_p, cout_p)
    w2_t = _conv3x3_to_taps(params["w2"], s2, cout_p, cout_p)
    b1_p = jnp.pad(b1, (0, cout_p - cout)).reshape(1, cout_p).astype(jnp.float32)

    if "ws" in params:  # projection shortcut: 1x1 conv + BN
        ss, bs = _fold_bn(params["bns_gamma"], params["bns_beta"],
                          params["bns_mean"], params["bns_var"])
        ws = jnp.transpose(params["ws"].reshape(cout, cin), (1, 0)) * ss[None, :]
        b_out = b2 + bs
    else:               # identity shortcut, expressed as an identity matmul
        assert cin == cout, "identity shortcut requires Cin == Cout"
        ws = jnp.eye(cin, dtype=jnp.float32)
        b_out = b2
    ws_p = jnp.pad(ws, ((0, cin_p - cin), (0, cout_p - cout))).astype(jnp.bfloat16)
    bo_p = jnp.pad(b_out, (0, cout_p - cout)).reshape(1, cout_p).astype(jnp.float32)

    # Interior-row mask: 1.0 on real pixels, 0.0 on the 1-pixel padding ring.
    ii = jnp.arange(hp)
    jj = jnp.arange(wp)
    interior = (((ii >= 1) & (ii <= h))[:, None] &
                ((jj >= 1) & (jj <= w))[None, :])
    mask = interior.reshape(r, 1).astype(jnp.float32)

    out_flat = pl.pallas_call(
        functools.partial(_basic_block_kernel, wp=wp),
        out_shape=jax.ShapeDtypeStruct((n, r, cout_p), jnp.float32),
        grid=(n,),
        in_specs=[
            pl.BlockSpec((1, r, cin_p), lambda i: (i, 0, 0)),        # x
            pl.BlockSpec((9, cin_p, cout_p), lambda i: (0, 0, 0)),   # w1 (scaled)
            pl.BlockSpec((1, cout_p), lambda i: (0, 0)),             # b1
            pl.BlockSpec((9, cout_p, cout_p), lambda i: (0, 0, 0)),  # w2 (scaled)
            pl.BlockSpec((cin_p, cout_p), lambda i: (0, 0)),         # ws / eye
            pl.BlockSpec((1, cout_p), lambda i: (0, 0)),             # b2 (+ bs)
            pl.BlockSpec((r, 1), lambda i: (0, 0)),                  # interior mask
        ],
        out_specs=pl.BlockSpec((1, r, cout_p), lambda i: (i, 0, 0)),
        compiler_params=pltpu.CompilerParams(
            dimension_semantics=("parallel",),
            vmem_limit_bytes=48 * 1024 * 1024,
        ),
    )(x_flat, w1_t, b1_p, w2_t, ws_p, bo_p, mask)

    out = out_flat.reshape(n, hp, wp, cout_p)[:, 1:h + 1, 1:w + 1, :cout]
    return jnp.transpose(out, (0, 3, 1, 2))  # back to NCHW


# ------------------------------ pure-JAX reference -------------------------- #

def _reference_forward(x_nchw, params, stride=1):
    prec = lax.Precision.HIGHEST

    def conv(x, wt, s, padding):
        return lax.conv_general_dilated(
            x, wt, window_strides=(s, s), padding=padding,
            dimension_numbers=("NCHW", "OIHW", "NCHW"), precision=prec)

    def bn(x, pfx):
        g = params[pfx + "_gamma"][None, :, None, None]
        b = params[pfx + "_beta"][None, :, None, None]
        m = params[pfx + "_mean"][None, :, None, None]
        v = params[pfx + "_var"][None, :, None, None]
        return (x - m) * (g / jnp.sqrt(v + _BN_EPS)) + b

    h = jax.nn.relu(bn(conv(x_nchw, params["w1"], stride, ((1, 1), (1, 1))), "bn1"))
    out = bn(conv(h, params["w2"], 1, ((1, 1), (1, 1))), "bn2")
    if "ws" in params:
        sc = bn(conv(x_nchw, params["ws"], stride, ((0, 0), (0, 0))), "bns")
    else:
        sc = x_nchw
    return jax.nn.relu(out + sc)


def init_params(key, in_channels, out_channels, stride=1, expansion=1):
    ks = jax.random.split(key, 14)

    def bn(i):
        return dict(
            gamma=1.0 + 0.1 * jax.random.normal(ks[i], (out_channels,), jnp.float32),
            beta=0.1 * jax.random.normal(ks[i + 1], (out_channels,), jnp.float32),
            mean=0.05 * jax.random.normal(ks[i + 2], (out_channels,), jnp.float32),
            var=0.8 + 0.4 * jax.random.uniform(ks[i + 3], (out_channels,), jnp.float32),
        )

    p = {
        "w1": 0.1 * jax.random.normal(ks[0], (out_channels, in_channels, 3, 3), jnp.float32),
        "w2": 0.1 * jax.random.normal(ks[1], (out_channels, out_channels, 3, 3), jnp.float32),
    }
    bn1, bn2 = bn(2), bn(6)
    p.update({f"bn1_{k}": v for k, v in bn1.items()})
    p.update({f"bn2_{k}": v for k, v in bn2.items()})

    if stride != 1 or in_channels != expansion * out_channels:
        p["ws"] = 0.1 * jax.random.normal(
            ks[10], (expansion * out_channels, in_channels, 1, 1), jnp.float32)
        bns = bn(10)
        p.update({f"bns_{k}": v for k, v in bns.items()})
    return p


if __name__ == "__main__":
    key = jax.random.PRNGKey(0)
    n, h, w = 2, 16, 16

    # Config 1: Cin != Cout -> projection (1x1 conv + BN) shortcut.
    # Config 2: Cin == Cout -> identity shortcut.
    for cin, cout in ((4, 8), (8, 8)):
        key, kx, kp = jax.random.split(key, 3)
        x = jax.random.normal(kx, (n, cin, h, w), jnp.float32)
        params = init_params(kp, cin, cout, stride=1)

        fwd = jax.jit(functools.partial(basic_block_forward, params=params, stride=1))
        out = jax.block_until_ready(fwd(x))

        assert out.shape == (n, cout, h, w)
        assert bool(jnp.all(jnp.isfinite(out)))
        assert bool(jnp.all(out >= 0.0))  # final ReLU
        ref = _reference_forward(x, params, stride=1)
        assert bool(jnp.allclose(out, ref, atol=5e-2, rtol=1e-1)), (
            "max abs diff = %f" % float(jnp.max(jnp.abs(out - ref))))

    print("KERNEL_OK")
</pallas_src>

<mosaic_0001>
module attributes {stable_mosaic.version = 11 : i64} {
  func.func @_basic_block_kernel(%arg0: i32, %arg1: memref<1x324x8xbf16, #tpu.memory_space<vmem>>, %arg2: memref<9x8x128xbf16, #tpu.memory_space<vmem>>, %arg3: memref<1x128xf32, #tpu.memory_space<vmem>>, %arg4: memref<9x128x128xbf16, #tpu.memory_space<vmem>>, %arg5: memref<8x128xbf16, #tpu.memory_space<vmem>>, %arg6: memref<1x128xf32, #tpu.memory_space<vmem>>, %arg7: memref<324x1xf32, #tpu.memory_space<vmem>>, %arg8: memref<1x324x128xf32, #tpu.memory_space<vmem>>) attributes {dimension_semantics = [#tpu.dimension_semantics<parallel>], iteration_bounds = array<i64: 2>, scalar_prefetch = 0 : i64, scratch_operands = 0 : i64, tpu.core_type = #tpu.core_type<tc>, window_params = [{transform_indices = @transform_0, window_bounds = array<i64: 1, 324, 8>}, {pipeline_mode = #tpu.pipeline_mode<synchronous>, transform_indices = @transform_1, window_bounds = array<i64: 9, 8, 128>}, {pipeline_mode = #tpu.pipeline_mode<synchronous>, transform_indices = @transform_2, window_bounds = array<i64: 1, 128>}, {pipeline_mode = #tpu.pipeline_mode<synchronous>, transform_indices = @transform_3, window_bounds = array<i64: 9, 128, 128>}, {pipeline_mode = #tpu.pipeline_mode<synchronous>, transform_indices = @transform_4, window_bounds = array<i64: 8, 128>}, {pipeline_mode = #tpu.pipeline_mode<synchronous>, transform_indices = @transform_5, window_bounds = array<i64: 1, 128>}, {pipeline_mode = #tpu.pipeline_mode<synchronous>, transform_indices = @transform_6, window_bounds = array<i64: 324, 1>}, {transform_indices = @transform_7, window_bounds = array<i64: 1, 324, 128>}]} {
    %c0 = arith.constant 0 : index
    %c0_0 = arith.constant 0 : index
    %c0_1 = arith.constant 0 : index
    %0 = vector.load %arg1[%c0, %c0_0, %c0_1] : memref<1x324x8xbf16, #tpu.memory_space<vmem>>, vector<1x324x8xbf16>
    %1 = vector.shape_cast %0 : vector<1x324x8xbf16> to vector<324x8xbf16>
    %cst = arith.constant 0.000000e+00 : f32
    %2 = vector.broadcast %cst : f32 to vector<324x128xf32>
    %3 = vector.extract_strided_slice %1 {offsets = [305, 0], sizes = [19, 8], strides = [1, 1]} : vector<324x8xbf16> to vector<19x8xbf16>
    %4 = vector.extract_strided_slice %1 {offsets = [0, 0], sizes = [305, 8], strides = [1, 1]} : vector<324x8xbf16> to vector<305x8xbf16>
    %5 = tpu.concatenate %3, %4 in 0 : vector<19x8xbf16>, vector<305x8xbf16> -> vector<324x8xbf16>
    %c0_2 = arith.constant 0 : index
    %c0_3 = arith.constant 0 : index
    %c0_4 = arith.constant 0 : index
    %6 = vector.load %arg2[%c0_2, %c0_3, %c0_4] : memref<9x8x128xbf16, #tpu.memory_space<vmem>>, vector<1x8x128xbf16>
    %7 = vector.shape_cast %6 : vector<1x8x128xbf16> to vector<8x128xbf16>
    %cst_5 = arith.constant dense<0.000000e+00> : vector<324x128xf32>
    %8 = tpu.matmul %5, %7, %cst_5 {dimension_numbers = #tpu.dot_dimension_numbers<[1], [0], [0], [1], [0, 0, 1, 1], [], []>} : vector<324x8xbf16>, vector<8x128xbf16>, vector<324x128xf32> -> vector<324x128xf32>
    %9 = arith.addf %2, %8 : vector<324x128xf32>
    %10 = vector.extract_strided_slice %1 {offsets = [306, 0], sizes = [18, 8], strides = [1, 1]} : vector<324x8xbf16> to vector<18x8xbf16>
    %11 = vector.extract_strided_slice %1 {offsets = [0, 0], sizes = [306, 8], strides = [1, 1]} : vector<324x8xbf16> to vector<306x8xbf16>
    %12 = tpu.concatenate %10, %11 in 0 : vector<18x8xbf16>, vector<306x8xbf16> -> vector<324x8xbf16>
    %c1 = arith.constant 1 : index
    %c0_6 = arith.constant 0 : index
    %c0_7 = arith.constant 0 : index
    %13 = vector.load %arg2[%c1, %c0_6, %c0_7] : memref<9x8x128xbf16, #tpu.memory_space<vmem>>, vector<1x8x128xbf16>
    %14 = vector.shape_cast %13 : vector<1x8x128xbf16> to vector<8x128xbf16>
    %cst_8 = arith.constant dense<0.000000e+00> : vector<324x128xf32>
    %15 = tpu.matmul %12, %14, %cst_8 {dimension_numbers = #tpu.dot_dimension_numbers<[1], [0], [0], [1], [0, 0, 1, 1], [], []>} : vector<324x8xbf16>, vector<8x128xbf16>, vector<324x128xf32> -> vector<324x128xf32>
    %16 = arith.addf %9, %15 : vector<324x128xf32>
    %17 = vector.extract_strided_slice %1 {offsets = [307, 0], sizes = [17, 8], strides = [1, 1]} : vector<324x8xbf16> to vector<17x8xbf16>
    %18 = vector.extract_strided_slice %1 {offsets = [0, 0], sizes = [307, 8], strides = [1, 1]} : vector<324x8xbf16> to vector<307x8xbf16>
    %19 = tpu.concatenate %17, %18 in 0 : vector<17x8xbf16>, vector<307x8xbf16> -> vector<324x8xbf16>
    %c2 = arith.constant 2 : index
    %c0_9 = arith.constant 0 : index
    %c0_10 = arith.constant 0 : index
    %20 = vector.load %arg2[%c2, %c0_9, %c0_10] : memref<9x8x128xbf16, #tpu.memory_space<vmem>>, vector<1x8x128xbf16>
    %21 = vector.shape_cast %20 : vector<1x8x128xbf16> to vector<8x128xbf16>
    %cst_11 = arith.constant dense<0.000000e+00> : vector<324x128xf32>
    %22 = tpu.matmul %19, %21, %cst_11 {dimension_numbers = #tpu.dot_dimension_numbers<[1], [0], [0], [1], [0, 0, 1, 1], [], []>} : vector<324x8xbf16>, vector<8x128xbf16>, vector<324x128xf32> -> vector<324x128xf32>
    %23 = arith.addf %16, %22 : vector<324x128xf32>
    %24 = vector.extract_strided_slice %1 {offsets = [323, 0], sizes = [1, 8], strides = [1, 1]} : vector<324x8xbf16> to vector<1x8xbf16>
    %25 = vector.extract_strided_slice %1 {offsets = [0, 0], sizes = [323, 8], strides = [1, 1]} : vector<324x8xbf16> to vector<323x8xbf16>
    %26 = tpu.concatenate %24, %25 in 0 : vector<1x8xbf16>, vector<323x8xbf16> -> vector<324x8xbf16>
    %c3 = arith.constant 3 : index
    %c0_12 = arith.constant 0 : index
    %c0_13 = arith.constant 0 : index
    %27 = vector.load %arg2[%c3, %c0_12, %c0_13] : memref<9x8x128xbf16, #tpu.memory_space<vmem>>, vector<1x8x128xbf16>
    %28 = vector.shape_cast %27 : vector<1x8x128xbf16> to vector<8x128xbf16>
    %cst_14 = arith.constant dense<0.000000e+00> : vector<324x128xf32>
    %29 = tpu.matmul %26, %28, %cst_14 {dimension_numbers = #tpu.dot_dimension_numbers<[1], [0], [0], [1], [0, 0, 1, 1], [], []>} : vector<324x8xbf16>, vector<8x128xbf16>, vector<324x128xf32> -> vector<324x128xf32>
    %30 = arith.addf %23, %29 : vector<324x128xf32>
    %c4 = arith.constant 4 : index
    %c0_15 = arith.constant 0 : index
    %c0_16 = arith.constant 0 : index
    %31 = vector.load %arg2[%c4, %c0_15, %c0_16] : memref<9x8x128xbf16, #tpu.memory_space<vmem>>, vector<1x8x128xbf16>
    %32 = vector.shape_cast %31 : vector<1x8x128xbf16> to vector<8x128xbf16>
    %cst_17 = arith.constant dense<0.000000e+00> : vector<324x128xf32>
    %33 = tpu.matmul %1, %32, %cst_17 {dimension_numbers = #tpu.dot_dimension_numbers<[1], [0], [0], [1], [0, 0, 1, 1], [], []>} : vector<324x8xbf16>, vector<8x128xbf16>, vector<324x128xf32> -> vector<324x128xf32>
    %34 = arith.addf %30, %33 : vector<324x128xf32>
    %35 = vector.extract_strided_slice %1 {offsets = [1, 0], sizes = [323, 8], strides = [1, 1]} : vector<324x8xbf16> to vector<323x8xbf16>
    %36 = vector.extract_strided_slice %1 {offsets = [0, 0], sizes = [1, 8], strides = [1, 1]} : vector<324x8xbf16> to vector<1x8xbf16>
    %37 = tpu.concatenate %35, %36 in 0 : vector<323x8xbf16>, vector<1x8xbf16> -> vector<324x8xbf16>
    %c5 = arith.constant 5 : index
    %c0_18 = arith.constant 0 : index
    %c0_19 = arith.constant 0 : index
    %38 = vector.load %arg2[%c5, %c0_18, %c0_19] : memref<9x8x128xbf16, #tpu.memory_space<vmem>>, vector<1x8x128xbf16>
    %39 = vector.shape_cast %38 : vector<1x8x128xbf16> to vector<8x128xbf16>
    %cst_20 = arith.constant dense<0.000000e+00> : vector<324x128xf32>
    %40 = tpu.matmul %37, %39, %cst_20 {dimension_numbers = #tpu.dot_dimension_numbers<[1], [0], [0], [1], [0, 0, 1, 1], [], []>} : vector<324x8xbf16>, vector<8x128xbf16>, vector<324x128xf32> -> vector<324x128xf32>
    %41 = arith.addf %34, %40 : vector<324x128xf32>
    %42 = vector.extract_strided_slice %1 {offsets = [17, 0], sizes = [307, 8], strides = [1, 1]} : vector<324x8xbf16> to vector<307x8xbf16>
    %43 = vector.extract_strided_slice %1 {offsets = [0, 0], sizes = [17, 8], strides = [1, 1]} : vector<324x8xbf16> to vector<17x8xbf16>
    %44 = tpu.concatenate %42, %43 in 0 : vector<307x8xbf16>, vector<17x8xbf16> -> vector<324x8xbf16>
    %c6 = arith.constant 6 : index
    %c0_21 = arith.constant 0 : index
    %c0_22 = arith.constant 0 : index
    %45 = vector.load %arg2[%c6, %c0_21, %c0_22] : memref<9x8x128xbf16, #tpu.memory_space<vmem>>, vector<1x8x128xbf16>
    %46 = vector.shape_cast %45 : vector<1x8x128xbf16> to vector<8x128xbf16>
    %cst_23 = arith.constant dense<0.000000e+00> : vector<324x128xf32>
    %47 = tpu.matmul %44, %46, %cst_23 {dimension_numbers = #tpu.dot_dimension_numbers<[1], [0], [0], [1], [0, 0, 1, 1], [], []>} : vector<324x8xbf16>, vector<8x128xbf16>, vector<324x128xf32> -> vector<324x128xf32>
    %48 = arith.addf %41, %47 : vector<324x128xf32>
    %49 = vector.extract_strided_slice %1 {offsets = [18, 0], sizes = [306, 8], strides = [1, 1]} : vector<324x8xbf16> to vector<306x8xbf16>
    %50 = vector.extract_strided_slice %1 {offsets = [0, 0], sizes = [18, 8], strides = [1, 1]} : vector<324x8xbf16> to vector<18x8xbf16>
    %51 = tpu.concatenate %49, %50 in 0 : vector<306x8xbf16>, vector<18x8xbf16> -> vector<324x8xbf16>
    %c7 = arith.constant 7 : index
    %c0_24 = arith.constant 0 : index
    %c0_25 = arith.constant 0 : index
    %52 = vector.load %arg2[%c7, %c0_24, %c0_25] : memref<9x8x128xbf16, #tpu.memory_space<vmem>>, vector<1x8x128xbf16>
    %53 = vector.shape_cast %52 : vector<1x8x128xbf16> to vector<8x128xbf16>
    %cst_26 = arith.constant dense<0.000000e+00> : vector<324x128xf32>
    %54 = tpu.matmul %51, %53, %cst_26 {dimension_numbers = #tpu.dot_dimension_numbers<[1], [0], [0], [1], [0, 0, 1, 1], [], []>} : vector<324x8xbf16>, vector<8x128xbf16>, vector<324x128xf32> -> vector<324x128xf32>
    %55 = arith.addf %48, %54 : vector<324x128xf32>
    %56 = vector.extract_strided_slice %1 {offsets = [19, 0], sizes = [305, 8], strides = [1, 1]} : vector<324x8xbf16> to vector<305x8xbf16>
    %57 = vector.extract_strided_slice %1 {offsets = [0, 0], sizes = [19, 8], strides = [1, 1]} : vector<324x8xbf16> to vector<19x8xbf16>
    %58 = tpu.concatenate %56, %57 in 0 : vector<305x8xbf16>, vector<19x8xbf16> -> vector<324x8xbf16>
    %c8 = arith.constant 8 : index
    %c0_27 = arith.constant 0 : index
    %c0_28 = arith.constant 0 : index
    %59 = vector.load %arg2[%c8, %c0_27, %c0_28] : memref<9x8x128xbf16, #tpu.memory_space<vmem>>, vector<1x8x128xbf16>
    %60 = vector.shape_cast %59 : vector<1x8x128xbf16> to vector<8x128xbf16>
    %cst_29 = arith.constant dense<0.000000e+00> : vector<324x128xf32>
    %61 = tpu.matmul %58, %60, %cst_29 {dimension_numbers = #tpu.dot_dimension_numbers<[1], [0], [0], [1], [0, 0, 1, 1], [], []>} : vector<324x8xbf16>, vector<8x128xbf16>, vector<324x128xf32> -> vector<324x128xf32>
    %62 = arith.addf %55, %61 : vector<324x128xf32>
    %c0_30 = arith.constant 0 : index
    %c0_31 = arith.constant 0 : index
    %63 = vector.load %arg3[%c0_30, %c0_31] : memref<1x128xf32, #tpu.memory_space<vmem>>, vector<1x128xf32>
    %64 = vector.broadcast %63 : vector<1x128xf32> to vector<324x128xf32>
    %65 = arith.addf %62, %64 : vector<324x128xf32>
    %cst_32 = arith.constant 0.000000e+00 : f32
    %66 = vector.broadcast %cst_32 : f32 to vector<324x128xf32>
    %67 = arith.maximumf %65, %66 : vector<324x128xf32>
    %c0_33 = arith.constant 0 : index
    %c0_34 = arith.constant 0 : index
    %68 = vector.load %arg7[%c0_33, %c0_34] : memref<324x1xf32, #tpu.memory_space<vmem>>, vector<324x1xf32>
    %69 = vector.broadcast %68 : vector<324x1xf32> to vector<324x128xf32>
    %70 = arith.mulf %67, %69 : vector<324x128xf32>
    %71 = arith.truncf %70 : vector<324x128xf32> to vector<324x128xbf16>
    %cst_35 = arith.constant 0.000000e+00 : f32
    %72 = vector.broadcast %cst_35 : f32 to vector<324x128xf32>
    %73 = vector.extract_strided_slice %71 {offsets = [305, 0], sizes = [19, 128], strides = [1, 1]} : vector<324x128xbf16> to vector<19x128xbf16>
    %74 = vector.extract_strided_slice %71 {offsets = [0, 0], sizes = [305, 128], strides = [1, 1]} : vector<324x128xbf16> to vector<305x128xbf16>
    %75 = tpu.concatenate %73, %74 in 0 : vector<19x128xbf16>, vector<305x128xbf16> -> vector<324x128xbf16>
    %c0_36 = arith.constant 0 : index
    %c0_37 = arith.constant 0 : index
    %c0_38 = arith.constant 0 : index
    %76 = vector.load %arg4[%c0_36, %c0_37, %c0_38] : memref<9x128x128xbf16, #tpu.memory_space<vmem>>, vector<1x128x128xbf16>
    %77 = vector.shape_cast %76 : vector<1x128x128xbf16> to vector<128x128xbf16>
    %cst_39 = arith.constant dense<0.000000e+00> : vector<324x128xf32>
    %78 = tpu.matmul %75, %77, %cst_39 {dimension_numbers = #tpu.dot_dimension_numbers<[1], [0], [0], [1], [0, 0, 1, 1], [], []>} : vector<324x128xbf16>, vector<128x128xbf16>, vector<324x128xf32> -> vector<324x128xf32>
    %79 = arith.addf %72, %78 : vector<324x128xf32>
    %80 = vector.extract_strided_slice %71 {offsets = [306, 0], sizes = [18, 128], strides = [1, 1]} : vector<324x128xbf16> to vector<18x128xbf16>
    %81 = vector.extract_strided_slice %71 {offsets = [0, 0], sizes = [306, 128], strides = [1, 1]} : vector<324x128xbf16> to vector<306x128xbf16>
    %82 = tpu.concatenate %80, %81 in 0 : vector<18x128xbf16>, vector<306x128xbf16> -> vector<324x128xbf16>
    %c1_40 = arith.constant 1 : index
    %c0_41 = arith.constant 0 : index
    %c0_42 = arith.constant 0 : index
    %83 = vector.load %arg4[%c1_40, %c0_41, %c0_42] : memref<9x128x128xbf16, #tpu.memory_space<vmem>>, vector<1x128x128xbf16>
    %84 = vector.shape_cast %83 : vector<1x128x128xbf16> to vector<128x128xbf16>
    %cst_43 = arith.constant dense<0.000000e+00> : vector<324x128xf32>
    %85 = tpu.matmul %82, %84, %cst_43 {dimension_numbers = #tpu.dot_dimension_numbers<[1], [0], [0], [1], [0, 0, 1, 1], [], []>} : vector<324x128xbf16>, vector<128x128xbf16>, vector<324x128xf32> -> vector<324x128xf32>
    %86 = arith.addf %79, %85 : vector<324x128xf32>
    %87 = vector.extract_strided_slice %71 {offsets = [307, 0], sizes = [17, 128], strides = [1, 1]} : vector<324x128xbf16> to vector<17x128xbf16>
    %88 = vector.extract_strided_slice %71 {offsets = [0, 0], sizes = [307, 128], strides = [1, 1]} : vector<324x128xbf16> to vector<307x128xbf16>
    %89 = tpu.concatenate %87, %88 in 0 : vector<17x128xbf16>, vector<307x128xbf16> -> vector<324x128xbf16>
    %c2_44 = arith.constant 2 : index
    %c0_45 = arith.constant 0 : index
    %c0_46 = arith.constant 0 : index
    %90 = vector.load %arg4[%c2_44, %c0_45, %c0_46] : memref<9x128x128xbf16, #tpu.memory_space<vmem>>, vector<1x128x128xbf16>
    %91 = vector.shape_cast %90 : vector<1x128x128xbf16> to vector<128x128xbf16>
    %cst_47 = arith.constant dense<0.000000e+00> : vector<324x128xf32>
    %92 = tpu.matmul %89, %91, %cst_47 {dimension_numbers = #tpu.dot_dimension_numbers<[1], [0], [0], [1], [0, 0, 1, 1], [], []>} : vector<324x128xbf16>, vector<128x128xbf16>, vector<324x128xf32> -> vector<324x128xf32>
    %93 = arith.addf %86, %92 : vector<324x128xf32>
    %94 = vector.extract_strided_slice %71 {offsets = [323, 0], sizes = [1, 128], strides = [1, 1]} : vector<324x128xbf16> to vector<1x128xbf16>
    %95 = vector.extract_strided_slice %71 {offsets = [0, 0], sizes = [323, 128], strides = [1, 1]} : vector<324x128xbf16> to vector<323x128xbf16>
    %96 = tpu.concatenate %94, %95 in 0 : vector<1x128xbf16>, vector<323x128xbf16> -> vector<324x128xbf16>
    %c3_48 = arith.constant 3 : index
    %c0_49 = arith.constant 0 : index
    %c0_50 = arith.constant 0 : index
    %97 = vector.load %arg4[%c3_48, %c0_49, %c0_50] : memref<9x128x128xbf16, #tpu.memory_space<vmem>>, vector<1x128x128xbf16>
    %98 = vector.shape_cast %97 : vector<1x128x128xbf16> to vector<128x128xbf16>
    %cst_51 = arith.constant dense<0.000000e+00> : vector<324x128xf32>
    %99 = tpu.matmul %96, %98, %cst_51 {dimension_numbers = #tpu.dot_dimension_numbers<[1], [0], [0], [1], [0, 0, 1, 1], [], []>} : vector<324x128xbf16>, vector<128x128xbf16>, vector<324x128xf32> -> vector<324x128xf32>
    %100 = arith.addf %93, %99 : vector<324x128xf32>
    %c4_52 = arith.constant 4 : index
    %c0_53 = arith.constant 0 : index
    %c0_54 = arith.constant 0 : index
    %101 = vector.load %arg4[%c4_52, %c0_53, %c0_54] : memref<9x128x128xbf16, #tpu.memory_space<vmem>>, vector<1x128x128xbf16>
    %102 = vector.shape_cast %101 : vector<1x128x128xbf16> to vector<128x128xbf16>
    %cst_55 = arith.constant dense<0.000000e+00> : vector<324x128xf32>
    %103 = tpu.matmul %71, %102, %cst_55 {dimension_numbers = #tpu.dot_dimension_numbers<[1], [0], [0], [1], [0, 0, 1, 1], [], []>} : vector<324x128xbf16>, vector<128x128xbf16>, vector<324x128xf32> -> vector<324x128xf32>
    %104 = arith.addf %100, %103 : vector<324x128xf32>
    %105 = vector.extract_strided_slice %71 {offsets = [1, 0], sizes = [323, 128], strides = [1, 1]} : vector<324x128xbf16> to vector<323x128xbf16>
    %106 = vector.extract_strided_slice %71 {offsets = [0, 0], sizes = [1, 128], strides = [1, 1]} : vector<324x128xbf16> to vector<1x128xbf16>
    %107 = tpu.concatenate %105, %106 in 0 : vector<323x128xbf16>, vector<1x128xbf16> -> vector<324x128xbf16>
    %c5_56 = arith.constant 5 : index
    %c0_57 = arith.constant 0 : index
    %c0_58 = arith.constant 0 : index
    %108 = vector.load %arg4[%c5_56, %c0_57, %c0_58] : memref<9x128x128xbf16, #tpu.memory_space<vmem>>, vector<1x128x128xbf16>
    %109 = vector.shape_cast %108 : vector<1x128x128xbf16> to vector<128x128xbf16>
    %cst_59 = arith.constant dense<0.000000e+00> : vector<324x128xf32>
    %110 = tpu.matmul %107, %109, %cst_59 {dimension_numbers = #tpu.dot_dimension_numbers<[1], [0], [0], [1], [0, 0, 1, 1], [], []>} : vector<324x128xbf16>, vector<128x128xbf16>, vector<324x128xf32> -> vector<324x128xf32>
    %111 = arith.addf %104, %110 : vector<324x128xf32>
    %112 = vector.extract_strided_slice %71 {offsets = [17, 0], sizes = [307, 128], strides = [1, 1]} : vector<324x128xbf16> to vector<307x128xbf16>
    %113 = vector.extract_strided_slice %71 {offsets = [0, 0], sizes = [17, 128], strides = [1, 1]} : vector<324x128xbf16> to vector<17x128xbf16>
    %114 = tpu.concatenate %112, %113 in 0 : vector<307x128xbf16>, vector<17x128xbf16> -> vector<324x128xbf16>
    %c6_60 = arith.constant 6 : index
    %c0_61 = arith.constant 0 : index
    %c0_62 = arith.constant 0 : index
    %115 = vector.load %arg4[%c6_60, %c0_61, %c0_62] : memref<9x128x128xbf16, #tpu.memory_space<vmem>>, vector<1x128x128xbf16>
    %116 = vector.shape_cast %115 : vector<1x128x128xbf16> to vector<128x128xbf16>
    %cst_63 = arith.constant dense<0.000000e+00> : vector<324x128xf32>
    %117 = tpu.matmul %114, %116, %cst_63 {dimension_numbers = #tpu.dot_dimension_numbers<[1], [0], [0], [1], [0, 0, 1, 1], [], []>} : vector<324x128xbf16>, vector<128x128xbf16>, vector<324x128xf32> -> vector<324x128xf32>
    %118 = arith.addf %111, %117 : vector<324x128xf32>
    %119 = vector.extract_strided_slice %71 {offsets = [18, 0], sizes = [306, 128], strides = [1, 1]} : vector<324x128xbf16> to vector<306x128xbf16>
    %120 = vector.extract_strided_slice %71 {offsets = [0, 0], sizes = [18, 128], strides = [1, 1]} : vector<324x128xbf16> to vector<18x128xbf16>
    %121 = tpu.concatenate %119, %120 in 0 : vector<306x128xbf16>, vector<18x128xbf16> -> vector<324x128xbf16>
    %c7_64 = arith.constant 7 : index
    %c0_65 = arith.constant 0 : index
    %c0_66 = arith.constant 0 : index
    %122 = vector.load %arg4[%c7_64, %c0_65, %c0_66] : memref<9x128x128xbf16, #tpu.memory_space<vmem>>, vector<1x128x128xbf16>
    %123 = vector.shape_cast %122 : vector<1x128x128xbf16> to vector<128x128xbf16>
    %cst_67 = arith.constant dense<0.000000e+00> : vector<324x128xf32>
    %124 = tpu.matmul %121, %123, %cst_67 {dimension_numbers = #tpu.dot_dimension_numbers<[1], [0], [0], [1], [0, 0, 1, 1], [], []>} : vector<324x128xbf16>, vector<128x128xbf16>, vector<324x128xf32> -> vector<324x128xf32>
    %125 = arith.addf %118, %124 : vector<324x128xf32>
    %126 = vector.extract_strided_slice %71 {offsets = [19, 0], sizes = [305, 128], strides = [1, 1]} : vector<324x128xbf16> to vector<305x128xbf16>
    %127 = vector.extract_strided_slice %71 {offsets = [0, 0], sizes = [19, 128], strides = [1, 1]} : vector<324x128xbf16> to vector<19x128xbf16>
    %128 = tpu.concatenate %126, %127 in 0 : vector<305x128xbf16>, vector<19x128xbf16> -> vector<324x128xbf16>
    %c8_68 = arith.constant 8 : index
    %c0_69 = arith.constant 0 : index
    %c0_70 = arith.constant 0 : index
    %129 = vector.load %arg4[%c8_68, %c0_69, %c0_70] : memref<9x128x128xbf16, #tpu.memory_space<vmem>>, vector<1x128x128xbf16>
    %130 = vector.shape_cast %129 : vector<1x128x128xbf16> to vector<128x128xbf16>
    %cst_71 = arith.constant dense<0.000000e+00> : vector<324x128xf32>
    %131 = tpu.matmul %128, %130, %cst_71 {dimension_numbers = #tpu.dot_dimension_numbers<[1], [0], [0], [1], [0, 0, 1, 1], [], []>} : vector<324x128xbf16>, vector<128x128xbf16>, vector<324x128xf32> -> vector<324x128xf32>
    %132 = arith.addf %125, %131 : vector<324x128xf32>
    %c0_72 = arith.constant 0 : index
    %c0_73 = arith.constant 0 : index
    %133 = vector.load %arg5[%c0_72, %c0_73] : memref<8x128xbf16, #tpu.memory_space<vmem>>, vector<8x128xbf16>
    %cst_74 = arith.constant dense<0.000000e+00> : vector<324x128xf32>
    %134 = tpu.matmul %1, %133, %cst_74 {dimension_numbers = #tpu.dot_dimension_numbers<[1], [0], [0], [1], [0, 0, 1, 1], [], []>} : vector<324x8xbf16>, vector<8x128xbf16>, vector<324x128xf32> -> vector<324x128xf32>
    %135 = arith.addf %132, %134 : vector<324x128xf32>
    %c0_75 = arith.constant 0 : index
    %c0_76 = arith.constant 0 : index
    %136 = vector.load %arg6[%c0_75, %c0_76] : memref<1x128xf32, #tpu.memory_space<vmem>>, vector<1x128xf32>
    %137 = vector.broadcast %136 : vector<1x128xf32> to vector<324x128xf32>
    %138 = arith.addf %135, %137 : vector<324x128xf32>
    %cst_77 = arith.constant 0.000000e+00 : f32
    %139 = vector.broadcast %cst_77 : f32 to vector<324x128xf32>
    %140 = arith.maximumf %138, %139 : vector<324x128xf32>
    %c0_78 = arith.constant 0 : index
    %c0_79 = arith.constant 0 : index
    %c0_80 = arith.constant 0 : index
    %141 = vector.load %arg8[%c0_78, %c0_79, %c0_80] : memref<1x324x128xf32, #tpu.memory_space<vmem>>, vector<1x324x128xf32>
    %142 = vector.shape_cast %141 : vector<1x324x128xf32> to vector<324x128xf32>
    %143 = vector.shape_cast %140 : vector<324x128xf32> to vector<1x324x128xf32>
    tpu.vector_store %arg8[%c0_78, %c0_79, %c0_80], %143 {strides = array<i32>} : memref<1x324x128xf32, #tpu.memory_space<vmem>>, vector<1x324x128xf32>,
    return
  }
  func.func @transform_0(%arg0: i32) -> (i32, i32, i32) {
    %c0_i32 = arith.constant 0 : i32
    %c0_i32_0 = arith.constant 0 : i32
    %c0_i32_1 = arith.constant 0 : i32
    return %arg0, %c0_i32, %c0_i32_0 : i32, i32, i32
  }
  func.func @transform_1(%arg0: i32) -> (i32, i32, i32) {
    %c0_i32 = arith.constant 0 : i32
    %c0_i32_0 = arith.constant 0 : i32
    %c0_i32_1 = arith.constant 0 : i32
    %c0_i32_2 = arith.constant 0 : i32
    return %c0_i32, %c0_i32_0, %c0_i32_1 : i32, i32, i32
  }
  func.func @transform_2(%arg0: i32) -> (i32, i32) {
    %c0_i32 = arith.constant 0 : i32
    %c0_i32_0 = arith.constant 0 : i32
    %c0_i32_1 = arith.constant 0 : i32
    return %c0_i32, %c0_i32_0 : i32, i32
  }
  func.func @transform_3(%arg0: i32) -> (i32, i32, i32) {
    %c0_i32 = arith.constant 0 : i32
    %c0_i32_0 = arith.constant 0 : i32
    %c0_i32_1 = arith.constant 0 : i32
    %c0_i32_2 = arith.constant 0 : i32
    return %c0_i32, %c0_i32_0, %c0_i32_1 : i32, i32, i32
  }
  func.func @transform_4(%arg0: i32) -> (i32, i32) {
    %c0_i32 = arith.constant 0 : i32
    %c0_i32_0 = arith.constant 0 : i32
    %c0_i32_1 = arith.constant 0 : i32
    return %c0_i32, %c0_i32_0 : i32, i32
  }
  func.func @transform_5(%arg0: i32) -> (i32, i32) {
    %c0_i32 = arith.constant 0 : i32
    %c0_i32_0 = arith.constant 0 : i32
    %c0_i32_1 = arith.constant 0 : i32
    return %c0_i32, %c0_i32_0 : i32, i32
  }
  func.func @transform_6(%arg0: i32) -> (i32, i32) {
    %c0_i32 = arith.constant 0 : i32
    %c0_i32_0 = arith.constant 0 : i32
    %c0_i32_1 = arith.constant 0 : i32
    return %c0_i32, %c0_i32_0 : i32, i32
  }
  func.func @transform_7(%arg0: i32) -> (i32, i32, i32) {
    %c0_i32 = arith.constant 0 : i32
    %c0_i32_0 = arith.constant 0 : i32
    %c0_i32_1 = arith.constant 0 : i32
    return %arg0, %c0_i32, %c0_i32_0 : i32, i32, i32
  }
}

</mosaic_0001>

<llo_original>
// kernel: basic_block_forward.1
$region0: #{basic_block_forward.1}
  #allocation0 [shape = 'u32[]', space=smem, size = 0x4, offset = 0x4, fixed_abs, tag = 'smem constant byte address 0x4 - core index']
  #allocation1 [shape = 'u32[144,128]{1,0:T(1,128)}', space=vmem, size = 0x12000, scoped, tag = 'internal scratch']
  %s0 = inlined_call_operand.vmem [shape: bf16[2,324,8], index: 0, kind: input, shape index: {}]
  %s1 = inlined_call_operand.vmem [shape: bf16[9,8,128], index: 1, kind: input, shape index: {}]
  %s2 = inlined_call_operand.vmem [shape: f32[1,128], index: 2, kind: input, shape index: {}]
  %s3 = inlined_call_operand.vmem [shape: bf16[9,128,128], index: 3, kind: input, shape index: {}]
  %s4 = inlined_call_operand.vmem [shape: bf16[8,128], index: 4, kind: input, shape index: {}]
  %s5 = inlined_call_operand.vmem [shape: f32[1,128], index: 5, kind: input, shape index: {}]
  %s6 = inlined_call_operand.vmem [shape: f32[324,1], index: 6, kind: input, shape index: {}]
  %s7 = inlined_call_operand.vmem [shape: f32[2,324,128], index: 7, kind: output, shape index: {}]
  %s8 = sld [smem:[#allocation0]]
  $region61: #{basic_block_forward.1} parent=0
    _
  %s10 = ssub.s32 1, %s8
  %s11 = scalar_select 0, %s10, %s8
  loop: start=0, step=1, limit=4
  $region2: #{basic_block_forward.1} parent=0 // loop_pre_header
    _
  $region3: #{basic_block_forward.1} parent=0 // loop_header
    %s13 = sphi 0, %s17
    %p14 = scmp.ge.s32.totalorder %s13, 4
    %s23 = sphi 0, %s25
    %s26 = sphi 0, %s23
    %s27 = sphi 0, %s26
    %s43 = sphi 0, %s27
    %s47 = sphi 0, %s47
    %s49 = sphi 0, %s47
    %s50 = sphi 0, %s49
    %s64 = sphi 0, %s50
    %s68 = sphi 0, %s68
    %s70 = sphi 0, %s68
    %s71 = sphi 0, %s70
    %s85 = sphi 0, %s71
    %s89 = sphi 0, %s89
    %s91 = sphi 0, %s89
    %s92 = sphi 0, %s91
    %s106 = sphi 0, %s92
    %s110 = sphi 0, %s110
    %s112 = sphi 0, %s110
    %s113 = sphi 0, %s112
    %s127 = sphi 0, %s113
    %s131 = sphi 0, %s131
    %s133 = sphi 0, %s131
    %s134 = sphi 0, %s133
    %s148 = sphi 0, %s134
    %s152 = sphi 0, %s152
    %s154 = sphi 0, %s152
    %s155 = sphi 0, %s154
    %s169 = sphi 0, %s155
    %s175 = sphi 0, %s177
    %s178 = sphi 0, %s175
    %s179 = sphi 0, %s178
    %s195 = sphi 0, %s179
  $region4: #{basic_block_forward.1} parent=0 // loop_header_branch
    %16 = sbr.rel (%p14) target = $region8
  $region5: #{basic_block_forward.1} parent=0 // loop_body
    %s18 = ssub.s32 %s13, 1
    %s19 = ssub.s32 %s13, 2
    %s20 = sadd.s32 %s13, 1
    %s21 = ssub.s32 %s13, %s20
    %p22 = scmp.eq.s32.totalorder %s21, 0
    %s24 = sadd.s32 %s23, 1
    %s25 = scalar_select %p22, %s23, %s24
    %p28 = pneg %p22
    %p29 = scmp.eq.s32.totalorder %s13, 1
    %p30 = por %p28, %p29
    %p31 = scmp.ne.s32.totalorder %s23, %s26
    %p32 = scmp.eq.s32.totalorder %s13, 0
    %p33 = por %p31, %p32
    %p34 = scmp.ne.s32.totalorder %s23, %s26
    %p35 = scmp.eq.s32.totalorder %s18, 1
    %p36 = por %p34, %p35
    %p37 = scmp.ne.s32.totalorder %s26, %s27
    %p38 = scmp.eq.s32.totalorder %s18, 0
    %p39 = por %p37, %p38
    %p40 = scmp.ne.s32.totalorder %s26, %s27
    %p41 = scmp.eq.s32.totalorder %s19, 1
    %p42 = por %p40, %p41
    %p44 = scmp.ne.s32.totalorder %s27, %s43
    %p45 = scmp.eq.s32.totalorder %s19, 0
    %p46 = por %p44, %p45
    %s48 = sadd.s32 %s47, 1
    %p51 = scmp.eq.s32.totalorder %s13, 1
    %p52 = scmp.ne.s32.totalorder %s47, %s49
    %p53 = scmp.eq.s32.totalorder %s13, 0
    %p54 = por %p52, %p53
    %p55 = scmp.ne.s32.totalorder %s47, %s49
    %p56 = scmp.eq.s32.totalorder %s18, 1
    %p57 = por %p55, %p56
    %p58 = scmp.ne.s32.totalorder %s49, %s50
    %p59 = scmp.eq.s32.totalorder %s18, 0
    %p60 = por %p58, %p59
    %p61 = scmp.ne.s32.totalorder %s49, %s50
    %p62 = scmp.eq.s32.totalorder %s19, 1
    %p63 = por %p61, %p62
    %p65 = scmp.ne.s32.totalorder %s50, %s64
    %p66 = scmp.eq.s32.totalorder %s19, 0
    %p67 = por %p65, %p66
    %s69 = sadd.s32 %s68, 1
    %p72 = scmp.eq.s32.totalorder %s13, 1
    %p73 = scmp.ne.s32.totalorder %s68, %s70
    %p74 = scmp.eq.s32.totalorder %s13, 0
    %p75 = por %p73, %p74
    %p76 = scmp.ne.s32.totalorder %s68, %s70
    %p77 = scmp.eq.s32.totalorder %s18, 1
    %p78 = por %p76, %p77
    %p79 = scmp.ne.s32.totalorder %s70, %s71
    %p80 = scmp.eq.s32.totalorder %s18, 0
    %p81 = por %p79, %p80
    %p82 = scmp.ne.s32.totalorder %s70, %s71
    %p83 = scmp.eq.s32.totalorder %s19, 1
    %p84 = por %p82, %p83
    %p86 = scmp.ne.s32.totalorder %s71, %s85
    %p87 = scmp.eq.s32.totalorder %s19, 0
    %p88 = por %p86, %p87
    %s90 = sadd.s32 %s89, 1
    %p93 = scmp.eq.s32.totalorder %s13, 1
    %p94 = scmp.ne.s32.totalorder %s89, %s91
    %p95 = scmp.eq.s32.totalorder %s13, 0
    %p96 = por %p94, %p95
    %p97 = scmp.ne.s32.totalorder %s89, %s91
    %p98 = scmp.eq.s32.totalorder %s18, 1
    %p99 = por %p97, %p98
    %p100 = scmp.ne.s32.totalorder %s91, %s92
    %p101 = scmp.eq.s32.totalorder %s18, 0
    %p102 = por %p100, %p101
    %p103 = scmp.ne.s32.totalorder %s91, %s92
    %p104 = scmp.eq.s32.totalorder %s19, 1
    %p105 = por %p103, %p104
    %p107 = scmp.ne.s32.totalorder %s92, %s106
    %p108 = scmp.eq.s32.totalorder %s19, 0
    %p109 = por %p107, %p108
    %s111 = sadd.s32 %s110, 1
    %p114 = scmp.eq.s32.totalorder %s13, 1
    %p115 = scmp.ne.s32.totalorder %s110, %s112
    %p116 = scmp.eq.s32.totalorder %s13, 0
    %p117 = por %p115, %p116
    %p118 = scmp.ne.s32.totalorder %s110, %s112
    %p119 = scmp.eq.s32.totalorder %s18, 1
    %p120 = por %p118, %p119
    %p121 = scmp.ne.s32.totalorder %s112, %s113
    %p122 = scmp.eq.s32.totalorder %s18, 0
    %p123 = por %p121, %p122
    %p124 = scmp.ne.s32.totalorder %s112, %s113
    %p125 = scmp.eq.s32.totalorder %s19, 1
    %p126 = por %p124, %p125
    %p128 = scmp.ne.s32.totalorder %s113, %s127
    %p129 = scmp.eq.s32.totalorder %s19, 0
    %p130 = por %p128, %p129
    %s132 = sadd.s32 %s131, 1
    %p135 = scmp.eq.s32.totalorder %s13, 1
    %p136 = scmp.ne.s32.totalorder %s131, %s133
    %p137 = scmp.eq.s32.totalorder %s13, 0
    %p138 = por %p136, %p137
    %p139 = scmp.ne.s32.totalorder %s131, %s133
    %p140 = scmp.eq.s32.totalorder %s18, 1
    %p141 = por %p139, %p140
    %p142 = scmp.ne.s32.totalorder %s133, %s134
    %p143 = scmp.eq.s32.totalorder %s18, 0
    %p144 = por %p142, %p143
    %p145 = scmp.ne.s32.totalorder %s133, %s134
    %p146 = scmp.eq.s32.totalorder %s19, 1
    %p147 = por %p145, %p146
    %p149 = scmp.ne.s32.totalorder %s134, %s148
    %p150 = scmp.eq.s32.totalorder %s19, 0
    %p151 = por %p149, %p150
    %s153 = sadd.s32 %s152, 1
    %p156 = scmp.eq.s32.totalorder %s13, 1
    %p157 = scmp.ne.s32.totalorder %s152, %s154
    %p158 = scmp.eq.s32.totalorder %s13, 0
    %p159 = por %p157, %p158
    %p160 = scmp.ne.s32.totalorder %s152, %s154
    %p161 = scmp.eq.s32.totalorder %s18, 1
    %p162 = por %p160, %p161
    %p163 = scmp.ne.s32.totalorder %s154, %s155
    %p164 = scmp.eq.s32.totalorder %s18, 0
    %p165 = por %p163, %p164
    %p166 = scmp.ne.s32.totalorder %s154, %s155
    %p167 = scmp.eq.s32.totalorder %s19, 1
    %p168 = por %p166, %p167
    %p170 = scmp.ne.s32.totalorder %s155, %s169
    %p171 = scmp.eq.s32.totalorder %s19, 0
    %p172 = por %p170, %p171
    %s173 = ssub.s32 %s13, %s20
    %p174 = scmp.eq.s32.totalorder %s173, 0
    %s176 = sadd.s32 %s175, 1
    %s177 = scalar_select %p174, %s175, %s176
    %p180 = pneg %p174
    %p181 = scmp.eq.s32.totalorder %s13, 1
    %p182 = por %p180, %p181
    %p183 = scmp.ne.s32.totalorder %s175, %s178
    %p184 = scmp.eq.s32.totalorder %s13, 0
    %p185 = por %p183, %p184
    %p186 = scmp.ne.s32.totalorder %s175, %s178
    %p187 = scmp.eq.s32.totalorder %s18, 1
    %p188 = por %p186, %p187
    %p189 = scmp.ne.s32.totalorder %s178, %s179
    %p190 = scmp.eq.s32.totalorder %s18, 0
    %p191 = por %p189, %p190
    %p192 = scmp.ne.s32.totalorder %s178, %s179
    %p193 = scmp.eq.s32.totalorder %s19, 1
    %p194 = por %p192, %p193
    %p196 = scmp.ne.s32.totalorder %s179, %s195
    %p197 = scmp.eq.s32.totalorder %s19, 0
    %p198 = por %p196, %p197
    %p199 = scmp.le.s32.totalorder 1, %s13
    %p200 = scmp.lt.s32.totalorder %s13, 3
    %p201 = pnand %p199, %p200
    %p202 = pneg %p201
    // Predicated region
    $region9: #{basic_block_forward.1} parent=5 // pred_check
      _
    $region10: #{basic_block_forward.1} parent=5 // pred_check_branch
      %204 = sbr.rel (%p201) target = $region12
    $region11: #{basic_block_forward.1} parent=5 // pred_region
      %s205 = ssub.s32 %s13, 1
      // Predicated region
      $region13: #{basic_block_forward.1} parent=11 // pred_check
        %p206 = pneg %p60
      $region14: #{basic_block_forward.1} parent=11 // pred_check_branch
        %208 = sbr.rel (%p206) target = $region16
      $region15: #{basic_block_forward.1} parent=11 // pred_region
        _
      $region16: #{basic_block_forward.1} parent=11 // pred_fallthru
        _
      // Predicated region
      $region17: #{basic_block_forward.1} parent=11 // pred_check
        %p209 = pneg %p81
      $region18: #{basic_block_forward.1} parent=11 // pred_check_branch
        %211 = sbr.rel (%p209) target = $region20
      $region19: #{basic_block_forward.1} parent=11 // pred_region
        _
      $region20: #{basic_block_forward.1} parent=11 // pred_fallthru
        _
      // Predicated region
      $region21: #{basic_block_forward.1} parent=11 // pred_check
        %p212 = pneg %p102
      $region22: #{basic_block_forward.1} parent=11 // pred_check_branch
        %214 = sbr.rel (%p212) target = $region24
      $region23: #{basic_block_forward.1} parent=11 // pred_region
        _
      $region24: #{basic_block_forward.1} parent=11 // pred_fallthru
        _
      // Predicated region
      $region25: #{basic_block_forward.1} parent=11 // pred_check
        %p215 = pneg %p123
      $region26: #{basic_block_forward.1} parent=11 // pred_check_branch
        %217 = sbr.rel (%p215) target = $region28
      $region27: #{basic_block_forward.1} parent=11 // pred_region
        _
      $region28: #{basic_block_forward.1} parent=11 // pred_fallthru
        _
      // Predicated region
      $region29: #{basic_block_forward.1} parent=11 // pred_check
        %p218 = pneg %p144
      $region30: #{basic_block_forward.1} parent=11 // pred_check_branch
        %220 = sbr.rel (%p218) target = $region32
      $region31: #{basic_block_forward.1} parent=11 // pred_region
        _
      $region32: #{basic_block_forward.1} parent=11 // pred_fallthru
        _
      // Predicated region
      $region33: #{basic_block_forward.1} parent=11 // pred_check
        %p221 = pneg %p165
      $region34: #{basic_block_forward.1} parent=11 // pred_check_branch
        %223 = sbr.rel (%p221) target = $region36
      $region35: #{basic_block_forward.1} parent=11 // pred_region
        _
      $region36: #{basic_block_forward.1} parent=11 // pred_fallthru
        _
    $region12: #{basic_block_forward.1} parent=5 // pred_fallthru
      _
    %p224 = scmp.lt.s32.totalorder %s13, 2
    // Predicated region
    $region37: #{basic_block_forward.1} parent=5 // pred_check
      %p225 = pneg %p224
    $region38: #{basic_block_forward.1} parent=5 // pred_check_branch
      %227 = sbr.rel (%p225) target = $region40
    $region39: #{basic_block_forward.1} parent=5 // pred_region
      // Predicated region
      $region41: #{basic_block_forward.1} parent=39 // pred_check
        %p228 = pneg %p33
      $region42: #{basic_block_forward.1} parent=39 // pred_check_branch
        %230 = sbr.rel (%p228) target = $region44
      $region43: #{basic_block_forward.1} parent=39 // pred_region
        %p231 = scmp.lt.s32.totalorder %s13, 1
        %s232 = scalar_select %p231, %s13, 1
        %s233 = smul.addr %s232, 41
        %s234 = smul.addr %s233, 4
        %s235 = scalar_lea.vmem %s0, %s234
      $region44: #{basic_block_forward.1} parent=39 // pred_fallthru
        _
    $region40: #{basic_block_forward.1} parent=5 // pred_fallthru
      _
    %p236 = scmp.le.s32.totalorder 1, %s13
    %p237 = scmp.lt.s32.totalorder %s13, 3
    %p238 = pnand %p236, %p237
    %p239 = pneg %p238
    // Predicated region
    $region45: #{basic_block_forward.1} parent=5 // pred_check
      _
    $region46: #{basic_block_forward.1} parent=5 // pred_check_branch
      %241 = sbr.rel (%p238) target = $region48
    $region47: #{basic_block_forward.1} parent=5 // pred_region
      %s242 = ssub.s32 %s13, 1
      %p243 = scmp.lt.s32.totalorder %s18, 1
      %s244 = scalar_select %p243, %s18, 1
      %s245 = smul.addr %s244, 41
      %s246 = smul.addr %s245, 4
      %s247 = scalar_lea.vmem %s0, %s246
      %p248 = pneg %p39
      %p249 = pneg %p36
      %p250 = pneg %p60
      %p251 = pneg %p57
      %p252 = pneg %p81
      %p253 = pneg %p78
      %p254 = pneg %p102
      %p255 = pneg %p99
      %p256 = pneg %p123
      %p257 = pneg %p120
      %p258 = pneg %p144
      %p259 = pneg %p141
      %p260 = pneg %p165
      %p261 = pneg %p162
      %p262 = pneg %p191
      %p263 = pneg %p188
      %p264 = scmp.lt.s32.totalorder %s18, 1
      %s265 = scalar_select %p264, %s18, 1
      %s266 = smul.addr %s265, 41
      %s267 = smul.addr %s266, 8
      %s268 = scalar_lea.vmem %s7, %s267
      %p269 = scmp.lt.s32.totalorder %s18, 1
      %s270 = scalar_select %p269, %s18, 1
      %s271 = smul.addr %s270, 41
      %s272 = smul.addr %s271, 4
      %s273 = scalar_lea.vmem %s0, %s272
      %p274 = scmp.lt.s32.totalorder %s18, 1
      %s275 = scalar_select %p274, %s18, 1
      %s276 = smul.addr %s275, 41
      %s277 = smul.addr %s276, 8
      %s278 = scalar_lea.vmem %s7, %s277
      %v280 = vld [vmem:[%s273] sm:$0xf]
      %v281 = vld [vmem:[%s273 + $0x4] sm:$0xf]
      %v282 = vld [vmem:[%s273 + $0x8] sm:$0xf]
      %v283 = vld [vmem:[%s273 + $0xc] sm:$0xf]
      %v284 = vld [vmem:[%s273 + $0x10] sm:$0xf]
      %v285 = vld [vmem:[%s273 + $0x14] sm:$0xf]
      %v286 = vld [vmem:[%s273 + $0x18] sm:$0xf]
      %v287 = vld [vmem:[%s273 + $0x1c] sm:$0xf]
      %v288 = vld [vmem:[%s273 + $0x20] sm:$0xf]
      %v289 = vld [vmem:[%s273 + $0x24] sm:$0xf]
      %v290 = vld [vmem:[%s273 + $0x28] sm:$0xf]
      %v291 = vld [vmem:[%s273 + $0x2c] sm:$0xf]
      %v292 = vld [vmem:[%s273 + $0x30] sm:$0xf]
      %v293 = vld [vmem:[%s273 + $0x34] sm:$0xf]
      %v294 = vld [vmem:[%s273 + $0x38] sm:$0xf]
      %v295 = vld [vmem:[%s273 + $0x3c] sm:$0xf]
      %v296 = vld [vmem:[%s273 + $0x40] sm:$0xf]
      %v297 = vld [vmem:[%s273 + $0x44] sm:$0xf]
      %v298 = vld [vmem:[%s273 + $0x48] sm:$0xf]
      %v299 = vld [vmem:[%s273 + $0x4c] sm:$0xf]
      %v300 = vld [vmem:[%s273 + $0x50] sm:$0xf]
      %v301 = vld [vmem:[%s273 + $0x54] sm:$0xf]
      %v302 = vld [vmem:[%s273 + $0x58] sm:$0xf]
      %v303 = vld [vmem:[%s273 + $0x5c] sm:$0xf]
      %v304 = vld [vmem:[%s273 + $0x60] sm:$0xf]
      %v305 = vld [vmem:[%s273 + $0x64] sm:$0xf]
      %v306 = vld [vmem:[%s273 + $0x68] sm:$0xf]
      %v307 = vld [vmem:[%s273 + $0x6c] sm:$0xf]
      %v308 = vld [vmem:[%s273 + $0x70] sm:$0xf]
      %v309 = vld [vmem:[%s273 + $0x74] sm:$0xf]
      %v310 = vld [vmem:[%s273 + $0x78] sm:$0xf]
      %v311 = vld [vmem:[%s273 + $0x7c] sm:$0xf]
      %v312 = vld [vmem:[%s273 + $0x80] sm:$0xf]
      %v313 = vld [vmem:[%s273 + $0x84] sm:$0xf]
      %v314 = vld [vmem:[%s273 + $0x88] sm:$0xf]
      %v315 = vld [vmem:[%s273 + $0x8c] sm:$0xf]
      %v316 = vld [vmem:[%s273 + $0x90] sm:$0xf]
      %v317 = vld [vmem:[%s273 + $0x94] sm:$0xf]
      %v318 = vld [vmem:[%s273 + $0x98] sm:$0xf]
      %v319 = vld [vmem:[%s273 + $0x9c] sm:$0xf]
      %v320 = vld [vmem:[%s273 + $0xa0] sm:$0x3]
      %v324 = vunpack.c.l.b16 %v318
      %v325 = vunpack.c.l.b16 %v319
      %v326 = vunpack.c.l.b16 %v320
      %v327 = vpack.c.b16 %v325, %v324
      %v328 = vpack.c.b16 %v326, %v326
      %vm329 = vsmask.f32 7424
      %v331 = vshrl.u32 %v327, 16
      %v333 = vshll.u32 %v327, 16
      %v335 = vrot.slane %v333, 1
      %v336 = vor.u32 %v331, %v335
      %v338 = vshll.u32 %v328, 16
      %v340 = vrot.slane %v338, 1
      %v341 = vsel %vm329, %v336, %v340
      %v342 = vshrl.u32 %v328, 16
      %v344 = vor.u32 %v342, %v340
      %v384 = vunpack.c.l.b16 %v280
      %v385 = vunpack.c.l.b16 %v281
      %v386 = vunpack.c.l.b16 %v282
      %v387 = vunpack.c.l.b16 %v283
      %v388 = vunpack.c.l.b16 %v284
      %v389 = vunpack.c.l.b16 %v285
      %v390 = vunpack.c.l.b16 %v286
      %v391 = vunpack.c.l.b16 %v287
      %v392 = vunpack.c.l.b16 %v288
      %v393 = vunpack.c.l.b16 %v289
      %v394 = vunpack.c.l.b16 %v290
      %v395 = vunpack.c.l.b16 %v291
      %v396 = vunpack.c.l.b16 %v292
      %v397 = vunpack.c.l.b16 %v293
      %v398 = vunpack.c.l.b16 %v294
      %v399 = vunpack.c.l.b16 %v295
      %v400 = vunpack.c.l.b16 %v296
      %v401 = vunpack.c.l.b16 %v297
      %v402 = vunpack.c.l.b16 %v298
      %v403 = vunpack.c.l.b16 %v299
      %v404 = vunpack.c.l.b16 %v300
      %v405 = vunpack.c.l.b16 %v301
      %v406 = vunpack.c.l.b16 %v302
      %v407 = vunpack.c.l.b16 %v303
      %v408 = vunpack.c.l.b16 %v304
      %v409 = vunpack.c.l.b16 %v305
      %v410 = vunpack.c.l.b16 %v306
      %v411 = vunpack.c.l.b16 %v307
      %v412 = vunpack.c.l.b16 %v308
      %v413 = vunpack.c.l.b16 %v309
      %v414 = vunpack.c.l.b16 %v310
      %v415 = vunpack.c.l.b16 %v311
      %v416 = vunpack.c.l.b16 %v312
      %v417 = vunpack.c.l.b16 %v313
      %v418 = vunpack.c.l.b16 %v314
      %v419 = vunpack.c.l.b16 %v315
      %v420 = vunpack.c.l.b16 %v316
      %v421 = vunpack.c.l.b16 %v317
      %v422 = vpack.c.b16 %v385, %v384
      %v423 = vpack.c.b16 %v387, %v386
      %v424 = vpack.c.b16 %v389, %v388
      %v425 = vpack.c.b16 %v391, %v390
      %v426 = vpack.c.b16 %v393, %v392
      %v427 = vpack.c.b16 %v395, %v394
      %v428 = vpack.c.b16 %v397, %v396
      %v429 = vpack.c.b16 %v399, %v398
      %v430 = vpack.c.b16 %v401, %v400
      %v431 = vpack.c.b16 %v403, %v402
      %v432 = vpack.c.b16 %v405, %v404
      %v433 = vpack.c.b16 %v407, %v406
      %v434 = vpack.c.b16 %v409, %v408
      %v435 = vpack.c.b16 %v411, %v410
      %v436 = vpack.c.b16 %v413, %v412
      %v437 = vpack.c.b16 %v415, %v414
      %v438 = vpack.c.b16 %v417, %v416
      %v439 = vpack.c.b16 %v419, %v418
      %v440 = vpack.c.b16 %v421, %v420
      %v441 = vpack.c.b16 %v324, %v324
      %vm442 = vsmask.f32 1280
      %v444 = vshrl.u32 %v422, 16
      %v446 = vrot.slane %v444, 6
      %v447 = vshll.u32 %v422, 16
      %v449 = vrot.slane %v447, 7
      %v450 = vor.u32 %v446, %v449
      %v452 = vshrl.u32 %v423, 16
      %v454 = vrot.slane %v452, 6
      %v455 = vshll.u32 %v423, 16
      %v457 = vrot.slane %v455, 7
      %v458 = vor.u32 %v454, %v457
      %v459 = vsel %vm442, %v450, %v458
      %v461 = vshrl.u32 %v424, 16
      %v463 = vrot.slane %v461, 6
      %v464 = vshll.u32 %v424, 16
      %v466 = vrot.slane %v464, 7
      %v467 = vor.u32 %v463, %v466
      %v468 = vsel %vm442, %v458, %v467
      %v470 = vshrl.u32 %v425, 16
      %v472 = vrot.slane %v470, 6
      %v473 = vshll.u32 %v425, 16
      %v475 = vrot.slane %v473, 7
      %v476 = vor.u32 %v472, %v475
      %v477 = vsel %vm442, %v467, %v476
      %v479 = vshrl.u32 %v426, 16
      %v481 = vrot.slane %v479, 6
      %v482 = vshll.u32 %v426, 16
      %v484 = vrot.slane %v482, 7
      %v485 = vor.u32 %v481, %v484
      %v486 = vsel %vm442, %v476, %v485
      %v488 = vshrl.u32 %v427, 16
      %v490 = vrot.slane %v488, 6
      %v491 = vshll.u32 %v427, 16
      %v493 = vrot.slane %v491, 7
      %v494 = vor.u32 %v490, %v493
      %v495 = vsel %vm442, %v485, %v494
      %v497 = vshrl.u32 %v428, 16
      %v499 = vrot.slane %v497, 6
      %v500 = vshll.u32 %v428, 16
      %v502 = vrot.slane %v500, 7
      %v503 = vor.u32 %v499, %v502
      %v504 = vsel %vm442, %v494, %v503
      %v506 = vshrl.u32 %v429, 16
      %v508 = vrot.slane %v506, 6
      %v509 = vshll.u32 %v429, 16
      %v511 = vrot.slane %v509, 7
      %v512 = vor.u32 %v508, %v511
      %v513 = vsel %vm442, %v503, %v512
      %v515 = vshrl.u32 %v430, 16
      %v517 = vrot.slane %v515, 6
      %v518 = vshll.u32 %v430, 16
      %v520 = vrot.slane %v518, 7
      %v521 = vor.u32 %v517, %v520
      %v522 = vsel %vm442, %v512, %v521
      %v524 = vshrl.u32 %v431, 16
      %v526 = vrot.slane %v524, 6
      %v527 = vshll.u32 %v431, 16
      %v529 = vrot.slane %v527, 7
      %v530 = vor.u32 %v526, %v529
      %v531 = vsel %vm442, %v521, %v530
      %v533 = vshrl.u32 %v432, 16
      %v535 = vrot.slane %v533, 6
      %v536 = vshll.u32 %v432, 16
      %v538 = vrot.slane %v536, 7
      %v539 = vor.u32 %v535, %v538
      %v540 = vsel %vm442, %v530, %v539
      %v542 = vshrl.u32 %v433, 16
      %v544 = vrot.slane %v542, 6
      %v545 = vshll.u32 %v433, 16
      %v547 = vrot.slane %v545, 7
      %v548 = vor.u32 %v544, %v547
      %v549 = vsel %vm442, %v539, %v548
      %v551 = vshrl.u32 %v434, 16
      %v553 = vrot.slane %v551, 6
      %v554 = vshll.u32 %v434, 16
      %v556 = vrot.slane %v554, 7
      %v557 = vor.u32 %v553, %v556
      %v558 = vsel %vm442, %v548, %v557
      %v560 = vshrl.u32 %v435, 16
      %v562 = vrot.slane %v560, 6
      %v563 = vshll.u32 %v435, 16
      %v565 = vrot.slane %v563, 7
      %v566 = vor.u32 %v562, %v565
      %v567 = vsel %vm442, %v557, %v566
      %v569 = vshrl.u32 %v436, 16
      %v571 = vrot.slane %v569, 6
      %v572 = vshll.u32 %v436, 16
      %v574 = vrot.slane %v572, 7
      %v575 = vor.u32 %v571, %v574
      %v576 = vsel %vm442, %v566, %v575
      %v578 = vshrl.u32 %v437, 16
      %v580 = vrot.slane %v578, 6
      %v581 = vshll.u32 %v437, 16
      %v583 = vrot.slane %v581, 7
      %v584 = vor.u32 %v580, %v583
      %v585 = vsel %vm442, %v575, %v584
      %v587 = vshrl.u32 %v438, 16
      %v589 = vrot.slane %v587, 6
      %v590 = vshll.u32 %v438, 16
      %v592 = vrot.slane %v590, 7
      %v593 = vor.u32 %v589, %v592
      %v594 = vsel %vm442, %v584, %v593
      %v596 = vshrl.u32 %v439, 16
      %v598 = vrot.slane %v596, 6
      %v599 = vshll.u32 %v439, 16
      %v601 = vrot.slane %v599, 7
      %v602 = vor.u32 %v598, %v601
      %v603 = vsel %vm442, %v593, %v602
      %v605 = vshrl.u32 %v440, 16
      %v607 = vrot.slane %v605, 6
      %v608 = vshll.u32 %v440, 16
      %v610 = vrot.slane %v608, 7
      %v611 = vor.u32 %v607, %v610
      %v612 = vsel %vm442, %v602, %v611
      %v614 = vshll.u32 %v441, 16
      %v616 = vrot.slane %v614, 7
      %v617 = vsel %vm442, %v611, %v616
      %vm619 = vcmask 1041408
      %vm620 = vmand %vm619, %vm442
      %v621 = vsel %vm620, %v344, %v450
      %v622 = vld [vmem:[%s1] sm:$0xf]
      %vm623 = vcmask 1046528
      %v624 = vrot.slane %v327, 1
      %v625 = vrot.slane %v328, 1
      %v626 = vsel %vm623, %v624, %v625
      %vm627 = vcmask 1040384
      %v628 = vrot.slane %v422, 7
      %v629 = vrot.slane %v423, 7
      %v630 = vsel %vm627, %v628, %v629
      %v631 = vrot.slane %v424, 7
      %v632 = vsel %vm627, %v629, %v631
      %v633 = vrot.slane %v425, 7
      %v634 = vsel %vm627, %v631, %v633
      %v635 = vrot.slane %v426, 7
      %v636 = vsel %vm627, %v633, %v635
      %v637 = vrot.slane %v427, 7
      %v638 = vsel %vm627, %v635, %v637
      %v639 = vrot.slane %v428, 7
      %v640 = vsel %vm627, %v637, %v639
      %v641 = vrot.slane %v429, 7
      %v642 = vsel %vm627, %v639, %v641
      %v643 = vrot.slane %v430, 7
      %v644 = vsel %vm627, %v641, %v643
      %v645 = vrot.slane %v431, 7
      %v646 = vsel %vm627, %v643, %v645
      %v647 = vrot.slane %v432, 7
      %v648 = vsel %vm627, %v645, %v647
      %v649 = vrot.slane %v433, 7
      %v650 = vsel %vm627, %v647, %v649
      %v651 = vrot.slane %v434, 7
      %v652 = vsel %vm627, %v649, %v651
      %v653 = vrot.slane %v435, 7
      %v654 = vsel %vm627, %v651, %v653
      %v655 = vrot.slane %v436, 7
      %v656 = vsel %vm627, %v653, %v655
      %v657 = vrot.slane %v437, 7
      %v658 = vsel %vm627, %v655, %v657
      %v659 = vrot.slane %v438, 7
      %v660 = vsel %vm627, %v657, %v659
      %v661 = vrot.slane %v439, 7
      %v662 = vsel %vm627, %v659, %v661
      %v663 = vrot.slane %v440, 7
      %v664 = vsel %vm627, %v661, %v663
      %v665 = vrot.slane %v441, 7
      %v666 = vsel %vm627, %v663, %v665
      %vm667 = vcmask 1040384
      %v670 = vsel %vm667, %v625, %v628
      %s671 = scalar_lea.vmem %s1, 4
      %v672 = vld [vmem:[%s671] sm:$0xf]
      %vm673 = vcmask 64512
      %v675 = vsel %vm673, %v626, 0
      %v677 = vsel %vm673, %v670, 0
      %v680 = vsel %vm673, %v630, 0
      %v683 = vsel %vm673, %v632, 0
      %v686 = vsel %vm673, %v634, 0
      %v689 = vsel %vm673, %v636, 0
      %v692 = vsel %vm673, %v638, 0
      %v695 = vsel %vm673, %v640, 0
      %v698 = vsel %vm673, %v642, 0
      %v701 = vsel %vm673, %v644, 0
      %v704 = vsel %vm673, %v646, 0
      %v707 = vsel %vm673, %v648, 0
      %v710 = vsel %vm673, %v650, 0
      %v713 = vsel %vm673, %v652, 0
      %v716 = vsel %vm673, %v654, 0
      %v719 = vsel %vm673, %v656, 0
      %v722 = vsel %vm673, %v658, 0
      %v725 = vsel %vm673, %v660, 0
      %v728 = vsel %vm673, %v662, 0
      %v731 = vsel %vm673, %v664, 0
      %v734 = vsel %vm673, %v666, 0
      %vm736 = vcmask 1043456
      %v738 = vsel %vm736, %v672, 0
      %740 = vmatprep.subr.bf16.mxu0 0
      %741 = vmatpush1.bf16.msra.mxu0 0
      %742 = vmatprep.subr.bf16.mxu0 0
      %743 = vmatpush1.bf16.msra.mxu0 0
      %744 = vmatprep.subr.bf16.mxu0 0
      %745 = vmatpush1.bf16.msra.mxu0 0
      %746 = vmatprep.subr.bf16.mxu0 0
      %747 = vmatpush1.bf16.msra.mxu0 0
      %748 = vmatprep.subr.bf16.mxu0 0
      %749 = vmatpush1.bf16.msra.mxu0 0
      %750 = vmatprep.subr.bf16.mxu0 0
      %751 = vmatpush1.bf16.msra.mxu0 0
      %752 = vmatprep.subr.bf16.mxu0 0
      %753 = vmatpush1.bf16.msra.mxu0 0
      %754 = vmatprep.subr.bf16.mxu0 0
      %755 = vmatpush1.bf16.msra.mxu0 %v738
      %756 = vmatprep.subr.bf16.mxu0 0
      %757 = vmatpush2.bf16.msra.mxu0 0
      %758 = vmatprep.subr.bf16.mxu0 0
      %759 = vmatpush2.bf16.msra.mxu0 0
      %760 = vmatprep.subr.bf16.mxu0 0
      %761 = vmatpush2.bf16.msra.mxu0 0
      %762 = vmatprep.subr.bf16.mxu0 0
      %763 = vmatpush2.bf16.msra.mxu0 0
      %764 = vmatprep.subr.bf16.mxu0 0
      %765 = vmatpush2.bf16.msra.mxu0 0
      %766 = vmatprep.subr.bf16.mxu0 0
      %767 = vmatpush2.bf16.msra.mxu0 0
      %768 = vmatprep.subr.bf16.mxu0 0
      %769 = vmatpush2.bf16.msra.mxu0 0
      %770 = vmatprep.subr.bf16.mxu0 0
      %771 = vmatpush2.bf16.msra.mxu0 0
      %772 = vmatprep.mubr.bf16.mxu0 0
      %773 = vmatmul.mubr.bf16.gmra.mxu0 %v675
      %v774 = vpop.f32.mrf.mxu0
      %v775 = vadd.f32 0.0, %v774
      %v776 = vpop.f32.mrf.mxu0
      %v777 = vpop.f32.mrf.mxu0
      %v778 = vadd.f32 0.0, %v777
      %v779 = vpop.f32.mrf.mxu0
      %780 = vmatprep.mubr.bf16.mxu0 0
      %781 = vmatmul.mubr.bf16.gmra.mxu0 %v677
      %v782 = vpop.f32.mrf.mxu0
      %v783 = vadd.f32 0.0, %v782
      %v784 = vpop.f32.mrf.mxu0
      %v785 = vpop.f32.mrf.mxu0
      %v786 = vadd.f32 0.0, %v785
      %v787 = vpop.f32.mrf.mxu0
      %788 = vmatprep.mubr.bf16.mxu0 0
      %789 = vmatmul.mubr.bf16.gmra.mxu0 %v680
      %v790 = vpop.f32.mrf.mxu0
      %v791 = vadd.f32 0.0, %v790
      %v792 = vpop.f32.mrf.mxu0
      %v793 = vpop.f32.mrf.mxu0
      %v794 = vadd.f32 0.0, %v793
      %v795 = vpop.f32.mrf.mxu0
      %796 = vmatprep.mubr.bf16.mxu0 0
      %797 = vmatmul.mubr.bf16.gmra.mxu0 %v683
      %v798 = vpop.f32.mrf.mxu0
      %v799 = vadd.f32 0.0, %v798
      %v800 = vpop.f32.mrf.mxu0
      %v801 = vpop.f32.mrf.mxu0
      %v802 = vadd.f32 0.0, %v801
      %v803 = vpop.f32.mrf.mxu0
      %804 = vmatprep.mubr.bf16.mxu0 0
      %805 = vmatmul.mubr.bf16.gmra.mxu0 %v686
      %v806 = vpop.f32.mrf.mxu0
      %v807 = vadd.f32 0.0, %v806
      %v808 = vpop.f32.mrf.mxu0
      %v809 = vpop.f32.mrf.mxu0
      %v810 = vadd.f32 0.0, %v809
      %v811 = vpop.f32.mrf.mxu0
      %812 = vmatprep.mubr.bf16.mxu0 0
      %813 = vmatmul.mubr.bf16.gmra.mxu0 %v689
      %v814 = vpop.f32.mrf.mxu0
      %v815 = vadd.f32 0.0, %v814
      %v816 = vpop.f32.mrf.mxu0
      %v817 = vpop.f32.mrf.mxu0
      %v818 = vadd.f32 0.0, %v817
      %v819 = vpop.f32.mrf.mxu0
      %820 = vmatprep.mubr.bf16.mxu0 0
      %821 = vmatmul.mubr.bf16.gmra.mxu0 %v692
      %v822 = vpop.f32.mrf.mxu0
      %v823 = vadd.f32 0.0, %v822
      %v824 = vpop.f32.mrf.mxu0
      %v825 = vpop.f32.mrf.mxu0
      %v826 = vadd.f32 0.0, %v825
      %v827 = vpop.f32.mrf.mxu0
      %828 = vmatprep.mubr.bf16.mxu0 0
      %829 = vmatmul.mubr.bf16.gmra.mxu0 %v695
      %v830 = vpop.f32.mrf.mxu0
      %v831 = vadd.f32 0.0, %v830
      %v832 = vpop.f32.mrf.mxu0
      %v833 = vpop.f32.mrf.mxu0
      %v834 = vadd.f32 0.0, %v833
      %v835 = vpop.f32.mrf.mxu0
      %836 = vmatprep.mubr.bf16.mxu0 0
      %837 = vmatmul.mubr.bf16.gmra.mxu0 %v698
      %v838 = vpop.f32.mrf.mxu0
      %v839 = vadd.f32 0.0, %v838
      %v840 = vpop.f32.mrf.mxu0
      %v841 = vpop.f32.mrf.mxu0
      %v842 = vadd.f32 0.0, %v841
      %v843 = vpop.f32.mrf.mxu0
      %844 = vmatprep.mubr.bf16.mxu0 0
      %845 = vmatmul.mubr.bf16.gmra.mxu0 %v701
      %v846 = vpop.f32.mrf.mxu0
      %v847 = vadd.f32 0.0, %v846
      %v848 = vpop.f32.mrf.mxu0
      %v849 = vpop.f32.mrf.mxu0
      %v850 = vadd.f32 0.0, %v849
      %v851 = vpop.f32.mrf.mxu0
      %852 = vmatprep.mubr.bf16.mxu0 0
      %853 = vmatmul.mubr.bf16.gmra.mxu0 %v704
      %v854 = vpop.f32.mrf.mxu0
      %v855 = vadd.f32 0.0, %v854
      %v856 = vpop.f32.mrf.mxu0
      %v857 = vpop.f32.mrf.mxu0
      %v858 = vadd.f32 0.0, %v857
      %v859 = vpop.f32.mrf.mxu0
      %860 = vmatprep.mubr.bf16.mxu0 0
      %861 = vmatmul.mubr.bf16.gmra.mxu0 %v707
      %v862 = vpop.f32.mrf.mxu0
      %v863 = vadd.f32 0.0, %v862
      %v864 = vpop.f32.mrf.mxu0
      %v865 = vpop.f32.mrf.mxu0
      %v866 = vadd.f32 0.0, %v865
      %v867 = vpop.f32.mrf.mxu0
      %868 = vmatprep.mubr.bf16.mxu0 0
      %869 = vmatmul.mubr.bf16.gmra.mxu0 %v710
      %v870 = vpop.f32.mrf.mxu0
      %v871 = vadd.f32 0.0, %v870
      %v872 = vpop.f32.mrf.mxu0
      %v873 = vpop.f32.mrf.mxu0
      %v874 = vadd.f32 0.0, %v873
      %v875 = vpop.f32.mrf.mxu0
      %876 = vmatprep.mubr.bf16.mxu0 0
      %877 = vmatmul.mubr.bf16.gmra.mxu0 %v713
      %v878 = vpop.f32.mrf.mxu0
      %v879 = vadd.f32 0.0, %v878
      %v880 = vpop.f32.mrf.mxu0
      %v881 = vpop.f32.mrf.mxu0
      %v882 = vadd.f32 0.0, %v881
      %v883 = vpop.f32.mrf.mxu0
      %884 = vmatprep.mubr.bf16.mxu0 0
      %885 = vmatmul.mubr.bf16.gmra.mxu0 %v716
      %v886 = vpop.f32.mrf.mxu0
      %v887 = vadd.f32 0.0, %v886
      %v888 = vpop.f32.mrf.mxu0
      %v889 = vpop.f32.mrf.mxu0
      %v890 = vadd.f32 0.0, %v889
      %v891 = vpop.f32.mrf.mxu0
      %892 = vmatprep.mubr.bf16.mxu0 0
      %893 = vmatmul.mubr.bf16.gmra.mxu0 %v719
      %v894 = vpop.f32.mrf.mxu0
      %v895 = vadd.f32 0.0, %v894
      %v896 = vpop.f32.mrf.mxu0
      %v897 = vpop.f32.mrf.mxu0
      %v898 = vadd.f32 0.0, %v897
      %v899 = vpop.f32.mrf.mxu0
      %900 = vmatprep.mubr.bf16.mxu0 0
      %901 = vmatmul.mubr.bf16.gmra.mxu0 %v722
      %v902 = vpop.f32.mrf.mxu0
      %v903 = vadd.f32 0.0, %v902
      %v904 = vpop.f32.mrf.mxu0
      %v905 = vpop.f32.mrf.mxu0
      %v906 = vadd.f32 0.0, %v905
      %v907 = vpop.f32.mrf.mxu0
      %908 = vmatprep.mubr.bf16.mxu0 0
      %909 = vmatmul.mubr.bf16.gmra.mxu0 %v725
      %v910 = vpop.f32.mrf.mxu0
      %v911 = vadd.f32 0.0, %v910
      %v912 = vpop.f32.mrf.mxu0
      %v913 = vpop.f32.mrf.mxu0
      %v914 = vadd.f32 0.0, %v913
      %v915 = vpop.f32.mrf.mxu0
      %916 = vmatprep.mubr.bf16.mxu0 0
      %917 = vmatmul.mubr.bf16.gmra.mxu0 %v728
      %v918 = vpop.f32.mrf.mxu0
      %v919 = vadd.f32 0.0, %v918
      %v920 = vpop.f32.mrf.mxu0
      %v921 = vpop.f32.mrf.mxu0
      %v922 = vadd.f32 0.0, %v921
      %v923 = vpop.f32.mrf.mxu0
      %924 = vmatprep.mubr.bf16.mxu0 0
      %925 = vmatmul.mubr.bf16.gmra.mxu0 %v731
      %v926 = vpop.f32.mrf.mxu0
      %v927 = vadd.f32 0.0, %v926
      %v928 = vpop.f32.mrf.mxu0
      %v929 = vpop.f32.mrf.mxu0
      %v930 = vadd.f32 0.0, %v929
      %v931 = vpop.f32.mrf.mxu0
      %932 = vmatprep.mubr.bf16.mxu0 0
      %933 = vmatmul.mubr.bf16.gmra.mxu0 %v734
      %v934 = vpop.f32.mrf.mxu0
      %v935 = vadd.f32 0.0, %v934
      %v936 = vpop.f32.mrf.mxu0
      %v937 = vpop.f32.mrf.mxu0
      %v938 = vpop.f32.mrf.mxu0
      %939 = vdwg.mxu0
      %v941 = vsel %vm673, %v341, 0
      %v944 = vsel %vm673, %v621, 0
      %v947 = vsel %vm673, %v459, 0
      %v950 = vsel %vm673, %v468, 0
      %v953 = vsel %vm673, %v477, 0
      %v956 = vsel %vm673, %v486, 0
      %v959 = vsel %vm673, %v495, 0
      %v962 = vsel %vm673, %v504, 0
      %v965 = vsel %vm673, %v513, 0
      %v968 = vsel %vm673, %v522, 0
      %v971 = vsel %vm673, %v531, 0
      %v974 = vsel %vm673, %v540, 0
      %v977 = vsel %vm673, %v549, 0
      %v980 = vsel %vm673, %v558, 0
      %v983 = vsel %vm673, %v567, 0
      %v986 = vsel %vm673, %v576, 0
      %v989 = vsel %vm673, %v585, 0
      %v992 = vsel %vm673, %v594, 0
      %v995 = vsel %vm673, %v603, 0
      %v998 = vsel %vm673, %v612, 0
      %v1001 = vsel %vm673, %v617, 0
      %v1004 = vsel %vm736, %v622, 0
      %1006 = vmatprep.subr.bf16.mxu0 0
      %1007 = vmatpush1.bf16.msra.mxu0 0
      %1008 = vmatprep.subr.bf16.mxu0 0
      %1009 = vmatpush1.bf16.msra.mxu0 0
      %1010 = vmatprep.subr.bf16.mxu0 0
      %1011 = vmatpush1.bf16.msra.mxu0 0
      %1012 = vmatprep.subr.bf16.mxu0 0
      %1013 = vmatpush1.bf16.msra.mxu0 0
      %1014 = vmatprep.subr.bf16.mxu0 0
      %1015 = vmatpush1.bf16.msra.mxu0 0
      %1016 = vmatprep.subr.bf16.mxu0 0
      %1017 = vmatpush1.bf16.msra.mxu0 0
      %1018 = vmatprep.subr.bf16.mxu0 0
      %1019 = vmatpush1.bf16.msra.mxu0 0
      %1020 = vmatprep.subr.bf16.mxu0 0
      %1021 = vmatpush1.bf16.msra.mxu0 %v1004
      %1022 = vmatprep.subr.bf16.mxu0 0
      %1023 = vmatpush2.bf16.msra.mxu0 0
      %1024 = vmatprep.subr.bf16.mxu0 0
      %1025 = vmatpush2.bf16.msra.mxu0 0
      %1026 = vmatprep.subr.bf16.mxu0 0
      %1027 = vmatpush2.bf16.msra.mxu0 0
      %1028 = vmatprep.subr.bf16.mxu0 0
      %1029 = vmatpush2.bf16.msra.mxu0 0
      %1030 = vmatprep.subr.bf16.mxu0 0
      %1031 = vmatpush2.bf16.msra.mxu0 0
      %1032 = vmatprep.subr.bf16.mxu0 0
      %1033 = vmatpush2.bf16.msra.mxu0 0
      %1034 = vmatprep.subr.bf16.mxu0 0
      %1035 = vmatpush2.bf16.msra.mxu0 0
      %1036 = vmatprep.subr.bf16.mxu0 0
      %1037 = vmatpush2.bf16.msra.mxu0 0
      %1038 = vmatprep.mubr.bf16.mxu0 0
      %1039 = vmatmul.mubr.bf16.gmra.mxu0 %v941
      %v1040 = vpop.f32.mrf.mxu0
      %v1041 = vadd.f32 %v775, %v1040
      %v1042 = vpop.f32.mrf.mxu0
      %v1043 = vpop.f32.mrf.mxu0
      %v1044 = vadd.f32 %v778, %v1043
      %v1045 = vpop.f32.mrf.mxu0
      %1046 = vmatprep.mubr.bf16.mxu0 0
      %1047 = vmatmul.mubr.bf16.gmra.mxu0 %v944
      %v1048 = vpop.f32.mrf.mxu0
      %v1049 = vadd.f32 %v783, %v1048
      %v1050 = vpop.f32.mrf.mxu0
      %v1051 = vpop.f32.mrf.mxu0
      %v1052 = vadd.f32 %v786, %v1051
      %v1053 = vpop.f32.mrf.mxu0
      %1054 = vmatprep.mubr.bf16.mxu0 0
      %1055 = vmatmul.mubr.bf16.gmra.mxu0 %v947
      %v1056 = vpop.f32.mrf.mxu0
      %v1057 = vadd.f32 %v791, %v1056
      %v1058 = vpop.f32.mrf.mxu0
      %v1059 = vpop.f32.mrf.mxu0
      %v1060 = vadd.f32 %v794, %v1059
      %v1061 = vpop.f32.mrf.mxu0
      %1062 = vmatprep.mubr.bf16.mxu0 0
      %1063 = vmatmul.mubr.bf16.gmra.mxu0 %v950
      %v1064 = vpop.f32.mrf.mxu0
      %v1065 = vadd.f32 %v799, %v1064
      %v1066 = vpop.f32.mrf.mxu0
      %v1067 = vpop.f32.mrf.mxu0
      %v1068 = vadd.f32 %v802, %v1067
      %v1069 = vpop.f32.mrf.mxu0
      %1070 = vmatprep.mubr.bf16.mxu0 0
      %1071 = vmatmul.mubr.bf16.gmra.mxu0 %v953
      %v1072 = vpop.f32.mrf.mxu0
      %v1073 = vadd.f32 %v807, %v1072
      %v1074 = vpop.f32.mrf.mxu0
      %v1075 = vpop.f32.mrf.mxu0
      %v1076 = vadd.f32 %v810, %v1075
      %v1077 = vpop.f32.mrf.mxu0
      %1078 = vmatprep.mubr.bf16.mxu0 0
      %1079 = vmatmul.mubr.bf16.gmra.mxu0 %v956
      %v1080 = vpop.f32.mrf.mxu0
      %v1081 = vadd.f32 %v815, %v1080
      %v1082 = vpop.f32.mrf.mxu0
      %v1083 = vpop.f32.mrf.mxu0
      %v1084 = vadd.f32 %v818, %v1083
      %v1085 = vpop.f32.mrf.mxu0
      %1086 = vmatprep.mubr.bf16.mxu0 0
      %1087 = vmatmul.mubr.bf16.gmra.mxu0 %v959
      %v1088 = vpop.f32.mrf.mxu0
      %v1089 = vadd.f32 %v823, %v1088
      %v1090 = vpop.f32.mrf.mxu0
      %v1091 = vpop.f32.mrf.mxu0
      %v1092 = vadd.f32 %v826, %v1091
      %v1093 = vpop.f32.mrf.mxu0
      %1094 = vmatprep.mubr.bf16.mxu0 0
      %1095 = vmatmul.mubr.bf16.gmra.mxu0 %v962
      %v1096 = vpop.f32.mrf.mxu0
      %v1097 = vadd.f32 %v831, %v1096
      %v1098 = vpop.f32.mrf.mxu0
      %v1099 = vpop.f32.mrf.mxu0
      %v1100 = vadd.f32 %v834, %v1099
      %v1101 = vpop.f32.mrf.mxu0
      %1102 = vmatprep.mubr.bf16.mxu0 0
      %1103 = vmatmul.mubr.bf16.gmra.mxu0 %v965
      %v1104 = vpop.f32.mrf.mxu0
      %v1105 = vadd.f32 %v839, %v1104
      %v1106 = vpop.f32.mrf.mxu0
      %v1107 = vpop.f32.mrf.mxu0
      %v1108 = vadd.f32 %v842, %v1107
      %v1109 = vpop.f32.mrf.mxu0
      %1110 = vmatprep.mubr.bf16.mxu0 0
      %1111 = vmatmul.mubr.bf16.gmra.mxu0 %v968
      %v1112 = vpop.f32.mrf.mxu0
      %v1113 = vadd.f32 %v847, %v1112
      %v1114 = vpop.f32.mrf.mxu0
      %v1115 = vpop.f32.mrf.mxu0
      %v1116 = vadd.f32 %v850, %v1115
      %v1117 = vpop.f32.mrf.mxu0
      %1118 = vmatprep.mubr.bf16.mxu0 0
      %1119 = vmatmul.mubr.bf16.gmra.mxu0 %v971
      %v1120 = vpop.f32.mrf.mxu0
      %v1121 = vadd.f32 %v855, %v1120
      %v1122 = vpop.f32.mrf.mxu0
      %v1123 = vpop.f32.mrf.mxu0
      %v1124 = vadd.f32 %v858, %v1123
      %v1125 = vpop.f32.mrf.mxu0
      %1126 = vmatprep.mubr.bf16.mxu0 0
      %1127 = vmatmul.mubr.bf16.gmra.mxu0 %v974
      %v1128 = vpop.f32.mrf.mxu0
      %v1129 = vadd.f32 %v863, %v1128
      %v1130 = vpop.f32.mrf.mxu0
      %v1131 = vpop.f32.mrf.mxu0
      %v1132 = vadd.f32 %v866, %v1131
      %v1133 = vpop.f32.mrf.mxu0
      %1134 = vmatprep.mubr.bf16.mxu0 0
      %1135 = vmatmul.mubr.bf16.gmra.mxu0 %v977
      %v1136 = vpop.f32.mrf.mxu0
      %v1137 = vadd.f32 %v871, %v1136
      %v1138 = vpop.f32.mrf.mxu0
      %v1139 = vpop.f32.mrf.mxu0
      %v1140 = vadd.f32 %v874, %v1139
      %v1141 = vpop.f32.mrf.mxu0
      %1142 = vmatprep.mubr.bf16.mxu0 0
      %1143 = vmatmul.mubr.bf16.gmra.mxu0 %v980
      %v1144 = vpop.f32.mrf.mxu0
      %v1145 = vadd.f32 %v879, %v1144
      %v1146 = vpop.f32.mrf.mxu0
      %v1147 = vpop.f32.mrf.mxu0
      %v1148 = vadd.f32 %v882, %v1147
      %v1149 = vpop.f32.mrf.mxu0
      %1150 = vmatprep.mubr.bf16.mxu0 0
      %1151 = vmatmul.mubr.bf16.gmra.mxu0 %v983
      %v1152 = vpop.f32.mrf.mxu0
      %v1153 = vadd.f32 %v887, %v1152
      %v1154 = vpop.f32.mrf.mxu0
      %v1155 = vpop.f32.mrf.mxu0
      %v1156 = vadd.f32 %v890, %v1155
      %v1157 = vpop.f32.mrf.mxu0
      %1158 = vmatprep.mubr.bf16.mxu0 0
      %1159 = vmatmul.mubr.bf16.gmra.mxu0 %v986
      %v1160 = vpop.f32.mrf.mxu0
      %v1161 = vadd.f32 %v895, %v1160
      %v1162 = vpop.f32.mrf.mxu0
      %v1163 = vpop.f32.mrf.mxu0
      %v1164 = vadd.f32 %v898, %v1163
      %v1165 = vpop.f32.mrf.mxu0
      %1166 = vmatprep.mubr.bf16.mxu0 0
      %1167 = vmatmul.mubr.bf16.gmra.mxu0 %v989
      %v1168 = vpop.f32.mrf.mxu0
      %v1169 = vadd.f32 %v903, %v1168
      %v1170 = vpop.f32.mrf.mxu0
      %v1171 = vpop.f32.mrf.mxu0
      %v1172 = vadd.f32 %v906, %v1171
      %v1173 = vpop.f32.mrf.mxu0
      %1174 = vmatprep.mubr.bf16.mxu0 0
      %1175 = vmatmul.mubr.bf16.gmra.mxu0 %v992
      %v1176 = vpop.f32.mrf.mxu0
      %v1177 = vadd.f32 %v911, %v1176
      %v1178 = vpop.f32.mrf.mxu0
      %v1179 = vpop.f32.mrf.mxu0
      %v1180 = vadd.f32 %v914, %v1179
      %v1181 = vpop.f32.mrf.mxu0
      %1182 = vmatprep.mubr.bf16.mxu0 0
      %1183 = vmatmul.mubr.bf16.gmra.mxu0 %v995
      %v1184 = vpop.f32.mrf.mxu0
      %v1185 = vadd.f32 %v919, %v1184
      %v1186 = vpop.f32.mrf.mxu0
      %v1187 = vpop.f32.mrf.mxu0
      %v1188 = vadd.f32 %v922, %v1187
      %v1189 = vpop.f32.mrf.mxu0
      %1190 = vmatprep.mubr.bf16.mxu0 0
      %1191 = vmatmul.mubr.bf16.gmra.mxu0 %v998
      %v1192 = vpop.f32.mrf.mxu0
      %v1193 = vadd.f32 %v927, %v1192
      %v1194 = vpop.f32.mrf.mxu0
      %v1195 = vpop.f32.mrf.mxu0
      %v1196 = vadd.f32 %v930, %v1195
      %v1197 = vpop.f32.mrf.mxu0
      %1198 = vmatprep.mubr.bf16.mxu0 0
      %1199 = vmatmul.mubr.bf16.gmra.mxu0 %v1001
      %v1200 = vpop.f32.mrf.mxu0
      %v1201 = vadd.f32 %v935, %v1200
      %v1202 = vpop.f32.mrf.mxu0
      %v1203 = vpop.f32.mrf.mxu0
      %v1204 = vpop.f32.mrf.mxu0
      %1205 = vdwg.mxu0
      %vm1206 = vsmask.f32 6400
      %v1207 = vrot.slane %v331, 1
      %v1208 = vrot.slane %v333, 2
      %v1209 = vor.u32 %v1207, %v1208
      %v1210 = vrot.slane %v342, 1
      %v1211 = vrot.slane %v338, 2
      %v1212 = vor.u32 %v1210, %v1211
      %v1213 = vsel %vm1206, %v1209, %v1212
      %vm1215 = vsmask.f32 256
      %v1216 = vrot.slane %v444, 7
      %v1217 = vor.u32 %v1216, %v447
      %v1218 = vrot.slane %v452, 7
      %v1219 = vor.u32 %v1218, %v455
      %v1220 = vsel %vm1215, %v1216, %v1219
      %v1221 = vrot.slane %v461, 7
      %v1222 = vor.u32 %v1221, %v464
      %v1223 = vsel %vm1215, %v1218, %v1222
      %v1224 = vrot.slane %v470, 7
      %v1225 = vor.u32 %v1224, %v473
      %v1226 = vsel %vm1215, %v1221, %v1225
      %v1227 = vrot.slane %v479, 7
      %v1228 = vor.u32 %v1227, %v482
      %v1229 = vsel %vm1215, %v1224, %v1228
      %v1230 = vrot.slane %v488, 7
      %v1231 = vor.u32 %v1230, %v491
      %v1232 = vsel %vm1215, %v1227, %v1231
      %v1233 = vrot.slane %v497, 7
      %v1234 = vor.u32 %v1233, %v500
      %v1235 = vsel %vm1215, %v1230, %v1234
      %v1236 = vrot.slane %v506, 7
      %v1237 = vor.u32 %v1236, %v509
      %v1238 = vsel %vm1215, %v1233, %v1237
      %v1239 = vrot.slane %v515, 7
      %v1240 = vor.u32 %v1239, %v518
      %v1241 = vsel %vm1215, %v1236, %v1240
      %v1242 = vrot.slane %v524, 7
      %v1243 = vor.u32 %v1242, %v527
      %v1244 = vsel %vm1215, %v1239, %v1243
      %v1245 = vrot.slane %v533, 7
      %v1246 = vor.u32 %v1245, %v536
      %v1247 = vsel %vm1215, %v1242, %v1246
      %v1248 = vrot.slane %v542, 7
      %v1249 = vor.u32 %v1248, %v545
      %v1250 = vsel %vm1215, %v1245, %v1249
      %v1251 = vrot.slane %v551, 7
      %v1252 = vor.u32 %v1251, %v554
      %v1253 = vsel %vm1215, %v1248, %v1252
      %v1254 = vrot.slane %v560, 7
      %v1255 = vor.u32 %v1254, %v563
      %v1256 = vsel %vm1215, %v1251, %v1255
      %v1257 = vrot.slane %v569, 7
      %v1258 = vor.u32 %v1257, %v572
      %v1259 = vsel %vm1215, %v1254, %v1258
      %v1260 = vrot.slane %v578, 7
      %v1261 = vor.u32 %v1260, %v581
      %v1262 = vsel %vm1215, %v1257, %v1261
      %v1263 = vrot.slane %v587, 7
      %v1264 = vor.u32 %v1263, %v590
      %v1265 = vsel %vm1215, %v1260, %v1264
      %v1266 = vrot.slane %v596, 7
      %v1267 = vor.u32 %v1266, %v599
      %v1268 = vsel %vm1215, %v1263, %v1267
      %v1269 = vrot.slane %v605, 7
      %v1270 = vor.u32 %v1269, %v608
      %v1271 = vsel %vm1215, %v1266, %v1270
      %v1272 = vshrl.u32 %v441, 16
      %v1274 = vrot.slane %v1272, 7
      %v1275 = vor.u32 %v1274, %v614
      %v1276 = vsel %vm1215, %v1269, %v1275
      %vm1278 = vmand %vm627, %vm1215
      %v1279 = vsel %vm1278, %v1210, %v1217
      %s1280 = scalar_lea.vmem %s1, 8
      %v1281 = vld [vmem:[%s1280] sm:$0xf]
      %v1283 = vsel %vm673, %v1213, 0
      %v1286 = vsel %vm673, %v1279, 0
      %v1289 = vsel %vm673, %v1220, 0
      %v1292 = vsel %vm673, %v1223, 0
      %v1295 = vsel %vm673, %v1226, 0
      %v1298 = vsel %vm673, %v1229, 0
      %v1301 = vsel %vm673, %v1232, 0
      %v1304 = vsel %vm673, %v1235, 0
      %v1307 = vsel %vm673, %v1238, 0
      %v1310 = vsel %vm673, %v1241, 0
      %v1313 = vsel %vm673, %v1244, 0
      %v1316 = vsel %vm673, %v1247, 0
      %v1319 = vsel %vm673, %v1250, 0
      %v1322 = vsel %vm673, %v1253, 0
      %v1325 = vsel %vm673, %v1256, 0
      %v1328 = vsel %vm673, %v1259, 0
      %v1331 = vsel %vm673, %v1262, 0
      %v1334 = vsel %vm673, %v1265, 0
      %v1337 = vsel %vm673, %v1268, 0
      %v1340 = vsel %vm673, %v1271, 0
      %v1343 = vsel %vm673, %v1276, 0
      %v1346 = vsel %vm736, %v1281, 0
      %1348 = vmatprep.subr.bf16.mxu0 0
      %1349 = vmatpush1.bf16.msra.mxu0 0
      %1350 = vmatprep.subr.bf16.mxu0 0
      %1351 = vmatpush1.bf16.msra.mxu0 0
      %1352 = vmatprep.subr.bf16.mxu0 0
      %1353 = vmatpush1.bf16.msra.mxu0 0
      %1354 = vmatprep.subr.bf16.mxu0 0
      %1355 = vmatpush1.bf16.msra.mxu0 0
      %1356 = vmatprep.subr.bf16.mxu0 0
      %1357 = vmatpush1.bf16.msra.mxu0 0
      %1358 = vmatprep.subr.bf16.mxu0 0
      %1359 = vmatpush1.bf16.msra.mxu0 0
      %1360 = vmatprep.subr.bf16.mxu0 0
      %1361 = vmatpush1.bf16.msra.mxu0 0
      %1362 = vmatprep.subr.bf16.mxu0 0
      %1363 = vmatpush1.bf16.msra.mxu0 %v1346
      %1364 = vmatprep.subr.bf16.mxu0 0
      %1365 = vmatpush2.bf16.msra.mxu0 0
      %1366 = vmatprep.subr.bf16.mxu0 0
      %1367 = vmatpush2.bf16.msra.mxu0 0
      %1368 = vmatprep.subr.bf16.mxu0 0
      %1369 = vmatpush2.bf16.msra.mxu0 0
      %1370 = vmatprep.subr.bf16.mxu0 0
      %1371 = vmatpush2.bf16.msra.mxu0 0
      %1372 = vmatprep.subr.bf16.mxu0 0
      %1373 = vmatpush2.bf16.msra.mxu0 0
      %1374 = vmatprep.subr.bf16.mxu0 0
      %1375 = vmatpush2.bf16.msra.mxu0 0
      %1376 = vmatprep.subr.bf16.mxu0 0
      %1377 = vmatpush2.bf16.msra.mxu0 0
      %1378 = vmatprep.subr.bf16.mxu0 0
      %1379 = vmatpush2.bf16.msra.mxu0 0
      %1380 = vmatprep.mubr.bf16.mxu0 0
      %1381 = vmatmul.mubr.bf16.gmra.mxu0 %v1283
      %v1382 = vpop.f32.mrf.mxu0
      %v1383 = vadd.f32 0.0, %v1382
      %v1384 = vpop.f32.mrf.mxu0
      %v1385 = vpop.f32.mrf.mxu0
      %v1386 = vadd.f32 0.0, %v1385
      %v1387 = vpop.f32.mrf.mxu0
      %1388 = vmatprep.mubr.bf16.mxu0 0
      %1389 = vmatmul.mubr.bf16.gmra.mxu0 %v1286
      %v1390 = vpop.f32.mrf.mxu0
      %v1391 = vadd.f32 0.0, %v1390
      %v1392 = vpop.f32.mrf.mxu0
      %v1393 = vpop.f32.mrf.mxu0
      %v1394 = vadd.f32 0.0, %v1393
      %v1395 = vpop.f32.mrf.mxu0
      %1396 = vmatprep.mubr.bf16.mxu0 0
      %1397 = vmatmul.mubr.bf16.gmra.mxu0 %v1289
      %v1398 = vpop.f32.mrf.mxu0
      %v1399 = vadd.f32 0.0, %v1398
      %v1400 = vpop.f32.mrf.mxu0
      %v1401 = vpop.f32.mrf.mxu0
      %v1402 = vadd.f32 0.0, %v1401
      %v1403 = vpop.f32.mrf.mxu0
      %1404 = vmatprep.mubr.bf16.mxu0 0
      %1405 = vmatmul.mubr.bf16.gmra.mxu0 %v1292
      %v1406 = vpop.f32.mrf.mxu0
      %v1407 = vadd.f32 0.0, %v1406
      %v1408 = vpop.f32.mrf.mxu0
      %v1409 = vpop.f32.mrf.mxu0
      %v1410 = vadd.f32 0.0, %v1409
      %v1411 = vpop.f32.mrf.mxu0
      %1412 = vmatprep.mubr.bf16.mxu0 0
      %1413 = vmatmul.mubr.bf16.gmra.mxu0 %v1295
      %v1414 = vpop.f32.mrf.mxu0
      %v1415 = vadd.f32 0.0, %v1414
      %v1416 = vpop.f32.mrf.mxu0
      %v1417 = vpop.f32.mrf.mxu0
      %v1418 = vadd.f32 0.0, %v1417
      %v1419 = vpop.f32.mrf.mxu0
      %1420 = vmatprep.mubr.bf16.mxu0 0
      %1421 = vmatmul.mubr.bf16.gmra.mxu0 %v1298
      %v1422 = vpop.f32.mrf.mxu0
      %v1423 = vadd.f32 0.0, %v1422
      %v1424 = vpop.f32.mrf.mxu0
      %v1425 = vpop.f32.mrf.mxu0
      %v1426 = vadd.f32 0.0, %v1425
      %v1427 = vpop.f32.mrf.mxu0
      %1428 = vmatprep.mubr.bf16.mxu0 0
      %1429 = vmatmul.mubr.bf16.gmra.mxu0 %v1301
      %v1430 = vpop.f32.mrf.mxu0
      %v1431 = vadd.f32 0.0, %v1430
      %v1432 = vpop.f32.mrf.mxu0
      %v1433 = vpop.f32.mrf.mxu0
      %v1434 = vadd.f32 0.0, %v1433
      %v1435 = vpop.f32.mrf.mxu0
      %1436 = vmatprep.mubr.bf16.mxu0 0
      %1437 = vmatmul.mubr.bf16.gmra.mxu0 %v1304
      %v1438 = vpop.f32.mrf.mxu0
      %v1439 = vadd.f32 0.0, %v1438
      %v1440 = vpop.f32.mrf.mxu0
      %v1441 = vpop.f32.mrf.mxu0
      %v1442 = vadd.f32 0.0, %v1441
      %v1443 = vpop.f32.mrf.mxu0
      %1444 = vmatprep.mubr.bf16.mxu0 0
      %1445 = vmatmul.mubr.bf16.gmra.mxu0 %v1307
      %v1446 = vpop.f32.mrf.mxu0
      %v1447 = vadd.f32 0.0, %v1446
      %v1448 = vpop.f32.mrf.mxu0
      %v1449 = vpop.f32.mrf.mxu0
      %v1450 = vadd.f32 0.0, %v1449
      %v1451 = vpop.f32.mrf.mxu0
      %1452 = vmatprep.mubr.bf16.mxu0 0
      %1453 = vmatmul.mubr.bf16.gmra.mxu0 %v1310
      %v1454 = vpop.f32.mrf.mxu0
      %v1455 = vadd.f32 0.0, %v1454
      %v1456 = vpop.f32.mrf.mxu0
      %v1457 = vpop.f32.mrf.mxu0
      %v1458 = vadd.f32 0.0, %v1457
      %v1459 = vpop.f32.mrf.mxu0
      %1460 = vmatprep.mubr.bf16.mxu0 0
      %1461 = vmatmul.mubr.bf16.gmra.mxu0 %v1313
      %v1462 = vpop.f32.mrf.mxu0
      %v1463 = vadd.f32 0.0, %v1462
      %v1464 = vpop.f32.mrf.mxu0
      %v1465 = vpop.f32.mrf.mxu0
      %v1466 = vadd.f32 0.0, %v1465
      %v1467 = vpop.f32.mrf.mxu0
      %1468 = vmatprep.mubr.bf16.mxu0 0
      %1469 = vmatmul.mubr.bf16.gmra.mxu0 %v1316
      %v1470 = vpop.f32.mrf.mxu0
      %v1471 = vadd.f32 0.0, %v1470
      %v1472 = vpop.f32.mrf.mxu0
      %v1473 = vpop.f32.mrf.mxu0
      %v1474 = vadd.f32 0.0, %v1473
      %v1475 = vpop.f32.mrf.mxu0
      %1476 = vmatprep.mubr.bf16.mxu0 0
      %1477 = vmatmul.mubr.bf16.gmra.mxu0 %v1319
      %v1478 = vpop.f32.mrf.mxu0
      %v1479 = vadd.f32 0.0, %v1478
      %v1480 = vpop.f32.mrf.mxu0
      %v1481 = vpop.f32.mrf.mxu0
      %v1482 = vadd.f32 0.0, %v1481
      %v1483 = vpop.f32.mrf.mxu0
      %1484 = vmatprep.mubr.bf16.mxu0 0
      %1485 = vmatmul.mubr.bf16.gmra.mxu0 %v1322
      %v1486 = vpop.f32.mrf.mxu0
      %v1487 = vadd.f32 0.0, %v1486
      %v1488 = vpop.f32.mrf.mxu0
      %v1489 = vpop.f32.mrf.mxu0
      %v1490 = vadd.f32 0.0, %v1489
      %v1491 = vpop.f32.mrf.mxu0
      %1492 = vmatprep.mubr.bf16.mxu0 0
      %1493 = vmatmul.mubr.bf16.gmra.mxu0 %v1325
      %v1494 = vpop.f32.mrf.mxu0
      %v1495 = vadd.f32 0.0, %v1494
      %v1496 = vpop.f32.mrf.mxu0
      %v1497 = vpop.f32.mrf.mxu0
      %v1498 = vadd.f32 0.0, %v1497
      %v1499 = vpop.f32.mrf.mxu0
      %1500 = vmatprep.mubr.bf16.mxu0 0
      %1501 = vmatmul.mubr.bf16.gmra.mxu0 %v1328
      %v1502 = vpop.f32.mrf.mxu0
      %v1503 = vadd.f32 0.0, %v1502
      %v1504 = vpop.f32.mrf.mxu0
      %v1505 = vpop.f32.mrf.mxu0
      %v1506 = vadd.f32 0.0, %v1505
      %v1507 = vpop.f32.mrf.mxu0
      %1508 = vmatprep.mubr.bf16.mxu0 0
      %1509 = vmatmul.mubr.bf16.gmra.mxu0 %v1331
      %v1510 = vpop.f32.mrf.mxu0
      %v1511 = vadd.f32 0.0, %v1510
      %v1512 = vpop.f32.mrf.mxu0
      %v1513 = vpop.f32.mrf.mxu0
      %v1514 = vadd.f32 0.0, %v1513
      %v1515 = vpop.f32.mrf.mxu0
      %1516 = vmatprep.mubr.bf16.mxu0 0
      %1517 = vmatmul.mubr.bf16.gmra.mxu0 %v1334
      %v1518 = vpop.f32.mrf.mxu0
      %v1519 = vadd.f32 0.0, %v1518
      %v1520 = vpop.f32.mrf.mxu0
      %v1521 = vpop.f32.mrf.mxu0
      %v1522 = vadd.f32 0.0, %v1521
      %v1523 = vpop.f32.mrf.mxu0
      %1524 = vmatprep.mubr.bf16.mxu0 0
      %1525 = vmatmul.mubr.bf16.gmra.mxu0 %v1337
      %v1526 = vpop.f32.mrf.mxu0
      %v1527 = vadd.f32 0.0, %v1526
      %v1528 = vpop.f32.mrf.mxu0
      %v1529 = vpop.f32.mrf.mxu0
      %v1530 = vadd.f32 0.0, %v1529
      %v1531 = vpop.f32.mrf.mxu0
      %1532 = vmatprep.mubr.bf16.mxu0 0
      %1533 = vmatmul.mubr.bf16.gmra.mxu0 %v1340
      %v1534 = vpop.f32.mrf.mxu0
      %v1535 = vadd.f32 0.0, %v1534
      %v1536 = vpop.f32.mrf.mxu0
      %v1537 = vpop.f32.mrf.mxu0
      %v1538 = vadd.f32 0.0, %v1537
      %v1539 = vpop.f32.mrf.mxu0
      %1540 = vmatprep.mubr.bf16.mxu0 0
      %1541 = vmatmul.mubr.bf16.gmra.mxu0 %v1343
      %v1542 = vpop.f32.mrf.mxu0
      %v1543 = vadd.f32 0.0, %v1542
      %v1544 = vpop.f32.mrf.mxu0
      %v1545 = vpop.f32.mrf.mxu0
      %v1546 = vpop.f32.mrf.mxu0
      %1547 = vdwg.mxu0
      %v1548 = vadd.f32 %v1041, %v1383
      %v1549 = vadd.f32 %v1044, %v1386
      %v1550 = vadd.f32 %v1049, %v1391
      %v1551 = vadd.f32 %v1052, %v1394
      %v1552 = vadd.f32 %v1057, %v1399
      %v1553 = vadd.f32 %v1060, %v1402
      %v1554 = vadd.f32 %v1065, %v1407
      %v1555 = vadd.f32 %v1068, %v1410
      %v1556 = vadd.f32 %v1073, %v1415
      %v1557 = vadd.f32 %v1076, %v1418
      %v1558 = vadd.f32 %v1081, %v1423
      %v1559 = vadd.f32 %v1084, %v1426
      %v1560 = vadd.f32 %v1089, %v1431
      %v1561 = vadd.f32 %v1092, %v1434
      %v1562 = vadd.f32 %v1097, %v1439
      %v1563 = vadd.f32 %v1100, %v1442
      %v1564 = vadd.f32 %v1105, %v1447
      %v1565 = vadd.f32 %v1108, %v1450
      %v1566 = vadd.f32 %v1113, %v1455
      %v1567 = vadd.f32 %v1116, %v1458
      %v1568 = vadd.f32 %v1121, %v1463
      %v1569 = vadd.f32 %v1124, %v1466
      %v1570 = vadd.f32 %v1129, %v1471
      %v1571 = vadd.f32 %v1132, %v1474
      %v1572 = vadd.f32 %v1137, %v1479
      %v1573 = vadd.f32 %v1140, %v1482
      %v1574 = vadd.f32 %v1145, %v1487
      %v1575 = vadd.f32 %v1148, %v1490
      %v1576 = vadd.f32 %v1153, %v1495
      %v1577 = vadd.f32 %v1156, %v1498
      %v1578 = vadd.f32 %v1161, %v1503
      %v1579 = vadd.f32 %v1164, %v1506
      %v1580 = vadd.f32 %v1169, %v1511
      %v1581 = vadd.f32 %v1172, %v1514
      %v1582 = vadd.f32 %v1177, %v1519
      %v1583 = vadd.f32 %v1180, %v1522
      %v1584 = vadd.f32 %v1185, %v1527
      %v1585 = vadd.f32 %v1188, %v1530
      %v1586 = vadd.f32 %v1193, %v1535
      %v1587 = vadd.f32 %v1196, %v1538
      %v1588 = vadd.f32 %v1201, %v1543
      %v1589 = vrot.slane %v331, 7
      %v1590 = vor.u32 %v1589, %v333
      %v1591 = vsel %vm1215, %v1269, %v1590
      %v1592 = vrot.slane %v342, 7
      %v1593 = vor.u32 %v1592, %v338
      %v1594 = vsel %vm1215, %v1589, %v1593
      %s1595 = scalar_lea.vmem %s1, 12
      %v1596 = vld [vmem:[%s1595] sm:$0xf]
      %v1598 = vsel %vm673, %v1591, 0
      %v1601 = vsel %vm673, %v1594, 0
      %v1604 = vsel %vm736, %v1596, 0
      %1606 = vmatprep.subr.bf16.mxu0 0
      %1607 = vmatpush1.bf16.msra.mxu0 0
      %1608 = vmatprep.subr.bf16.mxu0 0
      %1609 = vmatpush1.bf16.msra.mxu0 0
      %1610 = vmatprep.subr.bf16.mxu0 0
      %1611 = vmatpush1.bf16.msra.mxu0 0
      %1612 = vmatprep.subr.bf16.mxu0 0
      %1613 = vmatpush1.bf16.msra.mxu0 0
      %1614 = vmatprep.subr.bf16.mxu0 0
      %1615 = vmatpush1.bf16.msra.mxu0 0
      %1616 = vmatprep.subr.bf16.mxu0 0
      %1617 = vmatpush1.bf16.msra.mxu0 0
      %1618 = vmatprep.subr.bf16.mxu0 0
      %1619 = vmatpush1.bf16.msra.mxu0 0
      %1620 = vmatprep.subr.bf16.mxu0 0
      %1621 = vmatpush1.bf16.msra.mxu0 %v1604
      %1622 = vmatprep.subr.bf16.mxu0 0
      %1623 = vmatpush2.bf16.msra.mxu0 0
      %1624 = vmatprep.subr.bf16.mxu0 0
      %1625 = vmatpush2.bf16.msra.mxu0 0
      %1626 = vmatprep.subr.bf16.mxu0 0
      %1627 = vmatpush2.bf16.msra.mxu0 0
      %1628 = vmatprep.subr.bf16.mxu0 0
      %1629 = vmatpush2.bf16.msra.mxu0 0
      %1630 = vmatprep.subr.bf16.mxu0 0
      %1631 = vmatpush2.bf16.msra.mxu0 0
      %1632 = vmatprep.subr.bf16.mxu0 0
      %1633 = vmatpush2.bf16.msra.mxu0 0
      %1634 = vmatprep.subr.bf16.mxu0 0
      %1635 = vmatpush2.bf16.msra.mxu0 0
      %1636 = vmatprep.subr.bf16.mxu0 0
      %1637 = vmatpush2.bf16.msra.mxu0 0
      %1638 = vmatprep.mubr.bf16.mxu0 0
      %1639 = vmatmul.mubr.bf16.gmra.mxu0 %v1286
      %v1640 = vpop.f32.mrf.mxu0
      %v1641 = vadd.f32 0.0, %v1640
      %v1642 = vpop.f32.mrf.mxu0
      %v1643 = vpop.f32.mrf.mxu0
      %v1644 = vadd.f32 0.0, %v1643
      %v1645 = vpop.f32.mrf.mxu0
      %1646 = vmatprep.mubr.bf16.mxu0 0
      %1647 = vmatmul.mubr.bf16.gmra.mxu0 %v1289
      %v1648 = vpop.f32.mrf.mxu0
      %v1649 = vadd.f32 0.0, %v1648
      %v1650 = vpop.f32.mrf.mxu0
      %v1651 = vpop.f32.mrf.mxu0
      %v1652 = vadd.f32 0.0, %v1651
      %v1653 = vpop.f32.mrf.mxu0
      %1654 = vmatprep.mubr.bf16.mxu0 0
      %1655 = vmatmul.mubr.bf16.gmra.mxu0 %v1292
      %v1656 = vpop.f32.mrf.mxu0
      %v1657 = vadd.f32 0.0, %v1656
      %v1658 = vpop.f32.mrf.mxu0
      %v1659 = vpop.f32.mrf.mxu0
      %v1660 = vadd.f32 0.0, %v1659
      %v1661 = vpop.f32.mrf.mxu0
      %1662 = vmatprep.mubr.bf16.mxu0 0
      %1663 = vmatmul.mubr.bf16.gmra.mxu0 %v1295
      %v1664 = vpop.f32.mrf.mxu0
      %v1665 = vadd.f32 0.0, %v1664
      %v1666 = vpop.f32.mrf.mxu0
      %v1667 = vpop.f32.mrf.mxu0
      %v1668 = vadd.f32 0.0, %v1667
      %v1669 = vpop.f32.mrf.mxu0
      %1670 = vmatprep.mubr.bf16.mxu0 0
      %1671 = vmatmul.mubr.bf16.gmra.mxu0 %v1298
      %v1672 = vpop.f32.mrf.mxu0
      %v1673 = vadd.f32 0.0, %v1672
      %v1674 = vpop.f32.mrf.mxu0
      %v1675 = vpop.f32.mrf.mxu0
      %v1676 = vadd.f32 0.0, %v1675
      %v1677 = vpop.f32.mrf.mxu0
      %1678 = vmatprep.mubr.bf16.mxu0 0
      %1679 = vmatmul.mubr.bf16.gmra.mxu0 %v1301
      %v1680 = vpop.f32.mrf.mxu0
      %v1681 = vadd.f32 0.0, %v1680
      %v1682 = vpop.f32.mrf.mxu0
      %v1683 = vpop.f32.mrf.mxu0
      %v1684 = vadd.f32 0.0, %v1683
      %v1685 = vpop.f32.mrf.mxu0
      %1686 = vmatprep.mubr.bf16.mxu0 0
      %1687 = vmatmul.mubr.bf16.gmra.mxu0 %v1304
      %v1688 = vpop.f32.mrf.mxu0
      %v1689 = vadd.f32 0.0, %v1688
      %v1690 = vpop.f32.mrf.mxu0
      %v1691 = vpop.f32.mrf.mxu0
      %v1692 = vadd.f32 0.0, %v1691
      %v1693 = vpop.f32.mrf.mxu0
      %1694 = vmatprep.mubr.bf16.mxu0 0
      %1695 = vmatmul.mubr.bf16.gmra.mxu0 %v1307
      %v1696 = vpop.f32.mrf.mxu0
      %v1697 = vadd.f32 0.0, %v1696
      %v1698 = vpop.f32.mrf.mxu0
      %v1699 = vpop.f32.mrf.mxu0
      %v1700 = vadd.f32 0.0, %v1699
      %v1701 = vpop.f32.mrf.mxu0
      %1702 = vmatprep.mubr.bf16.mxu0 0
      %1703 = vmatmul.mubr.bf16.gmra.mxu0 %v1310
      %v1704 = vpop.f32.mrf.mxu0
      %v1705 = vadd.f32 0.0, %v1704
      %v1706 = vpop.f32.mrf.mxu0
      %v1707 = vpop.f32.mrf.mxu0
      %v1708 = vadd.f32 0.0, %v1707
      %v1709 = vpop.f32.mrf.mxu0
      %1710 = vmatprep.mubr.bf16.mxu0 0
      %1711 = vmatmul.mubr.bf16.gmra.mxu0 %v1313
      %v1712 = vpop.f32.mrf.mxu0
      %v1713 = vadd.f32 0.0, %v1712
      %v1714 = vpop.f32.mrf.mxu0
      %v1715 = vpop.f32.mrf.mxu0
      %v1716 = vadd.f32 0.0, %v1715
      %v1717 = vpop.f32.mrf.mxu0
      %1718 = vmatprep.mubr.bf16.mxu0 0
      %1719 = vmatmul.mubr.bf16.gmra.mxu0 %v1316
      %v1720 = vpop.f32.mrf.mxu0
      %v1721 = vadd.f32 0.0, %v1720
      %v1722 = vpop.f32.mrf.mxu0
      %v1723 = vpop.f32.mrf.mxu0
      %v1724 = vadd.f32 0.0, %v1723
      %v1725 = vpop.f32.mrf.mxu0
      %1726 = vmatprep.mubr.bf16.mxu0 0
      %1727 = vmatmul.mubr.bf16.gmra.mxu0 %v1319
      %v1728 = vpop.f32.mrf.mxu0
      %v1729 = vadd.f32 0.0, %v1728
      %v1730 = vpop.f32.mrf.mxu0
      %v1731 = vpop.f32.mrf.mxu0
      %v1732 = vadd.f32 0.0, %v1731
      %v1733 = vpop.f32.mrf.mxu0
      %1734 = vmatprep.mubr.bf16.mxu0 0
      %1735 = vmatmul.mubr.bf16.gmra.mxu0 %v1322
      %v1736 = vpop.f32.mrf.mxu0
      %v1737 = vadd.f32 0.0, %v1736
      %v1738 = vpop.f32.mrf.mxu0
      %v1739 = vpop.f32.mrf.mxu0
      %v1740 = vadd.f32 0.0, %v1739
      %v1741 = vpop.f32.mrf.mxu0
      %1742 = vmatprep.mubr.bf16.mxu0 0
      %1743 = vmatmul.mubr.bf16.gmra.mxu0 %v1325
      %v1744 = vpop.f32.mrf.mxu0
      %v1745 = vadd.f32 0.0, %v1744
      %v1746 = vpop.f32.mrf.mxu0
      %v1747 = vpop.f32.mrf.mxu0
      %v1748 = vadd.f32 0.0, %v1747
      %v1749 = vpop.f32.mrf.mxu0
      %1750 = vmatprep.mubr.bf16.mxu0 0
      %1751 = vmatmul.mubr.bf16.gmra.mxu0 %v1328
      %v1752 = vpop.f32.mrf.mxu0
      %v1753 = vadd.f32 0.0, %v1752
      %v1754 = vpop.f32.mrf.mxu0
      %v1755 = vpop.f32.mrf.mxu0
      %v1756 = vadd.f32 0.0, %v1755
      %v1757 = vpop.f32.mrf.mxu0
      %1758 = vmatprep.mubr.bf16.mxu0 0
      %1759 = vmatmul.mubr.bf16.gmra.mxu0 %v1331
      %v1760 = vpop.f32.mrf.mxu0
      %v1761 = vadd.f32 0.0, %v1760
      %v1762 = vpop.f32.mrf.mxu0
      %v1763 = vpop.f32.mrf.mxu0
      %v1764 = vadd.f32 0.0, %v1763
      %v1765 = vpop.f32.mrf.mxu0
      %1766 = vmatprep.mubr.bf16.mxu0 0
      %1767 = vmatmul.mubr.bf16.gmra.mxu0 %v1334
      %v1768 = vpop.f32.mrf.mxu0
      %v1769 = vadd.f32 0.0, %v1768
      %v1770 = vpop.f32.mrf.mxu0
      %v1771 = vpop.f32.mrf.mxu0
      %v1772 = vadd.f32 0.0, %v1771
      %v1773 = vpop.f32.mrf.mxu0
      %1774 = vmatprep.mubr.bf16.mxu0 0
      %1775 = vmatmul.mubr.bf16.gmra.mxu0 %v1337
      %v1776 = vpop.f32.mrf.mxu0
      %v1777 = vadd.f32 0.0, %v1776
      %v1778 = vpop.f32.mrf.mxu0
      %v1779 = vpop.f32.mrf.mxu0
      %v1780 = vadd.f32 0.0, %v1779
      %v1781 = vpop.f32.mrf.mxu0
      %1782 = vmatprep.mubr.bf16.mxu0 0
      %1783 = vmatmul.mubr.bf16.gmra.mxu0 %v1340
      %v1784 = vpop.f32.mrf.mxu0
      %v1785 = vadd.f32 0.0, %v1784
      %v1786 = vpop.f32.mrf.mxu0
      %v1787 = vpop.f32.mrf.mxu0
      %v1788 = vadd.f32 0.0, %v1787
      %v1789 = vpop.f32.mrf.mxu0
      %1790 = vmatprep.mubr.bf16.mxu0 0
      %1791 = vmatmul.mubr.bf16.gmra.mxu0 %v1598
      %v1792 = vpop.f32.mrf.mxu0
      %v1793 = vadd.f32 0.0, %v1792
      %v1794 = vpop.f32.mrf.mxu0
      %v1795 = vpop.f32.mrf.mxu0
      %v1796 = vadd.f32 0.0, %v1795
      %v1797 = vpop.f32.mrf.mxu0
      %1798 = vmatprep.mubr.bf16.mxu0 0
      %1799 = vmatmul.mubr.bf16.gmra.mxu0 %v1601
      %v1800 = vpop.f32.mrf.mxu0
      %v1801 = vadd.f32 0.0, %v1800
      %v1802 = vpop.f32.mrf.mxu0
      %v1803 = vpop.f32.mrf.mxu0
      %v1804 = vpop.f32.mrf.mxu0
      %1805 = vdwg.mxu0
      %v1806 = vadd.f32 %v1548, %v1641
      %v1807 = vadd.f32 %v1549, %v1644
      %v1808 = vadd.f32 %v1550, %v1649
      %v1809 = vadd.f32 %v1551, %v1652
      %v1810 = vadd.f32 %v1552, %v1657
      %v1811 = vadd.f32 %v1553, %v1660
      %v1812 = vadd.f32 %v1554, %v1665
      %v1813 = vadd.f32 %v1555, %v1668
      %v1814 = vadd.f32 %v1556, %v1673
      %v1815 = vadd.f32 %v1557, %v1676
      %v1816 = vadd.f32 %v1558, %v1681
      %v1817 = vadd.f32 %v1559, %v1684
      %v1818 = vadd.f32 %v1560, %v1689
      %v1819 = vadd.f32 %v1561, %v1692
      %v1820 = vadd.f32 %v1562, %v1697
      %v1821 = vadd.f32 %v1563, %v1700
      %v1822 = vadd.f32 %v1564, %v1705
      %v1823 = vadd.f32 %v1565, %v1708
      %v1824 = vadd.f32 %v1566, %v1713
      %v1825 = vadd.f32 %v1567, %v1716
      %v1826 = vadd.f32 %v1568, %v1721
      %v1827 = vadd.f32 %v1569, %v1724
      %v1828 = vadd.f32 %v1570, %v1729
      %v1829 = vadd.f32 %v1571, %v1732
      %v1830 = vadd.f32 %v1572, %v1737
      %v1831 = vadd.f32 %v1573, %v1740
      %v1832 = vadd.f32 %v1574, %v1745
      %v1833 = vadd.f32 %v1575, %v1748
      %v1834 = vadd.f32 %v1576, %v1753
      %v1835 = vadd.f32 %v1577, %v1756
      %v1836 = vadd.f32 %v1578, %v1761
      %v1837 = vadd.f32 %v1579, %v1764
      %v1838 = vadd.f32 %v1580, %v1769
      %v1839 = vadd.f32 %v1581, %v1772
      %v1840 = vadd.f32 %v1582, %v1777
      %v1841 = vadd.f32 %v1583, %v1780
      %v1842 = vadd.f32 %v1584, %v1785
      %v1843 = vadd.f32 %v1585, %v1788
      %v1844 = vadd.f32 %v1586, %v1793
      %v1845 = vadd.f32 %v1587, %v1796
      %v1846 = vadd.f32 %v1588, %v1801
      %s1847 = scalar_lea.vmem %s1, 16
      %v1848 = vld [vmem:[%s1847] sm:$0xf]
      %v1849 = vsel %vm673, %v422, 0
      %v1851 = vsel %vm673, %v423, 0
      %v1853 = vsel %vm673, %v424, 0
      %v1855 = vsel %vm673, %v425, 0
      %v1857 = vsel %vm673, %v426, 0
      %v1859 = vsel %vm673, %v427, 0
      %v1861 = vsel %vm673, %v428, 0
      %v1863 = vsel %vm673, %v429, 0
      %v1865 = vsel %vm673, %v430, 0
      %v1867 = vsel %vm673, %v431, 0
      %v1869 = vsel %vm673, %v432, 0
      %v1871 = vsel %vm673, %v433, 0
      %v1873 = vsel %vm673, %v434, 0
      %v1875 = vsel %vm673, %v435, 0
      %v1877 = vsel %vm673, %v436, 0
      %v1879 = vsel %vm673, %v437, 0
      %v1881 = vsel %vm673, %v438, 0
      %v1883 = vsel %vm673, %v439, 0
      %v1885 = vsel %vm673, %v440, 0
      %v1887 = vsel %vm673, %v327, 0
      %v1889 = vsel %vm673, %v328, 0
      %v1892 = vsel %vm736, %v1848, 0
      %1894 = vmatprep.subr.bf16.mxu0 0
      %1895 = vmatpush1.bf16.msra.mxu0 0
      %1896 = vmatprep.subr.bf16.mxu0 0
      %1897 = vmatpush1.bf16.msra.mxu0 0
      %1898 = vmatprep.subr.bf16.mxu0 0
      %1899 = vmatpush1.bf16.msra.mxu0 0
      %1900 = vmatprep.subr.bf16.mxu0 0
      %1901 = vmatpush1.bf16.msra.mxu0 0
      %1902 = vmatprep.subr.bf16.mxu0 0
      %1903 = vmatpush1.bf16.msra.mxu0 0
      %1904 = vmatprep.subr.bf16.mxu0 0
      %1905 = vmatpush1.bf16.msra.mxu0 0
      %1906 = vmatprep.subr.bf16.mxu0 0
      %1907 = vmatpush1.bf16.msra.mxu0 0
      %1908 = vmatprep.subr.bf16.mxu0 0
      %1909 = vmatpush1.bf16.msra.mxu0 %v1892
      %1910 = vmatprep.subr.bf16.mxu0 0
      %1911 = vmatpush2.bf16.msra.mxu0 0
      %1912 = vmatprep.subr.bf16.mxu0 0
      %1913 = vmatpush2.bf16.msra.mxu0 0
      %1914 = vmatprep.subr.bf16.mxu0 0
      %1915 = vmatpush2.bf16.msra.mxu0 0
      %1916 = vmatprep.subr.bf16.mxu0 0
      %1917 = vmatpush2.bf16.msra.mxu0 0
      %1918 = vmatprep.subr.bf16.mxu0 0
      %1919 = vmatpush2.bf16.msra.mxu0 0
      %1920 = vmatprep.subr.bf16.mxu0 0
      %1921 = vmatpush2.bf16.msra.mxu0 0
      %1922 = vmatprep.subr.bf16.mxu0 0
      %1923 = vmatpush2.bf16.msra.mxu0 0
      %1924 = vmatprep.subr.bf16.mxu0 0
      %1925 = vmatpush2.bf16.msra.mxu0 0
      %1926 = vmatprep.mubr.bf16.mxu0 0
      %1927 = vmatmul.mubr.bf16.gmra.mxu0 %v1849
      %v1928 = vpop.f32.mrf.mxu0
      %v1929 = vadd.f32 0.0, %v1928
      %v1930 = vpop.f32.mrf.mxu0
      %v1931 = vpop.f32.mrf.mxu0
      %v1932 = vadd.f32 0.0, %v1931
      %v1933 = vpop.f32.mrf.mxu0
      %1934 = vmatprep.mubr.bf16.mxu0 0
      %1935 = vmatmul.mubr.bf16.gmra.mxu0 %v1851
      %v1936 = vpop.f32.mrf.mxu0
      %v1937 = vadd.f32 0.0, %v1936
      %v1938 = vpop.f32.mrf.mxu0
      %v1939 = vpop.f32.mrf.mxu0
      %v1940 = vadd.f32 0.0, %v1939
      %v1941 = vpop.f32.mrf.mxu0
      %1942 = vmatprep.mubr.bf16.mxu0 0
      %1943 = vmatmul.mubr.bf16.gmra.mxu0 %v1853
      %v1944 = vpop.f32.mrf.mxu0
      %v1945 = vadd.f32 0.0, %v1944
      %v1946 = vpop.f32.mrf.mxu0
      %v1947 = vpop.f32.mrf.mxu0
      %v1948 = vadd.f32 0.0, %v1947
      %v1949 = vpop.f32.mrf.mxu0
      %1950 = vmatprep.mubr.bf16.mxu0 0
      %1951 = vmatmul.mubr.bf16.gmra.mxu0 %v1855
      %v1952 = vpop.f32.mrf.mxu0
      %v1953 = vadd.f32 0.0, %v1952
      %v1954 = vpop.f32.mrf.mxu0
      %v1955 = vpop.f32.mrf.mxu0
      %v1956 = vadd.f32 0.0, %v1955
      %v1957 = vpop.f32.mrf.mxu0
      %1958 = vmatprep.mubr.bf16.mxu0 0
      %1959 = vmatmul.mubr.bf16.gmra.mxu0 %v1857
      %v1960 = vpop.f32.mrf.mxu0
      %v1961 = vadd.f32 0.0, %v1960
      %v1962 = vpop.f32.mrf.mxu0
      %v1963 = vpop.f32.mrf.mxu0
      %v1964 = vadd.f32 0.0, %v1963
      %v1965 = vpop.f32.mrf.mxu0
      %1966 = vmatprep.mubr.bf16.mxu0 0
      %1967 = vmatmul.mubr.bf16.gmra.mxu0 %v1859
      %v1968 = vpop.f32.mrf.mxu0
      %v1969 = vadd.f32 0.0, %v1968
      %v1970 = vpop.f32.mrf.mxu0
      %v1971 = vpop.f32.mrf.mxu0
      %v1972 = vadd.f32 0.0, %v1971
      %v1973 = vpop.f32.mrf.mxu0
      %1974 = vmatprep.mubr.bf16.mxu0 0
      %1975 = vmatmul.mubr.bf16.gmra.mxu0 %v1861
      %v1976 = vpop.f32.mrf.mxu0
      %v1977 = vadd.f32 0.0, %v1976
      %v1978 = vpop.f32.mrf.mxu0
      %v1979 = vpop.f32.mrf.mxu0
      %v1980 = vadd.f32 0.0, %v1979
      %v1981 = vpop.f32.mrf.mxu0
      %1982 = vmatprep.mubr.bf16.mxu0 0
      %1983 = vmatmul.mubr.bf16.gmra.mxu0 %v1863
      %v1984 = vpop.f32.mrf.mxu0
      %v1985 = vadd.f32 0.0, %v1984
      %v1986 = vpop.f32.mrf.mxu0
      %v1987 = vpop.f32.mrf.mxu0
      %v1988 = vadd.f32 0.0, %v1987
      %v1989 = vpop.f32.mrf.mxu0
      %1990 = vmatprep.mubr.bf16.mxu0 0
      %1991 = vmatmul.mubr.bf16.gmra.mxu0 %v1865
      %v1992 = vpop.f32.mrf.mxu0
      %v1993 = vadd.f32 0.0, %v1992
      %v1994 = vpop.f32.mrf.mxu0
      %v1995 = vpop.f32.mrf.mxu0
      %v1996 = vadd.f32 0.0, %v1995
      %v1997 = vpop.f32.mrf.mxu0
      %1998 = vmatprep.mubr.bf16.mxu0 0
      %1999 = vmatmul.mubr.bf16.gmra.mxu0 %v1867
      %v2000 = vpop.f32.mrf.mxu0
      %v2001 = vadd.f32 0.0, %v2000
      %v2002 = vpop.f32.mrf.mxu0
      %v2003 = vpop.f32.mrf.mxu0
      %v2004 = vadd.f32 0.0, %v2003
      %v2005 = vpop.f32.mrf.mxu0
      %2006 = vmatprep.mubr.bf16.mxu0 0
      %2007 = vmatmul.mubr.bf16.gmra.mxu0 %v1869
      %v2008 = vpop.f32.mrf.mxu0
      %v2009 = vadd.f32 0.0, %v2008
      %v2010 = vpop.f32.mrf.mxu0
      %v2011 = vpop.f32.mrf.mxu0
      %v2012 = vadd.f32 0.0, %v2011
      %v2013 = vpop.f32.mrf.mxu0
      %2014 = vmatprep.mubr.bf16.mxu0 0
      %2015 = vmatmul.mubr.bf16.gmra.mxu0 %v1871
      %v2016 = vpop.f32.mrf.mxu0
      %v2017 = vadd.f32 0.0, %v2016
      %v2018 = vpop.f32.mrf.mxu0
      %v2019 = vpop.f32.mrf.mxu0
      %v2020 = vadd.f32 0.0, %v2019
      %v2021 = vpop.f32.mrf.mxu0
      %2022 = vmatprep.mubr.bf16.mxu0 0
      %2023 = vmatmul.mubr.bf16.gmra.mxu0 %v1873
      %v2024 = vpop.f32.mrf.mxu0
      %v2025 = vadd.f32 0.0, %v2024
      %v2026 = vpop.f32.mrf.mxu0
      %v2027 = vpop.f32.mrf.mxu0
      %v2028 = vadd.f32 0.0, %v2027
      %v2029 = vpop.f32.mrf.mxu0
      %2030 = vmatprep.mubr.bf16.mxu0 0
      %2031 = vmatmul.mubr.bf16.gmra.mxu0 %v1875
      %v2032 = vpop.f32.mrf.mxu0
      %v2033 = vadd.f32 0.0, %v2032
      %v2034 = vpop.f32.mrf.mxu0
      %v2035 = vpop.f32.mrf.mxu0
      %v2036 = vadd.f32 0.0, %v2035
      %v2037 = vpop.f32.mrf.mxu0
      %2038 = vmatprep.mubr.bf16.mxu0 0
      %2039 = vmatmul.mubr.bf16.gmra.mxu0 %v1877
      %v2040 = vpop.f32.mrf.mxu0
      %v2041 = vadd.f32 0.0, %v2040
      %v2042 = vpop.f32.mrf.mxu0
      %v2043 = vpop.f32.mrf.mxu0
      %v2044 = vadd.f32 0.0, %v2043
      %v2045 = vpop.f32.mrf.mxu0
      %2046 = vmatprep.mubr.bf16.mxu0 0
      %2047 = vmatmul.mubr.bf16.gmra.mxu0 %v1879
      %v2048 = vpop.f32.mrf.mxu0
      %v2049 = vadd.f32 0.0, %v2048
      %v2050 = vpop.f32.mrf.mxu0
      %v2051 = vpop.f32.mrf.mxu0
      %v2052 = vadd.f32 0.0, %v2051
      %v2053 = vpop.f32.mrf.mxu0
      %2054 = vmatprep.mubr.bf16.mxu0 0
      %2055 = vmatmul.mubr.bf16.gmra.mxu0 %v1881
      %v2056 = vpop.f32.mrf.mxu0
      %v2057 = vadd.f32 0.0, %v2056
      %v2058 = vpop.f32.mrf.mxu0
      %v2059 = vpop.f32.mrf.mxu0
      %v2060 = vadd.f32 0.0, %v2059
      %v2061 = vpop.f32.mrf.mxu0
      %2062 = vmatprep.mubr.bf16.mxu0 0
      %2063 = vmatmul.mubr.bf16.gmra.mxu0 %v1883
      %v2064 = vpop.f32.mrf.mxu0
      %v2065 = vadd.f32 0.0, %v2064
      %v2066 = vpop.f32.mrf.mxu0
      %v2067 = vpop.f32.mrf.mxu0
      %v2068 = vadd.f32 0.0, %v2067
      %v2069 = vpop.f32.mrf.mxu0
      %2070 = vmatprep.mubr.bf16.mxu0 0
      %2071 = vmatmul.mubr.bf16.gmra.mxu0 %v1885
      %v2072 = vpop.f32.mrf.mxu0
      %v2073 = vadd.f32 0.0, %v2072
      %v2074 = vpop.f32.mrf.mxu0
      %v2075 = vpop.f32.mrf.mxu0
      %v2076 = vadd.f32 0.0, %v2075
      %v2077 = vpop.f32.mrf.mxu0
      %2078 = vmatprep.mubr.bf16.mxu0 0
      %2079 = vmatmul.mubr.bf16.gmra.mxu0 %v1887
      %v2080 = vpop.f32.mrf.mxu0
      %v2081 = vadd.f32 0.0, %v2080
      %v2082 = vpop.f32.mrf.mxu0
      %v2083 = vpop.f32.mrf.mxu0
      %v2084 = vadd.f32 0.0, %v2083
      %v2085 = vpop.f32.mrf.mxu0
      %2086 = vmatprep.mubr.bf16.mxu0 0
      %2087 = vmatmul.mubr.bf16.gmra.mxu0 %v1889
      %v2088 = vpop.f32.mrf.mxu0
      %v2089 = vadd.f32 0.0, %v2088
      %v2090 = vpop.f32.mrf.mxu0
      %v2091 = vpop.f32.mrf.mxu0
      %v2092 = vpop.f32.mrf.mxu0
      %2093 = vdwg.mxu0
      %v2094 = vadd.f32 %v1806, %v1929
      %v2095 = vadd.f32 %v1807, %v1932
      %v2096 = vadd.f32 %v1808, %v1937
      %v2097 = vadd.f32 %v1809, %v1940
      %v2098 = vadd.f32 %v1810, %v1945
      %v2099 = vadd.f32 %v1811, %v1948
      %v2100 = vadd.f32 %v1812, %v1953
      %v2101 = vadd.f32 %v1813, %v1956
      %v2102 = vadd.f32 %v1814, %v1961
      %v2103 = vadd.f32 %v1815, %v1964
      %v2104 = vadd.f32 %v1816, %v1969
      %v2105 = vadd.f32 %v1817, %v1972
      %v2106 = vadd.f32 %v1818, %v1977
      %v2107 = vadd.f32 %v1819, %v1980
      %v2108 = vadd.f32 %v1820, %v1985
      %v2109 = vadd.f32 %v1821, %v1988
      %v2110 = vadd.f32 %v1822, %v1993
      %v2111 = vadd.f32 %v1823, %v1996
      %v2112 = vadd.f32 %v1824, %v2001
      %v2113 = vadd.f32 %v1825, %v2004
      %v2114 = vadd.f32 %v1826, %v2009
      %v2115 = vadd.f32 %v1827, %v2012
      %v2116 = vadd.f32 %v1828, %v2017
      %v2117 = vadd.f32 %v1829, %v2020
      %v2118 = vadd.f32 %v1830, %v2025
      %v2119 = vadd.f32 %v1831, %v2028
      %v2120 = vadd.f32 %v1832, %v2033
      %v2121 = vadd.f32 %v1833, %v2036
      %v2122 = vadd.f32 %v1834, %v2041
      %v2123 = vadd.f32 %v1835, %v2044
      %v2124 = vadd.f32 %v1836, %v2049
      %v2125 = vadd.f32 %v1837, %v2052
      %v2126 = vadd.f32 %v1838, %v2057
      %v2127 = vadd.f32 %v1839, %v2060
      %v2128 = vadd.f32 %v1840, %v2065
      %v2129 = vadd.f32 %v1841, %v2068
      %v2130 = vadd.f32 %v1842, %v2073
      %v2131 = vadd.f32 %v1843, %v2076
      %v2132 = vadd.f32 %v1844, %v2081
      %v2133 = vadd.f32 %v1845, %v2084
      %v2134 = vadd.f32 %v1846, %v2089
      %v2135 = vrot.slane %v447, 1
      %v2136 = vor.u32 %v444, %v2135
      %v2137 = vrot.slane %v455, 1
      %v2138 = vsel %vm329, %v2136, %v2137
      %v2139 = vor.u32 %v452, %v2137
      %v2140 = vrot.slane %v464, 1
      %v2141 = vsel %vm329, %v2139, %v2140
      %v2142 = vor.u32 %v461, %v2140
      %v2143 = vrot.slane %v473, 1
      %v2144 = vsel %vm329, %v2142, %v2143
      %v2145 = vor.u32 %v470, %v2143
      %v2146 = vrot.slane %v482, 1
      %v2147 = vsel %vm329, %v2145, %v2146
      %v2148 = vor.u32 %v479, %v2146
      %v2149 = vrot.slane %v491, 1
      %v2150 = vsel %vm329, %v2148, %v2149
      %v2151 = vor.u32 %v488, %v2149
      %v2152 = vrot.slane %v500, 1
      %v2153 = vsel %vm329, %v2151, %v2152
      %v2154 = vor.u32 %v497, %v2152
      %v2155 = vrot.slane %v509, 1
      %v2156 = vsel %vm329, %v2154, %v2155
      %v2157 = vor.u32 %v506, %v2155
      %v2158 = vrot.slane %v518, 1
      %v2159 = vsel %vm329, %v2157, %v2158
      %v2160 = vor.u32 %v515, %v2158
      %v2161 = vrot.slane %v527, 1
      %v2162 = vsel %vm329, %v2160, %v2161
      %v2163 = vor.u32 %v524, %v2161
      %v2164 = vrot.slane %v536, 1
      %v2165 = vsel %vm329, %v2163, %v2164
      %v2166 = vor.u32 %v533, %v2164
      %v2167 = vrot.slane %v545, 1
      %v2168 = vsel %vm329, %v2166, %v2167
      %v2169 = vor.u32 %v542, %v2167
      %v2170 = vrot.slane %v554, 1
      %v2171 = vsel %vm329, %v2169, %v2170
      %v2172 = vor.u32 %v551, %v2170
      %v2173 = vrot.slane %v563, 1
      %v2174 = vsel %vm329, %v2172, %v2173
      %v2175 = vor.u32 %v560, %v2173
      %v2176 = vrot.slane %v572, 1
      %v2177 = vsel %vm329, %v2175, %v2176
      %v2178 = vor.u32 %v569, %v2176
      %v2179 = vrot.slane %v581, 1
      %v2180 = vsel %vm329, %v2178, %v2179
      %v2181 = vor.u32 %v578, %v2179
      %v2182 = vrot.slane %v590, 1
      %v2183 = vsel %vm329, %v2181, %v2182
      %v2184 = vor.u32 %v587, %v2182
      %v2185 = vrot.slane %v599, 1
      %v2186 = vsel %vm329, %v2184, %v2185
      %v2187 = vor.u32 %v596, %v2185
      %v2188 = vrot.slane %v608, 1
      %v2189 = vsel %vm329, %v2187, %v2188
      %v2190 = vor.u32 %v605, %v2188
      %v2191 = vsel %vm329, %v2190, %v335
      %v2192 = vpack.c.b16 %v384, %v384
      %v2194 = vshll.u32 %v2192, 16
      %v2196 = vrot.slane %v2194, 7
      %v2198 = vsel %vm620, %v344, %v2196
      %s2199 = scalar_lea.vmem %s1, 20
      %v2200 = vld [vmem:[%s2199] sm:$0xf]
      %v2202 = vsel %vm673, %v2138, 0
      %v2205 = vsel %vm673, %v2141, 0
      %v2208 = vsel %vm673, %v2144, 0
      %v2211 = vsel %vm673, %v2147, 0
      %v2214 = vsel %vm673, %v2150, 0
      %v2217 = vsel %vm673, %v2153, 0
      %v2220 = vsel %vm673, %v2156, 0
      %v2223 = vsel %vm673, %v2159, 0
      %v2226 = vsel %vm673, %v2162, 0
      %v2229 = vsel %vm673, %v2165, 0
      %v2232 = vsel %vm673, %v2168, 0
      %v2235 = vsel %vm673, %v2171, 0
      %v2238 = vsel %vm673, %v2174, 0
      %v2241 = vsel %vm673, %v2177, 0
      %v2244 = vsel %vm673, %v2180, 0
      %v2247 = vsel %vm673, %v2183, 0
      %v2250 = vsel %vm673, %v2186, 0
      %v2253 = vsel %vm673, %v2189, 0
      %v2256 = vsel %vm673, %v2191, 0
      %v2259 = vsel %vm673, %v2198, 0
      %v2262 = vsel %vm736, %v2200, 0
      %2264 = vmatprep.subr.bf16.mxu0 0
      %2265 = vmatpush1.bf16.msra.mxu0 0
      %2266 = vmatprep.subr.bf16.mxu0 0
      %2267 = vmatpush1.bf16.msra.mxu0 0
      %2268 = vmatprep.subr.bf16.mxu0 0
      %2269 = vmatpush1.bf16.msra.mxu0 0
      %2270 = vmatprep.subr.bf16.mxu0 0
      %2271 = vmatpush1.bf16.msra.mxu0 0
      %2272 = vmatprep.subr.bf16.mxu0 0
      %2273 = vmatpush1.bf16.msra.mxu0 0
      %2274 = vmatprep.subr.bf16.mxu0 0
      %2275 = vmatpush1.bf16.msra.mxu0 0
      %2276 = vmatprep.subr.bf16.mxu0 0
      %2277 = vmatpush1.bf16.msra.mxu0 0
      %2278 = vmatprep.subr.bf16.mxu0 0
      %2279 = vmatpush1.bf16.msra.mxu0 %v2262
      %2280 = vmatprep.subr.bf16.mxu0 0
      %2281 = vmatpush2.bf16.msra.mxu0 0
      %2282 = vmatprep.subr.bf16.mxu0 0
      %2283 = vmatpush2.bf16.msra.mxu0 0
      %2284 = vmatprep.subr.bf16.mxu0 0
      %2285 = vmatpush2.bf16.msra.mxu0 0
      %2286 = vmatprep.subr.bf16.mxu0 0
      %2287 = vmatpush2.bf16.msra.mxu0 0
      %2288 = vmatprep.subr.bf16.mxu0 0
      %2289 = vmatpush2.bf16.msra.mxu0 0
      %2290 = vmatprep.subr.bf16.mxu0 0
      %2291 = vmatpush2.bf16.msra.mxu0 0
      %2292 = vmatprep.subr.bf16.mxu0 0
      %2293 = vmatpush2.bf16.msra.mxu0 0
      %2294 = vmatprep.subr.bf16.mxu0 0
      %2295 = vmatpush2.bf16.msra.mxu0 0
      %2296 = vmatprep.mubr.bf16.mxu0 0
      %2297 = vmatmul.mubr.bf16.gmra.mxu0 %v2202
      %v2298 = vpop.f32.mrf.mxu0
      %v2299 = vadd.f32 0.0, %v2298
      %v2300 = vpop.f32.mrf.mxu0
      %v2301 = vpop.f32.mrf.mxu0
      %v2302 = vadd.f32 0.0, %v2301
      %v2303 = vpop.f32.mrf.mxu0
      %2304 = vmatprep.mubr.bf16.mxu0 0
      %2305 = vmatmul.mubr.bf16.gmra.mxu0 %v2205
      %v2306 = vpop.f32.mrf.mxu0
      %v2307 = vadd.f32 0.0, %v2306
      %v2308 = vpop.f32.mrf.mxu0
      %v2309 = vpop.f32.mrf.mxu0
      %v2310 = vadd.f32 0.0, %v2309
      %v2311 = vpop.f32.mrf.mxu0
      %2312 = vmatprep.mubr.bf16.mxu0 0
      %2313 = vmatmul.mubr.bf16.gmra.mxu0 %v2208
      %v2314 = vpop.f32.mrf.mxu0
      %v2315 = vadd.f32 0.0, %v2314
      %v2316 = vpop.f32.mrf.mxu0
      %v2317 = vpop.f32.mrf.mxu0
      %v2318 = vadd.f32 0.0, %v2317
      %v2319 = vpop.f32.mrf.mxu0
      %2320 = vmatprep.mubr.bf16.mxu0 0
      %2321 = vmatmul.mubr.bf16.gmra.mxu0 %v2211
      %v2322 = vpop.f32.mrf.mxu0
      %v2323 = vadd.f32 0.0, %v2322
      %v2324 = vpop.f32.mrf.mxu0
      %v2325 = vpop.f32.mrf.mxu0
      %v2326 = vadd.f32 0.0, %v2325
      %v2327 = vpop.f32.mrf.mxu0
      %2328 = vmatprep.mubr.bf16.mxu0 0
      %2329 = vmatmul.mubr.bf16.gmra.mxu0 %v2214
      %v2330 = vpop.f32.mrf.mxu0
      %v2331 = vadd.f32 0.0, %v2330
      %v2332 = vpop.f32.mrf.mxu0
      %v2333 = vpop.f32.mrf.mxu0
      %v2334 = vadd.f32 0.0, %v2333
      %v2335 = vpop.f32.mrf.mxu0
      %2336 = vmatprep.mubr.bf16.mxu0 0
      %2337 = vmatmul.mubr.bf16.gmra.mxu0 %v2217
      %v2338 = vpop.f32.mrf.mxu0
      %v2339 = vadd.f32 0.0, %v2338
      %v2340 = vpop.f32.mrf.mxu0
      %v2341 = vpop.f32.mrf.mxu0
      %v2342 = vadd.f32 0.0, %v2341
      %v2343 = vpop.f32.mrf.mxu0
      %2344 = vmatprep.mubr.bf16.mxu0 0
      %2345 = vmatmul.mubr.bf16.gmra.mxu0 %v2220
      %v2346 = vpop.f32.mrf.mxu0
      %v2347 = vadd.f32 0.0, %v2346
      %v2348 = vpop.f32.mrf.mxu0
      %v2349 = vpop.f32.mrf.mxu0
      %v2350 = vadd.f32 0.0, %v2349
      %v2351 = vpop.f32.mrf.mxu0
      %2352 = vmatprep.mubr.bf16.mxu0 0
      %2353 = vmatmul.mubr.bf16.gmra.mxu0 %v2223
      %v2354 = vpop.f32.mrf.mxu0
      %v2355 = vadd.f32 0.0, %v2354
      %v2356 = vpop.f32.mrf.mxu0
      %v2357 = vpop.f32.mrf.mxu0
      %v2358 = vadd.f32 0.0, %v2357
      %v2359 = vpop.f32.mrf.mxu0
      %2360 = vmatprep.mubr.bf16.mxu0 0
      %2361 = vmatmul.mubr.bf16.gmra.mxu0 %v2226
      %v2362 = vpop.f32.mrf.mxu0
      %v2363 = vadd.f32 0.0, %v2362
      %v2364 = vpop.f32.mrf.mxu0
      %v2365 = vpop.f32.mrf.mxu0
      %v2366 = vadd.f32 0.0, %v2365
      %v2367 = vpop.f32.mrf.mxu0
      %2368 = vmatprep.mubr.bf16.mxu0 0
      %2369 = vmatmul.mubr.bf16.gmra.mxu0 %v2229
      %v2370 = vpop.f32.mrf.mxu0
      %v2371 = vadd.f32 0.0, %v2370
      %v2372 = vpop.f32.mrf.mxu0
      %v2373 = vpop.f32.mrf.mxu0
      %v2374 = vadd.f32 0.0, %v2373
      %v2375 = vpop.f32.mrf.mxu0
      %2376 = vmatprep.mubr.bf16.mxu0 0
      %2377 = vmatmul.mubr.bf16.gmra.mxu0 %v2232
      %v2378 = vpop.f32.mrf.mxu0
      %v2379 = vadd.f32 0.0, %v2378
      %v2380 = vpop.f32.mrf.mxu0
      %v2381 = vpop.f32.mrf.mxu0
      %v2382 = vadd.f32 0.0, %v2381
      %v2383 = vpop.f32.mrf.mxu0
      %2384 = vmatprep.mubr.bf16.mxu0 0
      %2385 = vmatmul.mubr.bf16.gmra.mxu0 %v2235
      %v2386 = vpop.f32.mrf.mxu0
      %v2387 = vadd.f32 0.0, %v2386
      %v2388 = vpop.f32.mrf.mxu0
      %v2389 = vpop.f32.mrf.mxu0
      %v2390 = vadd.f32 0.0, %v2389
      %v2391 = vpop.f32.mrf.mxu0
      %2392 = vmatprep.mubr.bf16.mxu0 0
      %2393 = vmatmul.mubr.bf16.gmra.mxu0 %v2238
      %v2394 = vpop.f32.mrf.mxu0
      %v2395 = vadd.f32 0.0, %v2394
      %v2396 = vpop.f32.mrf.mxu0
      %v2397 = vpop.f32.mrf.mxu0
      %v2398 = vadd.f32 0.0, %v2397
      %v2399 = vpop.f32.mrf.mxu0
      %2400 = vmatprep.mubr.bf16.mxu0 0
      %2401 = vmatmul.mubr.bf16.gmra.mxu0 %v2241
      %v2402 = vpop.f32.mrf.mxu0
      %v2403 = vadd.f32 0.0, %v2402
      %v2404 = vpop.f32.mrf.mxu0
      %v2405 = vpop.f32.mrf.mxu0
      %v2406 = vadd.f32 0.0, %v2405
      %v2407 = vpop.f32.mrf.mxu0
      %2408 = vmatprep.mubr.bf16.mxu0 0
      %2409 = vmatmul.mubr.bf16.gmra.mxu0 %v2244
      %v2410 = vpop.f32.mrf.mxu0
      %v2411 = vadd.f32 0.0, %v2410
      %v2412 = vpop.f32.mrf.mxu0
      %v2413 = vpop.f32.mrf.mxu0
      %v2414 = vadd.f32 0.0, %v2413
      %v2415 = vpop.f32.mrf.mxu0
      %2416 = vmatprep.mubr.bf16.mxu0 0
      %2417 = vmatmul.mubr.bf16.gmra.mxu0 %v2247
      %v2418 = vpop.f32.mrf.mxu0
      %v2419 = vadd.f32 0.0, %v2418
      %v2420 = vpop.f32.mrf.mxu0
      %v2421 = vpop.f32.mrf.mxu0
      %v2422 = vadd.f32 0.0, %v2421
      %v2423 = vpop.f32.mrf.mxu0
      %2424 = vmatprep.mubr.bf16.mxu0 0
      %2425 = vmatmul.mubr.bf16.gmra.mxu0 %v2250
      %v2426 = vpop.f32.mrf.mxu0
      %v2427 = vadd.f32 0.0, %v2426
      %v2428 = vpop.f32.mrf.mxu0
      %v2429 = vpop.f32.mrf.mxu0
      %v2430 = vadd.f32 0.0, %v2429
      %v2431 = vpop.f32.mrf.mxu0
      %2432 = vmatprep.mubr.bf16.mxu0 0
      %2433 = vmatmul.mubr.bf16.gmra.mxu0 %v2253
      %v2434 = vpop.f32.mrf.mxu0
      %v2435 = vadd.f32 0.0, %v2434
      %v2436 = vpop.f32.mrf.mxu0
      %v2437 = vpop.f32.mrf.mxu0
      %v2438 = vadd.f32 0.0, %v2437
      %v2439 = vpop.f32.mrf.mxu0
      %2440 = vmatprep.mubr.bf16.mxu0 0
      %2441 = vmatmul.mubr.bf16.gmra.mxu0 %v2256
      %v2442 = vpop.f32.mrf.mxu0
      %v2443 = vadd.f32 0.0, %v2442
      %v2444 = vpop.f32.mrf.mxu0
      %v2445 = vpop.f32.mrf.mxu0
      %v2446 = vadd.f32 0.0, %v2445
      %v2447 = vpop.f32.mrf.mxu0
      %2448 = vmatprep.mubr.bf16.mxu0 0
      %2449 = vmatmul.mubr.bf16.gmra.mxu0 %v941
      %v2450 = vpop.f32.mrf.mxu0
      %v2451 = vadd.f32 0.0, %v2450
      %v2452 = vpop.f32.mrf.mxu0
      %v2453 = vpop.f32.mrf.mxu0
      %v2454 = vadd.f32 0.0, %v2453
      %v2455 = vpop.f32.mrf.mxu0
      %2456 = vmatprep.mubr.bf16.mxu0 0
      %2457 = vmatmul.mubr.bf16.gmra.mxu0 %v2259
      %v2458 = vpop.f32.mrf.mxu0
      %v2459 = vadd.f32 0.0, %v2458
      %v2460 = vpop.f32.mrf.mxu0
      %v2461 = vpop.f32.mrf.mxu0
      %v2462 = vpop.f32.mrf.mxu0
      %2463 = vdwg.mxu0
      %v2464 = vadd.f32 %v2094, %v2299
      %v2465 = vadd.f32 %v2095, %v2302
      %v2466 = vadd.f32 %v2096, %v2307
      %v2467 = vadd.f32 %v2097, %v2310
      %v2468 = vadd.f32 %v2098, %v2315
      %v2469 = vadd.f32 %v2099, %v2318
      %v2470 = vadd.f32 %v2100, %v2323
      %v2471 = vadd.f32 %v2101, %v2326
      %v2472 = vadd.f32 %v2102, %v2331
      %v2473 = vadd.f32 %v2103, %v2334
      %v2474 = vadd.f32 %v2104, %v2339
      %v2475 = vadd.f32 %v2105, %v2342
      %v2476 = vadd.f32 %v2106, %v2347
      %v2477 = vadd.f32 %v2107, %v2350
      %v2478 = vadd.f32 %v2108, %v2355
      %v2479 = vadd.f32 %v2109, %v2358
      %v2480 = vadd.f32 %v2110, %v2363
      %v2481 = vadd.f32 %v2111, %v2366
      %v2482 = vadd.f32 %v2112, %v2371
      %v2483 = vadd.f32 %v2113, %v2374
      %v2484 = vadd.f32 %v2114, %v2379
      %v2485 = vadd.f32 %v2115, %v2382
      %v2486 = vadd.f32 %v2116, %v2387
      %v2487 = vadd.f32 %v2117, %v2390
      %v2488 = vadd.f32 %v2118, %v2395
      %v2489 = vadd.f32 %v2119, %v2398
      %v2490 = vadd.f32 %v2120, %v2403
      %v2491 = vadd.f32 %v2121, %v2406
      %v2492 = vadd.f32 %v2122, %v2411
      %v2493 = vadd.f32 %v2123, %v2414
      %v2494 = vadd.f32 %v2124, %v2419
      %v2495 = vadd.f32 %v2125, %v2422
      %v2496 = vadd.f32 %v2126, %v2427
      %v2497 = vadd.f32 %v2127, %v2430
      %v2498 = vadd.f32 %v2128, %v2435
      %v2499 = vadd.f32 %v2129, %v2438
      %v2500 = vadd.f32 %v2130, %v2443
      %v2501 = vadd.f32 %v2131, %v2446
      %v2502 = vadd.f32 %v2132, %v2451
      %v2503 = vadd.f32 %v2133, %v2454
      %v2504 = vadd.f32 %v2134, %v2459
      %v2505 = vpack.c.b16 %v386, %v386
      %v2507 = vshll.u32 %v2505, 16
      %v2509 = vrot.slane %v2507, 7
      %v2510 = vsel %vm442, %v450, %v2509
      %s2511 = scalar_lea.vmem %s1, 24
      %v2512 = vld [vmem:[%s2511] sm:$0xf]
      %v2514 = vsel %vm673, %v2510, 0
      %v2517 = vsel %vm736, %v2512, 0
      %2519 = vmatprep.subr.bf16.mxu0 0
      %2520 = vmatpush1.bf16.msra.mxu0 0
      %2521 = vmatprep.subr.bf16.mxu0 0
      %2522 = vmatpush1.bf16.msra.mxu0 0
      %2523 = vmatprep.subr.bf16.mxu0 0
      %2524 = vmatpush1.bf16.msra.mxu0 0
      %2525 = vmatprep.subr.bf16.mxu0 0
      %2526 = vmatpush1.bf16.msra.mxu0 0
      %2527 = vmatprep.subr.bf16.mxu0 0
      %2528 = vmatpush1.bf16.msra.mxu0 0
      %2529 = vmatprep.subr.bf16.mxu0 0
      %2530 = vmatpush1.bf16.msra.mxu0 0
      %2531 = vmatprep.subr.bf16.mxu0 0
      %2532 = vmatpush1.bf16.msra.mxu0 0
      %2533 = vmatprep.subr.bf16.mxu0 0
      %2534 = vmatpush1.bf16.msra.mxu0 %v2517
      %2535 = vmatprep.subr.bf16.mxu0 0
      %2536 = vmatpush2.bf16.msra.mxu0 0
      %2537 = vmatprep.subr.bf16.mxu0 0
      %2538 = vmatpush2.bf16.msra.mxu0 0
      %2539 = vmatprep.subr.bf16.mxu0 0
      %2540 = vmatpush2.bf16.msra.mxu0 0
      %2541 = vmatprep.subr.bf16.mxu0 0
      %2542 = vmatpush2.bf16.msra.mxu0 0
      %2543 = vmatprep.subr.bf16.mxu0 0
      %2544 = vmatpush2.bf16.msra.mxu0 0
      %2545 = vmatprep.subr.bf16.mxu0 0
      %2546 = vmatpush2.bf16.msra.mxu0 0
      %2547 = vmatprep.subr.bf16.mxu0 0
      %2548 = vmatpush2.bf16.msra.mxu0 0
      %2549 = vmatprep.subr.bf16.mxu0 0
      %2550 = vmatpush2.bf16.msra.mxu0 0
      %2551 = vmatprep.mubr.bf16.mxu0 0
      %2552 = vmatmul.mubr.bf16.gmra.mxu0 %v2205
      %v2553 = vpop.f32.mrf.mxu0
      %v2554 = vadd.f32 0.0, %v2553
      %v2555 = vpop.f32.mrf.mxu0
      %v2556 = vpop.f32.mrf.mxu0
      %v2557 = vadd.f32 0.0, %v2556
      %v2558 = vpop.f32.mrf.mxu0
      %2559 = vmatprep.mubr.bf16.mxu0 0
      %2560 = vmatmul.mubr.bf16.gmra.mxu0 %v2208
      %v2561 = vpop.f32.mrf.mxu0
      %v2562 = vadd.f32 0.0, %v2561
      %v2563 = vpop.f32.mrf.mxu0
      %v2564 = vpop.f32.mrf.mxu0
      %v2565 = vadd.f32 0.0, %v2564
      %v2566 = vpop.f32.mrf.mxu0
      %2567 = vmatprep.mubr.bf16.mxu0 0
      %2568 = vmatmul.mubr.bf16.gmra.mxu0 %v2211
      %v2569 = vpop.f32.mrf.mxu0
      %v2570 = vadd.f32 0.0, %v2569
      %v2571 = vpop.f32.mrf.mxu0
      %v2572 = vpop.f32.mrf.mxu0
      %v2573 = vadd.f32 0.0, %v2572
      %v2574 = vpop.f32.mrf.mxu0
      %2575 = vmatprep.mubr.bf16.mxu0 0
      %2576 = vmatmul.mubr.bf16.gmra.mxu0 %v2214
      %v2577 = vpop.f32.mrf.mxu0
      %v2578 = vadd.f32 0.0, %v2577
      %v2579 = vpop.f32.mrf.mxu0
      %v2580 = vpop.f32.mrf.mxu0
      %v2581 = vadd.f32 0.0, %v2580
      %v2582 = vpop.f32.mrf.mxu0
      %2583 = vmatprep.mubr.bf16.mxu0 0
      %2584 = vmatmul.mubr.bf16.gmra.mxu0 %v2217
      %v2585 = vpop.f32.mrf.mxu0
      %v2586 = vadd.f32 0.0, %v2585
      %v2587 = vpop.f32.mrf.mxu0
      %v2588 = vpop.f32.mrf.mxu0
      %v2589 = vadd.f32 0.0, %v2588
      %v2590 = vpop.f32.mrf.mxu0
      %2591 = vmatprep.mubr.bf16.mxu0 0
      %2592 = vmatmul.mubr.bf16.gmra.mxu0 %v2220
      %v2593 = vpop.f32.mrf.mxu0
      %v2594 = vadd.f32 0.0, %v2593
      %v2595 = vpop.f32.mrf.mxu0
      %v2596 = vpop.f32.mrf.mxu0
      %v2597 = vadd.f32 0.0, %v2596
      %v2598 = vpop.f32.mrf.mxu0
      %2599 = vmatprep.mubr.bf16.mxu0 0
      %2600 = vmatmul.mubr.bf16.gmra.mxu0 %v2223
      %v2601 = vpop.f32.mrf.mxu0
      %v2602 = vadd.f32 0.0, %v2601
      %v2603 = vpop.f32.mrf.mxu0
      %v2604 = vpop.f32.mrf.mxu0
      %v2605 = vadd.f32 0.0, %v2604
      %v2606 = vpop.f32.mrf.mxu0
      %2607 = vmatprep.mubr.bf16.mxu0 0
      %2608 = vmatmul.mubr.bf16.gmra.mxu0 %v2226
      %v2609 = vpop.f32.mrf.mxu0
      %v2610 = vadd.f32 0.0, %v2609
      %v2611 = vpop.f32.mrf.mxu0
      %v2612 = vpop.f32.mrf.mxu0
      %v2613 = vadd.f32 0.0, %v2612
      %v2614 = vpop.f32.mrf.mxu0
      %2615 = vmatprep.mubr.bf16.mxu0 0
      %2616 = vmatmul.mubr.bf16.gmra.mxu0 %v2229
      %v2617 = vpop.f32.mrf.mxu0
      %v2618 = vadd.f32 0.0, %v2617
      %v2619 = vpop.f32.mrf.mxu0
      %v2620 = vpop.f32.mrf.mxu0
      %v2621 = vadd.f32 0.0, %v2620
      %v2622 = vpop.f32.mrf.mxu0
      %2623 = vmatprep.mubr.bf16.mxu0 0
      %2624 = vmatmul.mubr.bf16.gmra.mxu0 %v2232
      %v2625 = vpop.f32.mrf.mxu0
      %v2626 = vadd.f32 0.0, %v2625
      %v2627 = vpop.f32.mrf.mxu0
      %v2628 = vpop.f32.mrf.mxu0
      %v2629 = vadd.f32 0.0, %v2628
      %v2630 = vpop.f32.mrf.mxu0
      %2631 = vmatprep.mubr.bf16.mxu0 0
      %2632 = vmatmul.mubr.bf16.gmra.mxu0 %v2235
      %v2633 = vpop.f32.mrf.mxu0
      %v2634 = vadd.f32 0.0, %v2633
      %v2635 = vpop.f32.mrf.mxu0
      %v2636 = vpop.f32.mrf.mxu0
      %v2637 = vadd.f32 0.0, %v2636
      %v2638 = vpop.f32.mrf.mxu0
      %2639 = vmatprep.mubr.bf16.mxu0 0
      %2640 = vmatmul.mubr.bf16.gmra.mxu0 %v2238
      %v2641 = vpop.f32.mrf.mxu0
      %v2642 = vadd.f32 0.0, %v2641
      %v2643 = vpop.f32.mrf.mxu0
      %v2644 = vpop.f32.mrf.mxu0
      %v2645 = vadd.f32 0.0, %v2644
      %v2646 = vpop.f32.mrf.mxu0
      %2647 = vmatprep.mubr.bf16.mxu0 0
      %2648 = vmatmul.mubr.bf16.gmra.mxu0 %v2241
      %v2649 = vpop.f32.mrf.mxu0
      %v2650 = vadd.f32 0.0, %v2649
      %v2651 = vpop.f32.mrf.mxu0
      %v2652 = vpop.f32.mrf.mxu0
      %v2653 = vadd.f32 0.0, %v2652
      %v2654 = vpop.f32.mrf.mxu0
      %2655 = vmatprep.mubr.bf16.mxu0 0
      %2656 = vmatmul.mubr.bf16.gmra.mxu0 %v2244
      %v2657 = vpop.f32.mrf.mxu0
      %v2658 = vadd.f32 0.0, %v2657
      %v2659 = vpop.f32.mrf.mxu0
      %v2660 = vpop.f32.mrf.mxu0
      %v2661 = vadd.f32 0.0, %v2660
      %v2662 = vpop.f32.mrf.mxu0
      %2663 = vmatprep.mubr.bf16.mxu0 0
      %2664 = vmatmul.mubr.bf16.gmra.mxu0 %v2247
      %v2665 = vpop.f32.mrf.mxu0
      %v2666 = vadd.f32 0.0, %v2665
      %v2667 = vpop.f32.mrf.mxu0
      %v2668 = vpop.f32.mrf.mxu0
      %v2669 = vadd.f32 0.0, %v2668
      %v2670 = vpop.f32.mrf.mxu0
      %2671 = vmatprep.mubr.bf16.mxu0 0
      %2672 = vmatmul.mubr.bf16.gmra.mxu0 %v2250
      %v2673 = vpop.f32.mrf.mxu0
      %v2674 = vadd.f32 0.0, %v2673
      %v2675 = vpop.f32.mrf.mxu0
      %v2676 = vpop.f32.mrf.mxu0
      %v2677 = vadd.f32 0.0, %v2676
      %v2678 = vpop.f32.mrf.mxu0
      %2679 = vmatprep.mubr.bf16.mxu0 0
      %2680 = vmatmul.mubr.bf16.gmra.mxu0 %v2253
      %v2681 = vpop.f32.mrf.mxu0
      %v2682 = vadd.f32 0.0, %v2681
      %v2683 = vpop.f32.mrf.mxu0
      %v2684 = vpop.f32.mrf.mxu0
      %v2685 = vadd.f32 0.0, %v2684
      %v2686 = vpop.f32.mrf.mxu0
      %2687 = vmatprep.mubr.bf16.mxu0 0
      %2688 = vmatmul.mubr.bf16.gmra.mxu0 %v2256
      %v2689 = vpop.f32.mrf.mxu0
      %v2690 = vadd.f32 0.0, %v2689
      %v2691 = vpop.f32.mrf.mxu0
      %v2692 = vpop.f32.mrf.mxu0
      %v2693 = vadd.f32 0.0, %v2692
      %v2694 = vpop.f32.mrf.mxu0
      %2695 = vmatprep.mubr.bf16.mxu0 0
      %2696 = vmatmul.mubr.bf16.gmra.mxu0 %v941
      %v2697 = vpop.f32.mrf.mxu0
      %v2698 = vadd.f32 0.0, %v2697
      %v2699 = vpop.f32.mrf.mxu0
      %v2700 = vpop.f32.mrf.mxu0
      %v2701 = vadd.f32 0.0, %v2700
      %v2702 = vpop.f32.mrf.mxu0
      %2703 = vmatprep.mubr.bf16.mxu0 0
      %2704 = vmatmul.mubr.bf16.gmra.mxu0 %v944
      %v2705 = vpop.f32.mrf.mxu0
      %v2706 = vadd.f32 0.0, %v2705
      %v2707 = vpop.f32.mrf.mxu0
      %v2708 = vpop.f32.mrf.mxu0
      %v2709 = vadd.f32 0.0, %v2708
      %v2710 = vpop.f32.mrf.mxu0
      %2711 = vmatprep.mubr.bf16.mxu0 0
      %2712 = vmatmul.mubr.bf16.gmra.mxu0 %v2514
      %v2713 = vpop.f32.mrf.mxu0
      %v2714 = vadd.f32 0.0, %v2713
      %v2715 = vpop.f32.mrf.mxu0
      %v2716 = vpop.f32.mrf.mxu0
      %v2717 = vpop.f32.mrf.mxu0
      %2718 = vdwg.mxu0
      %v2719 = vadd.f32 %v2464, %v2554
      %v2720 = vadd.f32 %v2465, %v2557
      %v2721 = vadd.f32 %v2466, %v2562
      %v2722 = vadd.f32 %v2467, %v2565
      %v2723 = vadd.f32 %v2468, %v2570
      %v2724 = vadd.f32 %v2469, %v2573
      %v2725 = vadd.f32 %v2470, %v2578
      %v2726 = vadd.f32 %v2471, %v2581
      %v2727 = vadd.f32 %v2472, %v2586
      %v2728 = vadd.f32 %v2473, %v2589
      %v2729 = vadd.f32 %v2474, %v2594
      %v2730 = vadd.f32 %v2475, %v2597
      %v2731 = vadd.f32 %v2476, %v2602
      %v2732 = vadd.f32 %v2477, %v2605
      %v2733 = vadd.f32 %v2478, %v2610
      %v2734 = vadd.f32 %v2479, %v2613
      %v2735 = vadd.f32 %v2480, %v2618
      %v2736 = vadd.f32 %v2481, %v2621
      %v2737 = vadd.f32 %v2482, %v2626
      %v2738 = vadd.f32 %v2483, %v2629
      %v2739 = vadd.f32 %v2484, %v2634
      %v2740 = vadd.f32 %v2485, %v2637
      %v2741 = vadd.f32 %v2486, %v2642
      %v2742 = vadd.f32 %v2487, %v2645
      %v2743 = vadd.f32 %v2488, %v2650
      %v2744 = vadd.f32 %v2489, %v2653
      %v2745 = vadd.f32 %v2490, %v2658
      %v2746 = vadd.f32 %v2491, %v2661
      %v2747 = vadd.f32 %v2492, %v2666
      %v2748 = vadd.f32 %v2493, %v2669
      %v2749 = vadd.f32 %v2494, %v2674
      %v2750 = vadd.f32 %v2495, %v2677
      %v2751 = vadd.f32 %v2496, %v2682
      %v2752 = vadd.f32 %v2497, %v2685
      %v2753 = vadd.f32 %v2498, %v2690
      %v2754 = vadd.f32 %v2499, %v2693
      %v2755 = vadd.f32 %v2500, %v2698
      %v2756 = vadd.f32 %v2501, %v2701
      %v2757 = vadd.f32 %v2502, %v2706
      %v2758 = vadd.f32 %v2503, %v2709
      %v2759 = vadd.f32 %v2504, %v2714
      %v2760 = vrot.slane %v423, 1
      %v2761 = vrot.slane %v424, 1
      %v2762 = vsel %vm623, %v2760, %v2761
      %v2763 = vrot.slane %v425, 1
      %v2764 = vsel %vm623, %v2761, %v2763
      %v2765 = vrot.slane %v426, 1
      %v2766 = vsel %vm623, %v2763, %v2765
      %v2767 = vrot.slane %v427, 1
      %v2768 = vsel %vm623, %v2765, %v2767
      %v2769 = vrot.slane %v428, 1
      %v2770 = vsel %vm623, %v2767, %v2769
      %v2771 = vrot.slane %v429, 1
      %v2772 = vsel %vm623, %v2769, %v2771
      %v2773 = vrot.slane %v430, 1
      %v2774 = vsel %vm623, %v2771, %v2773
      %v2775 = vrot.slane %v431, 1
      %v2776 = vsel %vm623, %v2773, %v2775
      %v2777 = vrot.slane %v432, 1
      %v2778 = vsel %vm623, %v2775, %v2777
      %v2779 = vrot.slane %v433, 1
      %v2780 = vsel %vm623, %v2777, %v2779
      %v2781 = vrot.slane %v434, 1
      %v2782 = vsel %vm623, %v2779, %v2781
      %v2783 = vrot.slane %v435, 1
      %v2784 = vsel %vm623, %v2781, %v2783
      %v2785 = vrot.slane %v436, 1
      %v2786 = vsel %vm623, %v2783, %v2785
      %v2787 = vrot.slane %v437, 1
      %v2788 = vsel %vm623, %v2785, %v2787
      %v2789 = vrot.slane %v438, 1
      %v2790 = vsel %vm623, %v2787, %v2789
      %v2791 = vrot.slane %v439, 1
      %v2792 = vsel %vm623, %v2789, %v2791
      %v2793 = vrot.slane %v440, 1
      %v2794 = vsel %vm623, %v2791, %v2793
      %v2795 = vsel %vm623, %v2793, %v624
      %v2796 = vrot.slane %v2505, 7
      %v2797 = vsel %vm627, %v628, %v2796
      %s2798 = scalar_lea.vmem %s1, 28
      %v2799 = vld [vmem:[%s2798] sm:$0xf]
      %v2801 = vsel %vm673, %v2762, 0
      %v2804 = vsel %vm673, %v2764, 0
      %v2807 = vsel %vm673, %v2766, 0
      %v2810 = vsel %vm673, %v2768, 0
      %v2813 = vsel %vm673, %v2770, 0
      %v2816 = vsel %vm673, %v2772, 0
      %v2819 = vsel %vm673, %v2774, 0
      %v2822 = vsel %vm673, %v2776, 0
      %v2825 = vsel %vm673, %v2778, 0
      %v2828 = vsel %vm673, %v2780, 0
      %v2831 = vsel %vm673, %v2782, 0
      %v2834 = vsel %vm673, %v2784, 0
      %v2837 = vsel %vm673, %v2786, 0
      %v2840 = vsel %vm673, %v2788, 0
      %v2843 = vsel %vm673, %v2790, 0
      %v2846 = vsel %vm673, %v2792, 0
      %v2849 = vsel %vm673, %v2794, 0
      %v2852 = vsel %vm673, %v2795, 0
      %v2855 = vsel %vm673, %v2797, 0
      %v2858 = vsel %vm736, %v2799, 0
      %2860 = vmatprep.subr.bf16.mxu0 0
      %2861 = vmatpush1.bf16.msra.mxu0 0
      %2862 = vmatprep.subr.bf16.mxu0 0
      %2863 = vmatpush1.bf16.msra.mxu0 0
      %2864 = vmatprep.subr.bf16.mxu0 0
      %2865 = vmatpush1.bf16.msra.mxu0 0
      %2866 = vmatprep.subr.bf16.mxu0 0
      %2867 = vmatpush1.bf16.msra.mxu0 0
      %2868 = vmatprep.subr.bf16.mxu0 0
      %2869 = vmatpush1.bf16.msra.mxu0 0
      %2870 = vmatprep.subr.bf16.mxu0 0
      %2871 = vmatpush1.bf16.msra.mxu0 0
      %2872 = vmatprep.subr.bf16.mxu0 0
      %2873 = vmatpush1.bf16.msra.mxu0 0
      %2874 = vmatprep.subr.bf16.mxu0 0
      %2875 = vmatpush1.bf16.msra.mxu0 %v2858
      %2876 = vmatprep.subr.bf16.mxu0 0
      %2877 = vmatpush2.bf16.msra.mxu0 0
      %2878 = vmatprep.subr.bf16.mxu0 0
      %2879 = vmatpush2.bf16.msra.mxu0 0
      %2880 = vmatprep.subr.bf16.mxu0 0
      %2881 = vmatpush2.bf16.msra.mxu0 0
      %2882 = vmatprep.subr.bf16.mxu0 0
      %2883 = vmatpush2.bf16.msra.mxu0 0
      %2884 = vmatprep.subr.bf16.mxu0 0
      %2885 = vmatpush2.bf16.msra.mxu0 0
      %2886 = vmatprep.subr.bf16.mxu0 0
      %2887 = vmatpush2.bf16.msra.mxu0 0
      %2888 = vmatprep.subr.bf16.mxu0 0
      %2889 = vmatpush2.bf16.msra.mxu0 0
      %2890 = vmatprep.subr.bf16.mxu0 0
      %2891 = vmatpush2.bf16.msra.mxu0 0
      %2892 = vmatprep.mubr.bf16.mxu0 0
      %2893 = vmatmul.mubr.bf16.gmra.mxu0 %v2801
      %v2894 = vpop.f32.mrf.mxu0
      %v2895 = vadd.f32 0.0, %v2894
      %v2896 = vpop.f32.mrf.mxu0
      %v2897 = vpop.f32.mrf.mxu0
      %v2898 = vadd.f32 0.0, %v2897
      %v2899 = vpop.f32.mrf.mxu0
      %2900 = vmatprep.mubr.bf16.mxu0 0
      %2901 = vmatmul.mubr.bf16.gmra.mxu0 %v2804
      %v2902 = vpop.f32.mrf.mxu0
      %v2903 = vadd.f32 0.0, %v2902
      %v2904 = vpop.f32.mrf.mxu0
      %v2905 = vpop.f32.mrf.mxu0
      %v2906 = vadd.f32 0.0, %v2905
      %v2907 = vpop.f32.mrf.mxu0
      %2908 = vmatprep.mubr.bf16.mxu0 0
      %2909 = vmatmul.mubr.bf16.gmra.mxu0 %v2807
      %v2910 = vpop.f32.mrf.mxu0
      %v2911 = vadd.f32 0.0, %v2910
      %v2912 = vpop.f32.mrf.mxu0
      %v2913 = vpop.f32.mrf.mxu0
      %v2914 = vadd.f32 0.0, %v2913
      %v2915 = vpop.f32.mrf.mxu0
      %2916 = vmatprep.mubr.bf16.mxu0 0
      %2917 = vmatmul.mubr.bf16.gmra.mxu0 %v2810
      %v2918 = vpop.f32.mrf.mxu0
      %v2919 = vadd.f32 0.0, %v2918
      %v2920 = vpop.f32.mrf.mxu0
      %v2921 = vpop.f32.mrf.mxu0
      %v2922 = vadd.f32 0.0, %v2921
      %v2923 = vpop.f32.mrf.mxu0
      %2924 = vmatprep.mubr.bf16.mxu0 0
      %2925 = vmatmul.mubr.bf16.gmra.mxu0 %v2813
      %v2926 = vpop.f32.mrf.mxu0
      %v2927 = vadd.f32 0.0, %v2926
      %v2928 = vpop.f32.mrf.mxu0
      %v2929 = vpop.f32.mrf.mxu0
      %v2930 = vadd.f32 0.0, %v2929
      %v2931 = vpop.f32.mrf.mxu0
      %2932 = vmatprep.mubr.bf16.mxu0 0
      %2933 = vmatmul.mubr.bf16.gmra.mxu0 %v2816
      %v2934 = vpop.f32.mrf.mxu0
      %v2935 = vadd.f32 0.0, %v2934
      %v2936 = vpop.f32.mrf.mxu0
      %v2937 = vpop.f32.mrf.mxu0
      %v2938 = vadd.f32 0.0, %v2937
      %v2939 = vpop.f32.mrf.mxu0
      %2940 = vmatprep.mubr.bf16.mxu0 0
      %2941 = vmatmul.mubr.bf16.gmra.mxu0 %v2819
      %v2942 = vpop.f32.mrf.mxu0
      %v2943 = vadd.f32 0.0, %v2942
      %v2944 = vpop.f32.mrf.mxu0
      %v2945 = vpop.f32.mrf.mxu0
      %v2946 = vadd.f32 0.0, %v2945
      %v2947 = vpop.f32.mrf.mxu0
      %2948 = vmatprep.mubr.bf16.mxu0 0
      %2949 = vmatmul.mubr.bf16.gmra.mxu0 %v2822
      %v2950 = vpop.f32.mrf.mxu0
      %v2951 = vadd.f32 0.0, %v2950
      %v2952 = vpop.f32.mrf.mxu0
      %v2953 = vpop.f32.mrf.mxu0
      %v2954 = vadd.f32 0.0, %v2953
      %v2955 = vpop.f32.mrf.mxu0
      %2956 = vmatprep.mubr.bf16.mxu0 0
      %2957 = vmatmul.mubr.bf16.gmra.mxu0 %v2825
      %v2958 = vpop.f32.mrf.mxu0
      %v2959 = vadd.f32 0.0, %v2958
      %v2960 = vpop.f32.mrf.mxu0
      %v2961 = vpop.f32.mrf.mxu0
      %v2962 = vadd.f32 0.0, %v2961
      %v2963 = vpop.f32.mrf.mxu0
      %2964 = vmatprep.mubr.bf16.mxu0 0
      %2965 = vmatmul.mubr.bf16.gmra.mxu0 %v2828
      %v2966 = vpop.f32.mrf.mxu0
      %v2967 = vadd.f32 0.0, %v2966
      %v2968 = vpop.f32.mrf.mxu0
      %v2969 = vpop.f32.mrf.mxu0
      %v2970 = vadd.f32 0.0, %v2969
      %v2971 = vpop.f32.mrf.mxu0
      %2972 = vmatprep.mubr.bf16.mxu0 0
      %2973 = vmatmul.mubr.bf16.gmra.mxu0 %v2831
      %v2974 = vpop.f32.mrf.mxu0
      %v2975 = vadd.f32 0.0, %v2974
      %v2976 = vpop.f32.mrf.mxu0
      %v2977 = vpop.f32.mrf.mxu0
      %v2978 = vadd.f32 0.0, %v2977
      %v2979 = vpop.f32.mrf.mxu0
      %2980 = vmatprep.mubr.bf16.mxu0 0
      %2981 = vmatmul.mubr.bf16.gmra.mxu0 %v2834
      %v2982 = vpop.f32.mrf.mxu0
      %v2983 = vadd.f32 0.0, %v2982
      %v2984 = vpop.f32.mrf.mxu0
      %v2985 = vpop.f32.mrf.mxu0
      %v2986 = vadd.f32 0.0, %v2985
      %v2987 = vpop.f32.mrf.mxu0
      %2988 = vmatprep.mubr.bf16.mxu0 0
      %2989 = vmatmul.mubr.bf16.gmra.mxu0 %v2837
      %v2990 = vpop.f32.mrf.mxu0
      %v2991 = vadd.f32 0.0, %v2990
      %v2992 = vpop.f32.mrf.mxu0
      %v2993 = vpop.f32.mrf.mxu0
      %v2994 = vadd.f32 0.0, %v2993
      %v2995 = vpop.f32.mrf.mxu0
      %2996 = vmatprep.mubr.bf16.mxu0 0
      %2997 = vmatmul.mubr.bf16.gmra.mxu0 %v2840
      %v2998 = vpop.f32.mrf.mxu0
      %v2999 = vadd.f32 0.0, %v2998
      %v3000 = vpop.f32.mrf.mxu0
      %v3001 = vpop.f32.mrf.mxu0
      %v3002 = vadd.f32 0.0, %v3001
      %v3003 = vpop.f32.mrf.mxu0
      %3004 = vmatprep.mubr.bf16.mxu0 0
      %3005 = vmatmul.mubr.bf16.gmra.mxu0 %v2843
      %v3006 = vpop.f32.mrf.mxu0
      %v3007 = vadd.f32 0.0, %v3006
      %v3008 = vpop.f32.mrf.mxu0
      %v3009 = vpop.f32.mrf.mxu0
      %v3010 = vadd.f32 0.0, %v3009
      %v3011 = vpop.f32.mrf.mxu0
      %3012 = vmatprep.mubr.bf16.mxu0 0
      %3013 = vmatmul.mubr.bf16.gmra.mxu0 %v2846
      %v3014 = vpop.f32.mrf.mxu0
      %v3015 = vadd.f32 0.0, %v3014
      %v3016 = vpop.f32.mrf.mxu0
      %v3017 = vpop.f32.mrf.mxu0
      %v3018 = vadd.f32 0.0, %v3017
      %v3019 = vpop.f32.mrf.mxu0
      %3020 = vmatprep.mubr.bf16.mxu0 0
      %3021 = vmatmul.mubr.bf16.gmra.mxu0 %v2849
      %v3022 = vpop.f32.mrf.mxu0
      %v3023 = vadd.f32 0.0, %v3022
      %v3024 = vpop.f32.mrf.mxu0
      %v3025 = vpop.f32.mrf.mxu0
      %v3026 = vadd.f32 0.0, %v3025
      %v3027 = vpop.f32.mrf.mxu0
      %3028 = vmatprep.mubr.bf16.mxu0 0
      %3029 = vmatmul.mubr.bf16.gmra.mxu0 %v2852
      %v3030 = vpop.f32.mrf.mxu0
      %v3031 = vadd.f32 0.0, %v3030
      %v3032 = vpop.f32.mrf.mxu0
      %v3033 = vpop.f32.mrf.mxu0
      %v3034 = vadd.f32 0.0, %v3033
      %v3035 = vpop.f32.mrf.mxu0
      %3036 = vmatprep.mubr.bf16.mxu0 0
      %3037 = vmatmul.mubr.bf16.gmra.mxu0 %v675
      %v3038 = vpop.f32.mrf.mxu0
      %v3039 = vadd.f32 0.0, %v3038
      %v3040 = vpop.f32.mrf.mxu0
      %v3041 = vpop.f32.mrf.mxu0
      %v3042 = vadd.f32 0.0, %v3041
      %v3043 = vpop.f32.mrf.mxu0
      %3044 = vmatprep.mubr.bf16.mxu0 0
      %3045 = vmatmul.mubr.bf16.gmra.mxu0 %v677
      %v3046 = vpop.f32.mrf.mxu0
      %v3047 = vadd.f32 0.0, %v3046
      %v3048 = vpop.f32.mrf.mxu0
      %v3049 = vpop.f32.mrf.mxu0
      %v3050 = vadd.f32 0.0, %v3049
      %v3051 = vpop.f32.mrf.mxu0
      %3052 = vmatprep.mubr.bf16.mxu0 0
      %3053 = vmatmul.mubr.bf16.gmra.mxu0 %v2855
      %v3054 = vpop.f32.mrf.mxu0
      %v3055 = vadd.f32 0.0, %v3054
      %v3056 = vpop.f32.mrf.mxu0
      %v3057 = vpop.f32.mrf.mxu0
      %v3058 = vpop.f32.mrf.mxu0
      %3059 = vdwg.mxu0
      %v3060 = vadd.f32 %v2719, %v2895
      %v3061 = vadd.f32 %v2720, %v2898
      %v3062 = vadd.f32 %v2721, %v2903
      %v3063 = vadd.f32 %v2722, %v2906
      %v3064 = vadd.f32 %v2723, %v2911
      %v3065 = vadd.f32 %v2724, %v2914
      %v3066 = vadd.f32 %v2725, %v2919
      %v3067 = vadd.f32 %v2726, %v2922
      %v3068 = vadd.f32 %v2727, %v2927
      %v3069 = vadd.f32 %v2728, %v2930
      %v3070 = vadd.f32 %v2729, %v2935
      %v3071 = vadd.f32 %v2730, %v2938
      %v3072 = vadd.f32 %v2731, %v2943
      %v3073 = vadd.f32 %v2732, %v2946
      %v3074 = vadd.f32 %v2733, %v2951
      %v3075 = vadd.f32 %v2734, %v2954
      %v3076 = vadd.f32 %v2735, %v2959
      %v3077 = vadd.f32 %v2736, %v2962
      %v3078 = vadd.f32 %v2737, %v2967
      %v3079 = vadd.f32 %v2738, %v2970
      %v3080 = vadd.f32 %v2739, %v2975
      %v3081 = vadd.f32 %v2740, %v2978
      %v3082 = vadd.f32 %v2741, %v2983
      %v3083 = vadd.f32 %v2742, %v2986
      %v3084 = vadd.f32 %v2743, %v2991
      %v3085 = vadd.f32 %v2744, %v2994
      %v3086 = vadd.f32 %v2745, %v2999
      %v3087 = vadd.f32 %v2746, %v3002
      %v3088 = vadd.f32 %v2747, %v3007
      %v3089 = vadd.f32 %v2748, %v3010
      %v3090 = vadd.f32 %v2749, %v3015
      %v3091 = vadd.f32 %v2750, %v3018
      %v3092 = vadd.f32 %v2751, %v3023
      %v3093 = vadd.f32 %v2752, %v3026
      %v3094 = vadd.f32 %v2753, %v3031
      %v3095 = vadd.f32 %v2754, %v3034
      %v3096 = vadd.f32 %v2755, %v3039
      %v3097 = vadd.f32 %v2756, %v3042
      %v3098 = vadd.f32 %v2757, %v3047
      %v3099 = vadd.f32 %v2758, %v3050
      %v3100 = vadd.f32 %v2759, %v3055
      %v3101 = vrot.slane %v452, 1
      %v3102 = vrot.slane %v455, 2
      %v3103 = vor.u32 %v3101, %v3102
      %v3104 = vrot.slane %v461, 1
      %v3105 = vrot.slane %v464, 2
      %v3106 = vor.u32 %v3104, %v3105
      %v3107 = vsel %vm1206, %v3103, %v3106
      %v3108 = vrot.slane %v470, 1
      %v3109 = vrot.slane %v473, 2
      %v3110 = vor.u32 %v3108, %v3109
      %v3111 = vsel %vm1206, %v3106, %v3110
      %v3112 = vrot.slane %v479, 1
      %v3113 = vrot.slane %v482, 2
      %v3114 = vor.u32 %v3112, %v3113
      %v3115 = vsel %vm1206, %v3110, %v3114
      %v3116 = vrot.slane %v488, 1
      %v3117 = vrot.slane %v491, 2
      %v3118 = vor.u32 %v3116, %v3117
      %v3119 = vsel %vm1206, %v3114, %v3118
      %v3120 = vrot.slane %v497, 1
      %v3121 = vrot.slane %v500, 2
      %v3122 = vor.u32 %v3120, %v3121
      %v3123 = vsel %vm1206, %v3118, %v3122
      %v3124 = vrot.slane %v506, 1
      %v3125 = vrot.slane %v509, 2
      %v3126 = vor.u32 %v3124, %v3125
      %v3127 = vsel %vm1206, %v3122, %v3126
      %v3128 = vrot.slane %v515, 1
      %v3129 = vrot.slane %v518, 2
      %v3130 = vor.u32 %v3128, %v3129
      %v3131 = vsel %vm1206, %v3126, %v3130
      %v3132 = vrot.slane %v524, 1
      %v3133 = vrot.slane %v527, 2
      %v3134 = vor.u32 %v3132, %v3133
      %v3135 = vsel %vm1206, %v3130, %v3134
      %v3136 = vrot.slane %v533, 1
      %v3137 = vrot.slane %v536, 2
      %v3138 = vor.u32 %v3136, %v3137
      %v3139 = vsel %vm1206, %v3134, %v3138
      %v3140 = vrot.slane %v542, 1
      %v3141 = vrot.slane %v545, 2
      %v3142 = vor.u32 %v3140, %v3141
      %v3143 = vsel %vm1206, %v3138, %v3142
      %v3144 = vrot.slane %v551, 1
      %v3145 = vrot.slane %v554, 2
      %v3146 = vor.u32 %v3144, %v3145
      %v3147 = vsel %vm1206, %v3142, %v3146
      %v3148 = vrot.slane %v560, 1
      %v3149 = vrot.slane %v563, 2
      %v3150 = vor.u32 %v3148, %v3149
      %v3151 = vsel %vm1206, %v3146, %v3150
      %v3152 = vrot.slane %v569, 1
      %v3153 = vrot.slane %v572, 2
      %v3154 = vor.u32 %v3152, %v3153
      %v3155 = vsel %vm1206, %v3150, %v3154
      %v3156 = vrot.slane %v578, 1
      %v3157 = vrot.slane %v581, 2
      %v3158 = vor.u32 %v3156, %v3157
      %v3159 = vsel %vm1206, %v3154, %v3158
      %v3160 = vrot.slane %v587, 1
      %v3161 = vrot.slane %v590, 2
      %v3162 = vor.u32 %v3160, %v3161
      %v3163 = vsel %vm1206, %v3158, %v3162
      %v3164 = vrot.slane %v596, 1
      %v3165 = vrot.slane %v599, 2
      %v3166 = vor.u32 %v3164, %v3165
      %v3167 = vsel %vm1206, %v3162, %v3166
      %v3168 = vrot.slane %v605, 1
      %v3169 = vrot.slane %v608, 2
      %v3170 = vor.u32 %v3168, %v3169
      %v3171 = vsel %vm1206, %v3166, %v3170
      %v3172 = vsel %vm1206, %v3170, %v1209
      %v3173 = vshrl.u32 %v2505, 16
      %v3175 = vrot.slane %v3173, 7
      %v3176 = vor.u32 %v3175, %v2507
      %v3177 = vsel %vm1215, %v1216, %v3176
      %s3178 = scalar_lea.vmem %s1, 32
      %v3179 = vld [vmem:[%s3178] sm:$0xf]
      %v3181 = vsel %vm673, %v3107, 0
      %v3184 = vsel %vm673, %v3111, 0
      %v3187 = vsel %vm673, %v3115, 0
      %v3190 = vsel %vm673, %v3119, 0
      %v3193 = vsel %vm673, %v3123, 0
      %v3196 = vsel %vm673, %v3127, 0
      %v3199 = vsel %vm673, %v3131, 0
      %v3202 = vsel %vm673, %v3135, 0
      %v3205 = vsel %vm673, %v3139, 0
      %v3208 = vsel %vm673, %v3143, 0
      %v3211 = vsel %vm673, %v3147, 0
      %v3214 = vsel %vm673, %v3151, 0
      %v3217 = vsel %vm673, %v3155, 0
      %v3220 = vsel %vm673, %v3159, 0
      %v3223 = vsel %vm673, %v3163, 0
      %v3226 = vsel %vm673, %v3167, 0
      %v3229 = vsel %vm673, %v3171, 0
      %v3232 = vsel %vm673, %v3172, 0
      %v3235 = vsel %vm673, %v3177, 0
      %v3238 = vsel %vm736, %v3179, 0
      %3240 = vmatprep.subr.bf16.mxu0 0
      %3241 = vmatpush1.bf16.msra.mxu0 0
      %3242 = vmatprep.subr.bf16.mxu0 0
      %3243 = vmatpush1.bf16.msra.mxu0 0
      %3244 = vmatprep.subr.bf16.mxu0 0
      %3245 = vmatpush1.bf16.msra.mxu0 0
      %3246 = vmatprep.subr.bf16.mxu0 0
      %3247 = vmatpush1.bf16.msra.mxu0 0
      %3248 = vmatprep.subr.bf16.mxu0 0
      %3249 = vmatpush1.bf16.msra.mxu0 0
      %3250 = vmatprep.subr.bf16.mxu0 0
      %3251 = vmatpush1.bf16.msra.mxu0 0
      %3252 = vmatprep.subr.bf16.mxu0 0
      %3253 = vmatpush1.bf16.msra.mxu0 0
      %3254 = vmatprep.subr.bf16.mxu0 0
      %3255 = vmatpush1.bf16.msra.mxu0 %v3238
      %3256 = vmatprep.subr.bf16.mxu0 0
      %3257 = vmatpush2.bf16.msra.mxu0 0
      %3258 = vmatprep.subr.bf16.mxu0 0
      %3259 = vmatpush2.bf16.msra.mxu0 0
      %3260 = vmatprep.subr.bf16.mxu0 0
      %3261 = vmatpush2.bf16.msra.mxu0 0
      %3262 = vmatprep.subr.bf16.mxu0 0
      %3263 = vmatpush2.bf16.msra.mxu0 0
      %3264 = vmatprep.subr.bf16.mxu0 0
      %3265 = vmatpush2.bf16.msra.mxu0 0
      %3266 = vmatprep.subr.bf16.mxu0 0
      %3267 = vmatpush2.bf16.msra.mxu0 0
      %3268 = vmatprep.subr.bf16.mxu0 0
      %3269 = vmatpush2.bf16.msra.mxu0 0
      %3270 = vmatprep.subr.bf16.mxu0 0
      %3271 = vmatpush2.bf16.msra.mxu0 0
      %3272 = vmatprep.mubr.bf16.mxu0 0
      %3273 = vmatmul.mubr.bf16.gmra.mxu0 %v3181
      %v3274 = vpop.f32.mrf.mxu0
      %v3275 = vadd.f32 0.0, %v3274
      %v3276 = vpop.f32.mrf.mxu0
      %v3277 = vpop.f32.mrf.mxu0
      %v3278 = vadd.f32 0.0, %v3277
      %v3279 = vpop.f32.mrf.mxu0
      %3280 = vmatprep.mubr.bf16.mxu0 0
      %3281 = vmatmul.mubr.bf16.gmra.mxu0 %v3184
      %v3282 = vpop.f32.mrf.mxu0
      %v3283 = vadd.f32 0.0, %v3282
      %v3284 = vpop.f32.mrf.mxu0
      %v3285 = vpop.f32.mrf.mxu0
      %v3286 = vadd.f32 0.0, %v3285
      %v3287 = vpop.f32.mrf.mxu0
      %3288 = vmatprep.mubr.bf16.mxu0 0
      %3289 = vmatmul.mubr.bf16.gmra.mxu0 %v3187
      %v3290 = vpop.f32.mrf.mxu0
      %v3291 = vadd.f32 0.0, %v3290
      %v3292 = vpop.f32.mrf.mxu0
      %v3293 = vpop.f32.mrf.mxu0
      %v3294 = vadd.f32 0.0, %v3293
      %v3295 = vpop.f32.mrf.mxu0
      %3296 = vmatprep.mubr.bf16.mxu0 0
      %3297 = vmatmul.mubr.bf16.gmra.mxu0 %v3190
      %v3298 = vpop.f32.mrf.mxu0
      %v3299 = vadd.f32 0.0, %v3298
      %v3300 = vpop.f32.mrf.mxu0
      %v3301 = vpop.f32.mrf.mxu0
      %v3302 = vadd.f32 0.0, %v3301
      %v3303 = vpop.f32.mrf.mxu0
      %3304 = vmatprep.mubr.bf16.mxu0 0
      %3305 = vmatmul.mubr.bf16.gmra.mxu0 %v3193
      %v3306 = vpop.f32.mrf.mxu0
      %v3307 = vadd.f32 0.0, %v3306
      %v3308 = vpop.f32.mrf.mxu0
      %v3309 = vpop.f32.mrf.mxu0
      %v3310 = vadd.f32 0.0, %v3309
      %v3311 = vpop.f32.mrf.mxu0
      %3312 = vmatprep.mubr.bf16.mxu0 0
      %3313 = vmatmul.mubr.bf16.gmra.mxu0 %v3196
      %v3314 = vpop.f32.mrf.mxu0
      %v3315 = vadd.f32 0.0, %v3314
      %v3316 = vpop.f32.mrf.mxu0
      %v3317 = vpop.f32.mrf.mxu0
      %v3318 = vadd.f32 0.0, %v3317
      %v3319 = vpop.f32.mrf.mxu0
      %3320 = vmatprep.mubr.bf16.mxu0 0
      %3321 = vmatmul.mubr.bf16.gmra.mxu0 %v3199
      %v3322 = vpop.f32.mrf.mxu0
      %v3323 = vadd.f32 0.0, %v3322
      %v3324 = vpop.f32.mrf.mxu0
      %v3325 = vpop.f32.mrf.mxu0
      %v3326 = vadd.f32 0.0, %v3325
      %v3327 = vpop.f32.mrf.mxu0
      %3328 = vmatprep.mubr.bf16.mxu0 0
      %3329 = vmatmul.mubr.bf16.gmra.mxu0 %v3202
      %v3330 = vpop.f32.mrf.mxu0
      %v3331 = vadd.f32 0.0, %v3330
      %v3332 = vpop.f32.mrf.mxu0
      %v3333 = vpop.f32.mrf.mxu0
      %v3334 = vadd.f32 0.0, %v3333
      %v3335 = vpop.f32.mrf.mxu0
      %3336 = vmatprep.mubr.bf16.mxu0 0
      %3337 = vmatmul.mubr.bf16.gmra.mxu0 %v3205
      %v3338 = vpop.f32.mrf.mxu0
      %v3339 = vadd.f32 0.0, %v3338
      %v3340 = vpop.f32.mrf.mxu0
      %v3341 = vpop.f32.mrf.mxu0
      %v3342 = vadd.f32 0.0, %v3341
      %v3343 = vpop.f32.mrf.mxu0
      %3344 = vmatprep.mubr.bf16.mxu0 0
      %3345 = vmatmul.mubr.bf16.gmra.mxu0 %v3208
      %v3346 = vpop.f32.mrf.mxu0
      %v3347 = vadd.f32 0.0, %v3346
      %v3348 = vpop.f32.mrf.mxu0
      %v3349 = vpop.f32.mrf.mxu0
      %v3350 = vadd.f32 0.0, %v3349
      %v3351 = vpop.f32.mrf.mxu0
      %3352 = vmatprep.mubr.bf16.mxu0 0
      %3353 = vmatmul.mubr.bf16.gmra.mxu0 %v3211
      %v3354 = vpop.f32.mrf.mxu0
      %v3355 = vadd.f32 0.0, %v3354
      %v3356 = vpop.f32.mrf.mxu0
      %v3357 = vpop.f32.mrf.mxu0
      %v3358 = vadd.f32 0.0, %v3357
      %v3359 = vpop.f32.mrf.mxu0
      %3360 = vmatprep.mubr.bf16.mxu0 0
      %3361 = vmatmul.mubr.bf16.gmra.mxu0 %v3214
      %v3362 = vpop.f32.mrf.mxu0
      %v3363 = vadd.f32 0.0, %v3362
      %v3364 = vpop.f32.mrf.mxu0
      %v3365 = vpop.f32.mrf.mxu0
      %v3366 = vadd.f32 0.0, %v3365
      %v3367 = vpop.f32.mrf.mxu0
      %3368 = vmatprep.mubr.bf16.mxu0 0
      %3369 = vmatmul.mubr.bf16.gmra.mxu0 %v3217
      %v3370 = vpop.f32.mrf.mxu0
      %v3371 = vadd.f32 0.0, %v3370
      %v3372 = vpop.f32.mrf.mxu0
      %v3373 = vpop.f32.mrf.mxu0
      %v3374 = vadd.f32 0.0, %v3373
      %v3375 = vpop.f32.mrf.mxu0
      %3376 = vmatprep.mubr.bf16.mxu0 0
      %3377 = vmatmul.mubr.bf16.gmra.mxu0 %v3220
      %v3378 = vpop.f32.mrf.mxu0
      %v3379 = vadd.f32 0.0, %v3378
      %v3380 = vpop.f32.mrf.mxu0
      %v3381 = vpop.f32.mrf.mxu0
      %v3382 = vadd.f32 0.0, %v3381
      %v3383 = vpop.f32.mrf.mxu0
      %3384 = vmatprep.mubr.bf16.mxu0 0
      %3385 = vmatmul.mubr.bf16.gmra.mxu0 %v3223
      %v3386 = vpop.f32.mrf.mxu0
      %v3387 = vadd.f32 0.0, %v3386
      %v3388 = vpop.f32.mrf.mxu0
      %v3389 = vpop.f32.mrf.mxu0
      %v3390 = vadd.f32 0.0, %v3389
      %v3391 = vpop.f32.mrf.mxu0
      %3392 = vmatprep.mubr.bf16.mxu0 0
      %3393 = vmatmul.mubr.bf16.gmra.mxu0 %v3226
      %v3394 = vpop.f32.mrf.mxu0
      %v3395 = vadd.f32 0.0, %v3394
      %v3396 = vpop.f32.mrf.mxu0
      %v3397 = vpop.f32.mrf.mxu0
      %v3398 = vadd.f32 0.0, %v3397
      %v3399 = vpop.f32.mrf.mxu0
      %3400 = vmatprep.mubr.bf16.mxu0 0
      %3401 = vmatmul.mubr.bf16.gmra.mxu0 %v3229
      %v3402 = vpop.f32.mrf.mxu0
      %v3403 = vadd.f32 0.0, %v3402
      %v3404 = vpop.f32.mrf.mxu0
      %v3405 = vpop.f32.mrf.mxu0
      %v3406 = vadd.f32 0.0, %v3405
      %v3407 = vpop.f32.mrf.mxu0
      %3408 = vmatprep.mubr.bf16.mxu0 0
      %3409 = vmatmul.mubr.bf16.gmra.mxu0 %v3232
      %v3410 = vpop.f32.mrf.mxu0
      %v3411 = vadd.f32 0.0, %v3410
      %v3412 = vpop.f32.mrf.mxu0
      %v3413 = vpop.f32.mrf.mxu0
      %v3414 = vadd.f32 0.0, %v3413
      %v3415 = vpop.f32.mrf.mxu0
      %3416 = vmatprep.mubr.bf16.mxu0 0
      %3417 = vmatmul.mubr.bf16.gmra.mxu0 %v1283
      %v3418 = vpop.f32.mrf.mxu0
      %v3419 = vadd.f32 0.0, %v3418
      %v3420 = vpop.f32.mrf.mxu0
      %v3421 = vpop.f32.mrf.mxu0
      %v3422 = vadd.f32 0.0, %v3421
      %v3423 = vpop.f32.mrf.mxu0
      %3424 = vmatprep.mubr.bf16.mxu0 0
      %3425 = vmatmul.mubr.bf16.gmra.mxu0 %v1286
      %v3426 = vpop.f32.mrf.mxu0
      %v3427 = vadd.f32 0.0, %v3426
      %v3428 = vpop.f32.mrf.mxu0
      %v3429 = vpop.f32.mrf.mxu0
      %v3430 = vadd.f32 0.0, %v3429
      %v3431 = vpop.f32.mrf.mxu0
      %3432 = vmatprep.mubr.bf16.mxu0 0
      %3433 = vmatmul.mubr.bf16.gmra.mxu0 %v3235
      %v3434 = vpop.f32.mrf.mxu0
      %v3435 = vadd.f32 0.0, %v3434
      %v3436 = vpop.f32.mrf.mxu0
      %v3437 = vpop.f32.mrf.mxu0
      %v3438 = vpop.f32.mrf.mxu0
      %3439 = vdwg.mxu0
      %v3440 = vadd.f32 %v3060, %v3275
      %v3441 = vadd.f32 %v3061, %v3278
      %v3442 = vadd.f32 %v3062, %v3283
      %v3443 = vadd.f32 %v3063, %v3286
      %v3444 = vadd.f32 %v3064, %v3291
      %v3445 = vadd.f32 %v3065, %v3294
      %v3446 = vadd.f32 %v3066, %v3299
      %v3447 = vadd.f32 %v3067, %v3302
      %v3448 = vadd.f32 %v3068, %v3307
      %v3449 = vadd.f32 %v3069, %v3310
      %v3450 = vadd.f32 %v3070, %v3315
      %v3451 = vadd.f32 %v3071, %v3318
      %v3452 = vadd.f32 %v3072, %v3323
      %v3453 = vadd.f32 %v3073, %v3326
      %v3454 = vadd.f32 %v3074, %v3331
      %v3455 = vadd.f32 %v3075, %v3334
      %v3456 = vadd.f32 %v3076, %v3339
      %v3457 = vadd.f32 %v3077, %v3342
      %v3458 = vadd.f32 %v3078, %v3347
      %v3459 = vadd.f32 %v3079, %v3350
      %v3460 = vadd.f32 %v3080, %v3355
      %v3461 = vadd.f32 %v3081, %v3358
      %v3462 = vadd.f32 %v3082, %v3363
      %v3463 = vadd.f32 %v3083, %v3366
      %v3464 = vadd.f32 %v3084, %v3371
      %v3465 = vadd.f32 %v3085, %v3374
      %v3466 = vadd.f32 %v3086, %v3379
      %v3467 = vadd.f32 %v3087, %v3382
      %v3468 = vadd.f32 %v3088, %v3387
      %v3469 = vadd.f32 %v3089, %v3390
      %v3470 = vadd.f32 %v3090, %v3395
      %v3471 = vadd.f32 %v3091, %v3398
      %v3472 = vadd.f32 %v3092, %v3403
      %v3473 = vadd.f32 %v3093, %v3406
      %v3474 = vadd.f32 %v3094, %v3411
      %v3475 = vadd.f32 %v3095, %v3414
      %v3476 = vadd.f32 %v3096, %v3419
      %v3477 = vadd.f32 %v3097, %v3422
      %v3478 = vadd.f32 %v3098, %v3427
      %v3479 = vadd.f32 %v3099, %v3430
      %v3480 = vadd.f32 %v3100, %v3435
      %v3481 = vld [vmem:[%s2] sm:$0x1]
      %v3483 = vlaneseq
      %v3484 = vshrl.u32 %v3483, 7
      %v3485 = vsub.s32 0, %v3484
      %v3486 = vrot.slane %v3481, %v3485
      %v3488 = vadd.f32 %v3440, %v3486
      %v3489 = vadd.f32 %v3441, %v3486
      %v3490 = vadd.f32 %v3442, %v3486
      %v3491 = vadd.f32 %v3443, %v3486
      %v3492 = vadd.f32 %v3444, %v3486
      %v3493 = vadd.f32 %v3445, %v3486
      %v3494 = vadd.f32 %v3446, %v3486
      %v3495 = vadd.f32 %v3447, %v3486
      %v3496 = vadd.f32 %v3448, %v3486
      %v3497 = vadd.f32 %v3449, %v3486
      %v3498 = vadd.f32 %v3450, %v3486
      %v3499 = vadd.f32 %v3451, %v3486
      %v3500 = vadd.f32 %v3452, %v3486
      %v3501 = vadd.f32 %v3453, %v3486
      %v3502 = vadd.f32 %v3454, %v3486
      %v3503 = vadd.f32 %v3455, %v3486
      %v3504 = vadd.f32 %v3456, %v3486
      %v3505 = vadd.f32 %v3457, %v3486
      %v3506 = vadd.f32 %v3458, %v3486
      %v3507 = vadd.f32 %v3459, %v3486
      %v3508 = vadd.f32 %v3460, %v3486
      %v3509 = vadd.f32 %v3461, %v3486
      %v3510 = vadd.f32 %v3462, %v3486
      %v3511 = vadd.f32 %v3463, %v3486
      %v3512 = vadd.f32 %v3464, %v3486
      %v3513 = vadd.f32 %v3465, %v3486
      %v3514 = vadd.f32 %v3466, %v3486
      %v3515 = vadd.f32 %v3467, %v3486
      %v3516 = vadd.f32 %v3468, %v3486
      %v3517 = vadd.f32 %v3469, %v3486
      %v3518 = vadd.f32 %v3470, %v3486
      %v3519 = vadd.f32 %v3471, %v3486
      %v3520 = vadd.f32 %v3472, %v3486
      %v3521 = vadd.f32 %v3473, %v3486
      %v3522 = vadd.f32 %v3474, %v3486
      %v3523 = vadd.f32 %v3475, %v3486
      %v3524 = vadd.f32 %v3476, %v3486
      %v3525 = vadd.f32 %v3477, %v3486
      %v3526 = vadd.f32 %v3478, %v3486
      %v3527 = vadd.f32 %v3479, %v3486
      %v3528 = vadd.f32 %v3480, %v3486
      %v3529 = vmax.f32 %v3488, 0.0
      %v3530 = vmax.f32 %v3489, 0.0
      %v3531 = vmax.f32 %v3490, 0.0
      %v3532 = vmax.f32 %v3491, 0.0
      %v3533 = vmax.f32 %v3492, 0.0
      %v3534 = vmax.f32 %v3493, 0.0
      %v3535 = vmax.f32 %v3494, 0.0
      %v3536 = vmax.f32 %v3495, 0.0
      %v3537 = vmax.f32 %v3496, 0.0
      %v3538 = vmax.f32 %v3497, 0.0
      %v3539 = vmax.f32 %v3498, 0.0
      %v3540 = vmax.f32 %v3499, 0.0
      %v3541 = vmax.f32 %v3500, 0.0
      %v3542 = vmax.f32 %v3501, 0.0
      %v3543 = vmax.f32 %v3502, 0.0
      %v3544 = vmax.f32 %v3503, 0.0
      %v3545 = vmax.f32 %v3504, 0.0
      %v3546 = vmax.f32 %v3505, 0.0
      %v3547 = vmax.f32 %v3506, 0.0
      %v3548 = vmax.f32 %v3507, 0.0
      %v3549 = vmax.f32 %v3508, 0.0
      %v3550 = vmax.f32 %v3509, 0.0
      %v3551 = vmax.f32 %v3510, 0.0
      %v3552 = vmax.f32 %v3511, 0.0
      %v3553 = vmax.f32 %v3512, 0.0
      %v3554 = vmax.f32 %v3513, 0.0
      %v3555 = vmax.f32 %v3514, 0.0
      %v3556 = vmax.f32 %v3515, 0.0
      %v3557 = vmax.f32 %v3516, 0.0
      %v3558 = vmax.f32 %v3517, 0.0
      %v3559 = vmax.f32 %v3518, 0.0
      %v3560 = vmax.f32 %v3519, 0.0
      %v3561 = vmax.f32 %v3520, 0.0
      %v3562 = vmax.f32 %v3521, 0.0
      %v3563 = vmax.f32 %v3522, 0.0
      %v3564 = vmax.f32 %v3523, 0.0
      %v3565 = vmax.f32 %v3524, 0.0
      %v3566 = vmax.f32 %v3525, 0.0
      %v3567 = vmax.f32 %v3526, 0.0
      %v3568 = vmax.f32 %v3527, 0.0
      %v3569 = vmax.f32 %v3528, 0.0
      %v3570 = vld [vmem:[%s6] sm:$0xff]
      %v3571 = vld [vmem:[%s6 + $0x8] sm:$0xff]
      %v3572 = vld [vmem:[%s6 + $0x10] sm:$0xff]
      %v3573 = vld [vmem:[%s6 + $0x18] sm:$0xff]
      %v3574 = vld [vmem:[%s6 + $0x20] sm:$0xff]
      %v3575 = vld [vmem:[%s6 + $0x28] sm:$0xff]
      %v3576 = vld [vmem:[%s6 + $0x30] sm:$0xff]
      %v3577 = vld [vmem:[%s6 + $0x38] sm:$0xff]
      %v3578 = vld [vmem:[%s6 + $0x40] sm:$0xff]
      %v3579 = vld [vmem:[%s6 + $0x48] sm:$0xff]
      %v3580 = vld [vmem:[%s6 + $0x50] sm:$0xff]
      %v3581 = vld [vmem:[%s6 + $0x58] sm:$0xff]
      %v3582 = vld [vmem:[%s6 + $0x60] sm:$0xff]
      %v3583 = vld [vmem:[%s6 + $0x68] sm:$0xff]
      %v3584 = vld [vmem:[%s6 + $0x70] sm:$0xff]
      %v3585 = vld [vmem:[%s6 + $0x78] sm:$0xff]
      %v3586 = vld [vmem:[%s6 + $0x80] sm:$0xff]
      %v3587 = vld [vmem:[%s6 + $0x88] sm:$0xff]
      %v3588 = vld [vmem:[%s6 + $0x90] sm:$0xff]
      %v3589 = vld [vmem:[%s6 + $0x98] sm:$0xff]
      %v3590 = vld [vmem:[%s6 + $0xa0] sm:$0xff]
      %v3591 = vld [vmem:[%s6 + $0xa8] sm:$0xff]
      %v3592 = vld [vmem:[%s6 + $0xb0] sm:$0xff]
      %v3593 = vld [vmem:[%s6 + $0xb8] sm:$0xff]
      %v3594 = vld [vmem:[%s6 + $0xc0] sm:$0xff]
      %v3595 = vld [vmem:[%s6 + $0xc8] sm:$0xff]
      %v3596 = vld [vmem:[%s6 + $0xd0] sm:$0xff]
      %v3597 = vld [vmem:[%s6 + $0xd8] sm:$0xff]
      %v3598 = vld [vmem:[%s6 + $0xe0] sm:$0xff]
      %v3599 = vld [vmem:[%s6 + $0xe8] sm:$0xff]
      %v3600 = vld [vmem:[%s6 + $0xf0] sm:$0xff]
      %v3601 = vld [vmem:[%s6 + $0xf8] sm:$0xff]
      %v3602 = vld [vmem:[%s6 + $0x100] sm:$0xff]
      %v3603 = vld [vmem:[%s6 + $0x108] sm:$0xff]
      %v3604 = vld [vmem:[%s6 + $0x110] sm:$0xff]
      %v3605 = vld [vmem:[%s6 + $0x118] sm:$0xff]
      %v3606 = vld [vmem:[%s6 + $0x120] sm:$0xff]
      %v3607 = vld [vmem:[%s6 + $0x128] sm:$0xff]
      %v3608 = vld [vmem:[%s6 + $0x130] sm:$0xff]
      %v3609 = vld [vmem:[%s6 + $0x138] sm:$0xff]
      %v3610 = vld [vmem:[%s6 + $0x140] sm:$0xf]
      %3612 = vset.pattern.permute.xlu0 0
      %3613 = vperm.xlu0 %3612, %v3570
      %v3614 = vpop.permute.xlu0 %3613
      %3617 = vset.pattern.permute.xlu0 0
      %3618 = vperm.xlu0 %3617, %v3571
      %v3619 = vpop.permute.xlu0 %3618
      %3622 = vset.pattern.permute.xlu0 0
      %3623 = vperm.xlu0 %3622, %v3572
      %v3624 = vpop.permute.xlu0 %3623
      %3627 = vset.pattern.permute.xlu0 0
      %3628 = vperm.xlu0 %3627, %v3573
      %v3629 = vpop.permute.xlu0 %3628
      %3632 = vset.pattern.permute.xlu0 0
      %3633 = vperm.xlu0 %3632, %v3574
      %v3634 = vpop.permute.xlu0 %3633
      %3637 = vset.pattern.permute.xlu0 0
      %3638 = vperm.xlu0 %3637, %v3575
      %v3639 = vpop.permute.xlu0 %3638
      %3642 = vset.pattern.permute.xlu0 0
      %3643 = vperm.xlu0 %3642, %v3576
      %v3644 = vpop.permute.xlu0 %3643
      %3647 = vset.pattern.permute.xlu0 0
      %3648 = vperm.xlu0 %3647, %v3577
      %v3649 = vpop.permute.xlu0 %3648
      %3652 = vset.pattern.permute.xlu0 0
      %3653 = vperm.xlu0 %3652, %v3578
      %v3654 = vpop.permute.xlu0 %3653
      %3657 = vset.pattern.permute.xlu0 0
      %3658 = vperm.xlu0 %3657, %v3579
      %v3659 = vpop.permute.xlu0 %3658
      %3662 = vset.pattern.permute.xlu0 0
      %3663 = vperm.xlu0 %3662, %v3580
      %v3664 = vpop.permute.xlu0 %3663
      %3667 = vset.pattern.permute.xlu0 0
      %3668 = vperm.xlu0 %3667, %v3581
      %v3669 = vpop.permute.xlu0 %3668
      %3672 = vset.pattern.permute.xlu0 0
      %3673 = vperm.xlu0 %3672, %v3582
      %v3674 = vpop.permute.xlu0 %3673
      %3677 = vset.pattern.permute.xlu0 0
      %3678 = vperm.xlu0 %3677, %v3583
      %v3679 = vpop.permute.xlu0 %3678
      %3682 = vset.pattern.permute.xlu0 0
      %3683 = vperm.xlu0 %3682, %v3584
      %v3684 = vpop.permute.xlu0 %3683
      %3687 = vset.pattern.permute.xlu0 0
      %3688 = vperm.xlu0 %3687, %v3585
      %v3689 = vpop.permute.xlu0 %3688
      %3692 = vset.pattern.permute.xlu0 0
      %3693 = vperm.xlu0 %3692, %v3586
      %v3694 = vpop.permute.xlu0 %3693
      %3697 = vset.pattern.permute.xlu0 0
      %3698 = vperm.xlu0 %3697, %v3587
      %v3699 = vpop.permute.xlu0 %3698
      %3702 = vset.pattern.permute.xlu0 0
      %3703 = vperm.xlu0 %3702, %v3588
      %v3704 = vpop.permute.xlu0 %3703
      %3707 = vset.pattern.permute.xlu0 0
      %3708 = vperm.xlu0 %3707, %v3589
      %v3709 = vpop.permute.xlu0 %3708
      %3712 = vset.pattern.permute.xlu0 0
      %3713 = vperm.xlu0 %3712, %v3590
      %v3714 = vpop.permute.xlu0 %3713
      %3717 = vset.pattern.permute.xlu0 0
      %3718 = vperm.xlu0 %3717, %v3591
      %v3719 = vpop.permute.xlu0 %3718
      %3722 = vset.pattern.permute.xlu0 0
      %3723 = vperm.xlu0 %3722, %v3592
      %v3724 = vpop.permute.xlu0 %3723
      %3727 = vset.pattern.permute.xlu0 0
      %3728 = vperm.xlu0 %3727, %v3593
      %v3729 = vpop.permute.xlu0 %3728
      %3732 = vset.pattern.permute.xlu0 0
      %3733 = vperm.xlu0 %3732, %v3594
      %v3734 = vpop.permute.xlu0 %3733
      %3737 = vset.pattern.permute.xlu0 0
      %3738 = vperm.xlu0 %3737, %v3595
      %v3739 = vpop.permute.xlu0 %3738
      %3742 = vset.pattern.permute.xlu0 0
      %3743 = vperm.xlu0 %3742, %v3596
      %v3744 = vpop.permute.xlu0 %3743
      %3747 = vset.pattern.permute.xlu0 0
      %3748 = vperm.xlu0 %3747, %v3597
      %v3749 = vpop.permute.xlu0 %3748
      %3752 = vset.pattern.permute.xlu0 0
      %3753 = vperm.xlu0 %3752, %v3598
      %v3754 = vpop.permute.xlu0 %3753
      %3757 = vset.pattern.permute.xlu0 0
      %3758 = vperm.xlu0 %3757, %v3599
      %v3759 = vpop.permute.xlu0 %3758
      %3762 = vset.pattern.permute.xlu0 0
      %3763 = vperm.xlu0 %3762, %v3600
      %v3764 = vpop.permute.xlu0 %3763
      %3767 = vset.pattern.permute.xlu0 0
      %3768 = vperm.xlu0 %3767, %v3601
      %v3769 = vpop.permute.xlu0 %3768
      %3772 = vset.pattern.permute.xlu0 0
      %3773 = vperm.xlu0 %3772, %v3602
      %v3774 = vpop.permute.xlu0 %3773
      %3777 = vset.pattern.permute.xlu0 0
      %3778 = vperm.xlu0 %3777, %v3603
      %v3779 = vpop.permute.xlu0 %3778
      %3782 = vset.pattern.permute.xlu0 0
      %3783 = vperm.xlu0 %3782, %v3604
      %v3784 = vpop.permute.xlu0 %3783
      %3787 = vset.pattern.permute.xlu0 0
      %3788 = vperm.xlu0 %3787, %v3605
      %v3789 = vpop.permute.xlu0 %3788
      %3792 = vset.pattern.permute.xlu0 0
      %3793 = vperm.xlu0 %3792, %v3606
      %v3794 = vpop.permute.xlu0 %3793
      %3797 = vset.pattern.permute.xlu0 0
      %3798 = vperm.xlu0 %3797, %v3607
      %v3799 = vpop.permute.xlu0 %3798
      %3802 = vset.pattern.permute.xlu0 0
      %3803 = vperm.xlu0 %3802, %v3608
      %v3804 = vpop.permute.xlu0 %3803
      %3807 = vset.pattern.permute.xlu0 0
      %3808 = vperm.xlu0 %3807, %v3609
      %v3809 = vpop.permute.xlu0 %3808
      %3812 = vset.pattern.permute.xlu0 0
      %3813 = vperm.xlu0 %3812, %v3610
      %v3814 = vpop.permute.xlu0 %3813
      %v3816 = vmul.f32 %v3529, %v3614
      %v3817 = vmul.f32 %v3530, %v3619
      %v3818 = vmul.f32 %v3531, %v3624
      %v3819 = vmul.f32 %v3532, %v3629
      %v3820 = vmul.f32 %v3533, %v3634
      %v3821 = vmul.f32 %v3534, %v3639
      %v3822 = vmul.f32 %v3535, %v3644
      %v3823 = vmul.f32 %v3536, %v3649
      %v3824 = vmul.f32 %v3537, %v3654
      %v3825 = vmul.f32 %v3538, %v3659
      %v3826 = vmul.f32 %v3539, %v3664
      %v3827 = vmul.f32 %v3540, %v3669
      %v3828 = vmul.f32 %v3541, %v3674
      %v3829 = vmul.f32 %v3542, %v3679
      %v3830 = vmul.f32 %v3543, %v3684
      %v3831 = vmul.f32 %v3544, %v3689
      %v3832 = vmul.f32 %v3545, %v3694
      %v3833 = vmul.f32 %v3546, %v3699
      %v3834 = vmul.f32 %v3547, %v3704
      %v3835 = vmul.f32 %v3548, %v3709
      %v3836 = vmul.f32 %v3549, %v3714
      %v3837 = vmul.f32 %v3550, %v3719
      %v3838 = vmul.f32 %v3551, %v3724
      %v3839 = vmul.f32 %v3552, %v3729
      %v3840 = vmul.f32 %v3553, %v3734
      %v3841 = vmul.f32 %v3554, %v3739
      %v3842 = vmul.f32 %v3555, %v3744
      %v3843 = vmul.f32 %v3556, %v3749
      %v3844 = vmul.f32 %v3557, %v3754
      %v3845 = vmul.f32 %v3558, %v3759
      %v3846 = vmul.f32 %v3559, %v3764
      %v3847 = vmul.f32 %v3560, %v3769
      %v3848 = vmul.f32 %v3561, %v3774
      %v3849 = vmul.f32 %v3562, %v3779
      %v3850 = vmul.f32 %v3563, %v3784
      %v3851 = vmul.f32 %v3564, %v3789
      %v3852 = vmul.f32 %v3565, %v3794
      %v3853 = vmul.f32 %v3566, %v3799
      %v3854 = vmul.f32 %v3567, %v3804
      %v3855 = vmul.f32 %v3568, %v3809
      %v3856 = vmul.f32 %v3569, %v3814
      %v3857 = vpack.c.bf16 %v3817, %v3816
      %v3858 = vpack.c.bf16 %v3819, %v3818
      %v3859 = vpack.c.bf16 %v3821, %v3820
      %v3860 = vpack.c.bf16 %v3823, %v3822
      %v3861 = vpack.c.bf16 %v3825, %v3824
      %v3862 = vpack.c.bf16 %v3827, %v3826
      %v3863 = vpack.c.bf16 %v3829, %v3828
      %v3864 = vpack.c.bf16 %v3831, %v3830
      %v3865 = vpack.c.bf16 %v3833, %v3832
      %v3866 = vpack.c.bf16 %v3835, %v3834
      %v3867 = vpack.c.bf16 %v3837, %v3836
      %v3868 = vpack.c.bf16 %v3839, %v3838
      %v3869 = vpack.c.bf16 %v3841, %v3840
      %v3870 = vpack.c.bf16 %v3843, %v3842
      %v3871 = vpack.c.bf16 %v3845, %v3844
      %v3872 = vpack.c.bf16 %v3847, %v3846
      %v3873 = vpack.c.bf16 %v3849, %v3848
      %v3874 = vpack.c.bf16 %v3851, %v3850
      %v3875 = vpack.c.bf16 %v3853, %v3852
      %v3876 = vpack.c.bf16 %v3855, %v3854
      %v3877 = vpack.c.bf16 %v3856, %v3856
      %v3879 = vshrl.u32 %v3876, 16
      %v3881 = vshll.u32 %v3876, 16
      %v3883 = vrot.slane %v3881, 1
      %v3884 = vor.u32 %v3879, %v3883
      %v3886 = vshll.u32 %v3877, 16
      %v3888 = vrot.slane %v3886, 1
      %v3889 = vsel %vm329, %v3884, %v3888
      %v3890 = vshrl.u32 %v3877, 16
      %v3892 = vor.u32 %v3890, %v3888
      %v3896 = vshrl.u32 %v3857, 16
      %v3898 = vrot.slane %v3896, 6
      %v3899 = vshll.u32 %v3857, 16
      %v3901 = vrot.slane %v3899, 7
      %v3902 = vor.u32 %v3898, %v3901
      %v3904 = vshrl.u32 %v3858, 16
      %v3906 = vrot.slane %v3904, 6
      %v3907 = vshll.u32 %v3858, 16
      %v3909 = vrot.slane %v3907, 7
      %v3910 = vor.u32 %v3906, %v3909
      %v3911 = vsel %vm442, %v3902, %v3910
      %v3913 = vshrl.u32 %v3859, 16
      %v3915 = vrot.slane %v3913, 6
      %v3916 = vshll.u32 %v3859, 16
      %v3918 = vrot.slane %v3916, 7
      %v3919 = vor.u32 %v3915, %v3918
      %v3920 = vsel %vm442, %v3910, %v3919
      %v3922 = vshrl.u32 %v3860, 16
      %v3924 = vrot.slane %v3922, 6
      %v3925 = vshll.u32 %v3860, 16
      %v3927 = vrot.slane %v3925, 7
      %v3928 = vor.u32 %v3924, %v3927
      %v3929 = vsel %vm442, %v3919, %v3928
      %v3931 = vshrl.u32 %v3861, 16
      %v3933 = vrot.slane %v3931, 6
      %v3934 = vshll.u32 %v3861, 16
      %v3936 = vrot.slane %v3934, 7
      %v3937 = vor.u32 %v3933, %v3936
      %v3938 = vsel %vm442, %v3928, %v3937
      %v3940 = vshrl.u32 %v3862, 16
      %v3942 = vrot.slane %v3940, 6
      %v3943 = vshll.u32 %v3862, 16
      %v3945 = vrot.slane %v3943, 7
      %v3946 = vor.u32 %v3942, %v3945
      %v3947 = vsel %vm442, %v3937, %v3946
      %v3949 = vshrl.u32 %v3863, 16
      %v3951 = vrot.slane %v3949, 6
      %v3952 = vshll.u32 %v3863, 16
      %v3954 = vrot.slane %v3952, 7
      %v3955 = vor.u32 %v3951, %v3954
      %v3956 = vsel %vm442, %v3946, %v3955
      %v3958 = vshrl.u32 %v3864, 16
      %v3960 = vrot.slane %v3958, 6
      %v3961 = vshll.u32 %v3864, 16
      %v3963 = vrot.slane %v3961, 7
      %v3964 = vor.u32 %v3960, %v3963
      %v3965 = vsel %vm442, %v3955, %v3964
      %v3967 = vshrl.u32 %v3865, 16
      %v3969 = vrot.slane %v3967, 6
      %v3970 = vshll.u32 %v3865, 16
      %v3972 = vrot.slane %v3970, 7
      %v3973 = vor.u32 %v3969, %v3972
      %v3974 = vsel %vm442, %v3964, %v3973
      %v3976 = vshrl.u32 %v3866, 16
      %v3978 = vrot.slane %v3976, 6
      %v3979 = vshll.u32 %v3866, 16
      %v3981 = vrot.slane %v3979, 7
      %v3982 = vor.u32 %v3978, %v3981
      %v3983 = vsel %vm442, %v3973, %v3982
      %v3985 = vshrl.u32 %v3867, 16
      %v3987 = vrot.slane %v3985, 6
      %v3988 = vshll.u32 %v3867, 16
      %v3990 = vrot.slane %v3988, 7
      %v3991 = vor.u32 %v3987, %v3990
      %v3992 = vsel %vm442, %v3982, %v3991
      %v3994 = vshrl.u32 %v3868, 16
      %v3996 = vrot.slane %v3994, 6
      %v3997 = vshll.u32 %v3868, 16
      %v3999 = vrot.slane %v3997, 7
      %v4000 = vor.u32 %v3996, %v3999
      %v4001 = vsel %vm442, %v3991, %v4000
      %v4003 = vshrl.u32 %v3869, 16
      %v4005 = vrot.slane %v4003, 6
      %v4006 = vshll.u32 %v3869, 16
      %v4008 = vrot.slane %v4006, 7
      %v4009 = vor.u32 %v4005, %v4008
      %v4010 = vsel %vm442, %v4000, %v4009
      %v4012 = vshrl.u32 %v3870, 16
      %v4014 = vrot.slane %v4012, 6
      %v4015 = vshll.u32 %v3870, 16
      %v4017 = vrot.slane %v4015, 7
      %v4018 = vor.u32 %v4014, %v4017
      %v4019 = vsel %vm442, %v4009, %v4018
      %v4021 = vshrl.u32 %v3871, 16
      %v4023 = vrot.slane %v4021, 6
      %v4024 = vshll.u32 %v3871, 16
      %v4026 = vrot.slane %v4024, 7
      %v4027 = vor.u32 %v4023, %v4026
      %v4028 = vsel %vm442, %v4018, %v4027
      %v4030 = vshrl.u32 %v3872, 16
      %v4032 = vrot.slane %v4030, 6
      %v4033 = vshll.u32 %v3872, 16
      %v4035 = vrot.slane %v4033, 7
      %v4036 = vor.u32 %v4032, %v4035
      %v4037 = vsel %vm442, %v4027, %v4036
      %v4039 = vshrl.u32 %v3873, 16
      %v4041 = vrot.slane %v4039, 6
      %v4042 = vshll.u32 %v3873, 16
      %v4044 = vrot.slane %v4042, 7
      %v4045 = vor.u32 %v4041, %v4044
      %v4046 = vsel %vm442, %v4036, %v4045
      %v4048 = vshrl.u32 %v3874, 16
      %v4050 = vrot.slane %v4048, 6
      %v4051 = vshll.u32 %v3874, 16
      %v4053 = vrot.slane %v4051, 7
      %v4054 = vor.u32 %v4050, %v4053
      %v4055 = vsel %vm442, %v4045, %v4054
      %v4057 = vshrl.u32 %v3875, 16
      %v4059 = vrot.slane %v4057, 6
      %v4060 = vshll.u32 %v3875, 16
      %v4062 = vrot.slane %v4060, 7
      %v4063 = vor.u32 %v4059, %v4062
      %v4064 = vsel %vm442, %v4054, %v4063
      %v4065 = vrot.slane %v3881, 7
      %v4066 = vsel %vm442, %v4063, %v4065
      %v4087 = vsel %vm620, %v3892, %v3902
      %v4088 = vld [vmem:[%s3] sm:$0xf]
      %v4089 = vld [vmem:[%s3 + $0x4] sm:$0xf]
      %v4090 = vld [vmem:[%s3 + $0x8] sm:$0xf]
      %v4091 = vld [vmem:[%s3 + $0xc] sm:$0xf]
      %v4092 = vld [vmem:[%s3 + $0x10] sm:$0xf]
      %v4093 = vld [vmem:[%s3 + $0x14] sm:$0xf]
      %v4094 = vld [vmem:[%s3 + $0x18] sm:$0xf]
      %v4095 = vld [vmem:[%s3 + $0x1c] sm:$0xf]
      %v4096 = vld [vmem:[%s3 + $0x20] sm:$0xf]
      %v4097 = vld [vmem:[%s3 + $0x24] sm:$0xf]
      %v4098 = vld [vmem:[%s3 + $0x28] sm:$0xf]
      %v4099 = vld [vmem:[%s3 + $0x2c] sm:$0xf]
      %v4100 = vld [vmem:[%s3 + $0x30] sm:$0xf]
      %v4101 = vld [vmem:[%s3 + $0x34] sm:$0xf]
      %v4102 = vld [vmem:[%s3 + $0x38] sm:$0xf]
      %v4103 = vld [vmem:[%s3 + $0x3c] sm:$0xf]
      %v4106 = vrot.slane %v3876, 1
      %v4107 = vrot.slane %v3877, 1
      %v4108 = vsel %vm623, %v4106, %v4107
      %v4129 = vrot.slane %v3857, 7
      %v4130 = vrot.slane %v3858, 7
      %v4131 = vsel %vm627, %v4129, %v4130
      %v4132 = vrot.slane %v3859, 7
      %v4133 = vsel %vm627, %v4130, %v4132
      %v4134 = vrot.slane %v3860, 7
      %v4135 = vsel %vm627, %v4132, %v4134
      %v4136 = vrot.slane %v3861, 7
      %v4137 = vsel %vm627, %v4134, %v4136
      %v4138 = vrot.slane %v3862, 7
      %v4139 = vsel %vm627, %v4136, %v4138
      %v4140 = vrot.slane %v3863, 7
      %v4141 = vsel %vm627, %v4138, %v4140
      %v4142 = vrot.slane %v3864, 7
      %v4143 = vsel %vm627, %v4140, %v4142
      %v4144 = vrot.slane %v3865, 7
      %v4145 = vsel %vm627, %v4142, %v4144
      %v4146 = vrot.slane %v3866, 7
      %v4147 = vsel %vm627, %v4144, %v4146
      %v4148 = vrot.slane %v3867, 7
      %v4149 = vsel %vm627, %v4146, %v4148
      %v4150 = vrot.slane %v3868, 7
      %v4151 = vsel %vm627, %v4148, %v4150
      %v4152 = vrot.slane %v3869, 7
      %v4153 = vsel %vm627, %v4150, %v4152
      %v4154 = vrot.slane %v3870, 7
      %v4155 = vsel %vm627, %v4152, %v4154
      %v4156 = vrot.slane %v3871, 7
      %v4157 = vsel %vm627, %v4154, %v4156
      %v4158 = vrot.slane %v3872, 7
      %v4159 = vsel %vm627, %v4156, %v4158
      %v4160 = vrot.slane %v3873, 7
      %v4161 = vsel %vm627, %v4158, %v4160
      %v4162 = vrot.slane %v3874, 7
      %v4163 = vsel %vm627, %v4160, %v4162
      %v4164 = vrot.slane %v3875, 7
      %v4165 = vsel %vm627, %v4162, %v4164
      %v4166 = vrot.slane %v3876, 7
      %v4167 = vsel %vm627, %v4164, %v4166
      %v4189 = vsel %vm667, %v4107, %v4129
      %s4191 = scalar_lea.vmem %s3, 64
      %v4192 = vld [vmem:[%s4191] sm:$0xf]
      %v4193 = vld [vmem:[%s4191 + $0x4] sm:$0xf]
      %v4194 = vld [vmem:[%s4191 + $0x8] sm:$0xf]
      %v4195 = vld [vmem:[%s4191 + $0xc] sm:$0xf]
      %v4196 = vld [vmem:[%s4191 + $0x10] sm:$0xf]
      %v4197 = vld [vmem:[%s4191 + $0x14] sm:$0xf]
      %v4198 = vld [vmem:[%s4191 + $0x18] sm:$0xf]
      %v4199 = vld [vmem:[%s4191 + $0x1c] sm:$0xf]
      %v4200 = vld [vmem:[%s4191 + $0x20] sm:$0xf]
      %v4201 = vld [vmem:[%s4191 + $0x24] sm:$0xf]
      %v4202 = vld [vmem:[%s4191 + $0x28] sm:$0xf]
      %v4203 = vld [vmem:[%s4191 + $0x2c] sm:$0xf]
      %v4204 = vld [vmem:[%s4191 + $0x30] sm:$0xf]
      %v4205 = vld [vmem:[%s4191 + $0x34] sm:$0xf]
      %v4206 = vld [vmem:[%s4191 + $0x38] sm:$0xf]
      %v4207 = vld [vmem:[%s4191 + $0x3c] sm:$0xf]
      %v4224 = vunpack.c.l.b16 %v4192
      %v4225 = vunpack.c.l.b16 %v4193
      %v4226 = vunpack.c.l.b16 %v4194
      %v4227 = vunpack.c.l.b16 %v4195
      %v4228 = vunpack.c.l.b16 %v4196
      %v4229 = vunpack.c.l.b16 %v4197
      %v4230 = vunpack.c.l.b16 %v4198
      %v4231 = vunpack.c.l.b16 %v4199
      %v4232 = vunpack.c.l.b16 %v4200
      %v4233 = vunpack.c.l.b16 %v4201
      %v4234 = vunpack.c.l.b16 %v4202
      %v4235 = vunpack.c.l.b16 %v4203
      %v4236 = vunpack.c.l.b16 %v4204
      %v4237 = vunpack.c.l.b16 %v4205
      %v4238 = vunpack.c.l.b16 %v4206
      %v4239 = vunpack.c.l.b16 %v4207
      %v4240 = vpack.c.b16 %v4225, %v4224
      %v4241 = vpack.c.b16 %v4227, %v4226
      %v4242 = vpack.c.b16 %v4229, %v4228
      %v4243 = vpack.c.b16 %v4231, %v4230
      %v4244 = vpack.c.b16 %v4233, %v4232
      %v4245 = vpack.c.b16 %v4235, %v4234
      %v4246 = vpack.c.b16 %v4237, %v4236
      %v4247 = vpack.c.b16 %v4239, %v4238
      %4256 = vmatprep.subr.bf16.mxu0 0
      %4257 = vmatpush1.bf16.msra.mxu0 %v4247
      %4258 = vmatprep.subr.bf16.mxu0 0
      %4259 = vmatpush1.bf16.msra.mxu0 %v4246
      %4260 = vmatprep.subr.bf16.mxu0 0
      %4261 = vmatpush1.bf16.msra.mxu0 %v4245
      %4262 = vmatprep.subr.bf16.mxu0 0
      %4263 = vmatpush1.bf16.msra.mxu0 %v4244
      %4264 = vmatprep.subr.bf16.mxu0 0
      %4265 = vmatpush1.bf16.msra.mxu0 %v4243
      %4266 = vmatprep.subr.bf16.mxu0 0
      %4267 = vmatpush1.bf16.msra.mxu0 %v4242
      %4268 = vmatprep.subr.bf16.mxu0 0
      %4269 = vmatpush1.bf16.msra.mxu0 %v4241
      %4270 = vmatprep.subr.bf16.mxu0 0
      %4271 = vmatpush1.bf16.msra.mxu0 %v4240
      %4272 = vmatprep.subr.bf16.mxu0 0
      %4273 = vmatpush2.bf16.msra.mxu0 0
      %4274 = vmatprep.subr.bf16.mxu0 0
      %4275 = vmatpush2.bf16.msra.mxu0 0
      %4276 = vmatprep.subr.bf16.mxu0 0
      %4277 = vmatpush2.bf16.msra.mxu0 0
      %4278 = vmatprep.subr.bf16.mxu0 0
      %4279 = vmatpush2.bf16.msra.mxu0 0
      %4280 = vmatprep.subr.bf16.mxu0 0
      %4281 = vmatpush2.bf16.msra.mxu0 0
      %4282 = vmatprep.subr.bf16.mxu0 0
      %4283 = vmatpush2.bf16.msra.mxu0 0
      %4284 = vmatprep.subr.bf16.mxu0 0
      %4285 = vmatpush2.bf16.msra.mxu0 0
      %4286 = vmatprep.subr.bf16.mxu0 0
      %4287 = vmatpush2.bf16.msra.mxu0 0
      %4288 = vmatprep.mubr.bf16.mxu0 0
      %4289 = vmatmul.mubr.bf16.gmra.mxu0 %v4108
      %v4290 = vpop.f32.mrf.mxu0
      %v4291 = vadd.f32 0.0, %v4290
      %v4292 = vpop.f32.mrf.mxu0
      %v4293 = vpop.f32.mrf.mxu0
      %v4294 = vadd.f32 0.0, %v4293
      %v4295 = vpop.f32.mrf.mxu0
      %4296 = vmatprep.mubr.bf16.mxu0 0
      %4297 = vmatmul.mubr.bf16.gmra.mxu0 %v4189
      %v4298 = vpop.f32.mrf.mxu0
      %v4299 = vadd.f32 0.0, %v4298
      %v4300 = vpop.f32.mrf.mxu0
      %v4301 = vpop.f32.mrf.mxu0
      %v4302 = vadd.f32 0.0, %v4301
      %v4303 = vpop.f32.mrf.mxu0
      %4304 = vmatprep.mubr.bf16.mxu0 0
      %4305 = vmatmul.mubr.bf16.gmra.mxu0 %v4131
      %v4306 = vpop.f32.mrf.mxu0
      %v4307 = vadd.f32 0.0, %v4306
      %v4308 = vpop.f32.mrf.mxu0
      %v4309 = vpop.f32.mrf.mxu0
      %v4310 = vadd.f32 0.0, %v4309
      %v4311 = vpop.f32.mrf.mxu0
      %4312 = vmatprep.mubr.bf16.mxu0 0
      %4313 = vmatmul.mubr.bf16.gmra.mxu0 %v4133
      %v4314 = vpop.f32.mrf.mxu0
      %v4315 = vadd.f32 0.0, %v4314
      %v4316 = vpop.f32.mrf.mxu0
      %v4317 = vpop.f32.mrf.mxu0
      %v4318 = vadd.f32 0.0, %v4317
      %v4319 = vpop.f32.mrf.mxu0
      %4320 = vmatprep.mubr.bf16.mxu0 0
      %4321 = vmatmul.mubr.bf16.gmra.mxu0 %v4135
      %v4322 = vpop.f32.mrf.mxu0
      %v4323 = vadd.f32 0.0, %v4322
      %v4324 = vpop.f32.mrf.mxu0
      %v4325 = vpop.f32.mrf.mxu0
      %v4326 = vadd.f32 0.0, %v4325
      %v4327 = vpop.f32.mrf.mxu0
      %4328 = vmatprep.mubr.bf16.mxu0 0
      %4329 = vmatmul.mubr.bf16.gmra.mxu0 %v4137
      %v4330 = vpop.f32.mrf.mxu0
      %v4331 = vadd.f32 0.0, %v4330
      %v4332 = vpop.f32.mrf.mxu0
      %v4333 = vpop.f32.mrf.mxu0
      %v4334 = vadd.f32 0.0, %v4333
      %v4335 = vpop.f32.mrf.mxu0
      %4336 = vmatprep.mubr.bf16.mxu0 0
      %4337 = vmatmul.mubr.bf16.gmra.mxu0 %v4139
      %v4338 = vpop.f32.mrf.mxu0
      %v4339 = vadd.f32 0.0, %v4338
      %v4340 = vpop.f32.mrf.mxu0
      %v4341 = vpop.f32.mrf.mxu0
      %v4342 = vadd.f32 0.0, %v4341
      %v4343 = vpop.f32.mrf.mxu0
      %4344 = vmatprep.mubr.bf16.mxu0 0
      %4345 = vmatmul.mubr.bf16.gmra.mxu0 %v4141
      %v4346 = vpop.f32.mrf.mxu0
      %v4347 = vadd.f32 0.0, %v4346
      %v4348 = vpop.f32.mrf.mxu0
      %v4349 = vpop.f32.mrf.mxu0
      %v4350 = vadd.f32 0.0, %v4349
      %v4351 = vpop.f32.mrf.mxu0
      %4352 = vmatprep.mubr.bf16.mxu0 0
      %4353 = vmatmul.mubr.bf16.gmra.mxu0 %v4143
      %v4354 = vpop.f32.mrf.mxu0
      %v4355 = vadd.f32 0.0, %v4354
      %v4356 = vpop.f32.mrf.mxu0
      %v4357 = vpop.f32.mrf.mxu0
      %v4358 = vadd.f32 0.0, %v4357
      %v4359 = vpop.f32.mrf.mxu0
      %4360 = vmatprep.mubr.bf16.mxu0 0
      %4361 = vmatmul.mubr.bf16.gmra.mxu0 %v4145
      %v4362 = vpop.f32.mrf.mxu0
      %v4363 = vadd.f32 0.0, %v4362
      %v4364 = vpop.f32.mrf.mxu0
      %v4365 = vpop.f32.mrf.mxu0
      %v4366 = vadd.f32 0.0, %v4365
      %v4367 = vpop.f32.mrf.mxu0
      %4368 = vmatprep.mubr.bf16.mxu0 0
      %4369 = vmatmul.mubr.bf16.gmra.mxu0 %v4147
      %v4370 = vpop.f32.mrf.mxu0
      %v4371 = vadd.f32 0.0, %v4370
      %v4372 = vpop.f32.mrf.mxu0
      %v4373 = vpop.f32.mrf.mxu0
      %v4374 = vadd.f32 0.0, %v4373
      %v4375 = vpop.f32.mrf.mxu0
      %4376 = vmatprep.mubr.bf16.mxu0 0
      %4377 = vmatmul.mubr.bf16.gmra.mxu0 %v4149
      %v4378 = vpop.f32.mrf.mxu0
      %v4379 = vadd.f32 0.0, %v4378
      %v4380 = vpop.f32.mrf.mxu0
      %v4381 = vpop.f32.mrf.mxu0
      %v4382 = vadd.f32 0.0, %v4381
      %v4383 = vpop.f32.mrf.mxu0
      %4384 = vmatprep.mubr.bf16.mxu0 0
      %4385 = vmatmul.mubr.bf16.gmra.mxu0 %v4151
      %v4386 = vpop.f32.mrf.mxu0
      %v4387 = vadd.f32 0.0, %v4386
      %v4388 = vpop.f32.mrf.mxu0
      %v4389 = vpop.f32.mrf.mxu0
      %v4390 = vadd.f32 0.0, %v4389
      %v4391 = vpop.f32.mrf.mxu0
      %4392 = vmatprep.mubr.bf16.mxu0 0
      %4393 = vmatmul.mubr.bf16.gmra.mxu0 %v4153
      %v4394 = vpop.f32.mrf.mxu0
      %v4395 = vadd.f32 0.0, %v4394
      %v4396 = vpop.f32.mrf.mxu0
      %v4397 = vpop.f32.mrf.mxu0
      %v4398 = vadd.f32 0.0, %v4397
      %v4399 = vpop.f32.mrf.mxu0
      %4400 = vmatprep.mubr.bf16.mxu0 0
      %4401 = vmatmul.mubr.bf16.gmra.mxu0 %v4155
      %v4402 = vpop.f32.mrf.mxu0
      %v4403 = vadd.f32 0.0, %v4402
      %v4404 = vpop.f32.mrf.mxu0
      %v4405 = vpop.f32.mrf.mxu0
      %v4406 = vadd.f32 0.0, %v4405
      %v4407 = vpop.f32.mrf.mxu0
      %4408 = vmatprep.mubr.bf16.mxu0 0
      %4409 = vmatmul.mubr.bf16.gmra.mxu0 %v4157
      %v4410 = vpop.f32.mrf.mxu0
      %v4411 = vadd.f32 0.0, %v4410
      %v4412 = vpop.f32.mrf.mxu0
      %v4413 = vpop.f32.mrf.mxu0
      %v4414 = vadd.f32 0.0, %v4413
      %v4415 = vpop.f32.mrf.mxu0
      %4416 = vmatprep.mubr.bf16.mxu0 0
      %4417 = vmatmul.mubr.bf16.gmra.mxu0 %v4159
      %v4418 = vpop.f32.mrf.mxu0
      %v4419 = vadd.f32 0.0, %v4418
      %v4420 = vpop.f32.mrf.mxu0
      %v4421 = vpop.f32.mrf.mxu0
      %v4422 = vadd.f32 0.0, %v4421
      %v4423 = vpop.f32.mrf.mxu0
      %4424 = vmatprep.mubr.bf16.mxu0 0
      %4425 = vmatmul.mubr.bf16.gmra.mxu0 %v4161
      %v4426 = vpop.f32.mrf.mxu0
      %v4427 = vadd.f32 0.0, %v4426
      %v4428 = vpop.f32.mrf.mxu0
      %v4429 = vpop.f32.mrf.mxu0
      %v4430 = vadd.f32 0.0, %v4429
      %v4431 = vpop.f32.mrf.mxu0
      %4432 = vmatprep.mubr.bf16.mxu0 0
      %4433 = vmatmul.mubr.bf16.gmra.mxu0 %v4163
      %v4434 = vpop.f32.mrf.mxu0
      %v4435 = vadd.f32 0.0, %v4434
      %v4436 = vpop.f32.mrf.mxu0
      %v4437 = vpop.f32.mrf.mxu0
      %v4438 = vadd.f32 0.0, %v4437
      %v4439 = vpop.f32.mrf.mxu0
      %4440 = vmatprep.mubr.bf16.mxu0 0
      %4441 = vmatmul.mubr.bf16.gmra.mxu0 %v4165
      %v4442 = vpop.f32.mrf.mxu0
      %v4443 = vadd.f32 0.0, %v4442
      %v4444 = vpop.f32.mrf.mxu0
      %v4445 = vpop.f32.mrf.mxu0
      %v4446 = vadd.f32 0.0, %v4445
      %v4447 = vpop.f32.mrf.mxu0
      %4448 = vmatprep.mubr.bf16.mxu0 0
      %4449 = vmatmul.mubr.bf16.gmra.mxu0 %v4167
      %v4450 = vpop.f32.mrf.mxu0
      %v4451 = vadd.f32 0.0, %v4450
      %v4452 = vpop.f32.mrf.mxu0
      %v4453 = vpop.f32.mrf.mxu0
      %v4454 = vpop.f32.mrf.mxu0
      %4455 = vdwg.mxu0
      %v4472 = vunpack.c.l.b16 %v4088
      %v4473 = vunpack.c.l.b16 %v4089
      %v4474 = vunpack.c.l.b16 %v4090
      %v4475 = vunpack.c.l.b16 %v4091
      %v4476 = vunpack.c.l.b16 %v4092
      %v4477 = vunpack.c.l.b16 %v4093
      %v4478 = vunpack.c.l.b16 %v4094
      %v4479 = vunpack.c.l.b16 %v4095
      %v4480 = vunpack.c.l.b16 %v4096
      %v4481 = vunpack.c.l.b16 %v4097
      %v4482 = vunpack.c.l.b16 %v4098
      %v4483 = vunpack.c.l.b16 %v4099
      %v4484 = vunpack.c.l.b16 %v4100
      %v4485 = vunpack.c.l.b16 %v4101
      %v4486 = vunpack.c.l.b16 %v4102
      %v4487 = vunpack.c.l.b16 %v4103
      %v4488 = vpack.c.b16 %v4473, %v4472
      %v4489 = vpack.c.b16 %v4475, %v4474
      %v4490 = vpack.c.b16 %v4477, %v4476
      %v4491 = vpack.c.b16 %v4479, %v4478
      %v4492 = vpack.c.b16 %v4481, %v4480
      %v4493 = vpack.c.b16 %v4483, %v4482
      %v4494 = vpack.c.b16 %v4485, %v4484
      %v4495 = vpack.c.b16 %v4487, %v4486
      %4504 = vmatprep.subr.bf16.mxu0 0
      %4505 = vmatpush1.bf16.msra.mxu0 %v4495
      %4506 = vmatprep.subr.bf16.mxu0 0
      %4507 = vmatpush1.bf16.msra.mxu0 %v4494
      %4508 = vmatprep.subr.bf16.mxu0 0
      %4509 = vmatpush1.bf16.msra.mxu0 %v4493
      %4510 = vmatprep.subr.bf16.mxu0 0
      %4511 = vmatpush1.bf16.msra.mxu0 %v4492
      %4512 = vmatprep.subr.bf16.mxu0 0
      %4513 = vmatpush1.bf16.msra.mxu0 %v4491
      %4514 = vmatprep.subr.bf16.mxu0 0
      %4515 = vmatpush1.bf16.msra.mxu0 %v4490
      %4516 = vmatprep.subr.bf16.mxu0 0
      %4517 = vmatpush1.bf16.msra.mxu0 %v4489
      %4518 = vmatprep.subr.bf16.mxu0 0
      %4519 = vmatpush1.bf16.msra.mxu0 %v4488
      %4520 = vmatprep.subr.bf16.mxu0 0
      %4521 = vmatpush2.bf16.msra.mxu0 0
      %4522 = vmatprep.subr.bf16.mxu0 0
      %4523 = vmatpush2.bf16.msra.mxu0 0
      %4524 = vmatprep.subr.bf16.mxu0 0
      %4525 = vmatpush2.bf16.msra.mxu0 0
      %4526 = vmatprep.subr.bf16.mxu0 0
      %4527 = vmatpush2.bf16.msra.mxu0 0
      %4528 = vmatprep.subr.bf16.mxu0 0
      %4529 = vmatpush2.bf16.msra.mxu0 0
      %4530 = vmatprep.subr.bf16.mxu0 0
      %4531 = vmatpush2.bf16.msra.mxu0 0
      %4532 = vmatprep.subr.bf16.mxu0 0
      %4533 = vmatpush2.bf16.msra.mxu0 0
      %4534 = vmatprep.subr.bf16.mxu0 0
      %4535 = vmatpush2.bf16.msra.mxu0 0
      %4536 = vmatprep.mubr.bf16.mxu0 0
      %4537 = vmatmul.mubr.bf16.gmra.mxu0 %v3889
      %v4538 = vpop.f32.mrf.mxu0
      %v4539 = vadd.f32 %v4291, %v4538
      %v4540 = vpop.f32.mrf.mxu0
      %v4541 = vpop.f32.mrf.mxu0
      %v4542 = vadd.f32 %v4294, %v4541
      %v4543 = vpop.f32.mrf.mxu0
      %4544 = vmatprep.mubr.bf16.mxu0 0
      %4545 = vmatmul.mubr.bf16.gmra.mxu0 %v4087
      %v4546 = vpop.f32.mrf.mxu0
      %v4547 = vadd.f32 %v4299, %v4546
      %v4548 = vpop.f32.mrf.mxu0
      %v4549 = vpop.f32.mrf.mxu0
      %v4550 = vadd.f32 %v4302, %v4549
      %v4551 = vpop.f32.mrf.mxu0
      %4552 = vmatprep.mubr.bf16.mxu0 0
      %4553 = vmatmul.mubr.bf16.gmra.mxu0 %v3911
      %v4554 = vpop.f32.mrf.mxu0
      %v4555 = vadd.f32 %v4307, %v4554
      %v4556 = vpop.f32.mrf.mxu0
      %v4557 = vpop.f32.mrf.mxu0
      %v4558 = vadd.f32 %v4310, %v4557
      %v4559 = vpop.f32.mrf.mxu0
      %4560 = vmatprep.mubr.bf16.mxu0 0
      %4561 = vmatmul.mubr.bf16.gmra.mxu0 %v3920
      %v4562 = vpop.f32.mrf.mxu0
      %v4563 = vadd.f32 %v4315, %v4562
      %v4564 = vpop.f32.mrf.mxu0
      %v4565 = vpop.f32.mrf.mxu0
      %v4566 = vadd.f32 %v4318, %v4565
      %v4567 = vpop.f32.mrf.mxu0
      %4568 = vmatprep.mubr.bf16.mxu0 0
      %4569 = vmatmul.mubr.bf16.gmra.mxu0 %v3929
      %v4570 = vpop.f32.mrf.mxu0
      %v4571 = vadd.f32 %v4323, %v4570
      %v4572 = vpop.f32.mrf.mxu0
      %v4573 = vpop.f32.mrf.mxu0
      %v4574 = vadd.f32 %v4326, %v4573
      %v4575 = vpop.f32.mrf.mxu0
      %4576 = vmatprep.mubr.bf16.mxu0 0
      %4577 = vmatmul.mubr.bf16.gmra.mxu0 %v3938
      %v4578 = vpop.f32.mrf.mxu0
      %v4579 = vadd.f32 %v4331, %v4578
      %v4580 = vpop.f32.mrf.mxu0
      %v4581 = vpop.f32.mrf.mxu0
      %v4582 = vadd.f32 %v4334, %v4581
      %v4583 = vpop.f32.mrf.mxu0
      %4584 = vmatprep.mubr.bf16.mxu0 0
      %4585 = vmatmul.mubr.bf16.gmra.mxu0 %v3947
      %v4586 = vpop.f32.mrf.mxu0
      %v4587 = vadd.f32 %v4339, %v4586
      %v4588 = vpop.f32.mrf.mxu0
      %v4589 = vpop.f32.mrf.mxu0
      %v4590 = vadd.f32 %v4342, %v4589
      %v4591 = vpop.f32.mrf.mxu0
      %4592 = vmatprep.mubr.bf16.mxu0 0
      %4593 = vmatmul.mubr.bf16.gmra.mxu0 %v3956
      %v4594 = vpop.f32.mrf.mxu0
      %v4595 = vadd.f32 %v4347, %v4594
      %v4596 = vpop.f32.mrf.mxu0
      %v4597 = vpop.f32.mrf.mxu0
      %v4598 = vadd.f32 %v4350, %v4597
      %v4599 = vpop.f32.mrf.mxu0
      %4600 = vmatprep.mubr.bf16.mxu0 0
      %4601 = vmatmul.mubr.bf16.gmra.mxu0 %v3965
      %v4602 = vpop.f32.mrf.mxu0
      %v4603 = vadd.f32 %v4355, %v4602
      %v4604 = vpop.f32.mrf.mxu0
      %v4605 = vpop.f32.mrf.mxu0
      %v4606 = vadd.f32 %v4358, %v4605
      %v4607 = vpop.f32.mrf.mxu0
      %4608 = vmatprep.mubr.bf16.mxu0 0
      %4609 = vmatmul.mubr.bf16.gmra.mxu0 %v3974
      %v4610 = vpop.f32.mrf.mxu0
      %v4611 = vadd.f32 %v4363, %v4610
      %v4612 = vpop.f32.mrf.mxu0
      %v4613 = vpop.f32.mrf.mxu0
      %v4614 = vadd.f32 %v4366, %v4613
      %v4615 = vpop.f32.mrf.mxu0
      %4616 = vmatprep.mubr.bf16.mxu0 0
      %4617 = vmatmul.mubr.bf16.gmra.mxu0 %v3983
      %v4618 = vpop.f32.mrf.mxu0
      %v4619 = vadd.f32 %v4371, %v4618
      %v4620 = vpop.f32.mrf.mxu0
      %v4621 = vpop.f32.mrf.mxu0
      %v4622 = vadd.f32 %v4374, %v4621
      %v4623 = vpop.f32.mrf.mxu0
      %4624 = vmatprep.mubr.bf16.mxu0 0
      %4625 = vmatmul.mubr.bf16.gmra.mxu0 %v3992
      %v4626 = vpop.f32.mrf.mxu0
      %v4627 = vadd.f32 %v4379, %v4626
      %v4628 = vpop.f32.mrf.mxu0
      %v4629 = vpop.f32.mrf.mxu0
      %v4630 = vadd.f32 %v4382, %v4629
      %v4631 = vpop.f32.mrf.mxu0
      %4632 = vmatprep.mubr.bf16.mxu0 0
      %4633 = vmatmul.mubr.bf16.gmra.mxu0 %v4001
      %v4634 = vpop.f32.mrf.mxu0
      %v4635 = vadd.f32 %v4387, %v4634
      %v4636 = vpop.f32.mrf.mxu0
      %v4637 = vpop.f32.mrf.mxu0
      %v4638 = vadd.f32 %v4390, %v4637
      %v4639 = vpop.f32.mrf.mxu0
      %4640 = vmatprep.mubr.bf16.mxu0 0
      %4641 = vmatmul.mubr.bf16.gmra.mxu0 %v4010
      %v4642 = vpop.f32.mrf.mxu0
      %v4643 = vadd.f32 %v4395, %v4642
      %v4644 = vpop.f32.mrf.mxu0
      %v4645 = vpop.f32.mrf.mxu0
      %v4646 = vadd.f32 %v4398, %v4645
      %v4647 = vpop.f32.mrf.mxu0
      %4648 = vmatprep.mubr.bf16.mxu0 0
      %4649 = vmatmul.mubr.bf16.gmra.mxu0 %v4019
      %v4650 = vpop.f32.mrf.mxu0
      %v4651 = vadd.f32 %v4403, %v4650
      %v4652 = vpop.f32.mrf.mxu0
      %v4653 = vpop.f32.mrf.mxu0
      %v4654 = vadd.f32 %v4406, %v4653
      %v4655 = vpop.f32.mrf.mxu0
      %4656 = vmatprep.mubr.bf16.mxu0 0
      %4657 = vmatmul.mubr.bf16.gmra.mxu0 %v4028
      %v4658 = vpop.f32.mrf.mxu0
      %v4659 = vadd.f32 %v4411, %v4658
      %v4660 = vpop.f32.mrf.mxu0
      %v4661 = vpop.f32.mrf.mxu0
      %v4662 = vadd.f32 %v4414, %v4661
      %v4663 = vpop.f32.mrf.mxu0
      %4664 = vmatprep.mubr.bf16.mxu0 0
      %4665 = vmatmul.mubr.bf16.gmra.mxu0 %v4037
      %v4666 = vpop.f32.mrf.mxu0
      %v4667 = vadd.f32 %v4419, %v4666
      %v4668 = vpop.f32.mrf.mxu0
      %v4669 = vpop.f32.mrf.mxu0
      %v4670 = vadd.f32 %v4422, %v4669
      %v4671 = vpop.f32.mrf.mxu0
      %4672 = vmatprep.mubr.bf16.mxu0 0
      %4673 = vmatmul.mubr.bf16.gmra.mxu0 %v4046
      %v4674 = vpop.f32.mrf.mxu0
      %v4675 = vadd.f32 %v4427, %v4674
      %v4676 = vpop.f32.mrf.mxu0
      %v4677 = vpop.f32.mrf.mxu0
      %v4678 = vadd.f32 %v4430, %v4677
      %v4679 = vpop.f32.mrf.mxu0
      %4680 = vmatprep.mubr.bf16.mxu0 0
      %4681 = vmatmul.mubr.bf16.gmra.mxu0 %v4055
      %v4682 = vpop.f32.mrf.mxu0
      %v4683 = vadd.f32 %v4435, %v4682
      %v4684 = vpop.f32.mrf.mxu0
      %v4685 = vpop.f32.mrf.mxu0
      %v4686 = vadd.f32 %v4438, %v4685
      %v4687 = vpop.f32.mrf.mxu0
      %4688 = vmatprep.mubr.bf16.mxu0 0
      %4689 = vmatmul.mubr.bf16.gmra.mxu0 %v4064
      %v4690 = vpop.f32.mrf.mxu0
      %v4691 = vadd.f32 %v4443, %v4690
      %v4692 = vpop.f32.mrf.mxu0
      %v4693 = vpop.f32.mrf.mxu0
      %v4694 = vadd.f32 %v4446, %v4693
      %v4695 = vpop.f32.mrf.mxu0
      %4696 = vmatprep.mubr.bf16.mxu0 0
      %4697 = vmatmul.mubr.bf16.gmra.mxu0 %v4066
      %v4698 = vpop.f32.mrf.mxu0
      %v4699 = vadd.f32 %v4451, %v4698
      %v4700 = vpop.f32.mrf.mxu0
      %v4701 = vpop.f32.mrf.mxu0
      %v4702 = vpop.f32.mrf.mxu0
      %4703 = vdwg.mxu0
      %v4704 = vrot.slane %v3879, 1
      %v4705 = vrot.slane %v3881, 2
      %v4706 = vor.u32 %v4704, %v4705
      %v4707 = vrot.slane %v3890, 1
      %v4708 = vrot.slane %v3886, 2
      %v4709 = vor.u32 %v4707, %v4708
      %v4710 = vsel %vm1206, %v4706, %v4709
      %v4713 = vrot.slane %v3896, 7
      %v4714 = vor.u32 %v4713, %v3899
      %v4715 = vrot.slane %v3904, 7
      %v4716 = vor.u32 %v4715, %v3907
      %v4717 = vsel %vm1215, %v4713, %v4716
      %v4718 = vrot.slane %v3913, 7
      %v4719 = vor.u32 %v4718, %v3916
      %v4720 = vsel %vm1215, %v4715, %v4719
      %v4721 = vrot.slane %v3922, 7
      %v4722 = vor.u32 %v4721, %v3925
      %v4723 = vsel %vm1215, %v4718, %v4722
      %v4724 = vrot.slane %v3931, 7
      %v4725 = vor.u32 %v4724, %v3934
      %v4726 = vsel %vm1215, %v4721, %v4725
      %v4727 = vrot.slane %v3940, 7
      %v4728 = vor.u32 %v4727, %v3943
      %v4729 = vsel %vm1215, %v4724, %v4728
      %v4730 = vrot.slane %v3949, 7
      %v4731 = vor.u32 %v4730, %v3952
      %v4732 = vsel %vm1215, %v4727, %v4731
      %v4733 = vrot.slane %v3958, 7
      %v4734 = vor.u32 %v4733, %v3961
      %v4735 = vsel %vm1215, %v4730, %v4734
      %v4736 = vrot.slane %v3967, 7
      %v4737 = vor.u32 %v4736, %v3970
      %v4738 = vsel %vm1215, %v4733, %v4737
      %v4739 = vrot.slane %v3976, 7
      %v4740 = vor.u32 %v4739, %v3979
      %v4741 = vsel %vm1215, %v4736, %v4740
      %v4742 = vrot.slane %v3985, 7
      %v4743 = vor.u32 %v4742, %v3988
      %v4744 = vsel %vm1215, %v4739, %v4743
      %v4745 = vrot.slane %v3994, 7
      %v4746 = vor.u32 %v4745, %v3997
      %v4747 = vsel %vm1215, %v4742, %v4746
      %v4748 = vrot.slane %v4003, 7
      %v4749 = vor.u32 %v4748, %v4006
      %v4750 = vsel %vm1215, %v4745, %v4749
      %v4751 = vrot.slane %v4012, 7
      %v4752 = vor.u32 %v4751, %v4015
      %v4753 = vsel %vm1215, %v4748, %v4752
      %v4754 = vrot.slane %v4021, 7
      %v4755 = vor.u32 %v4754, %v4024
      %v4756 = vsel %vm1215, %v4751, %v4755
      %v4757 = vrot.slane %v4030, 7
      %v4758 = vor.u32 %v4757, %v4033
      %v4759 = vsel %vm1215, %v4754, %v4758
      %v4760 = vrot.slane %v4039, 7
      %v4761 = vor.u32 %v4760, %v4042
      %v4762 = vsel %vm1215, %v4757, %v4761
      %v4763 = vrot.slane %v4048, 7
      %v4764 = vor.u32 %v4763, %v4051
      %v4765 = vsel %vm1215, %v4760, %v4764
      %v4766 = vrot.slane %v4057, 7
      %v4767 = vor.u32 %v4766, %v4060
      %v4768 = vsel %vm1215, %v4763, %v4767
      %v4769 = vrot.slane %v3879, 7
      %v4770 = vor.u32 %v4769, %v3881
      %v4771 = vsel %vm1215, %v4766, %v4770
      %v4792 = vsel %vm1278, %v4707, %v4714
      %s4793 = scalar_lea.vmem %s3, 128
      %v4794 = vld [vmem:[%s4793] sm:$0xf]
      %v4795 = vld [vmem:[%s4793 + $0x4] sm:$0xf]
      %v4796 = vld [vmem:[%s4793 + $0x8] sm:$0xf]
      %v4797 = vld [vmem:[%s4793 + $0xc] sm:$0xf]
      %v4798 = vld [vmem:[%s4793 + $0x10] sm:$0xf]
      %v4799 = vld [vmem:[%s4793 + $0x14] sm:$0xf]
      %v4800 = vld [vmem:[%s4793 + $0x18] sm:$0xf]
      %v4801 = vld [vmem:[%s4793 + $0x1c] sm:$0xf]
      %v4802 = vld [vmem:[%s4793 + $0x20] sm:$0xf]
      %v4803 = vld [vmem:[%s4793 + $0x24] sm:$0xf]
      %v4804 = vld [vmem:[%s4793 + $0x28] sm:$0xf]
      %v4805 = vld [vmem:[%s4793 + $0x2c] sm:$0xf]
      %v4806 = vld [vmem:[%s4793 + $0x30] sm:$0xf]
      %v4807 = vld [vmem:[%s4793 + $0x34] sm:$0xf]
      %v4808 = vld [vmem:[%s4793 + $0x38] sm:$0xf]
      %v4809 = vld [vmem:[%s4793 + $0x3c] sm:$0xf]
      %v4826 = vunpack.c.l.b16 %v4794
      %v4827 = vunpack.c.l.b16 %v4795
      %v4828 = vunpack.c.l.b16 %v4796
      %v4829 = vunpack.c.l.b16 %v4797
      %v4830 = vunpack.c.l.b16 %v4798
      %v4831 = vunpack.c.l.b16 %v4799
      %v4832 = vunpack.c.l.b16 %v4800
      %v4833 = vunpack.c.l.b16 %v4801
      %v4834 = vunpack.c.l.b16 %v4802
      %v4835 = vunpack.c.l.b16 %v4803
      %v4836 = vunpack.c.l.b16 %v4804
      %v4837 = vunpack.c.l.b16 %v4805
      %v4838 = vunpack.c.l.b16 %v4806
      %v4839 = vunpack.c.l.b16 %v4807
      %v4840 = vunpack.c.l.b16 %v4808
      %v4841 = vunpack.c.l.b16 %v4809
      %v4842 = vpack.c.b16 %v4827, %v4826
      %v4843 = vpack.c.b16 %v4829, %v4828
      %v4844 = vpack.c.b16 %v4831, %v4830
      %v4845 = vpack.c.b16 %v4833, %v4832
      %v4846 = vpack.c.b16 %v4835, %v4834
      %v4847 = vpack.c.b16 %v4837, %v4836
      %v4848 = vpack.c.b16 %v4839, %v4838
      %v4849 = vpack.c.b16 %v4841, %v4840
      %4858 = vmatprep.subr.bf16.mxu0 0
      %4859 = vmatpush1.bf16.msra.mxu0 %v4849
      %4860 = vmatprep.subr.bf16.mxu0 0
      %4861 = vmatpush1.bf16.msra.mxu0 %v4848
      %4862 = vmatprep.subr.bf16.mxu0 0
      %4863 = vmatpush1.bf16.msra.mxu0 %v4847
      %4864 = vmatprep.subr.bf16.mxu0 0
      %4865 = vmatpush1.bf16.msra.mxu0 %v4846
      %4866 = vmatprep.subr.bf16.mxu0 0
      %4867 = vmatpush1.bf16.msra.mxu0 %v4845
      %4868 = vmatprep.subr.bf16.mxu0 0
      %4869 = vmatpush1.bf16.msra.mxu0 %v4844
      %4870 = vmatprep.subr.bf16.mxu0 0
      %4871 = vmatpush1.bf16.msra.mxu0 %v4843
      %4872 = vmatprep.subr.bf16.mxu0 0
      %4873 = vmatpush1.bf16.msra.mxu0 %v4842
      %4874 = vmatprep.subr.bf16.mxu0 0
      %4875 = vmatpush2.bf16.msra.mxu0 0
      %4876 = vmatprep.subr.bf16.mxu0 0
      %4877 = vmatpush2.bf16.msra.mxu0 0
      %4878 = vmatprep.subr.bf16.mxu0 0
      %4879 = vmatpush2.bf16.msra.mxu0 0
      %4880 = vmatprep.subr.bf16.mxu0 0
      %4881 = vmatpush2.bf16.msra.mxu0 0
      %4882 = vmatprep.subr.bf16.mxu0 0
      %4883 = vmatpush2.bf16.msra.mxu0 0
      %4884 = vmatprep.subr.bf16.mxu0 0
      %4885 = vmatpush2.bf16.msra.mxu0 0
      %4886 = vmatprep.subr.bf16.mxu0 0
      %4887 = vmatpush2.bf16.msra.mxu0 0
      %4888 = vmatprep.subr.bf16.mxu0 0
      %4889 = vmatpush2.bf16.msra.mxu0 0
      %4890 = vmatprep.mubr.bf16.mxu0 0
      %4891 = vmatmul.mubr.bf16.gmra.mxu0 %v4710
      %v4892 = vpop.f32.mrf.mxu0
      %v4893 = vadd.f32 0.0, %v4892
      %v4894 = vpop.f32.mrf.mxu0
      %v4895 = vpop.f32.mrf.mxu0
      %v4896 = vadd.f32 0.0, %v4895
      %v4897 = vpop.f32.mrf.mxu0
      %4898 = vmatprep.mubr.bf16.mxu0 0
      %4899 = vmatmul.mubr.bf16.gmra.mxu0 %v4792
      %v4900 = vpop.f32.mrf.mxu0
      %v4901 = vadd.f32 0.0, %v4900
      %v4902 = vpop.f32.mrf.mxu0
      %v4903 = vpop.f32.mrf.mxu0
      %v4904 = vadd.f32 0.0, %v4903
      %v4905 = vpop.f32.mrf.mxu0
      %4906 = vmatprep.mubr.bf16.mxu0 0
      %4907 = vmatmul.mubr.bf16.gmra.mxu0 %v4717
      %v4908 = vpop.f32.mrf.mxu0
      %v4909 = vadd.f32 0.0, %v4908
      %v4910 = vpop.f32.mrf.mxu0
      %v4911 = vpop.f32.mrf.mxu0
      %v4912 = vadd.f32 0.0, %v4911
      %v4913 = vpop.f32.mrf.mxu0
      %4914 = vmatprep.mubr.bf16.mxu0 0
      %4915 = vmatmul.mubr.bf16.gmra.mxu0 %v4720
      %v4916 = vpop.f32.mrf.mxu0
      %v4917 = vadd.f32 0.0, %v4916
      %v4918 = vpop.f32.mrf.mxu0
      %v4919 = vpop.f32.mrf.mxu0
      %v4920 = vadd.f32 0.0, %v4919
      %v4921 = vpop.f32.mrf.mxu0
      %4922 = vmatprep.mubr.bf16.mxu0 0
      %4923 = vmatmul.mubr.bf16.gmra.mxu0 %v4723
      %v4924 = vpop.f32.mrf.mxu0
      %v4925 = vadd.f32 0.0, %v4924
      %v4926 = vpop.f32.mrf.mxu0
      %v4927 = vpop.f32.mrf.mxu0
      %v4928 = vadd.f32 0.0, %v4927
      %v4929 = vpop.f32.mrf.mxu0
      %4930 = vmatprep.mubr.bf16.mxu0 0
      %4931 = vmatmul.mubr.bf16.gmra.mxu0 %v4726
      %v4932 = vpop.f32.mrf.mxu0
      %v4933 = vadd.f32 0.0, %v4932
      %v4934 = vpop.f32.mrf.mxu0
      %v4935 = vpop.f32.mrf.mxu0
      %v4936 = vadd.f32 0.0, %v4935
      %v4937 = vpop.f32.mrf.mxu0
      %4938 = vmatprep.mubr.bf16.mxu0 0
      %4939 = vmatmul.mubr.bf16.gmra.mxu0 %v4729
      %v4940 = vpop.f32.mrf.mxu0
      %v4941 = vadd.f32 0.0, %v4940
      %v4942 = vpop.f32.mrf.mxu0
      %v4943 = vpop.f32.mrf.mxu0
      %v4944 = vadd.f32 0.0, %v4943
      %v4945 = vpop.f32.mrf.mxu0
      %4946 = vmatprep.mubr.bf16.mxu0 0
      %4947 = vmatmul.mubr.bf16.gmra.mxu0 %v4732
      %v4948 = vpop.f32.mrf.mxu0
      %v4949 = vadd.f32 0.0, %v4948
      %v4950 = vpop.f32.mrf.mxu0
      %v4951 = vpop.f32.mrf.mxu0
      %v4952 = vadd.f32 0.0, %v4951
      %v4953 = vpop.f32.mrf.mxu0
      %4954 = vmatprep.mubr.bf16.mxu0 0
      %4955 = vmatmul.mubr.bf16.gmra.mxu0 %v4735
      %v4956 = vpop.f32.mrf.mxu0
      %v4957 = vadd.f32 0.0, %v4956
      %v4958 = vpop.f32.mrf.mxu0
      %v4959 = vpop.f32.mrf.mxu0
      %v4960 = vadd.f32 0.0, %v4959
      %v4961 = vpop.f32.mrf.mxu0
      %4962 = vmatprep.mubr.bf16.mxu0 0
      %4963 = vmatmul.mubr.bf16.gmra.mxu0 %v4738
      %v4964 = vpop.f32.mrf.mxu0
      %v4965 = vadd.f32 0.0, %v4964
      %v4966 = vpop.f32.mrf.mxu0
      %v4967 = vpop.f32.mrf.mxu0
      %v4968 = vadd.f32 0.0, %v4967
      %v4969 = vpop.f32.mrf.mxu0
      %4970 = vmatprep.mubr.bf16.mxu0 0
      %4971 = vmatmul.mubr.bf16.gmra.mxu0 %v4741
      %v4972 = vpop.f32.mrf.mxu0
      %v4973 = vadd.f32 0.0, %v4972
      %v4974 = vpop.f32.mrf.mxu0
      %v4975 = vpop.f32.mrf.mxu0
      %v4976 = vadd.f32 0.0, %v4975
      %v4977 = vpop.f32.mrf.mxu0
      %4978 = vmatprep.mubr.bf16.mxu0 0
      %4979 = vmatmul.mubr.bf16.gmra.mxu0 %v4744
      %v4980 = vpop.f32.mrf.mxu0
      %v4981 = vadd.f32 0.0, %v4980
      %v4982 = vpop.f32.mrf.mxu0
      %v4983 = vpop.f32.mrf.mxu0
      %v4984 = vadd.f32 0.0, %v4983
      %v4985 = vpop.f32.mrf.mxu0
      %4986 = vmatprep.mubr.bf16.mxu0 0
      %4987 = vmatmul.mubr.bf16.gmra.mxu0 %v4747
      %v4988 = vpop.f32.mrf.mxu0
      %v4989 = vadd.f32 0.0, %v4988
      %v4990 = vpop.f32.mrf.mxu0
      %v4991 = vpop.f32.mrf.mxu0
      %v4992 = vadd.f32 0.0, %v4991
      %v4993 = vpop.f32.mrf.mxu0
      %4994 = vmatprep.mubr.bf16.mxu0 0
      %4995 = vmatmul.mubr.bf16.gmra.mxu0 %v4750
      %v4996 = vpop.f32.mrf.mxu0
      %v4997 = vadd.f32 0.0, %v4996
      %v4998 = vpop.f32.mrf.mxu0
      %v4999 = vpop.f32.mrf.mxu0
      %v5000 = vadd.f32 0.0, %v4999
      %v5001 = vpop.f32.mrf.mxu0
      %5002 = vmatprep.mubr.bf16.mxu0 0
      %5003 = vmatmul.mubr.bf16.gmra.mxu0 %v4753
      %v5004 = vpop.f32.mrf.mxu0
      %v5005 = vadd.f32 0.0, %v5004
      %v5006 = vpop.f32.mrf.mxu0
      %v5007 = vpop.f32.mrf.mxu0
      %v5008 = vadd.f32 0.0, %v5007
      %v5009 = vpop.f32.mrf.mxu0
      %5010 = vmatprep.mubr.bf16.mxu0 0
      %5011 = vmatmul.mubr.bf16.gmra.mxu0 %v4756
      %v5012 = vpop.f32.mrf.mxu0
      %v5013 = vadd.f32 0.0, %v5012
      %v5014 = vpop.f32.mrf.mxu0
      %v5015 = vpop.f32.mrf.mxu0
      %v5016 = vadd.f32 0.0, %v5015
      %v5017 = vpop.f32.mrf.mxu0
      %5018 = vmatprep.mubr.bf16.mxu0 0
      %5019 = vmatmul.mubr.bf16.gmra.mxu0 %v4759
      %v5020 = vpop.f32.mrf.mxu0
      %v5021 = vadd.f32 0.0, %v5020
      %v5022 = vpop.f32.mrf.mxu0
      %v5023 = vpop.f32.mrf.mxu0
      %v5024 = vadd.f32 0.0, %v5023
      %v5025 = vpop.f32.mrf.mxu0
      %5026 = vmatprep.mubr.bf16.mxu0 0
      %5027 = vmatmul.mubr.bf16.gmra.mxu0 %v4762
      %v5028 = vpop.f32.mrf.mxu0
      %v5029 = vadd.f32 0.0, %v5028
      %v5030 = vpop.f32.mrf.mxu0
      %v5031 = vpop.f32.mrf.mxu0
      %v5032 = vadd.f32 0.0, %v5031
      %v5033 = vpop.f32.mrf.mxu0
      %5034 = vmatprep.mubr.bf16.mxu0 0
      %5035 = vmatmul.mubr.bf16.gmra.mxu0 %v4765
      %v5036 = vpop.f32.mrf.mxu0
      %v5037 = vadd.f32 0.0, %v5036
      %v5038 = vpop.f32.mrf.mxu0
      %v5039 = vpop.f32.mrf.mxu0
      %v5040 = vadd.f32 0.0, %v5039
      %v5041 = vpop.f32.mrf.mxu0
      %5042 = vmatprep.mubr.bf16.mxu0 0
      %5043 = vmatmul.mubr.bf16.gmra.mxu0 %v4768
      %v5044 = vpop.f32.mrf.mxu0
      %v5045 = vadd.f32 0.0, %v5044
      %v5046 = vpop.f32.mrf.mxu0
      %v5047 = vpop.f32.mrf.mxu0
      %v5048 = vadd.f32 0.0, %v5047
      %v5049 = vpop.f32.mrf.mxu0
      %5050 = vmatprep.mubr.bf16.mxu0 0
      %5051 = vmatmul.mubr.bf16.gmra.mxu0 %v4771
      %v5052 = vpop.f32.mrf.mxu0
      %v5053 = vadd.f32 0.0, %v5052
      %v5054 = vpop.f32.mrf.mxu0
      %v5055 = vpop.f32.mrf.mxu0
      %v5056 = vpop.f32.mrf.mxu0
      %5057 = vdwg.mxu0
      %v5058 = vadd.f32 %v4539, %v4893
      %v5059 = vadd.f32 %v4542, %v4896
      %v5060 = vadd.f32 %v4547, %v4901
      %v5061 = vadd.f32 %v4550, %v4904
      %v5062 = vadd.f32 %v4555, %v4909
      %v5063 = vadd.f32 %v4558, %v4912
      %v5064 = vadd.f32 %v4563, %v4917
      %v5065 = vadd.f32 %v4566, %v4920
      %v5066 = vadd.f32 %v4571, %v4925
      %v5067 = vadd.f32 %v4574, %v4928
      %v5068 = vadd.f32 %v4579, %v4933
      %v5069 = vadd.f32 %v4582, %v4936
      %v5070 = vadd.f32 %v4587, %v4941
      %v5071 = vadd.f32 %v4590, %v4944
      %v5072 = vadd.f32 %v4595, %v4949
      %v5073 = vadd.f32 %v4598, %v4952
      %v5074 = vadd.f32 %v4603, %v4957
      %v5075 = vadd.f32 %v4606, %v4960
      %v5076 = vadd.f32 %v4611, %v4965
      %v5077 = vadd.f32 %v4614, %v4968
      %v5078 = vadd.f32 %v4619, %v4973
      %v5079 = vadd.f32 %v4622, %v4976
      %v5080 = vadd.f32 %v4627, %v4981
      %v5081 = vadd.f32 %v4630, %v4984
      %v5082 = vadd.f32 %v4635, %v4989
      %v5083 = vadd.f32 %v4638, %v4992
      %v5084 = vadd.f32 %v4643, %v4997
      %v5085 = vadd.f32 %v4646, %v5000
      %v5086 = vadd.f32 %v4651, %v5005
      %v5087 = vadd.f32 %v4654, %v5008
      %v5088 = vadd.f32 %v4659, %v5013
      %v5089 = vadd.f32 %v4662, %v5016
      %v5090 = vadd.f32 %v4667, %v5021
      %v5091 = vadd.f32 %v4670, %v5024
      %v5092 = vadd.f32 %v4675, %v5029
      %v5093 = vadd.f32 %v4678, %v5032
      %v5094 = vadd.f32 %v4683, %v5037
      %v5095 = vadd.f32 %v4686, %v5040
      %v5096 = vadd.f32 %v4691, %v5045
      %v5097 = vadd.f32 %v4694, %v5048
      %v5098 = vadd.f32 %v4699, %v5053
      %v5099 = vrot.slane %v3890, 7
      %v5100 = vor.u32 %v5099, %v3886
      %v5101 = vsel %vm1215, %v4769, %v5100
      %s5103 = scalar_lea.vmem %s3, 192
      %v5104 = vld [vmem:[%s5103] sm:$0xf]
      %v5105 = vld [vmem:[%s5103 + $0x4] sm:$0xf]
      %v5106 = vld [vmem:[%s5103 + $0x8] sm:$0xf]
      %v5107 = vld [vmem:[%s5103 + $0xc] sm:$0xf]
      %v5108 = vld [vmem:[%s5103 + $0x10] sm:$0xf]
      %v5109 = vld [vmem:[%s5103 + $0x14] sm:$0xf]
      %v5110 = vld [vmem:[%s5103 + $0x18] sm:$0xf]
      %v5111 = vld [vmem:[%s5103 + $0x1c] sm:$0xf]
      %v5112 = vld [vmem:[%s5103 + $0x20] sm:$0xf]
      %v5113 = vld [vmem:[%s5103 + $0x24] sm:$0xf]
      %v5114 = vld [vmem:[%s5103 + $0x28] sm:$0xf]
      %v5115 = vld [vmem:[%s5103 + $0x2c] sm:$0xf]
      %v5116 = vld [vmem:[%s5103 + $0x30] sm:$0xf]
      %v5117 = vld [vmem:[%s5103 + $0x34] sm:$0xf]
      %v5118 = vld [vmem:[%s5103 + $0x38] sm:$0xf]
      %v5119 = vld [vmem:[%s5103 + $0x3c] sm:$0xf]
      %v5136 = vunpack.c.l.b16 %v5104
      %v5137 = vunpack.c.l.b16 %v5105
      %v5138 = vunpack.c.l.b16 %v5106
      %v5139 = vunpack.c.l.b16 %v5107
      %v5140 = vunpack.c.l.b16 %v5108
      %v5141 = vunpack.c.l.b16 %v5109
      %v5142 = vunpack.c.l.b16 %v5110
      %v5143 = vunpack.c.l.b16 %v5111
      %v5144 = vunpack.c.l.b16 %v5112
      %v5145 = vunpack.c.l.b16 %v5113
      %v5146 = vunpack.c.l.b16 %v5114
      %v5147 = vunpack.c.l.b16 %v5115
      %v5148 = vunpack.c.l.b16 %v5116
      %v5149 = vunpack.c.l.b16 %v5117
      %v5150 = vunpack.c.l.b16 %v5118
      %v5151 = vunpack.c.l.b16 %v5119
      %v5152 = vpack.c.b16 %v5137, %v5136
      %v5153 = vpack.c.b16 %v5139, %v5138
      %v5154 = vpack.c.b16 %v5141, %v5140
      %v5155 = vpack.c.b16 %v5143, %v5142
      %v5156 = vpack.c.b16 %v5145, %v5144
      %v5157 = vpack.c.b16 %v5147, %v5146
      %v5158 = vpack.c.b16 %v5149, %v5148
      %v5159 = vpack.c.b16 %v5151, %v5150
      %5168 = vmatprep.subr.bf16.mxu0 0
      %5169 = vmatpush1.bf16.msra.mxu0 %v5159
      %5170 = vmatprep.subr.bf16.mxu0 0
      %5171 = vmatpush1.bf16.msra.mxu0 %v5158
      %5172 = vmatprep.subr.bf16.mxu0 0
      %5173 = vmatpush1.bf16.msra.mxu0 %v5157
      %5174 = vmatprep.subr.bf16.mxu0 0
      %5175 = vmatpush1.bf16.msra.mxu0 %v5156
      %5176 = vmatprep.subr.bf16.mxu0 0
      %5177 = vmatpush1.bf16.msra.mxu0 %v5155
      %5178 = vmatprep.subr.bf16.mxu0 0
      %5179 = vmatpush1.bf16.msra.mxu0 %v5154
      %5180 = vmatprep.subr.bf16.mxu0 0
      %5181 = vmatpush1.bf16.msra.mxu0 %v5153
      %5182 = vmatprep.subr.bf16.mxu0 0
      %5183 = vmatpush1.bf16.msra.mxu0 %v5152
      %5184 = vmatprep.subr.bf16.mxu0 0
      %5185 = vmatpush2.bf16.msra.mxu0 0
      %5186 = vmatprep.subr.bf16.mxu0 0
      %5187 = vmatpush2.bf16.msra.mxu0 0
      %5188 = vmatprep.subr.bf16.mxu0 0
      %5189 = vmatpush2.bf16.msra.mxu0 0
      %5190 = vmatprep.subr.bf16.mxu0 0
      %5191 = vmatpush2.bf16.msra.mxu0 0
      %5192 = vmatprep.subr.bf16.mxu0 0
      %5193 = vmatpush2.bf16.msra.mxu0 0
      %5194 = vmatprep.subr.bf16.mxu0 0
      %5195 = vmatpush2.bf16.msra.mxu0 0
      %5196 = vmatprep.subr.bf16.mxu0 0
      %5197 = vmatpush2.bf16.msra.mxu0 0
      %5198 = vmatprep.subr.bf16.mxu0 0
      %5199 = vmatpush2.bf16.msra.mxu0 0
      %5200 = vmatprep.mubr.bf16.mxu0 0
      %5201 = vmatmul.mubr.bf16.gmra.mxu0 %v4792
      %v5202 = vpop.f32.mrf.mxu0
      %v5203 = vadd.f32 0.0, %v5202
      %v5204 = vpop.f32.mrf.mxu0
      %v5205 = vpop.f32.mrf.mxu0
      %v5206 = vadd.f32 0.0, %v5205
      %v5207 = vpop.f32.mrf.mxu0
      %5208 = vmatprep.mubr.bf16.mxu0 0
      %5209 = vmatmul.mubr.bf16.gmra.mxu0 %v4717
      %v5210 = vpop.f32.mrf.mxu0
      %v5211 = vadd.f32 0.0, %v5210
      %v5212 = vpop.f32.mrf.mxu0
      %v5213 = vpop.f32.mrf.mxu0
      %v5214 = vadd.f32 0.0, %v5213
      %v5215 = vpop.f32.mrf.mxu0
      %5216 = vmatprep.mubr.bf16.mxu0 0
      %5217 = vmatmul.mubr.bf16.gmra.mxu0 %v4720
      %v5218 = vpop.f32.mrf.mxu0
      %v5219 = vadd.f32 0.0, %v5218
      %v5220 = vpop.f32.mrf.mxu0
      %v5221 = vpop.f32.mrf.mxu0
      %v5222 = vadd.f32 0.0, %v5221
      %v5223 = vpop.f32.mrf.mxu0
      %5224 = vmatprep.mubr.bf16.mxu0 0
      %5225 = vmatmul.mubr.bf16.gmra.mxu0 %v4723
      %v5226 = vpop.f32.mrf.mxu0
      %v5227 = vadd.f32 0.0, %v5226
      %v5228 = vpop.f32.mrf.mxu0
      %v5229 = vpop.f32.mrf.mxu0
      %v5230 = vadd.f32 0.0, %v5229
      %v5231 = vpop.f32.mrf.mxu0
      %5232 = vmatprep.mubr.bf16.mxu0 0
      %5233 = vmatmul.mubr.bf16.gmra.mxu0 %v4726
      %v5234 = vpop.f32.mrf.mxu0
      %v5235 = vadd.f32 0.0, %v5234
      %v5236 = vpop.f32.mrf.mxu0
      %v5237 = vpop.f32.mrf.mxu0
      %v5238 = vadd.f32 0.0, %v5237
      %v5239 = vpop.f32.mrf.mxu0
      %5240 = vmatprep.mubr.bf16.mxu0 0
      %5241 = vmatmul.mubr.bf16.gmra.mxu0 %v4729
      %v5242 = vpop.f32.mrf.mxu0
      %v5243 = vadd.f32 0.0, %v5242
      %v5244 = vpop.f32.mrf.mxu0
      %v5245 = vpop.f32.mrf.mxu0
      %v5246 = vadd.f32 0.0, %v5245
      %v5247 = vpop.f32.mrf.mxu0
      %5248 = vmatprep.mubr.bf16.mxu0 0
      %5249 = vmatmul.mubr.bf16.gmra.mxu0 %v4732
      %v5250 = vpop.f32.mrf.mxu0
      %v5251 = vadd.f32 0.0, %v5250
      %v5252 = vpop.f32.mrf.mxu0
      %v5253 = vpop.f32.mrf.mxu0
      %v5254 = vadd.f32 0.0, %v5253
      %v5255 = vpop.f32.mrf.mxu0
      %5256 = vmatprep.mubr.bf16.mxu0 0
      %5257 = vmatmul.mubr.bf16.gmra.mxu0 %v4735
      %v5258 = vpop.f32.mrf.mxu0
      %v5259 = vadd.f32 0.0, %v5258
      %v5260 = vpop.f32.mrf.mxu0
      %v5261 = vpop.f32.mrf.mxu0
      %v5262 = vadd.f32 0.0, %v5261
      %v5263 = vpop.f32.mrf.mxu0
      %5264 = vmatprep.mubr.bf16.mxu0 0
      %5265 = vmatmul.mubr.bf16.gmra.mxu0 %v4738
      %v5266 = vpop.f32.mrf.mxu0
      %v5267 = vadd.f32 0.0, %v5266
      %v5268 = vpop.f32.mrf.mxu0
      %v5269 = vpop.f32.mrf.mxu0
      %v5270 = vadd.f32 0.0, %v5269
      %v5271 = vpop.f32.mrf.mxu0
      %5272 = vmatprep.mubr.bf16.mxu0 0
      %5273 = vmatmul.mubr.bf16.gmra.mxu0 %v4741
      %v5274 = vpop.f32.mrf.mxu0
      %v5275 = vadd.f32 0.0, %v5274
      %v5276 = vpop.f32.mrf.mxu0
      %v5277 = vpop.f32.mrf.mxu0
      %v5278 = vadd.f32 0.0, %v5277
      %v5279 = vpop.f32.mrf.mxu0
      %5280 = vmatprep.mubr.bf16.mxu0 0
      %5281 = vmatmul.mubr.bf16.gmra.mxu0 %v4744
      %v5282 = vpop.f32.mrf.mxu0
      %v5283 = vadd.f32 0.0, %v5282
      %v5284 = vpop.f32.mrf.mxu0
      %v5285 = vpop.f32.mrf.mxu0
      %v5286 = vadd.f32 0.0, %v5285
      %v5287 = vpop.f32.mrf.mxu0
      %5288 = vmatprep.mubr.bf16.mxu0 0
      %5289 = vmatmul.mubr.bf16.gmra.mxu0 %v4747
      %v5290 = vpop.f32.mrf.mxu0
      %v5291 = vadd.f32 0.0, %v5290
      %v5292 = vpop.f32.mrf.mxu0
      %v5293 = vpop.f32.mrf.mxu0
      %v5294 = vadd.f32 0.0, %v5293
      %v5295 = vpop.f32.mrf.mxu0
      %5296 = vmatprep.mubr.bf16.mxu0 0
      %5297 = vmatmul.mubr.bf16.gmra.mxu0 %v4750
      %v5298 = vpop.f32.mrf.mxu0
      %v5299 = vadd.f32 0.0, %v5298
      %v5300 = vpop.f32.mrf.mxu0
      %v5301 = vpop.f32.mrf.mxu0
      %v5302 = vadd.f32 0.0, %v5301
      %v5303 = vpop.f32.mrf.mxu0
      %5304 = vmatprep.mubr.bf16.mxu0 0
      %5305 = vmatmul.mubr.bf16.gmra.mxu0 %v4753
      %v5306 = vpop.f32.mrf.mxu0
      %v5307 = vadd.f32 0.0, %v5306
      %v5308 = vpop.f32.mrf.mxu0
      %v5309 = vpop.f32.mrf.mxu0
      %v5310 = vadd.f32 0.0, %v5309
      %v5311 = vpop.f32.mrf.mxu0
      %5312 = vmatprep.mubr.bf16.mxu0 0
      %5313 = vmatmul.mubr.bf16.gmra.mxu0 %v4756
      %v5314 = vpop.f32.mrf.mxu0
      %v5315 = vadd.f32 0.0, %v5314
      %v5316 = vpop.f32.mrf.mxu0
      %v5317 = vpop.f32.mrf.mxu0
      %v5318 = vadd.f32 0.0, %v5317
      %v5319 = vpop.f32.mrf.mxu0
      %5320 = vmatprep.mubr.bf16.mxu0 0
      %5321 = vmatmul.mubr.bf16.gmra.mxu0 %v4759
      %v5322 = vpop.f32.mrf.mxu0
      %v5323 = vadd.f32 0.0, %v5322
      %v5324 = vpop.f32.mrf.mxu0
      %v5325 = vpop.f32.mrf.mxu0
      %v5326 = vadd.f32 0.0, %v5325
      %v5327 = vpop.f32.mrf.mxu0
      %5328 = vmatprep.mubr.bf16.mxu0 0
      %5329 = vmatmul.mubr.bf16.gmra.mxu0 %v4762
      %v5330 = vpop.f32.mrf.mxu0
      %v5331 = vadd.f32 0.0, %v5330
      %v5332 = vpop.f32.mrf.mxu0
      %v5333 = vpop.f32.mrf.mxu0
      %v5334 = vadd.f32 0.0, %v5333
      %v5335 = vpop.f32.mrf.mxu0
      %5336 = vmatprep.mubr.bf16.mxu0 0
      %5337 = vmatmul.mubr.bf16.gmra.mxu0 %v4765
      %v5338 = vpop.f32.mrf.mxu0
      %v5339 = vadd.f32 0.0, %v5338
      %v5340 = vpop.f32.mrf.mxu0
      %v5341 = vpop.f32.mrf.mxu0
      %v5342 = vadd.f32 0.0, %v5341
      %v5343 = vpop.f32.mrf.mxu0
      %5344 = vmatprep.mubr.bf16.mxu0 0
      %5345 = vmatmul.mubr.bf16.gmra.mxu0 %v4768
      %v5346 = vpop.f32.mrf.mxu0
      %v5347 = vadd.f32 0.0, %v5346
      %v5348 = vpop.f32.mrf.mxu0
      %v5349 = vpop.f32.mrf.mxu0
      %v5350 = vadd.f32 0.0, %v5349
      %v5351 = vpop.f32.mrf.mxu0
      %5352 = vmatprep.mubr.bf16.mxu0 0
      %5353 = vmatmul.mubr.bf16.gmra.mxu0 %v4771
      %v5354 = vpop.f32.mrf.mxu0
      %v5355 = vadd.f32 0.0, %v5354
      %v5356 = vpop.f32.mrf.mxu0
      %v5357 = vpop.f32.mrf.mxu0
      %v5358 = vadd.f32 0.0, %v5357
      %v5359 = vpop.f32.mrf.mxu0
      %5360 = vmatprep.mubr.bf16.mxu0 0
      %5361 = vmatmul.mubr.bf16.gmra.mxu0 %v5101
      %v5362 = vpop.f32.mrf.mxu0
      %v5363 = vadd.f32 0.0, %v5362
      %v5364 = vpop.f32.mrf.mxu0
      %v5365 = vpop.f32.mrf.mxu0
      %v5366 = vpop.f32.mrf.mxu0
      %5367 = vdwg.mxu0
      %v5368 = vadd.f32 %v5058, %v5203
      %v5369 = vadd.f32 %v5059, %v5206
      %v5370 = vadd.f32 %v5060, %v5211
      %v5371 = vadd.f32 %v5061, %v5214
      %v5372 = vadd.f32 %v5062, %v5219
      %v5373 = vadd.f32 %v5063, %v5222
      %v5374 = vadd.f32 %v5064, %v5227
      %v5375 = vadd.f32 %v5065, %v5230
      %v5376 = vadd.f32 %v5066, %v5235
      %v5377 = vadd.f32 %v5067, %v5238
      %v5378 = vadd.f32 %v5068, %v5243
      %v5379 = vadd.f32 %v5069, %v5246
      %v5380 = vadd.f32 %v5070, %v5251
      %v5381 = vadd.f32 %v5071, %v5254
      %v5382 = vadd.f32 %v5072, %v5259
      %v5383 = vadd.f32 %v5073, %v5262
      %v5384 = vadd.f32 %v5074, %v5267
      %v5385 = vadd.f32 %v5075, %v5270
      %v5386 = vadd.f32 %v5076, %v5275
      %v5387 = vadd.f32 %v5077, %v5278
      %v5388 = vadd.f32 %v5078, %v5283
      %v5389 = vadd.f32 %v5079, %v5286
      %v5390 = vadd.f32 %v5080, %v5291
      %v5391 = vadd.f32 %v5081, %v5294
      %v5392 = vadd.f32 %v5082, %v5299
      %v5393 = vadd.f32 %v5083, %v5302
      %v5394 = vadd.f32 %v5084, %v5307
      %v5395 = vadd.f32 %v5085, %v5310
      %v5396 = vadd.f32 %v5086, %v5315
      %v5397 = vadd.f32 %v5087, %v5318
      %v5398 = vadd.f32 %v5088, %v5323
      %v5399 = vadd.f32 %v5089, %v5326
      %v5400 = vadd.f32 %v5090, %v5331
      %v5401 = vadd.f32 %v5091, %v5334
      %v5402 = vadd.f32 %v5092, %v5339
      %v5403 = vadd.f32 %v5093, %v5342
      %v5404 = vadd.f32 %v5094, %v5347
      %v5405 = vadd.f32 %v5095, %v5350
      %v5406 = vadd.f32 %v5096, %v5355
      %v5407 = vadd.f32 %v5097, %v5358
      %v5408 = vadd.f32 %v5098, %v5363
      %s5409 = scalar_lea.vmem %s3, 256
      %v5410 = vld [vmem:[%s5409] sm:$0xf]
      %v5411 = vld [vmem:[%s5409 + $0x4] sm:$0xf]
      %v5412 = vld [vmem:[%s5409 + $0x8] sm:$0xf]
      %v5413 = vld [vmem:[%s5409 + $0xc] sm:$0xf]
      %v5414 = vld [vmem:[%s5409 + $0x10] sm:$0xf]
      %v5415 = vld [vmem:[%s5409 + $0x14] sm:$0xf]
      %v5416 = vld [vmem:[%s5409 + $0x18] sm:$0xf]
      %v5417 = vld [vmem:[%s5409 + $0x1c] sm:$0xf]
      %v5418 = vld [vmem:[%s5409 + $0x20] sm:$0xf]
      %v5419 = vld [vmem:[%s5409 + $0x24] sm:$0xf]
      %v5420 = vld [vmem:[%s5409 + $0x28] sm:$0xf]
      %v5421 = vld [vmem:[%s5409 + $0x2c] sm:$0xf]
      %v5422 = vld [vmem:[%s5409 + $0x30] sm:$0xf]
      %v5423 = vld [vmem:[%s5409 + $0x34] sm:$0xf]
      %v5424 = vld [vmem:[%s5409 + $0x38] sm:$0xf]
      %v5425 = vld [vmem:[%s5409 + $0x3c] sm:$0xf]
      %v5442 = vunpack.c.l.b16 %v5410
      %v5443 = vunpack.c.l.b16 %v5411
      %v5444 = vunpack.c.l.b16 %v5412
      %v5445 = vunpack.c.l.b16 %v5413
      %v5446 = vunpack.c.l.b16 %v5414
      %v5447 = vunpack.c.l.b16 %v5415
      %v5448 = vunpack.c.l.b16 %v5416
      %v5449 = vunpack.c.l.b16 %v5417
      %v5450 = vunpack.c.l.b16 %v5418
      %v5451 = vunpack.c.l.b16 %v5419
      %v5452 = vunpack.c.l.b16 %v5420
      %v5453 = vunpack.c.l.b16 %v5421
      %v5454 = vunpack.c.l.b16 %v5422
      %v5455 = vunpack.c.l.b16 %v5423
      %v5456 = vunpack.c.l.b16 %v5424
      %v5457 = vunpack.c.l.b16 %v5425
      %v5458 = vpack.c.b16 %v5443, %v5442
      %v5459 = vpack.c.b16 %v5445, %v5444
      %v5460 = vpack.c.b16 %v5447, %v5446
      %v5461 = vpack.c.b16 %v5449, %v5448
      %v5462 = vpack.c.b16 %v5451, %v5450
      %v5463 = vpack.c.b16 %v5453, %v5452
      %v5464 = vpack.c.b16 %v5455, %v5454
      %v5465 = vpack.c.b16 %v5457, %v5456
      %5474 = vmatprep.subr.bf16.mxu0 0
      %5475 = vmatpush1.bf16.msra.mxu0 %v5465
      %5476 = vmatprep.subr.bf16.mxu0 0
      %5477 = vmatpush1.bf16.msra.mxu0 %v5464
      %5478 = vmatprep.subr.bf16.mxu0 0
      %5479 = vmatpush1.bf16.msra.mxu0 %v5463
      %5480 = vmatprep.subr.bf16.mxu0 0
      %5481 = vmatpush1.bf16.msra.mxu0 %v5462
      %5482 = vmatprep.subr.bf16.mxu0 0
      %5483 = vmatpush1.bf16.msra.mxu0 %v5461
      %5484 = vmatprep.subr.bf16.mxu0 0
      %5485 = vmatpush1.bf16.msra.mxu0 %v5460
      %5486 = vmatprep.subr.bf16.mxu0 0
      %5487 = vmatpush1.bf16.msra.mxu0 %v5459
      %5488 = vmatprep.subr.bf16.mxu0 0
      %5489 = vmatpush1.bf16.msra.mxu0 %v5458
      %5490 = vmatprep.subr.bf16.mxu0 0
      %5491 = vmatpush2.bf16.msra.mxu0 0
      %5492 = vmatprep.subr.bf16.mxu0 0
      %5493 = vmatpush2.bf16.msra.mxu0 0
      %5494 = vmatprep.subr.bf16.mxu0 0
      %5495 = vmatpush2.bf16.msra.mxu0 0
      %5496 = vmatprep.subr.bf16.mxu0 0
      %5497 = vmatpush2.bf16.msra.mxu0 0
      %5498 = vmatprep.subr.bf16.mxu0 0
      %5499 = vmatpush2.bf16.msra.mxu0 0
      %5500 = vmatprep.subr.bf16.mxu0 0
      %5501 = vmatpush2.bf16.msra.mxu0 0
      %5502 = vmatprep.subr.bf16.mxu0 0
      %5503 = vmatpush2.bf16.msra.mxu0 0
      %5504 = vmatprep.subr.bf16.mxu0 0
      %5505 = vmatpush2.bf16.msra.mxu0 0
      %5506 = vmatprep.mubr.bf16.mxu0 0
      %5507 = vmatmul.mubr.bf16.gmra.mxu0 %v3857
      %v5508 = vpop.f32.mrf.mxu0
      %v5509 = vadd.f32 0.0, %v5508
      %v5510 = vpop.f32.mrf.mxu0
      %v5511 = vpop.f32.mrf.mxu0
      %v5512 = vadd.f32 0.0, %v5511
      %v5513 = vpop.f32.mrf.mxu0
      %5514 = vmatprep.mubr.bf16.mxu0 0
      %5515 = vmatmul.mubr.bf16.gmra.mxu0 %v3858
      %v5516 = vpop.f32.mrf.mxu0
      %v5517 = vadd.f32 0.0, %v5516
      %v5518 = vpop.f32.mrf.mxu0
      %v5519 = vpop.f32.mrf.mxu0
      %v5520 = vadd.f32 0.0, %v5519
      %v5521 = vpop.f32.mrf.mxu0
      %5522 = vmatprep.mubr.bf16.mxu0 0
      %5523 = vmatmul.mubr.bf16.gmra.mxu0 %v3859
      %v5524 = vpop.f32.mrf.mxu0
      %v5525 = vadd.f32 0.0, %v5524
      %v5526 = vpop.f32.mrf.mxu0
      %v5527 = vpop.f32.mrf.mxu0
      %v5528 = vadd.f32 0.0, %v5527
      %v5529 = vpop.f32.mrf.mxu0
      %5530 = vmatprep.mubr.bf16.mxu0 0
      %5531 = vmatmul.mubr.bf16.gmra.mxu0 %v3860
      %v5532 = vpop.f32.mrf.mxu0
      %v5533 = vadd.f32 0.0, %v5532
      %v5534 = vpop.f32.mrf.mxu0
      %v5535 = vpop.f32.mrf.mxu0
      %v5536 = vadd.f32 0.0, %v5535
      %v5537 = vpop.f32.mrf.mxu0
      %5538 = vmatprep.mubr.bf16.mxu0 0
      %5539 = vmatmul.mubr.bf16.gmra.mxu0 %v3861
      %v5540 = vpop.f32.mrf.mxu0
      %v5541 = vadd.f32 0.0, %v5540
      %v5542 = vpop.f32.mrf.mxu0
      %v5543 = vpop.f32.mrf.mxu0
      %v5544 = vadd.f32 0.0, %v5543
      %v5545 = vpop.f32.mrf.mxu0
      %5546 = vmatprep.mubr.bf16.mxu0 0
      %5547 = vmatmul.mubr.bf16.gmra.mxu0 %v3862
      %v5548 = vpop.f32.mrf.mxu0
      %v5549 = vadd.f32 0.0, %v5548
      %v5550 = vpop.f32.mrf.mxu0
      %v5551 = vpop.f32.mrf.mxu0
      %v5552 = vadd.f32 0.0, %v5551
      %v5553 = vpop.f32.mrf.mxu0
      %5554 = vmatprep.mubr.bf16.mxu0 0
      %5555 = vmatmul.mubr.bf16.gmra.mxu0 %v3863
      %v5556 = vpop.f32.mrf.mxu0
      %v5557 = vadd.f32 0.0, %v5556
      %v5558 = vpop.f32.mrf.mxu0
      %v5559 = vpop.f32.mrf.mxu0
      %v5560 = vadd.f32 0.0, %v5559
      %v5561 = vpop.f32.mrf.mxu0
      %5562 = vmatprep.mubr.bf16.mxu0 0
      %5563 = vmatmul.mubr.bf16.gmra.mxu0 %v3864
      %v5564 = vpop.f32.mrf.mxu0
      %v5565 = vadd.f32 0.0, %v5564
      %v5566 = vpop.f32.mrf.mxu0
      %v5567 = vpop.f32.mrf.mxu0
      %v5568 = vadd.f32 0.0, %v5567
      %v5569 = vpop.f32.mrf.mxu0
      %5570 = vmatprep.mubr.bf16.mxu0 0
      %5571 = vmatmul.mubr.bf16.gmra.mxu0 %v3865
      %v5572 = vpop.f32.mrf.mxu0
      %v5573 = vadd.f32 0.0, %v5572
      %v5574 = vpop.f32.mrf.mxu0
      %v5575 = vpop.f32.mrf.mxu0
      %v5576 = vadd.f32 0.0, %v5575
      %v5577 = vpop.f32.mrf.mxu0
      %5578 = vmatprep.mubr.bf16.mxu0 0
      %5579 = vmatmul.mubr.bf16.gmra.mxu0 %v3866
      %v5580 = vpop.f32.mrf.mxu0
      %v5581 = vadd.f32 0.0, %v5580
      %v5582 = vpop.f32.mrf.mxu0
      %v5583 = vpop.f32.mrf.mxu0
      %v5584 = vadd.f32 0.0, %v5583
      %v5585 = vpop.f32.mrf.mxu0
      %5586 = vmatprep.mubr.bf16.mxu0 0
      %5587 = vmatmul.mubr.bf16.gmra.mxu0 %v3867
      %v5588 = vpop.f32.mrf.mxu0
      %v5589 = vadd.f32 0.0, %v5588
      %v5590 = vpop.f32.mrf.mxu0
      %v5591 = vpop.f32.mrf.mxu0
      %v5592 = vadd.f32 0.0, %v5591
      %v5593 = vpop.f32.mrf.mxu0
      %5594 = vmatprep.mubr.bf16.mxu0 0
      %5595 = vmatmul.mubr.bf16.gmra.mxu0 %v3868
      %v5596 = vpop.f32.mrf.mxu0
      %v5597 = vadd.f32 0.0, %v5596
      %v5598 = vpop.f32.mrf.mxu0
      %v5599 = vpop.f32.mrf.mxu0
      %v5600 = vadd.f32 0.0, %v5599
      %v5601 = vpop.f32.mrf.mxu0
      %5602 = vmatprep.mubr.bf16.mxu0 0
      %5603 = vmatmul.mubr.bf16.gmra.mxu0 %v3869
      %v5604 = vpop.f32.mrf.mxu0
      %v5605 = vadd.f32 0.0, %v5604
      %v5606 = vpop.f32.mrf.mxu0
      %v5607 = vpop.f32.mrf.mxu0
      %v5608 = vadd.f32 0.0, %v5607
      %v5609 = vpop.f32.mrf.mxu0
      %5610 = vmatprep.mubr.bf16.mxu0 0
      %5611 = vmatmul.mubr.bf16.gmra.mxu0 %v3870
      %v5612 = vpop.f32.mrf.mxu0
      %v5613 = vadd.f32 0.0, %v5612
      %v5614 = vpop.f32.mrf.mxu0
      %v5615 = vpop.f32.mrf.mxu0
      %v5616 = vadd.f32 0.0, %v5615
      %v5617 = vpop.f32.mrf.mxu0
      %5618 = vmatprep.mubr.bf16.mxu0 0
      %5619 = vmatmul.mubr.bf16.gmra.mxu0 %v3871
      %v5620 = vpop.f32.mrf.mxu0
      %v5621 = vadd.f32 0.0, %v5620
      %v5622 = vpop.f32.mrf.mxu0
      %v5623 = vpop.f32.mrf.mxu0
      %v5624 = vadd.f32 0.0, %v5623
      %v5625 = vpop.f32.mrf.mxu0
      %5626 = vmatprep.mubr.bf16.mxu0 0
      %5627 = vmatmul.mubr.bf16.gmra.mxu0 %v3872
      %v5628 = vpop.f32.mrf.mxu0
      %v5629 = vadd.f32 0.0, %v5628
      %v5630 = vpop.f32.mrf.mxu0
      %v5631 = vpop.f32.mrf.mxu0
      %v5632 = vadd.f32 0.0, %v5631
      %v5633 = vpop.f32.mrf.mxu0
      %5634 = vmatprep.mubr.bf16.mxu0 0
      %5635 = vmatmul.mubr.bf16.gmra.mxu0 %v3873
      %v5636 = vpop.f32.mrf.mxu0
      %v5637 = vadd.f32 0.0, %v5636
      %v5638 = vpop.f32.mrf.mxu0
      %v5639 = vpop.f32.mrf.mxu0
      %v5640 = vadd.f32 0.0, %v5639
      %v5641 = vpop.f32.mrf.mxu0
      %5642 = vmatprep.mubr.bf16.mxu0 0
      %5643 = vmatmul.mubr.bf16.gmra.mxu0 %v3874
      %v5644 = vpop.f32.mrf.mxu0
      %v5645 = vadd.f32 0.0, %v5644
      %v5646 = vpop.f32.mrf.mxu0
      %v5647 = vpop.f32.mrf.mxu0
      %v5648 = vadd.f32 0.0, %v5647
      %v5649 = vpop.f32.mrf.mxu0
      %5650 = vmatprep.mubr.bf16.mxu0 0
      %5651 = vmatmul.mubr.bf16.gmra.mxu0 %v3875
      %v5652 = vpop.f32.mrf.mxu0
      %v5653 = vadd.f32 0.0, %v5652
      %v5654 = vpop.f32.mrf.mxu0
      %v5655 = vpop.f32.mrf.mxu0
      %v5656 = vadd.f32 0.0, %v5655
      %v5657 = vpop.f32.mrf.mxu0
      %5658 = vmatprep.mubr.bf16.mxu0 0
      %5659 = vmatmul.mubr.bf16.gmra.mxu0 %v3876
      %v5660 = vpop.f32.mrf.mxu0
      %v5661 = vadd.f32 0.0, %v5660
      %v5662 = vpop.f32.mrf.mxu0
      %v5663 = vpop.f32.mrf.mxu0
      %v5664 = vadd.f32 0.0, %v5663
      %v5665 = vpop.f32.mrf.mxu0
      %5666 = vmatprep.mubr.bf16.mxu0 0
      %5667 = vmatmul.mubr.bf16.gmra.mxu0 %v3877
      %v5668 = vpop.f32.mrf.mxu0
      %v5669 = vadd.f32 0.0, %v5668
      %v5670 = vpop.f32.mrf.mxu0
      %v5671 = vpop.f32.mrf.mxu0
      %v5672 = vpop.f32.mrf.mxu0
      %5673 = vdwg.mxu0
      %v5674 = vadd.f32 %v5368, %v5509
      %v5675 = vadd.f32 %v5369, %v5512
      %v5676 = vadd.f32 %v5370, %v5517
      %v5677 = vadd.f32 %v5371, %v5520
      %v5678 = vadd.f32 %v5372, %v5525
      %v5679 = vadd.f32 %v5373, %v5528
      %v5680 = vadd.f32 %v5374, %v5533
      %v5681 = vadd.f32 %v5375, %v5536
      %v5682 = vadd.f32 %v5376, %v5541
      %v5683 = vadd.f32 %v5377, %v5544
      %v5684 = vadd.f32 %v5378, %v5549
      %v5685 = vadd.f32 %v5379, %v5552
      %v5686 = vadd.f32 %v5380, %v5557
      %v5687 = vadd.f32 %v5381, %v5560
      %v5688 = vadd.f32 %v5382, %v5565
      %v5689 = vadd.f32 %v5383, %v5568
      %v5690 = vadd.f32 %v5384, %v5573
      %v5691 = vadd.f32 %v5385, %v5576
      %v5692 = vadd.f32 %v5386, %v5581
      %v5693 = vadd.f32 %v5387, %v5584
      %v5694 = vadd.f32 %v5388, %v5589
      %v5695 = vadd.f32 %v5389, %v5592
      %v5696 = vadd.f32 %v5390, %v5597
      %v5697 = vadd.f32 %v5391, %v5600
      %v5698 = vadd.f32 %v5392, %v5605
      %v5699 = vadd.f32 %v5393, %v5608
      %v5700 = vadd.f32 %v5394, %v5613
      %v5701 = vadd.f32 %v5395, %v5616
      %v5702 = vadd.f32 %v5396, %v5621
      %v5703 = vadd.f32 %v5397, %v5624
      %v5704 = vadd.f32 %v5398, %v5629
      %v5705 = vadd.f32 %v5399, %v5632
      %v5706 = vadd.f32 %v5400, %v5637
      %v5707 = vadd.f32 %v5401, %v5640
      %v5708 = vadd.f32 %v5402, %v5645
      %v5709 = vadd.f32 %v5403, %v5648
      %v5710 = vadd.f32 %v5404, %v5653
      %v5711 = vadd.f32 %v5405, %v5656
      %v5712 = vadd.f32 %v5406, %v5661
      %v5713 = vadd.f32 %v5407, %v5664
      %v5714 = vadd.f32 %v5408, %v5669
      %v5715 = vrot.slane %v3899, 1
      %v5716 = vor.u32 %v3896, %v5715
      %v5717 = vrot.slane %v3907, 1
      %v5718 = vsel %vm329, %v5716, %v5717
      %v5719 = vor.u32 %v3904, %v5717
      %v5720 = vrot.slane %v3916, 1
      %v5721 = vsel %vm329, %v5719, %v5720
      %v5722 = vor.u32 %v3913, %v5720
      %v5723 = vrot.slane %v3925, 1
      %v5724 = vsel %vm329, %v5722, %v5723
      %v5725 = vor.u32 %v3922, %v5723
      %v5726 = vrot.slane %v3934, 1
      %v5727 = vsel %vm329, %v5725, %v5726
      %v5728 = vor.u32 %v3931, %v5726
      %v5729 = vrot.slane %v3943, 1
      %v5730 = vsel %vm329, %v5728, %v5729
      %v5731 = vor.u32 %v3940, %v5729
      %v5732 = vrot.slane %v3952, 1
      %v5733 = vsel %vm329, %v5731, %v5732
      %v5734 = vor.u32 %v3949, %v5732
      %v5735 = vrot.slane %v3961, 1
      %v5736 = vsel %vm329, %v5734, %v5735
      %v5737 = vor.u32 %v3958, %v5735
      %v5738 = vrot.slane %v3970, 1
      %v5739 = vsel %vm329, %v5737, %v5738
      %v5740 = vor.u32 %v3967, %v5738
      %v5741 = vrot.slane %v3979, 1
      %v5742 = vsel %vm329, %v5740, %v5741
      %v5743 = vor.u32 %v3976, %v5741
      %v5744 = vrot.slane %v3988, 1
      %v5745 = vsel %vm329, %v5743, %v5744
      %v5746 = vor.u32 %v3985, %v5744
      %v5747 = vrot.slane %v3997, 1
      %v5748 = vsel %vm329, %v5746, %v5747
      %v5749 = vor.u32 %v3994, %v5747
      %v5750 = vrot.slane %v4006, 1
      %v5751 = vsel %vm329, %v5749, %v5750
      %v5752 = vor.u32 %v4003, %v5750
      %v5753 = vrot.slane %v4015, 1
      %v5754 = vsel %vm329, %v5752, %v5753
      %v5755 = vor.u32 %v4012, %v5753
      %v5756 = vrot.slane %v4024, 1
      %v5757 = vsel %vm329, %v5755, %v5756
      %v5758 = vor.u32 %v4021, %v5756
      %v5759 = vrot.slane %v4033, 1
      %v5760 = vsel %vm329, %v5758, %v5759
      %v5761 = vor.u32 %v4030, %v5759
      %v5762 = vrot.slane %v4042, 1
      %v5763 = vsel %vm329, %v5761, %v5762
      %v5764 = vor.u32 %v4039, %v5762
      %v5765 = vrot.slane %v4051, 1
      %v5766 = vsel %vm329, %v5764, %v5765
      %v5767 = vor.u32 %v4048, %v5765
      %v5768 = vrot.slane %v4060, 1
      %v5769 = vsel %vm329, %v5767, %v5768
      %v5770 = vor.u32 %v4057, %v5768
      %v5771 = vsel %vm329, %v5770, %v3883
      %v5792 = vsel %vm620, %v3892, %v3901
      %s5793 = scalar_lea.vmem %s3, 320
      %v5794 = vld [vmem:[%s5793] sm:$0xf]
      %v5795 = vld [vmem:[%s5793 + $0x4] sm:$0xf]
      %v5796 = vld [vmem:[%s5793 + $0x8] sm:$0xf]
      %v5797 = vld [vmem:[%s5793 + $0xc] sm:$0xf]
      %v5798 = vld [vmem:[%s5793 + $0x10] sm:$0xf]
      %v5799 = vld [vmem:[%s5793 + $0x14] sm:$0xf]
      %v5800 = vld [vmem:[%s5793 + $0x18] sm:$0xf]
      %v5801 = vld [vmem:[%s5793 + $0x1c] sm:$0xf]
      %v5802 = vld [vmem:[%s5793 + $0x20] sm:$0xf]
      %v5803 = vld [vmem:[%s5793 + $0x24] sm:$0xf]
      %v5804 = vld [vmem:[%s5793 + $0x28] sm:$0xf]
      %v5805 = vld [vmem:[%s5793 + $0x2c] sm:$0xf]
      %v5806 = vld [vmem:[%s5793 + $0x30] sm:$0xf]
      %v5807 = vld [vmem:[%s5793 + $0x34] sm:$0xf]
      %v5808 = vld [vmem:[%s5793 + $0x38] sm:$0xf]
      %v5809 = vld [vmem:[%s5793 + $0x3c] sm:$0xf]
      %v5826 = vunpack.c.l.b16 %v5794
      %v5827 = vunpack.c.l.b16 %v5795
      %v5828 = vunpack.c.l.b16 %v5796
      %v5829 = vunpack.c.l.b16 %v5797
      %v5830 = vunpack.c.l.b16 %v5798
      %v5831 = vunpack.c.l.b16 %v5799
      %v5832 = vunpack.c.l.b16 %v5800
      %v5833 = vunpack.c.l.b16 %v5801
      %v5834 = vunpack.c.l.b16 %v5802
      %v5835 = vunpack.c.l.b16 %v5803
      %v5836 = vunpack.c.l.b16 %v5804
      %v5837 = vunpack.c.l.b16 %v5805
      %v5838 = vunpack.c.l.b16 %v5806
      %v5839 = vunpack.c.l.b16 %v5807
      %v5840 = vunpack.c.l.b16 %v5808
      %v5841 = vunpack.c.l.b16 %v5809
      %v5842 = vpack.c.b16 %v5827, %v5826
      %v5843 = vpack.c.b16 %v5829, %v5828
      %v5844 = vpack.c.b16 %v5831, %v5830
      %v5845 = vpack.c.b16 %v5833, %v5832
      %v5846 = vpack.c.b16 %v5835, %v5834
      %v5847 = vpack.c.b16 %v5837, %v5836
      %v5848 = vpack.c.b16 %v5839, %v5838
      %v5849 = vpack.c.b16 %v5841, %v5840
      %5858 = vmatprep.subr.bf16.mxu0 0
      %5859 = vmatpush1.bf16.msra.mxu0 %v5849
      %5860 = vmatprep.subr.bf16.mxu0 0
      %5861 = vmatpush1.bf16.msra.mxu0 %v5848
      %5862 = vmatprep.subr.bf16.mxu0 0
      %5863 = vmatpush1.bf16.msra.mxu0 %v5847
      %5864 = vmatprep.subr.bf16.mxu0 0
      %5865 = vmatpush1.bf16.msra.mxu0 %v5846
      %5866 = vmatprep.subr.bf16.mxu0 0
      %5867 = vmatpush1.bf16.msra.mxu0 %v5845
      %5868 = vmatprep.subr.bf16.mxu0 0
      %5869 = vmatpush1.bf16.msra.mxu0 %v5844
      %5870 = vmatprep.subr.bf16.mxu0 0
      %5871 = vmatpush1.bf16.msra.mxu0 %v5843
      %5872 = vmatprep.subr.bf16.mxu0 0
      %5873 = vmatpush1.bf16.msra.mxu0 %v5842
      %5874 = vmatprep.subr.bf16.mxu0 0
      %5875 = vmatpush2.bf16.msra.mxu0 0
      %5876 = vmatprep.subr.bf16.mxu0 0
      %5877 = vmatpush2.bf16.msra.mxu0 0
      %5878 = vmatprep.subr.bf16.mxu0 0
      %5879 = vmatpush2.bf16.msra.mxu0 0
      %5880 = vmatprep.subr.bf16.mxu0 0
      %5881 = vmatpush2.bf16.msra.mxu0 0
      %5882 = vmatprep.subr.bf16.mxu0 0
      %5883 = vmatpush2.bf16.msra.mxu0 0
      %5884 = vmatprep.subr.bf16.mxu0 0
      %5885 = vmatpush2.bf16.msra.mxu0 0
      %5886 = vmatprep.subr.bf16.mxu0 0
      %5887 = vmatpush2.bf16.msra.mxu0 0
      %5888 = vmatprep.subr.bf16.mxu0 0
      %5889 = vmatpush2.bf16.msra.mxu0 0
      %5890 = vmatprep.mubr.bf16.mxu0 0
      %5891 = vmatmul.mubr.bf16.gmra.mxu0 %v5718
      %v5892 = vpop.f32.mrf.mxu0
      %v5893 = vadd.f32 0.0, %v5892
      %v5894 = vpop.f32.mrf.mxu0
      %v5895 = vpop.f32.mrf.mxu0
      %v5896 = vadd.f32 0.0, %v5895
      %v5897 = vpop.f32.mrf.mxu0
      %5898 = vmatprep.mubr.bf16.mxu0 0
      %5899 = vmatmul.mubr.bf16.gmra.mxu0 %v5721
      %v5900 = vpop.f32.mrf.mxu0
      %v5901 = vadd.f32 0.0, %v5900
      %v5902 = vpop.f32.mrf.mxu0
      %v5903 = vpop.f32.mrf.mxu0
      %v5904 = vadd.f32 0.0, %v5903
      %v5905 = vpop.f32.mrf.mxu0
      %5906 = vmatprep.mubr.bf16.mxu0 0
      %5907 = vmatmul.mubr.bf16.gmra.mxu0 %v5724
      %v5908 = vpop.f32.mrf.mxu0
      %v5909 = vadd.f32 0.0, %v5908
      %v5910 = vpop.f32.mrf.mxu0
      %v5911 = vpop.f32.mrf.mxu0
      %v5912 = vadd.f32 0.0, %v5911
      %v5913 = vpop.f32.mrf.mxu0
      %5914 = vmatprep.mubr.bf16.mxu0 0
      %5915 = vmatmul.mubr.bf16.gmra.mxu0 %v5727
      %v5916 = vpop.f32.mrf.mxu0
      %v5917 = vadd.f32 0.0, %v5916
      %v5918 = vpop.f32.mrf.mxu0
      %v5919 = vpop.f32.mrf.mxu0
      %v5920 = vadd.f32 0.0, %v5919
      %v5921 = vpop.f32.mrf.mxu0
      %5922 = vmatprep.mubr.bf16.mxu0 0
      %5923 = vmatmul.mubr.bf16.gmra.mxu0 %v5730
      %v5924 = vpop.f32.mrf.mxu0
      %v5925 = vadd.f32 0.0, %v5924
      %v5926 = vpop.f32.mrf.mxu0
      %v5927 = vpop.f32.mrf.mxu0
      %v5928 = vadd.f32 0.0, %v5927
      %v5929 = vpop.f32.mrf.mxu0
      %5930 = vmatprep.mubr.bf16.mxu0 0
      %5931 = vmatmul.mubr.bf16.gmra.mxu0 %v5733
      %v5932 = vpop.f32.mrf.mxu0
      %v5933 = vadd.f32 0.0, %v5932
      %v5934 = vpop.f32.mrf.mxu0
      %v5935 = vpop.f32.mrf.mxu0
      %v5936 = vadd.f32 0.0, %v5935
      %v5937 = vpop.f32.mrf.mxu0
      %5938 = vmatprep.mubr.bf16.mxu0 0
      %5939 = vmatmul.mubr.bf16.gmra.mxu0 %v5736
      %v5940 = vpop.f32.mrf.mxu0
      %v5941 = vadd.f32 0.0, %v5940
      %v5942 = vpop.f32.mrf.mxu0
      %v5943 = vpop.f32.mrf.mxu0
      %v5944 = vadd.f32 0.0, %v5943
      %v5945 = vpop.f32.mrf.mxu0
      %5946 = vmatprep.mubr.bf16.mxu0 0
      %5947 = vmatmul.mubr.bf16.gmra.mxu0 %v5739
      %v5948 = vpop.f32.mrf.mxu0
      %v5949 = vadd.f32 0.0, %v5948
      %v5950 = vpop.f32.mrf.mxu0
      %v5951 = vpop.f32.mrf.mxu0
      %v5952 = vadd.f32 0.0, %v5951
      %v5953 = vpop.f32.mrf.mxu0
      %5954 = vmatprep.mubr.bf16.mxu0 0
      %5955 = vmatmul.mubr.bf16.gmra.mxu0 %v5742
      %v5956 = vpop.f32.mrf.mxu0
      %v5957 = vadd.f32 0.0, %v5956
      %v5958 = vpop.f32.mrf.mxu0
      %v5959 = vpop.f32.mrf.mxu0
      %v5960 = vadd.f32 0.0, %v5959
      %v5961 = vpop.f32.mrf.mxu0
      %5962 = vmatprep.mubr.bf16.mxu0 0
      %5963 = vmatmul.mubr.bf16.gmra.mxu0 %v5745
      %v5964 = vpop.f32.mrf.mxu0
      %v5965 = vadd.f32 0.0, %v5964
      %v5966 = vpop.f32.mrf.mxu0
      %v5967 = vpop.f32.mrf.mxu0
      %v5968 = vadd.f32 0.0, %v5967
      %v5969 = vpop.f32.mrf.mxu0
      %5970 = vmatprep.mubr.bf16.mxu0 0
      %5971 = vmatmul.mubr.bf16.gmra.mxu0 %v5748
      %v5972 = vpop.f32.mrf.mxu0
      %v5973 = vadd.f32 0.0, %v5972
      %v5974 = vpop.f32.mrf.mxu0
      %v5975 = vpop.f32.mrf.mxu0
      %v5976 = vadd.f32 0.0, %v5975
      %v5977 = vpop.f32.mrf.mxu0
      %5978 = vmatprep.mubr.bf16.mxu0 0
      %5979 = vmatmul.mubr.bf16.gmra.mxu0 %v5751
      %v5980 = vpop.f32.mrf.mxu0
      %v5981 = vadd.f32 0.0, %v5980
      %v5982 = vpop.f32.mrf.mxu0
      %v5983 = vpop.f32.mrf.mxu0
      %v5984 = vadd.f32 0.0, %v5983
      %v5985 = vpop.f32.mrf.mxu0
      %5986 = vmatprep.mubr.bf16.mxu0 0
      %5987 = vmatmul.mubr.bf16.gmra.mxu0 %v5754
      %v5988 = vpop.f32.mrf.mxu0
      %v5989 = vadd.f32 0.0, %v5988
      %v5990 = vpop.f32.mrf.mxu0
      %v5991 = vpop.f32.mrf.mxu0
      %v5992 = vadd.f32 0.0, %v5991
      %v5993 = vpop.f32.mrf.mxu0
      %5994 = vmatprep.mubr.bf16.mxu0 0
      %5995 = vmatmul.mubr.bf16.gmra.mxu0 %v5757
      %v5996 = vpop.f32.mrf.mxu0
      %v5997 = vadd.f32 0.0, %v5996
      %v5998 = vpop.f32.mrf.mxu0
      %v5999 = vpop.f32.mrf.mxu0
      %v6000 = vadd.f32 0.0, %v5999
      %v6001 = vpop.f32.mrf.mxu0
      %6002 = vmatprep.mubr.bf16.mxu0 0
      %6003 = vmatmul.mubr.bf16.gmra.mxu0 %v5760
      %v6004 = vpop.f32.mrf.mxu0
      %v6005 = vadd.f32 0.0, %v6004
      %v6006 = vpop.f32.mrf.mxu0
      %v6007 = vpop.f32.mrf.mxu0
      %v6008 = vadd.f32 0.0, %v6007
      %v6009 = vpop.f32.mrf.mxu0
      %6010 = vmatprep.mubr.bf16.mxu0 0
      %6011 = vmatmul.mubr.bf16.gmra.mxu0 %v5763
      %v6012 = vpop.f32.mrf.mxu0
      %v6013 = vadd.f32 0.0, %v6012
      %v6014 = vpop.f32.mrf.mxu0
      %v6015 = vpop.f32.mrf.mxu0
      %v6016 = vadd.f32 0.0, %v6015
      %v6017 = vpop.f32.mrf.mxu0
      %6018 = vmatprep.mubr.bf16.mxu0 0
      %6019 = vmatmul.mubr.bf16.gmra.mxu0 %v5766
      %v6020 = vpop.f32.mrf.mxu0
      %v6021 = vadd.f32 0.0, %v6020
      %v6022 = vpop.f32.mrf.mxu0
      %v6023 = vpop.f32.mrf.mxu0
      %v6024 = vadd.f32 0.0, %v6023
      %v6025 = vpop.f32.mrf.mxu0
      %6026 = vmatprep.mubr.bf16.mxu0 0
      %6027 = vmatmul.mubr.bf16.gmra.mxu0 %v5769
      %v6028 = vpop.f32.mrf.mxu0
      %v6029 = vadd.f32 0.0, %v6028
      %v6030 = vpop.f32.mrf.mxu0
      %v6031 = vpop.f32.mrf.mxu0
      %v6032 = vadd.f32 0.0, %v6031
      %v6033 = vpop.f32.mrf.mxu0
      %6034 = vmatprep.mubr.bf16.mxu0 0
      %6035 = vmatmul.mubr.bf16.gmra.mxu0 %v5771
      %v6036 = vpop.f32.mrf.mxu0
      %v6037 = vadd.f32 0.0, %v6036
      %v6038 = vpop.f32.mrf.mxu0
      %v6039 = vpop.f32.mrf.mxu0
      %v6040 = vadd.f32 0.0, %v6039
      %v6041 = vpop.f32.mrf.mxu0
      %6042 = vmatprep.mubr.bf16.mxu0 0
      %6043 = vmatmul.mubr.bf16.gmra.mxu0 %v3889
      %v6044 = vpop.f32.mrf.mxu0
      %v6045 = vadd.f32 0.0, %v6044
      %v6046 = vpop.f32.mrf.mxu0
      %v6047 = vpop.f32.mrf.mxu0
      %v6048 = vadd.f32 0.0, %v6047
      %v6049 = vpop.f32.mrf.mxu0
      %6050 = vmatprep.mubr.bf16.mxu0 0
      %6051 = vmatmul.mubr.bf16.gmra.mxu0 %v5792
      %v6052 = vpop.f32.mrf.mxu0
      %v6053 = vadd.f32 0.0, %v6052
      %v6054 = vpop.f32.mrf.mxu0
      %v6055 = vpop.f32.mrf.mxu0
      %v6056 = vpop.f32.mrf.mxu0
      %6057 = vdwg.mxu0
      %v6058 = vadd.f32 %v5674, %v5893
      %v6059 = vadd.f32 %v5675, %v5896
      %v6060 = vadd.f32 %v5676, %v5901
      %v6061 = vadd.f32 %v5677, %v5904
      %v6062 = vadd.f32 %v5678, %v5909
      %v6063 = vadd.f32 %v5679, %v5912
      %v6064 = vadd.f32 %v5680, %v5917
      %v6065 = vadd.f32 %v5681, %v5920
      %v6066 = vadd.f32 %v5682, %v5925
      %v6067 = vadd.f32 %v5683, %v5928
      %v6068 = vadd.f32 %v5684, %v5933
      %v6069 = vadd.f32 %v5685, %v5936
      %v6070 = vadd.f32 %v5686, %v5941
      %v6071 = vadd.f32 %v5687, %v5944
      %v6072 = vadd.f32 %v5688, %v5949
      %v6073 = vadd.f32 %v5689, %v5952
      %v6074 = vadd.f32 %v5690, %v5957
      %v6075 = vadd.f32 %v5691, %v5960
      %v6076 = vadd.f32 %v5692, %v5965
      %v6077 = vadd.f32 %v5693, %v5968
      %v6078 = vadd.f32 %v5694, %v5973
      %v6079 = vadd.f32 %v5695, %v5976
      %v6080 = vadd.f32 %v5696, %v5981
      %v6081 = vadd.f32 %v5697, %v5984
      %v6082 = vadd.f32 %v5698, %v5989
      %v6083 = vadd.f32 %v5699, %v5992
      %v6084 = vadd.f32 %v5700, %v5997
      %v6085 = vadd.f32 %v5701, %v6000
      %v6086 = vadd.f32 %v5702, %v6005
      %v6087 = vadd.f32 %v5703, %v6008
      %v6088 = vadd.f32 %v5704, %v6013
      %v6089 = vadd.f32 %v5705, %v6016
      %v6090 = vadd.f32 %v5706, %v6021
      %v6091 = vadd.f32 %v5707, %v6024
      %v6092 = vadd.f32 %v5708, %v6029
      %v6093 = vadd.f32 %v5709, %v6032
      %v6094 = vadd.f32 %v5710, %v6037
      %v6095 = vadd.f32 %v5711, %v6040
      %v6096 = vadd.f32 %v5712, %v6045
      %v6097 = vadd.f32 %v5713, %v6048
      %v6098 = vadd.f32 %v5714, %v6053
      %v6099 = vsel %vm442, %v3902, %v3909
      %s6101 = scalar_lea.vmem %s3, 384
      %v6102 = vld [vmem:[%s6101] sm:$0xf]
      %v6103 = vld [vmem:[%s6101 + $0x4] sm:$0xf]
      %v6104 = vld [vmem:[%s6101 + $0x8] sm:$0xf]
      %v6105 = vld [vmem:[%s6101 + $0xc] sm:$0xf]
      %v6106 = vld [vmem:[%s6101 + $0x10] sm:$0xf]
      %v6107 = vld [vmem:[%s6101 + $0x14] sm:$0xf]
      %v6108 = vld [vmem:[%s6101 + $0x18] sm:$0xf]
      %v6109 = vld [vmem:[%s6101 + $0x1c] sm:$0xf]
      %v6110 = vld [vmem:[%s6101 + $0x20] sm:$0xf]
      %v6111 = vld [vmem:[%s6101 + $0x24] sm:$0xf]
      %v6112 = vld [vmem:[%s6101 + $0x28] sm:$0xf]
      %v6113 = vld [vmem:[%s6101 + $0x2c] sm:$0xf]
      %v6114 = vld [vmem:[%s6101 + $0x30] sm:$0xf]
      %v6115 = vld [vmem:[%s6101 + $0x34] sm:$0xf]
      %v6116 = vld [vmem:[%s6101 + $0x38] sm:$0xf]
      %v6117 = vld [vmem:[%s6101 + $0x3c] sm:$0xf]
      %v6134 = vunpack.c.l.b16 %v6102
      %v6135 = vunpack.c.l.b16 %v6103
      %v6136 = vunpack.c.l.b16 %v6104
      %v6137 = vunpack.c.l.b16 %v6105
      %v6138 = vunpack.c.l.b16 %v6106
      %v6139 = vunpack.c.l.b16 %v6107
      %v6140 = vunpack.c.l.b16 %v6108
      %v6141 = vunpack.c.l.b16 %v6109
      %v6142 = vunpack.c.l.b16 %v6110
      %v6143 = vunpack.c.l.b16 %v6111
      %v6144 = vunpack.c.l.b16 %v6112
      %v6145 = vunpack.c.l.b16 %v6113
      %v6146 = vunpack.c.l.b16 %v6114
      %v6147 = vunpack.c.l.b16 %v6115
      %v6148 = vunpack.c.l.b16 %v6116
      %v6149 = vunpack.c.l.b16 %v6117
      %v6150 = vpack.c.b16 %v6135, %v6134
      %v6151 = vpack.c.b16 %v6137, %v6136
      %v6152 = vpack.c.b16 %v6139, %v6138
      %v6153 = vpack.c.b16 %v6141, %v6140
      %v6154 = vpack.c.b16 %v6143, %v6142
      %v6155 = vpack.c.b16 %v6145, %v6144
      %v6156 = vpack.c.b16 %v6147, %v6146
      %v6157 = vpack.c.b16 %v6149, %v6148
      %6166 = vmatprep.subr.bf16.mxu0 0
      %6167 = vmatpush1.bf16.msra.mxu0 %v6157
      %6168 = vmatprep.subr.bf16.mxu0 0
      %6169 = vmatpush1.bf16.msra.mxu0 %v6156
      %6170 = vmatprep.subr.bf16.mxu0 0
      %6171 = vmatpush1.bf16.msra.mxu0 %v6155
      %6172 = vmatprep.subr.bf16.mxu0 0
      %6173 = vmatpush1.bf16.msra.mxu0 %v6154
      %6174 = vmatprep.subr.bf16.mxu0 0
      %6175 = vmatpush1.bf16.msra.mxu0 %v6153
      %6176 = vmatprep.subr.bf16.mxu0 0
      %6177 = vmatpush1.bf16.msra.mxu0 %v6152
      %6178 = vmatprep.subr.bf16.mxu0 0
      %6179 = vmatpush1.bf16.msra.mxu0 %v6151
      %6180 = vmatprep.subr.bf16.mxu0 0
      %6181 = vmatpush1.bf16.msra.mxu0 %v6150
      %6182 = vmatprep.subr.bf16.mxu0 0
      %6183 = vmatpush2.bf16.msra.mxu0 0
      %6184 = vmatprep.subr.bf16.mxu0 0
      %6185 = vmatpush2.bf16.msra.mxu0 0
      %6186 = vmatprep.subr.bf16.mxu0 0
      %6187 = vmatpush2.bf16.msra.mxu0 0
      %6188 = vmatprep.subr.bf16.mxu0 0
      %6189 = vmatpush2.bf16.msra.mxu0 0
      %6190 = vmatprep.subr.bf16.mxu0 0
      %6191 = vmatpush2.bf16.msra.mxu0 0
      %6192 = vmatprep.subr.bf16.mxu0 0
      %6193 = vmatpush2.bf16.msra.mxu0 0
      %6194 = vmatprep.subr.bf16.mxu0 0
      %6195 = vmatpush2.bf16.msra.mxu0 0
      %6196 = vmatprep.subr.bf16.mxu0 0
      %6197 = vmatpush2.bf16.msra.mxu0 0
      %6198 = vmatprep.mubr.bf16.mxu0 0
      %6199 = vmatmul.mubr.bf16.gmra.mxu0 %v5721
      %v6200 = vpop.f32.mrf.mxu0
      %v6201 = vadd.f32 0.0, %v6200
      %v6202 = vpop.f32.mrf.mxu0
      %v6203 = vpop.f32.mrf.mxu0
      %v6204 = vadd.f32 0.0, %v6203
      %v6205 = vpop.f32.mrf.mxu0
      %6206 = vmatprep.mubr.bf16.mxu0 0
      %6207 = vmatmul.mubr.bf16.gmra.mxu0 %v5724
      %v6208 = vpop.f32.mrf.mxu0
      %v6209 = vadd.f32 0.0, %v6208
      %v6210 = vpop.f32.mrf.mxu0
      %v6211 = vpop.f32.mrf.mxu0
      %v6212 = vadd.f32 0.0, %v6211
      %v6213 = vpop.f32.mrf.mxu0
      %6214 = vmatprep.mubr.bf16.mxu0 0
      %6215 = vmatmul.mubr.bf16.gmra.mxu0 %v5727
      %v6216 = vpop.f32.mrf.mxu0
      %v6217 = vadd.f32 0.0, %v6216
      %v6218 = vpop.f32.mrf.mxu0
      %v6219 = vpop.f32.mrf.mxu0
      %v6220 = vadd.f32 0.0, %v6219
      %v6221 = vpop.f32.mrf.mxu0
      %6222 = vmatprep.mubr.bf16.mxu0 0
      %6223 = vmatmul.mubr.bf16.gmra.mxu0 %v5730
      %v6224 = vpop.f32.mrf.mxu0
      %v6225 = vadd.f32 0.0, %v6224
      %v6226 = vpop.f32.mrf.mxu0
      %v6227 = vpop.f32.mrf.mxu0
      %v6228 = vadd.f32 0.0, %v6227
      %v6229 = vpop.f32.mrf.mxu0
      %6230 = vmatprep.mubr.bf16.mxu0 0
      %6231 = vmatmul.mubr.bf16.gmra.mxu0 %v5733
      %v6232 = vpop.f32.mrf.mxu0
      %v6233 = vadd.f32 0.0, %v6232
      %v6234 = vpop.f32.mrf.mxu0
      %v6235 = vpop.f32.mrf.mxu0
      %v6236 = vadd.f32 0.0, %v6235
      %v6237 = vpop.f32.mrf.mxu0
      %6238 = vmatprep.mubr.bf16.mxu0 0
      %6239 = vmatmul.mubr.bf16.gmra.mxu0 %v5736
      %v6240 = vpop.f32.mrf.mxu0
      %v6241 = vadd.f32 0.0, %v6240
      %v6242 = vpop.f32.mrf.mxu0
      %v6243 = vpop.f32.mrf.mxu0
      %v6244 = vadd.f32 0.0, %v6243
      %v6245 = vpop.f32.mrf.mxu0
      %6246 = vmatprep.mubr.bf16.mxu0 0
      %6247 = vmatmul.mubr.bf16.gmra.mxu0 %v5739
      %v6248 = vpop.f32.mrf.mxu0
      %v6249 = vadd.f32 0.0, %v6248
      %v6250 = vpop.f32.mrf.mxu0
      %v6251 = vpop.f32.mrf.mxu0
      %v6252 = vadd.f32 0.0, %v6251
      %v6253 = vpop.f32.mrf.mxu0
      %6254 = vmatprep.mubr.bf16.mxu0 0
      %6255 = vmatmul.mubr.bf16.gmra.mxu0 %v5742
      %v6256 = vpop.f32.mrf.mxu0
      %v6257 = vadd.f32 0.0, %v6256
      %v6258 = vpop.f32.mrf.mxu0
      %v6259 = vpop.f32.mrf.mxu0
      %v6260 = vadd.f32 0.0, %v6259
      %v6261 = vpop.f32.mrf.mxu0
      %6262 = vmatprep.mubr.bf16.mxu0 0
      %6263 = vmatmul.mubr.bf16.gmra.mxu0 %v5745
      %v6264 = vpop.f32.mrf.mxu0
      %v6265 = vadd.f32 0.0, %v6264
      %v6266 = vpop.f32.mrf.mxu0
      %v6267 = vpop.f32.mrf.mxu0
      %v6268 = vadd.f32 0.0, %v6267
      %v6269 = vpop.f32.mrf.mxu0
      %6270 = vmatprep.mubr.bf16.mxu0 0
      %6271 = vmatmul.mubr.bf16.gmra.mxu0 %v5748
      %v6272 = vpop.f32.mrf.mxu0
      %v6273 = vadd.f32 0.0, %v6272
      %v6274 = vpop.f32.mrf.mxu0
      %v6275 = vpop.f32.mrf.mxu0
      %v6276 = vadd.f32 0.0, %v6275
      %v6277 = vpop.f32.mrf.mxu0
      %6278 = vmatprep.mubr.bf16.mxu0 0
      %6279 = vmatmul.mubr.bf16.gmra.mxu0 %v5751
      %v6280 = vpop.f32.mrf.mxu0
      %v6281 = vadd.f32 0.0, %v6280
      %v6282 = vpop.f32.mrf.mxu0
      %v6283 = vpop.f32.mrf.mxu0
      %v6284 = vadd.f32 0.0, %v6283
      %v6285 = vpop.f32.mrf.mxu0
      %6286 = vmatprep.mubr.bf16.mxu0 0
      %6287 = vmatmul.mubr.bf16.gmra.mxu0 %v5754
      %v6288 = vpop.f32.mrf.mxu0
      %v6289 = vadd.f32 0.0, %v6288
      %v6290 = vpop.f32.mrf.mxu0
      %v6291 = vpop.f32.mrf.mxu0
      %v6292 = vadd.f32 0.0, %v6291
      %v6293 = vpop.f32.mrf.mxu0
      %6294 = vmatprep.mubr.bf16.mxu0 0
      %6295 = vmatmul.mubr.bf16.gmra.mxu0 %v5757
      %v6296 = vpop.f32.mrf.mxu0
      %v6297 = vadd.f32 0.0, %v6296
      %v6298 = vpop.f32.mrf.mxu0
      %v6299 = vpop.f32.mrf.mxu0
      %v6300 = vadd.f32 0.0, %v6299
      %v6301 = vpop.f32.mrf.mxu0
      %6302 = vmatprep.mubr.bf16.mxu0 0
      %6303 = vmatmul.mubr.bf16.gmra.mxu0 %v5760
      %v6304 = vpop.f32.mrf.mxu0
      %v6305 = vadd.f32 0.0, %v6304
      %v6306 = vpop.f32.mrf.mxu0
      %v6307 = vpop.f32.mrf.mxu0
      %v6308 = vadd.f32 0.0, %v6307
      %v6309 = vpop.f32.mrf.mxu0
      %6310 = vmatprep.mubr.bf16.mxu0 0
      %6311 = vmatmul.mubr.bf16.gmra.mxu0 %v5763
      %v6312 = vpop.f32.mrf.mxu0
      %v6313 = vadd.f32 0.0, %v6312
      %v6314 = vpop.f32.mrf.mxu0
      %v6315 = vpop.f32.mrf.mxu0
      %v6316 = vadd.f32 0.0, %v6315
      %v6317 = vpop.f32.mrf.mxu0
      %6318 = vmatprep.mubr.bf16.mxu0 0
      %6319 = vmatmul.mubr.bf16.gmra.mxu0 %v5766
      %v6320 = vpop.f32.mrf.mxu0
      %v6321 = vadd.f32 0.0, %v6320
      %v6322 = vpop.f32.mrf.mxu0
      %v6323 = vpop.f32.mrf.mxu0
      %v6324 = vadd.f32 0.0, %v6323
      %v6325 = vpop.f32.mrf.mxu0
      %6326 = vmatprep.mubr.bf16.mxu0 0
      %6327 = vmatmul.mubr.bf16.gmra.mxu0 %v5769
      %v6328 = vpop.f32.mrf.mxu0
      %v6329 = vadd.f32 0.0, %v6328
      %v6330 = vpop.f32.mrf.mxu0
      %v6331 = vpop.f32.mrf.mxu0
      %v6332 = vadd.f32 0.0, %v6331
      %v6333 = vpop.f32.mrf.mxu0
      %6334 = vmatprep.mubr.bf16.mxu0 0
      %6335 = vmatmul.mubr.bf16.gmra.mxu0 %v5771
      %v6336 = vpop.f32.mrf.mxu0
      %v6337 = vadd.f32 0.0, %v6336
      %v6338 = vpop.f32.mrf.mxu0
      %v6339 = vpop.f32.mrf.mxu0
      %v6340 = vadd.f32 0.0, %v6339
      %v6341 = vpop.f32.mrf.mxu0
      %6342 = vmatprep.mubr.bf16.mxu0 0
      %6343 = vmatmul.mubr.bf16.gmra.mxu0 %v3889
      %v6344 = vpop.f32.mrf.mxu0
      %v6345 = vadd.f32 0.0, %v6344
      %v6346 = vpop.f32.mrf.mxu0
      %v6347 = vpop.f32.mrf.mxu0
      %v6348 = vadd.f32 0.0, %v6347
      %v6349 = vpop.f32.mrf.mxu0
      %6350 = vmatprep.mubr.bf16.mxu0 0
      %6351 = vmatmul.mubr.bf16.gmra.mxu0 %v4087
      %v6352 = vpop.f32.mrf.mxu0
      %v6353 = vadd.f32 0.0, %v6352
      %v6354 = vpop.f32.mrf.mxu0
      %v6355 = vpop.f32.mrf.mxu0
      %v6356 = vadd.f32 0.0, %v6355
      %v6357 = vpop.f32.mrf.mxu0
      %6358 = vmatprep.mubr.bf16.mxu0 0
      %6359 = vmatmul.mubr.bf16.gmra.mxu0 %v6099
      %v6360 = vpop.f32.mrf.mxu0
      %v6361 = vadd.f32 0.0, %v6360
      %v6362 = vpop.f32.mrf.mxu0
      %v6363 = vpop.f32.mrf.mxu0
      %v6364 = vpop.f32.mrf.mxu0
      %6365 = vdwg.mxu0
      %v6366 = vadd.f32 %v6058, %v6201
      %v6367 = vadd.f32 %v6059, %v6204
      %v6368 = vadd.f32 %v6060, %v6209
      %v6369 = vadd.f32 %v6061, %v6212
      %v6370 = vadd.f32 %v6062, %v6217
      %v6371 = vadd.f32 %v6063, %v6220
      %v6372 = vadd.f32 %v6064, %v6225
      %v6373 = vadd.f32 %v6065, %v6228
      %v6374 = vadd.f32 %v6066, %v6233
      %v6375 = vadd.f32 %v6067, %v6236
      %v6376 = vadd.f32 %v6068, %v6241
      %v6377 = vadd.f32 %v6069, %v6244
      %v6378 = vadd.f32 %v6070, %v6249
      %v6379 = vadd.f32 %v6071, %v6252
      %v6380 = vadd.f32 %v6072, %v6257
      %v6381 = vadd.f32 %v6073, %v6260
      %v6382 = vadd.f32 %v6074, %v6265
      %v6383 = vadd.f32 %v6075, %v6268
      %v6384 = vadd.f32 %v6076, %v6273
      %v6385 = vadd.f32 %v6077, %v6276
      %v6386 = vadd.f32 %v6078, %v6281
      %v6387 = vadd.f32 %v6079, %v6284
      %v6388 = vadd.f32 %v6080, %v6289
      %v6389 = vadd.f32 %v6081, %v6292
      %v6390 = vadd.f32 %v6082, %v6297
      %v6391 = vadd.f32 %v6083, %v6300
      %v6392 = vadd.f32 %v6084, %v6305
      %v6393 = vadd.f32 %v6085, %v6308
      %v6394 = vadd.f32 %v6086, %v6313
      %v6395 = vadd.f32 %v6087, %v6316
      %v6396 = vadd.f32 %v6088, %v6321
      %v6397 = vadd.f32 %v6089, %v6324
      %v6398 = vadd.f32 %v6090, %v6329
      %v6399 = vadd.f32 %v6091, %v6332
      %v6400 = vadd.f32 %v6092, %v6337
      %v6401 = vadd.f32 %v6093, %v6340
      %v6402 = vadd.f32 %v6094, %v6345
      %v6403 = vadd.f32 %v6095, %v6348
      %v6404 = vadd.f32 %v6096, %v6353
      %v6405 = vadd.f32 %v6097, %v6356
      %v6406 = vadd.f32 %v6098, %v6361
      %v6407 = vrot.slane %v3858, 1
      %v6408 = vrot.slane %v3859, 1
      %v6409 = vsel %vm623, %v6407, %v6408
      %v6410 = vrot.slane %v3860, 1
      %v6411 = vsel %vm623, %v6408, %v6410
      %v6412 = vrot.slane %v3861, 1
      %v6413 = vsel %vm623, %v6410, %v6412
      %v6414 = vrot.slane %v3862, 1
      %v6415 = vsel %vm623, %v6412, %v6414
      %v6416 = vrot.slane %v3863, 1
      %v6417 = vsel %vm623, %v6414, %v6416
      %v6418 = vrot.slane %v3864, 1
      %v6419 = vsel %vm623, %v6416, %v6418
      %v6420 = vrot.slane %v3865, 1
      %v6421 = vsel %vm623, %v6418, %v6420
      %v6422 = vrot.slane %v3866, 1
      %v6423 = vsel %vm623, %v6420, %v6422
      %v6424 = vrot.slane %v3867, 1
      %v6425 = vsel %vm623, %v6422, %v6424
      %v6426 = vrot.slane %v3868, 1
      %v6427 = vsel %vm623, %v6424, %v6426
      %v6428 = vrot.slane %v3869, 1
      %v6429 = vsel %vm623, %v6426, %v6428
      %v6430 = vrot.slane %v3870, 1
      %v6431 = vsel %vm623, %v6428, %v6430
      %v6432 = vrot.slane %v3871, 1
      %v6433 = vsel %vm623, %v6430, %v6432
      %v6434 = vrot.slane %v3872, 1
      %v6435 = vsel %vm623, %v6432, %v6434
      %v6436 = vrot.slane %v3873, 1
      %v6437 = vsel %vm623, %v6434, %v6436
      %v6438 = vrot.slane %v3874, 1
      %v6439 = vsel %vm623, %v6436, %v6438
      %v6440 = vrot.slane %v3875, 1
      %v6441 = vsel %vm623, %v6438, %v6440
      %v6442 = vsel %vm623, %v6440, %v4106
      %s6461 = scalar_lea.vmem %s3, 448
      %v6462 = vld [vmem:[%s6461] sm:$0xf]
      %v6463 = vld [vmem:[%s6461 + $0x4] sm:$0xf]
      %v6464 = vld [vmem:[%s6461 + $0x8] sm:$0xf]
      %v6465 = vld [vmem:[%s6461 + $0xc] sm:$0xf]
      %v6466 = vld [vmem:[%s6461 + $0x10] sm:$0xf]
      %v6467 = vld [vmem:[%s6461 + $0x14] sm:$0xf]
      %v6468 = vld [vmem:[%s6461 + $0x18] sm:$0xf]
      %v6469 = vld [vmem:[%s6461 + $0x1c] sm:$0xf]
      %v6470 = vld [vmem:[%s6461 + $0x20] sm:$0xf]
      %v6471 = vld [vmem:[%s6461 + $0x24] sm:$0xf]
      %v6472 = vld [vmem:[%s6461 + $0x28] sm:$0xf]
      %v6473 = vld [vmem:[%s6461 + $0x2c] sm:$0xf]
      %v6474 = vld [vmem:[%s6461 + $0x30] sm:$0xf]
      %v6475 = vld [vmem:[%s6461 + $0x34] sm:$0xf]
      %v6476 = vld [vmem:[%s6461 + $0x38] sm:$0xf]
      %v6477 = vld [vmem:[%s6461 + $0x3c] sm:$0xf]
      %v6494 = vunpack.c.l.b16 %v6462
      %v6495 = vunpack.c.l.b16 %v6463
      %v6496 = vunpack.c.l.b16 %v6464
      %v6497 = vunpack.c.l.b16 %v6465
      %v6498 = vunpack.c.l.b16 %v6466
      %v6499 = vunpack.c.l.b16 %v6467
      %v6500 = vunpack.c.l.b16 %v6468
      %v6501 = vunpack.c.l.b16 %v6469
      %v6502 = vunpack.c.l.b16 %v6470
      %v6503 = vunpack.c.l.b16 %v6471
      %v6504 = vunpack.c.l.b16 %v6472
      %v6505 = vunpack.c.l.b16 %v6473
      %v6506 = vunpack.c.l.b16 %v6474
      %v6507 = vunpack.c.l.b16 %v6475
      %v6508 = vunpack.c.l.b16 %v6476
      %v6509 = vunpack.c.l.b16 %v6477
      %v6510 = vpack.c.b16 %v6495, %v6494
      %v6511 = vpack.c.b16 %v6497, %v6496
      %v6512 = vpack.c.b16 %v6499, %v6498
      %v6513 = vpack.c.b16 %v6501, %v6500
      %v6514 = vpack.c.b16 %v6503, %v6502
      %v6515 = vpack.c.b16 %v6505, %v6504
      %v6516 = vpack.c.b16 %v6507, %v6506
      %v6517 = vpack.c.b16 %v6509, %v6508
      %6526 = vmatprep.subr.bf16.mxu0 0
      %6527 = vmatpush1.bf16.msra.mxu0 %v6517
      %6528 = vmatprep.subr.bf16.mxu0 0
      %6529 = vmatpush1.bf16.msra.mxu0 %v6516
      %6530 = vmatprep.subr.bf16.mxu0 0
      %6531 = vmatpush1.bf16.msra.mxu0 %v6515
      %6532 = vmatprep.subr.bf16.mxu0 0
      %6533 = vmatpush1.bf16.msra.mxu0 %v6514
      %6534 = vmatprep.subr.bf16.mxu0 0
      %6535 = vmatpush1.bf16.msra.mxu0 %v6513
      %6536 = vmatprep.subr.bf16.mxu0 0
      %6537 = vmatpush1.bf16.msra.mxu0 %v6512
      %6538 = vmatprep.subr.bf16.mxu0 0
      %6539 = vmatpush1.bf16.msra.mxu0 %v6511
      %6540 = vmatprep.subr.bf16.mxu0 0
      %6541 = vmatpush1.bf16.msra.mxu0 %v6510
      %6542 = vmatprep.subr.bf16.mxu0 0
      %6543 = vmatpush2.bf16.msra.mxu0 0
      %6544 = vmatprep.subr.bf16.mxu0 0
      %6545 = vmatpush2.bf16.msra.mxu0 0
      %6546 = vmatprep.subr.bf16.mxu0 0
      %6547 = vmatpush2.bf16.msra.mxu0 0
      %6548 = vmatprep.subr.bf16.mxu0 0
      %6549 = vmatpush2.bf16.msra.mxu0 0
      %6550 = vmatprep.subr.bf16.mxu0 0
      %6551 = vmatpush2.bf16.msra.mxu0 0
      %6552 = vmatprep.subr.bf16.mxu0 0
      %6553 = vmatpush2.bf16.msra.mxu0 0
      %6554 = vmatprep.subr.bf16.mxu0 0
      %6555 = vmatpush2.bf16.msra.mxu0 0
      %6556 = vmatprep.subr.bf16.mxu0 0
      %6557 = vmatpush2.bf16.msra.mxu0 0
      %6558 = vmatprep.mubr.bf16.mxu0 0
      %6559 = vmatmul.mubr.bf16.gmra.mxu0 %v6409
      %v6560 = vpop.f32.mrf.mxu0
      %v6561 = vadd.f32 0.0, %v6560
      %v6562 = vpop.f32.mrf.mxu0
      %v6563 = vpop.f32.mrf.mxu0
      %v6564 = vadd.f32 0.0, %v6563
      %v6565 = vpop.f32.mrf.mxu0
      %6566 = vmatprep.mubr.bf16.mxu0 0
      %6567 = vmatmul.mubr.bf16.gmra.mxu0 %v6411
      %v6568 = vpop.f32.mrf.mxu0
      %v6569 = vadd.f32 0.0, %v6568
      %v6570 = vpop.f32.mrf.mxu0
      %v6571 = vpop.f32.mrf.mxu0
      %v6572 = vadd.f32 0.0, %v6571
      %v6573 = vpop.f32.mrf.mxu0
      %6574 = vmatprep.mubr.bf16.mxu0 0
      %6575 = vmatmul.mubr.bf16.gmra.mxu0 %v6413
      %v6576 = vpop.f32.mrf.mxu0
      %v6577 = vadd.f32 0.0, %v6576
      %v6578 = vpop.f32.mrf.mxu0
      %v6579 = vpop.f32.mrf.mxu0
      %v6580 = vadd.f32 0.0, %v6579
      %v6581 = vpop.f32.mrf.mxu0
      %6582 = vmatprep.mubr.bf16.mxu0 0
      %6583 = vmatmul.mubr.bf16.gmra.mxu0 %v6415
      %v6584 = vpop.f32.mrf.mxu0
      %v6585 = vadd.f32 0.0, %v6584
      %v6586 = vpop.f32.mrf.mxu0
      %v6587 = vpop.f32.mrf.mxu0
      %v6588 = vadd.f32 0.0, %v6587
      %v6589 = vpop.f32.mrf.mxu0
      %6590 = vmatprep.mubr.bf16.mxu0 0
      %6591 = vmatmul.mubr.bf16.gmra.mxu0 %v6417
      %v6592 = vpop.f32.mrf.mxu0
      %v6593 = vadd.f32 0.0, %v6592
      %v6594 = vpop.f32.mrf.mxu0
      %v6595 = vpop.f32.mrf.mxu0
      %v6596 = vadd.f32 0.0, %v6595
      %v6597 = vpop.f32.mrf.mxu0
      %6598 = vmatprep.mubr.bf16.mxu0 0
      %6599 = vmatmul.mubr.bf16.gmra.mxu0 %v6419
      %v6600 = vpop.f32.mrf.mxu0
      %v6601 = vadd.f32 0.0, %v6600
      %v6602 = vpop.f32.mrf.mxu0
      %v6603 = vpop.f32.mrf.mxu0
      %v6604 = vadd.f32 0.0, %v6603
      %v6605 = vpop.f32.mrf.mxu0
      %6606 = vmatprep.mubr.bf16.mxu0 0
      %6607 = vmatmul.mubr.bf16.gmra.mxu0 %v6421
      %v6608 = vpop.f32.mrf.mxu0
      %v6609 = vadd.f32 0.0, %v6608
      %v6610 = vpop.f32.mrf.mxu0
      %v6611 = vpop.f32.mrf.mxu0
      %v6612 = vadd.f32 0.0, %v6611
      %v6613 = vpop.f32.mrf.mxu0
      %6614 = vmatprep.mubr.bf16.mxu0 0
      %6615 = vmatmul.mubr.bf16.gmra.mxu0 %v6423
      %v6616 = vpop.f32.mrf.mxu0
      %v6617 = vadd.f32 0.0, %v6616
      %v6618 = vpop.f32.mrf.mxu0
      %v6619 = vpop.f32.mrf.mxu0
      %v6620 = vadd.f32 0.0, %v6619
      %v6621 = vpop.f32.mrf.mxu0
      %6622 = vmatprep.mubr.bf16.mxu0 0
      %6623 = vmatmul.mubr.bf16.gmra.mxu0 %v6425
      %v6624 = vpop.f32.mrf.mxu0
      %v6625 = vadd.f32 0.0, %v6624
      %v6626 = vpop.f32.mrf.mxu0
      %v6627 = vpop.f32.mrf.mxu0
      %v6628 = vadd.f32 0.0, %v6627
      %v6629 = vpop.f32.mrf.mxu0
      %6630 = vmatprep.mubr.bf16.mxu0 0
      %6631 = vmatmul.mubr.bf16.gmra.mxu0 %v6427
      %v6632 = vpop.f32.mrf.mxu0
      %v6633 = vadd.f32 0.0, %v6632
      %v6634 = vpop.f32.mrf.mxu0
      %v6635 = vpop.f32.mrf.mxu0
      %v6636 = vadd.f32 0.0, %v6635
      %v6637 = vpop.f32.mrf.mxu0
      %6638 = vmatprep.mubr.bf16.mxu0 0
      %6639 = vmatmul.mubr.bf16.gmra.mxu0 %v6429
      %v6640 = vpop.f32.mrf.mxu0
      %v6641 = vadd.f32 0.0, %v6640
      %v6642 = vpop.f32.mrf.mxu0
      %v6643 = vpop.f32.mrf.mxu0
      %v6644 = vadd.f32 0.0, %v6643
      %v6645 = vpop.f32.mrf.mxu0
      %6646 = vmatprep.mubr.bf16.mxu0 0
      %6647 = vmatmul.mubr.bf16.gmra.mxu0 %v6431
      %v6648 = vpop.f32.mrf.mxu0
      %v6649 = vadd.f32 0.0, %v6648
      %v6650 = vpop.f32.mrf.mxu0
      %v6651 = vpop.f32.mrf.mxu0
      %v6652 = vadd.f32 0.0, %v6651
      %v6653 = vpop.f32.mrf.mxu0
      %6654 = vmatprep.mubr.bf16.mxu0 0
      %6655 = vmatmul.mubr.bf16.gmra.mxu0 %v6433
      %v6656 = vpop.f32.mrf.mxu0
      %v6657 = vadd.f32 0.0, %v6656
      %v6658 = vpop.f32.mrf.mxu0
      %v6659 = vpop.f32.mrf.mxu0
      %v6660 = vadd.f32 0.0, %v6659
      %v6661 = vpop.f32.mrf.mxu0
      %6662 = vmatprep.mubr.bf16.mxu0 0
      %6663 = vmatmul.mubr.bf16.gmra.mxu0 %v6435
      %v6664 = vpop.f32.mrf.mxu0
      %v6665 = vadd.f32 0.0, %v6664
      %v6666 = vpop.f32.mrf.mxu0
      %v6667 = vpop.f32.mrf.mxu0
      %v6668 = vadd.f32 0.0, %v6667
      %v6669 = vpop.f32.mrf.mxu0
      %6670 = vmatprep.mubr.bf16.mxu0 0
      %6671 = vmatmul.mubr.bf16.gmra.mxu0 %v6437
      %v6672 = vpop.f32.mrf.mxu0
      %v6673 = vadd.f32 0.0, %v6672
      %v6674 = vpop.f32.mrf.mxu0
      %v6675 = vpop.f32.mrf.mxu0
      %v6676 = vadd.f32 0.0, %v6675
      %v6677 = vpop.f32.mrf.mxu0
      %6678 = vmatprep.mubr.bf16.mxu0 0
      %6679 = vmatmul.mubr.bf16.gmra.mxu0 %v6439
      %v6680 = vpop.f32.mrf.mxu0
      %v6681 = vadd.f32 0.0, %v6680
      %v6682 = vpop.f32.mrf.mxu0
      %v6683 = vpop.f32.mrf.mxu0
      %v6684 = vadd.f32 0.0, %v6683
      %v6685 = vpop.f32.mrf.mxu0
      %6686 = vmatprep.mubr.bf16.mxu0 0
      %6687 = vmatmul.mubr.bf16.gmra.mxu0 %v6441
      %v6688 = vpop.f32.mrf.mxu0
      %v6689 = vadd.f32 0.0, %v6688
      %v6690 = vpop.f32.mrf.mxu0
      %v6691 = vpop.f32.mrf.mxu0
      %v6692 = vadd.f32 0.0, %v6691
      %v6693 = vpop.f32.mrf.mxu0
      %6694 = vmatprep.mubr.bf16.mxu0 0
      %6695 = vmatmul.mubr.bf16.gmra.mxu0 %v6442
      %v6696 = vpop.f32.mrf.mxu0
      %v6697 = vadd.f32 0.0, %v6696
      %v6698 = vpop.f32.mrf.mxu0
      %v6699 = vpop.f32.mrf.mxu0
      %v6700 = vadd.f32 0.0, %v6699
      %v6701 = vpop.f32.mrf.mxu0
      %6702 = vmatprep.mubr.bf16.mxu0 0
      %6703 = vmatmul.mubr.bf16.gmra.mxu0 %v4108
      %v6704 = vpop.f32.mrf.mxu0
      %v6705 = vadd.f32 0.0, %v6704
      %v6706 = vpop.f32.mrf.mxu0
      %v6707 = vpop.f32.mrf.mxu0
      %v6708 = vadd.f32 0.0, %v6707
      %v6709 = vpop.f32.mrf.mxu0
      %6710 = vmatprep.mubr.bf16.mxu0 0
      %6711 = vmatmul.mubr.bf16.gmra.mxu0 %v4189
      %v6712 = vpop.f32.mrf.mxu0
      %v6713 = vadd.f32 0.0, %v6712
      %v6714 = vpop.f32.mrf.mxu0
      %v6715 = vpop.f32.mrf.mxu0
      %v6716 = vadd.f32 0.0, %v6715
      %v6717 = vpop.f32.mrf.mxu0
      %6718 = vmatprep.mubr.bf16.mxu0 0
      %6719 = vmatmul.mubr.bf16.gmra.mxu0 %v4131
      %v6720 = vpop.f32.mrf.mxu0
      %v6721 = vadd.f32 0.0, %v6720
      %v6722 = vpop.f32.mrf.mxu0
      %v6723 = vpop.f32.mrf.mxu0
      %v6724 = vpop.f32.mrf.mxu0
      %6725 = vdwg.mxu0
      %v6726 = vadd.f32 %v6366, %v6561
      %v6727 = vadd.f32 %v6367, %v6564
      %v6728 = vadd.f32 %v6368, %v6569
      %v6729 = vadd.f32 %v6369, %v6572
      %v6730 = vadd.f32 %v6370, %v6577
      %v6731 = vadd.f32 %v6371, %v6580
      %v6732 = vadd.f32 %v6372, %v6585
      %v6733 = vadd.f32 %v6373, %v6588
      %v6734 = vadd.f32 %v6374, %v6593
      %v6735 = vadd.f32 %v6375, %v6596
      %v6736 = vadd.f32 %v6376, %v6601
      %v6737 = vadd.f32 %v6377, %v6604
      %v6738 = vadd.f32 %v6378, %v6609
      %v6739 = vadd.f32 %v6379, %v6612
      %v6740 = vadd.f32 %v6380, %v6617
      %v6741 = vadd.f32 %v6381, %v6620
      %v6742 = vadd.f32 %v6382, %v6625
      %v6743 = vadd.f32 %v6383, %v6628
      %v6744 = vadd.f32 %v6384, %v6633
      %v6745 = vadd.f32 %v6385, %v6636
      %v6746 = vadd.f32 %v6386, %v6641
      %v6747 = vadd.f32 %v6387, %v6644
      %v6748 = vadd.f32 %v6388, %v6649
      %v6749 = vadd.f32 %v6389, %v6652
      %v6750 = vadd.f32 %v6390, %v6657
      %v6751 = vadd.f32 %v6391, %v6660
      %v6752 = vadd.f32 %v6392, %v6665
      %v6753 = vadd.f32 %v6393, %v6668
      %v6754 = vadd.f32 %v6394, %v6673
      %v6755 = vadd.f32 %v6395, %v6676
      %v6756 = vadd.f32 %v6396, %v6681
      %v6757 = vadd.f32 %v6397, %v6684
      %v6758 = vadd.f32 %v6398, %v6689
      %v6759 = vadd.f32 %v6399, %v6692
      %v6760 = vadd.f32 %v6400, %v6697
      %v6761 = vadd.f32 %v6401, %v6700
      %v6762 = vadd.f32 %v6402, %v6705
      %v6763 = vadd.f32 %v6403, %v6708
      %v6764 = vadd.f32 %v6404, %v6713
      %v6765 = vadd.f32 %v6405, %v6716
      %v6766 = vadd.f32 %v6406, %v6721
      %v6767 = vrot.slane %v3904, 1
      %v6768 = vrot.slane %v3907, 2
      %v6769 = vor.u32 %v6767, %v6768
      %v6770 = vrot.slane %v3913, 1
      %v6771 = vrot.slane %v3916, 2
      %v6772 = vor.u32 %v6770, %v6771
      %v6773 = vsel %vm1206, %v6769, %v6772
      %v6774 = vrot.slane %v3922, 1
      %v6775 = vrot.slane %v3925, 2
      %v6776 = vor.u32 %v6774, %v6775
      %v6777 = vsel %vm1206, %v6772, %v6776
      %v6778 = vrot.slane %v3931, 1
      %v6779 = vrot.slane %v3934, 2
      %v6780 = vor.u32 %v6778, %v6779
      %v6781 = vsel %vm1206, %v6776, %v6780
      %v6782 = vrot.slane %v3940, 1
      %v6783 = vrot.slane %v3943, 2
      %v6784 = vor.u32 %v6782, %v6783
      %v6785 = vsel %vm1206, %v6780, %v6784
      %v6786 = vrot.slane %v3949, 1
      %v6787 = vrot.slane %v3952, 2
      %v6788 = vor.u32 %v6786, %v6787
      %v6789 = vsel %vm1206, %v6784, %v6788
      %v6790 = vrot.slane %v3958, 1
      %v6791 = vrot.slane %v3961, 2
      %v6792 = vor.u32 %v6790, %v6791
      %v6793 = vsel %vm1206, %v6788, %v6792
      %v6794 = vrot.slane %v3967, 1
      %v6795 = vrot.slane %v3970, 2
      %v6796 = vor.u32 %v6794, %v6795
      %v6797 = vsel %vm1206, %v6792, %v6796
      %v6798 = vrot.slane %v3976, 1
      %v6799 = vrot.slane %v3979, 2
      %v6800 = vor.u32 %v6798, %v6799
      %v6801 = vsel %vm1206, %v6796, %v6800
      %v6802 = vrot.slane %v3985, 1
      %v6803 = vrot.slane %v3988, 2
      %v6804 = vor.u32 %v6802, %v6803
      %v6805 = vsel %vm1206, %v6800, %v6804
      %v6806 = vrot.slane %v3994, 1
      %v6807 = vrot.slane %v3997, 2
      %v6808 = vor.u32 %v6806, %v6807
      %v6809 = vsel %vm1206, %v6804, %v6808
      %v6810 = vrot.slane %v4003, 1
      %v6811 = vrot.slane %v4006, 2
      %v6812 = vor.u32 %v6810, %v6811
      %v6813 = vsel %vm1206, %v6808, %v6812
      %v6814 = vrot.slane %v4012, 1
      %v6815 = vrot.slane %v4015, 2
      %v6816 = vor.u32 %v6814, %v6815
      %v6817 = vsel %vm1206, %v6812, %v6816
      %v6818 = vrot.slane %v4021, 1
      %v6819 = vrot.slane %v4024, 2
      %v6820 = vor.u32 %v6818, %v6819
      %v6821 = vsel %vm1206, %v6816, %v6820
      %v6822 = vrot.slane %v4030, 1
      %v6823 = vrot.slane %v4033, 2
      %v6824 = vor.u32 %v6822, %v6823
      %v6825 = vsel %vm1206, %v6820, %v6824
      %v6826 = vrot.slane %v4039, 1
      %v6827 = vrot.slane %v4042, 2
      %v6828 = vor.u32 %v6826, %v6827
      %v6829 = vsel %vm1206, %v6824, %v6828
      %v6830 = vrot.slane %v4048, 1
      %v6831 = vrot.slane %v4051, 2
      %v6832 = vor.u32 %v6830, %v6831
      %v6833 = vsel %vm1206, %v6828, %v6832
      %v6834 = vrot.slane %v4057, 1
      %v6835 = vrot.slane %v4060, 2
      %v6836 = vor.u32 %v6834, %v6835
      %v6837 = vsel %vm1206, %v6832, %v6836
      %v6838 = vsel %vm1206, %v6836, %v4706
      %s6857 = scalar_lea.vmem %s3, 512
      %v6858 = vld [vmem:[%s6857] sm:$0xf]
      %v6859 = vld [vmem:[%s6857 + $0x4] sm:$0xf]
      %v6860 = vld [vmem:[%s6857 + $0x8] sm:$0xf]
      %v6861 = vld [vmem:[%s6857 + $0xc] sm:$0xf]
      %v6862 = vld [vmem:[%s6857 + $0x10] sm:$0xf]
      %v6863 = vld [vmem:[%s6857 + $0x14] sm:$0xf]
      %v6864 = vld [vmem:[%s6857 + $0x18] sm:$0xf]
      %v6865 = vld [vmem:[%s6857 + $0x1c] sm:$0xf]
      %v6866 = vld [vmem:[%s6857 + $0x20] sm:$0xf]
      %v6867 = vld [vmem:[%s6857 + $0x24] sm:$0xf]
      %v6868 = vld [vmem:[%s6857 + $0x28] sm:$0xf]
      %v6869 = vld [vmem:[%s6857 + $0x2c] sm:$0xf]
      %v6870 = vld [vmem:[%s6857 + $0x30] sm:$0xf]
      %v6871 = vld [vmem:[%s6857 + $0x34] sm:$0xf]
      %v6872 = vld [vmem:[%s6857 + $0x38] sm:$0xf]
      %v6873 = vld [vmem:[%s6857 + $0x3c] sm:$0xf]
      %v6890 = vunpack.c.l.b16 %v6858
      %v6891 = vunpack.c.l.b16 %v6859
      %v6892 = vunpack.c.l.b16 %v6860
      %v6893 = vunpack.c.l.b16 %v6861
      %v6894 = vunpack.c.l.b16 %v6862
      %v6895 = vunpack.c.l.b16 %v6863
      %v6896 = vunpack.c.l.b16 %v6864
      %v6897 = vunpack.c.l.b16 %v6865
      %v6898 = vunpack.c.l.b16 %v6866
      %v6899 = vunpack.c.l.b16 %v6867
      %v6900 = vunpack.c.l.b16 %v6868
      %v6901 = vunpack.c.l.b16 %v6869
      %v6902 = vunpack.c.l.b16 %v6870
      %v6903 = vunpack.c.l.b16 %v6871
      %v6904 = vunpack.c.l.b16 %v6872
      %v6905 = vunpack.c.l.b16 %v6873
      %v6906 = vpack.c.b16 %v6891, %v6890
      %v6907 = vpack.c.b16 %v6893, %v6892
      %v6908 = vpack.c.b16 %v6895, %v6894
      %v6909 = vpack.c.b16 %v6897, %v6896
      %v6910 = vpack.c.b16 %v6899, %v6898
      %v6911 = vpack.c.b16 %v6901, %v6900
      %v6912 = vpack.c.b16 %v6903, %v6902
      %v6913 = vpack.c.b16 %v6905, %v6904
      %6922 = vmatprep.subr.bf16.mxu0 0
      %6923 = vmatpush1.bf16.msra.mxu0 %v6913
      %6924 = vmatprep.subr.bf16.mxu0 0
      %6925 = vmatpush1.bf16.msra.mxu0 %v6912
      %6926 = vmatprep.subr.bf16.mxu0 0
      %6927 = vmatpush1.bf16.msra.mxu0 %v6911
      %6928 = vmatprep.subr.bf16.mxu0 0
      %6929 = vmatpush1.bf16.msra.mxu0 %v6910
      %6930 = vmatprep.subr.bf16.mxu0 0
      %6931 = vmatpush1.bf16.msra.mxu0 %v6909
      %6932 = vmatprep.subr.bf16.mxu0 0
      %6933 = vmatpush1.bf16.msra.mxu0 %v6908
      %6934 = vmatprep.subr.bf16.mxu0 0
      %6935 = vmatpush1.bf16.msra.mxu0 %v6907
      %6936 = vmatprep.subr.bf16.mxu0 0
      %6937 = vmatpush1.bf16.msra.mxu0 %v6906
      %6938 = vmatprep.subr.bf16.mxu0 0
      %6939 = vmatpush2.bf16.msra.mxu0 0
      %6940 = vmatprep.subr.bf16.mxu0 0
      %6941 = vmatpush2.bf16.msra.mxu0 0
      %6942 = vmatprep.subr.bf16.mxu0 0
      %6943 = vmatpush2.bf16.msra.mxu0 0
      %6944 = vmatprep.subr.bf16.mxu0 0
      %6945 = vmatpush2.bf16.msra.mxu0 0
      %6946 = vmatprep.subr.bf16.mxu0 0
      %6947 = vmatpush2.bf16.msra.mxu0 0
      %6948 = vmatprep.subr.bf16.mxu0 0
      %6949 = vmatpush2.bf16.msra.mxu0 0
      %6950 = vmatprep.subr.bf16.mxu0 0
      %6951 = vmatpush2.bf16.msra.mxu0 0
      %6952 = vmatprep.subr.bf16.mxu0 0
      %6953 = vmatpush2.bf16.msra.mxu0 0
      %6954 = vmatprep.mubr.bf16.mxu0 0
      %6955 = vmatmul.mubr.bf16.gmra.mxu0 %v6773
      %v6956 = vpop.f32.mrf.mxu0
      %v6957 = vadd.f32 0.0, %v6956
      %v6958 = vpop.f32.mrf.mxu0
      %v6959 = vpop.f32.mrf.mxu0
      %v6960 = vadd.f32 0.0, %v6959
      %v6961 = vpop.f32.mrf.mxu0
      %6962 = vmatprep.mubr.bf16.mxu0 0
      %6963 = vmatmul.mubr.bf16.gmra.mxu0 %v6777
      %v6964 = vpop.f32.mrf.mxu0
      %v6965 = vadd.f32 0.0, %v6964
      %v6966 = vpop.f32.mrf.mxu0
      %v6967 = vpop.f32.mrf.mxu0
      %v6968 = vadd.f32 0.0, %v6967
      %v6969 = vpop.f32.mrf.mxu0
      %6970 = vmatprep.mubr.bf16.mxu0 0
      %6971 = vmatmul.mubr.bf16.gmra.mxu0 %v6781
      %v6972 = vpop.f32.mrf.mxu0
      %v6973 = vadd.f32 0.0, %v6972
      %v6974 = vpop.f32.mrf.mxu0
      %v6975 = vpop.f32.mrf.mxu0
      %v6976 = vadd.f32 0.0, %v6975
      %v6977 = vpop.f32.mrf.mxu0
      %6978 = vmatprep.mubr.bf16.mxu0 0
      %6979 = vmatmul.mubr.bf16.gmra.mxu0 %v6785
      %v6980 = vpop.f32.mrf.mxu0
      %v6981 = vadd.f32 0.0, %v6980
      %v6982 = vpop.f32.mrf.mxu0
      %v6983 = vpop.f32.mrf.mxu0
      %v6984 = vadd.f32 0.0, %v6983
      %v6985 = vpop.f32.mrf.mxu0
      %6986 = vmatprep.mubr.bf16.mxu0 0
      %6987 = vmatmul.mubr.bf16.gmra.mxu0 %v6789
      %v6988 = vpop.f32.mrf.mxu0
      %v6989 = vadd.f32 0.0, %v6988
      %v6990 = vpop.f32.mrf.mxu0
      %v6991 = vpop.f32.mrf.mxu0
      %v6992 = vadd.f32 0.0, %v6991
      %v6993 = vpop.f32.mrf.mxu0
      %6994 = vmatprep.mubr.bf16.mxu0 0
      %6995 = vmatmul.mubr.bf16.gmra.mxu0 %v6793
      %v6996 = vpop.f32.mrf.mxu0
      %v6997 = vadd.f32 0.0, %v6996
      %v6998 = vpop.f32.mrf.mxu0
      %v6999 = vpop.f32.mrf.mxu0
      %v7000 = vadd.f32 0.0, %v6999
      %v7001 = vpop.f32.mrf.mxu0
      %7002 = vmatprep.mubr.bf16.mxu0 0
      %7003 = vmatmul.mubr.bf16.gmra.mxu0 %v6797
      %v7004 = vpop.f32.mrf.mxu0
      %v7005 = vadd.f32 0.0, %v7004
      %v7006 = vpop.f32.mrf.mxu0
      %v7007 = vpop.f32.mrf.mxu0
      %v7008 = vadd.f32 0.0, %v7007
      %v7009 = vpop.f32.mrf.mxu0
      %7010 = vmatprep.mubr.bf16.mxu0 0
      %7011 = vmatmul.mubr.bf16.gmra.mxu0 %v6801
      %v7012 = vpop.f32.mrf.mxu0
      %v7013 = vadd.f32 0.0, %v7012
      %v7014 = vpop.f32.mrf.mxu0
      %v7015 = vpop.f32.mrf.mxu0
      %v7016 = vadd.f32 0.0, %v7015
      %v7017 = vpop.f32.mrf.mxu0
      %7018 = vmatprep.mubr.bf16.mxu0 0
      %7019 = vmatmul.mubr.bf16.gmra.mxu0 %v6805
      %v7020 = vpop.f32.mrf.mxu0
      %v7021 = vadd.f32 0.0, %v7020
      %v7022 = vpop.f32.mrf.mxu0
      %v7023 = vpop.f32.mrf.mxu0
      %v7024 = vadd.f32 0.0, %v7023
      %v7025 = vpop.f32.mrf.mxu0
      %7026 = vmatprep.mubr.bf16.mxu0 0
      %7027 = vmatmul.mubr.bf16.gmra.mxu0 %v6809
      %v7028 = vpop.f32.mrf.mxu0
      %v7029 = vadd.f32 0.0, %v7028
      %v7030 = vpop.f32.mrf.mxu0
      %v7031 = vpop.f32.mrf.mxu0
      %v7032 = vadd.f32 0.0, %v7031
      %v7033 = vpop.f32.mrf.mxu0
      %7034 = vmatprep.mubr.bf16.mxu0 0
      %7035 = vmatmul.mubr.bf16.gmra.mxu0 %v6813
      %v7036 = vpop.f32.mrf.mxu0
      %v7037 = vadd.f32 0.0, %v7036
      %v7038 = vpop.f32.mrf.mxu0
      %v7039 = vpop.f32.mrf.mxu0
      %v7040 = vadd.f32 0.0, %v7039
      %v7041 = vpop.f32.mrf.mxu0
      %7042 = vmatprep.mubr.bf16.mxu0 0
      %7043 = vmatmul.mubr.bf16.gmra.mxu0 %v6817
      %v7044 = vpop.f32.mrf.mxu0
      %v7045 = vadd.f32 0.0, %v7044
      %v7046 = vpop.f32.mrf.mxu0
      %v7047 = vpop.f32.mrf.mxu0
      %v7048 = vadd.f32 0.0, %v7047
      %v7049 = vpop.f32.mrf.mxu0
      %7050 = vmatprep.mubr.bf16.mxu0 0
      %7051 = vmatmul.mubr.bf16.gmra.mxu0 %v6821
      %v7052 = vpop.f32.mrf.mxu0
      %v7053 = vadd.f32 0.0, %v7052
      %v7054 = vpop.f32.mrf.mxu0
      %v7055 = vpop.f32.mrf.mxu0
      %v7056 = vadd.f32 0.0, %v7055
      %v7057 = vpop.f32.mrf.mxu0
      %7058 = vmatprep.mubr.bf16.mxu0 0
      %7059 = vmatmul.mubr.bf16.gmra.mxu0 %v6825
      %v7060 = vpop.f32.mrf.mxu0
      %v7061 = vadd.f32 0.0, %v7060
      %v7062 = vpop.f32.mrf.mxu0
      %v7063 = vpop.f32.mrf.mxu0
      %v7064 = vadd.f32 0.0, %v7063
      %v7065 = vpop.f32.mrf.mxu0
      %7066 = vmatprep.mubr.bf16.mxu0 0
      %7067 = vmatmul.mubr.bf16.gmra.mxu0 %v6829
      %v7068 = vpop.f32.mrf.mxu0
      %v7069 = vadd.f32 0.0, %v7068
      %v7070 = vpop.f32.mrf.mxu0
      %v7071 = vpop.f32.mrf.mxu0
      %v7072 = vadd.f32 0.0, %v7071
      %v7073 = vpop.f32.mrf.mxu0
      %7074 = vmatprep.mubr.bf16.mxu0 0
      %7075 = vmatmul.mubr.bf16.gmra.mxu0 %v6833
      %v7076 = vpop.f32.mrf.mxu0
      %v7077 = vadd.f32 0.0, %v7076
      %v7078 = vpop.f32.mrf.mxu0
      %v7079 = vpop.f32.mrf.mxu0
      %v7080 = vadd.f32 0.0, %v7079
      %v7081 = vpop.f32.mrf.mxu0
      %7082 = vmatprep.mubr.bf16.mxu0 0
      %7083 = vmatmul.mubr.bf16.gmra.mxu0 %v6837
      %v7084 = vpop.f32.mrf.mxu0
      %v7085 = vadd.f32 0.0, %v7084
      %v7086 = vpop.f32.mrf.mxu0
      %v7087 = vpop.f32.mrf.mxu0
      %v7088 = vadd.f32 0.0, %v7087
      %v7089 = vpop.f32.mrf.mxu0
      %7090 = vmatprep.mubr.bf16.mxu0 0
      %7091 = vmatmul.mubr.bf16.gmra.mxu0 %v6838
      %v7092 = vpop.f32.mrf.mxu0
      %v7093 = vadd.f32 0.0, %v7092
      %v7094 = vpop.f32.mrf.mxu0
      %v7095 = vpop.f32.mrf.mxu0
      %v7096 = vadd.f32 0.0, %v7095
      %v7097 = vpop.f32.mrf.mxu0
      %7098 = vmatprep.mubr.bf16.mxu0 0
      %7099 = vmatmul.mubr.bf16.gmra.mxu0 %v4710
      %v7100 = vpop.f32.mrf.mxu0
      %v7101 = vadd.f32 0.0, %v7100
      %v7102 = vpop.f32.mrf.mxu0
      %v7103 = vpop.f32.mrf.mxu0
      %v7104 = vadd.f32 0.0, %v7103
      %v7105 = vpop.f32.mrf.mxu0
      %7106 = vmatprep.mubr.bf16.mxu0 0
      %7107 = vmatmul.mubr.bf16.gmra.mxu0 %v4792
      %v7108 = vpop.f32.mrf.mxu0
      %v7109 = vadd.f32 0.0, %v7108
      %v7110 = vpop.f32.mrf.mxu0
      %v7111 = vpop.f32.mrf.mxu0
      %v7112 = vadd.f32 0.0, %v7111
      %v7113 = vpop.f32.mrf.mxu0
      %7114 = vmatprep.mubr.bf16.mxu0 0
      %7115 = vmatmul.mubr.bf16.gmra.mxu0 %v4717
      %v7116 = vpop.f32.mrf.mxu0
      %v7117 = vadd.f32 0.0, %v7116
      %v7118 = vpop.f32.mrf.mxu0
      %v7119 = vpop.f32.mrf.mxu0
      %v7120 = vpop.f32.mrf.mxu0
      %7121 = vdwg.mxu0
      %v7122 = vadd.f32 %v6726, %v6957
      %v7123 = vadd.f32 %v6727, %v6960
      %v7124 = vadd.f32 %v6728, %v6965
      %v7125 = vadd.f32 %v6729, %v6968
      %v7126 = vadd.f32 %v6730, %v6973
      %v7127 = vadd.f32 %v6731, %v6976
      %v7128 = vadd.f32 %v6732, %v6981
      %v7129 = vadd.f32 %v6733, %v6984
      %v7130 = vadd.f32 %v6734, %v6989
      %v7131 = vadd.f32 %v6735, %v6992
      %v7132 = vadd.f32 %v6736, %v6997
      %v7133 = vadd.f32 %v6737, %v7000
      %v7134 = vadd.f32 %v6738, %v7005
      %v7135 = vadd.f32 %v6739, %v7008
      %v7136 = vadd.f32 %v6740, %v7013
      %v7137 = vadd.f32 %v6741, %v7016
      %v7138 = vadd.f32 %v6742, %v7021
      %v7139 = vadd.f32 %v6743, %v7024
      %v7140 = vadd.f32 %v6744, %v7029
      %v7141 = vadd.f32 %v6745, %v7032
      %v7142 = vadd.f32 %v6746, %v7037
      %v7143 = vadd.f32 %v6747, %v7040
      %v7144 = vadd.f32 %v6748, %v7045
      %v7145 = vadd.f32 %v6749, %v7048
      %v7146 = vadd.f32 %v6750, %v7053
      %v7147 = vadd.f32 %v6751, %v7056
      %v7148 = vadd.f32 %v6752, %v7061
      %v7149 = vadd.f32 %v6753, %v7064
      %v7150 = vadd.f32 %v6754, %v7069
      %v7151 = vadd.f32 %v6755, %v7072
      %v7152 = vadd.f32 %v6756, %v7077
      %v7153 = vadd.f32 %v6757, %v7080
      %v7154 = vadd.f32 %v6758, %v7085
      %v7155 = vadd.f32 %v6759, %v7088
      %v7156 = vadd.f32 %v6760, %v7093
      %v7157 = vadd.f32 %v6761, %v7096
      %v7158 = vadd.f32 %v6762, %v7101
      %v7159 = vadd.f32 %v6763, %v7104
      %v7160 = vadd.f32 %v6764, %v7109
      %v7161 = vadd.f32 %v6765, %v7112
      %v7162 = vadd.f32 %v6766, %v7117
      %v7163 = vld [vmem:[%s4] sm:$0xf]
      %v7165 = vsel %vm736, %v7163, 0
      %7167 = vmatprep.subr.bf16.mxu0 0
      %7168 = vmatpush1.bf16.msra.mxu0 0
      %7169 = vmatprep.subr.bf16.mxu0 0
      %7170 = vmatpush1.bf16.msra.mxu0 0
      %7171 = vmatprep.subr.bf16.mxu0 0
      %7172 = vmatpush1.bf16.msra.mxu0 0
      %7173 = vmatprep.subr.bf16.mxu0 0
      %7174 = vmatpush1.bf16.msra.mxu0 0
      %7175 = vmatprep.subr.bf16.mxu0 0
      %7176 = vmatpush1.bf16.msra.mxu0 0
      %7177 = vmatprep.subr.bf16.mxu0 0
      %7178 = vmatpush1.bf16.msra.mxu0 0
      %7179 = vmatprep.subr.bf16.mxu0 0
      %7180 = vmatpush1.bf16.msra.mxu0 0
      %7181 = vmatprep.subr.bf16.mxu0 0
      %7182 = vmatpush1.bf16.msra.mxu0 %v7165
      %7183 = vmatprep.subr.bf16.mxu0 0
      %7184 = vmatpush2.bf16.msra.mxu0 0
      %7185 = vmatprep.subr.bf16.mxu0 0
      %7186 = vmatpush2.bf16.msra.mxu0 0
      %7187 = vmatprep.subr.bf16.mxu0 0
      %7188 = vmatpush2.bf16.msra.mxu0 0
      %7189 = vmatprep.subr.bf16.mxu0 0
      %7190 = vmatpush2.bf16.msra.mxu0 0
      %7191 = vmatprep.subr.bf16.mxu0 0
      %7192 = vmatpush2.bf16.msra.mxu0 0
      %7193 = vmatprep.subr.bf16.mxu0 0
      %7194 = vmatpush2.bf16.msra.mxu0 0
      %7195 = vmatprep.subr.bf16.mxu0 0
      %7196 = vmatpush2.bf16.msra.mxu0 0
      %7197 = vmatprep.subr.bf16.mxu0 0
      %7198 = vmatpush2.bf16.msra.mxu0 0
      %7199 = vmatprep.mubr.bf16.mxu0 0
      %7200 = vmatmul.mubr.bf16.gmra.mxu0 %v1849
      %v7201 = vpop.f32.mrf.mxu0
      %v7202 = vadd.f32 0.0, %v7201
      %v7203 = vpop.f32.mrf.mxu0
      %v7204 = vpop.f32.mrf.mxu0
      %v7205 = vadd.f32 0.0, %v7204
      %v7206 = vpop.f32.mrf.mxu0
      %7207 = vmatprep.mubr.bf16.mxu0 0
      %7208 = vmatmul.mubr.bf16.gmra.mxu0 %v1851
      %v7209 = vpop.f32.mrf.mxu0
      %v7210 = vadd.f32 0.0, %v7209
      %v7211 = vpop.f32.mrf.mxu0
      %v7212 = vpop.f32.mrf.mxu0
      %v7213 = vadd.f32 0.0, %v7212
      %v7214 = vpop.f32.mrf.mxu0
      %7215 = vmatprep.mubr.bf16.mxu0 0
      %7216 = vmatmul.mubr.bf16.gmra.mxu0 %v1853
      %v7217 = vpop.f32.mrf.mxu0
      %v7218 = vadd.f32 0.0, %v7217
      %v7219 = vpop.f32.mrf.mxu0
      %v7220 = vpop.f32.mrf.mxu0
      %v7221 = vadd.f32 0.0, %v7220
      %v7222 = vpop.f32.mrf.mxu0
      %7223 = vmatprep.mubr.bf16.mxu0 0
      %7224 = vmatmul.mubr.bf16.gmra.mxu0 %v1855
      %v7225 = vpop.f32.mrf.mxu0
      %v7226 = vadd.f32 0.0, %v7225
      %v7227 = vpop.f32.mrf.mxu0
      %v7228 = vpop.f32.mrf.mxu0
      %v7229 = vadd.f32 0.0, %v7228
      %v7230 = vpop.f32.mrf.mxu0
      %7231 = vmatprep.mubr.bf16.mxu0 0
      %7232 = vmatmul.mubr.bf16.gmra.mxu0 %v1857
      %v7233 = vpop.f32.mrf.mxu0
      %v7234 = vadd.f32 0.0, %v7233
      %v7235 = vpop.f32.mrf.mxu0
      %v7236 = vpop.f32.mrf.mxu0
      %v7237 = vadd.f32 0.0, %v7236
      %v7238 = vpop.f32.mrf.mxu0
      %7239 = vmatprep.mubr.bf16.mxu0 0
      %7240 = vmatmul.mubr.bf16.gmra.mxu0 %v1859
      %v7241 = vpop.f32.mrf.mxu0
      %v7242 = vadd.f32 0.0, %v7241
      %v7243 = vpop.f32.mrf.mxu0
      %v7244 = vpop.f32.mrf.mxu0
      %v7245 = vadd.f32 0.0, %v7244
      %v7246 = vpop.f32.mrf.mxu0
      %7247 = vmatprep.mubr.bf16.mxu0 0
      %7248 = vmatmul.mubr.bf16.gmra.mxu0 %v1861
      %v7249 = vpop.f32.mrf.mxu0
      %v7250 = vadd.f32 0.0, %v7249
      %v7251 = vpop.f32.mrf.mxu0
      %v7252 = vpop.f32.mrf.mxu0
      %v7253 = vadd.f32 0.0, %v7252
      %v7254 = vpop.f32.mrf.mxu0
      %7255 = vmatprep.mubr.bf16.mxu0 0
      %7256 = vmatmul.mubr.bf16.gmra.mxu0 %v1863
      %v7257 = vpop.f32.mrf.mxu0
      %v7258 = vadd.f32 0.0, %v7257
      %v7259 = vpop.f32.mrf.mxu0
      %v7260 = vpop.f32.mrf.mxu0
      %v7261 = vadd.f32 0.0, %v7260
      %v7262 = vpop.f32.mrf.mxu0
      %7263 = vmatprep.mubr.bf16.mxu0 0
      %7264 = vmatmul.mubr.bf16.gmra.mxu0 %v1865
      %v7265 = vpop.f32.mrf.mxu0
      %v7266 = vadd.f32 0.0, %v7265
      %v7267 = vpop.f32.mrf.mxu0
      %v7268 = vpop.f32.mrf.mxu0
      %v7269 = vadd.f32 0.0, %v7268
      %v7270 = vpop.f32.mrf.mxu0
      %7271 = vmatprep.mubr.bf16.mxu0 0
      %7272 = vmatmul.mubr.bf16.gmra.mxu0 %v1867
      %v7273 = vpop.f32.mrf.mxu0
      %v7274 = vadd.f32 0.0, %v7273
      %v7275 = vpop.f32.mrf.mxu0
      %v7276 = vpop.f32.mrf.mxu0
      %v7277 = vadd.f32 0.0, %v7276
      %v7278 = vpop.f32.mrf.mxu0
      %7279 = vmatprep.mubr.bf16.mxu0 0
      %7280 = vmatmul.mubr.bf16.gmra.mxu0 %v1869
      %v7281 = vpop.f32.mrf.mxu0
      %v7282 = vadd.f32 0.0, %v7281
      %v7283 = vpop.f32.mrf.mxu0
      %v7284 = vpop.f32.mrf.mxu0
      %v7285 = vadd.f32 0.0, %v7284
      %v7286 = vpop.f32.mrf.mxu0
      %7287 = vmatprep.mubr.bf16.mxu0 0
      %7288 = vmatmul.mubr.bf16.gmra.mxu0 %v1871
      %v7289 = vpop.f32.mrf.mxu0
      %v7290 = vadd.f32 0.0, %v7289
      %v7291 = vpop.f32.mrf.mxu0
      %v7292 = vpop.f32.mrf.mxu0
      %v7293 = vadd.f32 0.0, %v7292
      %v7294 = vpop.f32.mrf.mxu0
      %7295 = vmatprep.mubr.bf16.mxu0 0
      %7296 = vmatmul.mubr.bf16.gmra.mxu0 %v1873
      %v7297 = vpop.f32.mrf.mxu0
      %v7298 = vadd.f32 0.0, %v7297
      %v7299 = vpop.f32.mrf.mxu0
      %v7300 = vpop.f32.mrf.mxu0
      %v7301 = vadd.f32 0.0, %v7300
      %v7302 = vpop.f32.mrf.mxu0
      %7303 = vmatprep.mubr.bf16.mxu0 0
      %7304 = vmatmul.mubr.bf16.gmra.mxu0 %v1875
      %v7305 = vpop.f32.mrf.mxu0
      %v7306 = vadd.f32 0.0, %v7305
      %v7307 = vpop.f32.mrf.mxu0
      %v7308 = vpop.f32.mrf.mxu0
      %v7309 = vadd.f32 0.0, %v7308
      %v7310 = vpop.f32.mrf.mxu0
      %7311 = vmatprep.mubr.bf16.mxu0 0
      %7312 = vmatmul.mubr.bf16.gmra.mxu0 %v1877
      %v7313 = vpop.f32.mrf.mxu0
      %v7314 = vadd.f32 0.0, %v7313
      %v7315 = vpop.f32.mrf.mxu0
      %v7316 = vpop.f32.mrf.mxu0
      %v7317 = vadd.f32 0.0, %v7316
      %v7318 = vpop.f32.mrf.mxu0
      %7319 = vmatprep.mubr.bf16.mxu0 0
      %7320 = vmatmul.mubr.bf16.gmra.mxu0 %v1879
      %v7321 = vpop.f32.mrf.mxu0
      %v7322 = vadd.f32 0.0, %v7321
      %v7323 = vpop.f32.mrf.mxu0
      %v7324 = vpop.f32.mrf.mxu0
      %v7325 = vadd.f32 0.0, %v7324
      %v7326 = vpop.f32.mrf.mxu0
      %7327 = vmatprep.mubr.bf16.mxu0 0
      %7328 = vmatmul.mubr.bf16.gmra.mxu0 %v1881
      %v7329 = vpop.f32.mrf.mxu0
      %v7330 = vadd.f32 0.0, %v7329
      %v7331 = vpop.f32.mrf.mxu0
      %v7332 = vpop.f32.mrf.mxu0
      %v7333 = vadd.f32 0.0, %v7332
      %v7334 = vpop.f32.mrf.mxu0
      %7335 = vmatprep.mubr.bf16.mxu0 0
      %7336 = vmatmul.mubr.bf16.gmra.mxu0 %v1883
      %v7337 = vpop.f32.mrf.mxu0
      %v7338 = vadd.f32 0.0, %v7337
      %v7339 = vpop.f32.mrf.mxu0
      %v7340 = vpop.f32.mrf.mxu0
      %v7341 = vadd.f32 0.0, %v7340
      %v7342 = vpop.f32.mrf.mxu0
      %7343 = vmatprep.mubr.bf16.mxu0 0
      %7344 = vmatmul.mubr.bf16.gmra.mxu0 %v1885
      %v7345 = vpop.f32.mrf.mxu0
      %v7346 = vadd.f32 0.0, %v7345
      %v7347 = vpop.f32.mrf.mxu0
      %v7348 = vpop.f32.mrf.mxu0
      %v7349 = vadd.f32 0.0, %v7348
      %v7350 = vpop.f32.mrf.mxu0
      %7351 = vmatprep.mubr.bf16.mxu0 0
      %7352 = vmatmul.mubr.bf16.gmra.mxu0 %v1887
      %v7353 = vpop.f32.mrf.mxu0
      %v7354 = vadd.f32 0.0, %v7353
      %v7355 = vpop.f32.mrf.mxu0
      %v7356 = vpop.f32.mrf.mxu0
      %v7357 = vadd.f32 0.0, %v7356
      %v7358 = vpop.f32.mrf.mxu0
      %7359 = vmatprep.mubr.bf16.mxu0 0
      %7360 = vmatmul.mubr.bf16.gmra.mxu0 %v1889
      %v7361 = vpop.f32.mrf.mxu0
      %v7362 = vadd.f32 0.0, %v7361
      %v7363 = vpop.f32.mrf.mxu0
      %v7364 = vpop.f32.mrf.mxu0
      %v7365 = vpop.f32.mrf.mxu0
      %7366 = vdwg.mxu0
      %v7367 = vadd.f32 %v7122, %v7202
      %v7368 = vadd.f32 %v7123, %v7205
      %v7369 = vadd.f32 %v7124, %v7210
      %v7370 = vadd.f32 %v7125, %v7213
      %v7371 = vadd.f32 %v7126, %v7218
      %v7372 = vadd.f32 %v7127, %v7221
      %v7373 = vadd.f32 %v7128, %v7226
      %v7374 = vadd.f32 %v7129, %v7229
      %v7375 = vadd.f32 %v7130, %v7234
      %v7376 = vadd.f32 %v7131, %v7237
      %v7377 = vadd.f32 %v7132, %v7242
      %v7378 = vadd.f32 %v7133, %v7245
      %v7379 = vadd.f32 %v7134, %v7250
      %v7380 = vadd.f32 %v7135, %v7253
      %v7381 = vadd.f32 %v7136, %v7258
      %v7382 = vadd.f32 %v7137, %v7261
      %v7383 = vadd.f32 %v7138, %v7266
      %v7384 = vadd.f32 %v7139, %v7269
      %v7385 = vadd.f32 %v7140, %v7274
      %v7386 = vadd.f32 %v7141, %v7277
      %v7387 = vadd.f32 %v7142, %v7282
      %v7388 = vadd.f32 %v7143, %v7285
      %v7389 = vadd.f32 %v7144, %v7290
      %v7390 = vadd.f32 %v7145, %v7293
      %v7391 = vadd.f32 %v7146, %v7298
      %v7392 = vadd.f32 %v7147, %v7301
      %v7393 = vadd.f32 %v7148, %v7306
      %v7394 = vadd.f32 %v7149, %v7309
      %v7395 = vadd.f32 %v7150, %v7314
      %v7396 = vadd.f32 %v7151, %v7317
      %v7397 = vadd.f32 %v7152, %v7322
      %v7398 = vadd.f32 %v7153, %v7325
      %v7399 = vadd.f32 %v7154, %v7330
      %v7400 = vadd.f32 %v7155, %v7333
      %v7401 = vadd.f32 %v7156, %v7338
      %v7402 = vadd.f32 %v7157, %v7341
      %v7403 = vadd.f32 %v7158, %v7346
      %v7404 = vadd.f32 %v7159, %v7349
      %v7405 = vadd.f32 %v7160, %v7354
      %v7406 = vadd.f32 %v7161, %v7357
      %v7407 = vadd.f32 %v7162, %v7362
      %v7408 = vld [vmem:[%s5] sm:$0x1]
      %v7410 = vlaneseq
      %v7411 = vshrl.u32 %v7410, 7
      %v7412 = vsub.s32 0, %v7411
      %v7413 = vrot.slane %v7408, %v7412
      %v7415 = vadd.f32 %v7367, %v7413
      %v7416 = vadd.f32 %v7368, %v7413
      %v7417 = vadd.f32 %v7369, %v7413
      %v7418 = vadd.f32 %v7370, %v7413
      %v7419 = vadd.f32 %v7371, %v7413
      %v7420 = vadd.f32 %v7372, %v7413
      %v7421 = vadd.f32 %v7373, %v7413
      %v7422 = vadd.f32 %v7374, %v7413
      %v7423 = vadd.f32 %v7375, %v7413
      %v7424 = vadd.f32 %v7376, %v7413
      %v7425 = vadd.f32 %v7377, %v7413
      %v7426 = vadd.f32 %v7378, %v7413
      %v7427 = vadd.f32 %v7379, %v7413
      %v7428 = vadd.f32 %v7380, %v7413
      %v7429 = vadd.f32 %v7381, %v7413
      %v7430 = vadd.f32 %v7382, %v7413
      %v7431 = vadd.f32 %v7383, %v7413
      %v7432 = vadd.f32 %v7384, %v7413
      %v7433 = vadd.f32 %v7385, %v7413
      %v7434 = vadd.f32 %v7386, %v7413
      %v7435 = vadd.f32 %v7387, %v7413
      %v7436 = vadd.f32 %v7388, %v7413
      %v7437 = vadd.f32 %v7389, %v7413
      %v7438 = vadd.f32 %v7390, %v7413
      %v7439 = vadd.f32 %v7391, %v7413
      %v7440 = vadd.f32 %v7392, %v7413
      %v7441 = vadd.f32 %v7393, %v7413
      %v7442 = vadd.f32 %v7394, %v7413
      %v7443 = vadd.f32 %v7395, %v7413
      %v7444 = vadd.f32 %v7396, %v7413
      %v7445 = vadd.f32 %v7397, %v7413
      %v7446 = vadd.f32 %v7398, %v7413
      %v7447 = vadd.f32 %v7399, %v7413
      %v7448 = vadd.f32 %v7400, %v7413
      %v7449 = vadd.f32 %v7401, %v7413
      %v7450 = vadd.f32 %v7402, %v7413
      %v7451 = vadd.f32 %v7403, %v7413
      %v7452 = vadd.f32 %v7404, %v7413
      %v7453 = vadd.f32 %v7405, %v7413
      %v7454 = vadd.f32 %v7406, %v7413
      %v7455 = vadd.f32 %v7407, %v7413
      %v7456 = vmax.f32 %v7415, 0.0
      %v7457 = vmax.f32 %v7416, 0.0
      %v7458 = vmax.f32 %v7417, 0.0
      %v7459 = vmax.f32 %v7418, 0.0
      %v7460 = vmax.f32 %v7419, 0.0
      %v7461 = vmax.f32 %v7420, 0.0
      %v7462 = vmax.f32 %v7421, 0.0
      %v7463 = vmax.f32 %v7422, 0.0
      %v7464 = vmax.f32 %v7423, 0.0
      %v7465 = vmax.f32 %v7424, 0.0
      %v7466 = vmax.f32 %v7425, 0.0
      %v7467 = vmax.f32 %v7426, 0.0
      %v7468 = vmax.f32 %v7427, 0.0
      %v7469 = vmax.f32 %v7428, 0.0
      %v7470 = vmax.f32 %v7429, 0.0
      %v7471 = vmax.f32 %v7430, 0.0
      %v7472 = vmax.f32 %v7431, 0.0
      %v7473 = vmax.f32 %v7432, 0.0
      %v7474 = vmax.f32 %v7433, 0.0
      %v7475 = vmax.f32 %v7434, 0.0
      %v7476 = vmax.f32 %v7435, 0.0
      %v7477 = vmax.f32 %v7436, 0.0
      %v7478 = vmax.f32 %v7437, 0.0
      %v7479 = vmax.f32 %v7438, 0.0
      %v7480 = vmax.f32 %v7439, 0.0
      %v7481 = vmax.f32 %v7440, 0.0
      %v7482 = vmax.f32 %v7441, 0.0
      %v7483 = vmax.f32 %v7442, 0.0
      %v7484 = vmax.f32 %v7443, 0.0
      %v7485 = vmax.f32 %v7444, 0.0
      %v7486 = vmax.f32 %v7445, 0.0
      %v7487 = vmax.f32 %v7446, 0.0
      %v7488 = vmax.f32 %v7447, 0.0
      %v7489 = vmax.f32 %v7448, 0.0
      %v7490 = vmax.f32 %v7449, 0.0
      %v7491 = vmax.f32 %v7450, 0.0
      %v7492 = vmax.f32 %v7451, 0.0
      %v7493 = vmax.f32 %v7452, 0.0
      %v7494 = vmax.f32 %v7453, 0.0
      %v7495 = vmax.f32 %v7454, 0.0
      %v7496 = vmax.f32 %v7455, 0.0
      %7497 = vst [vmem:[%s278] sm:$0xff] %v7456
      %7498 = vst [vmem:[%s278 + $0x8] sm:$0xff] %v7457
      %7499 = vst [vmem:[%s278 + $0x10] sm:$0xff] %v7458
      %7500 = vst [vmem:[%s278 + $0x18] sm:$0xff] %v7459
      %7501 = vst [vmem:[%s278 + $0x20] sm:$0xff] %v7460
      %7502 = vst [vmem:[%s278 + $0x28] sm:$0xff] %v7461
      %7503 = vst [vmem:[%s278 + $0x30] sm:$0xff] %v7462
      %7504 = vst [vmem:[%s278 + $0x38] sm:$0xff] %v7463
      %7505 = vst [vmem:[%s278 + $0x40] sm:$0xff] %v7464
      %7506 = vst [vmem:[%s278 + $0x48] sm:$0xff] %v7465
      %7507 = vst [vmem:[%s278 + $0x50] sm:$0xff] %v7466
      %7508 = vst [vmem:[%s278 + $0x58] sm:$0xff] %v7467
      %7509 = vst [vmem:[%s278 + $0x60] sm:$0xff] %v7468
      %7510 = vst [vmem:[%s278 + $0x68] sm:$0xff] %v7469
      %7511 = vst [vmem:[%s278 + $0x70] sm:$0xff] %v7470
      %7512 = vst [vmem:[%s278 + $0x78] sm:$0xff] %v7471
      %7513 = vst [vmem:[%s278 + $0x80] sm:$0xff] %v7472
      %7514 = vst [vmem:[%s278 + $0x88] sm:$0xff] %v7473
      %7515 = vst [vmem:[%s278 + $0x90] sm:$0xff] %v7474
      %7516 = vst [vmem:[%s278 + $0x98] sm:$0xff] %v7475
      %7517 = vst [vmem:[%s278 + $0xa0] sm:$0xff] %v7476
      %7518 = vst [vmem:[%s278 + $0xa8] sm:$0xff] %v7477
      %7519 = vst [vmem:[%s278 + $0xb0] sm:$0xff] %v7478
      %7520 = vst [vmem:[%s278 + $0xb8] sm:$0xff] %v7479
      %7521 = vst [vmem:[%s278 + $0xc0] sm:$0xff] %v7480
      %7522 = vst [vmem:[%s278 + $0xc8] sm:$0xff] %v7481
      %7523 = vst [vmem:[%s278 + $0xd0] sm:$0xff] %v7482
      %7524 = vst [vmem:[%s278 + $0xd8] sm:$0xff] %v7483
      %7525 = vst [vmem:[%s278 + $0xe0] sm:$0xff] %v7484
      %7526 = vst [vmem:[%s278 + $0xe8] sm:$0xff] %v7485
      %7527 = vst [vmem:[%s278 + $0xf0] sm:$0xff] %v7486
      %7528 = vst [vmem:[%s278 + $0xf8] sm:$0xff] %v7487
      %7529 = vst [vmem:[%s278 + $0x100] sm:$0xff] %v7488
      %7530 = vst [vmem:[%s278 + $0x108] sm:$0xff] %v7489
      %7531 = vst [vmem:[%s278 + $0x110] sm:$0xff] %v7490
      %7532 = vst [vmem:[%s278 + $0x118] sm:$0xff] %v7491
      %7533 = vst [vmem:[%s278 + $0x120] sm:$0xff] %v7492
      %7534 = vst [vmem:[%s278 + $0x128] sm:$0xff] %v7493
      %7535 = vst [vmem:[%s278 + $0x130] sm:$0xff] %v7494
      %7536 = vst [vmem:[%s278 + $0x138] sm:$0xff] %v7495
      %7537 = vst [vmem:[%s278 + $0x140] sm:$0xf] %v7496
      %p7538 = scmp.lt.s32.totalorder %s18, 1
      %s7539 = scalar_select %p7538, %s18, 1
      %s7540 = smul.addr %s7539, 41
      %s7541 = smul.addr %s7540, 8
      %s7542 = scalar_lea.vmem %s7, %s7541
      // Predicated region
      $region49: #{basic_block_forward.1} parent=47 // pred_check
        %p7543 = pneg %p188
      $region50: #{basic_block_forward.1} parent=47 // pred_check_branch
        %7545 = sbr.rel (%p7543) target = $region52
      $region51: #{basic_block_forward.1} parent=47 // pred_region
        _
      $region52: #{basic_block_forward.1} parent=47 // pred_fallthru
        _
    $region48: #{basic_block_forward.1} parent=5 // pred_fallthru
      _
    %p7546 = scmp.le.s32.totalorder 2, %s13
    // Predicated region
    $region53: #{basic_block_forward.1} parent=5 // pred_check
      %p7547 = pneg %p7546
    $region54: #{basic_block_forward.1} parent=5 // pred_check_branch
      %7549 = sbr.rel (%p7547) target = $region56
    $region55: #{basic_block_forward.1} parent=5 // pred_region
      %s7550 = ssub.s32 %s13, 2
      // Predicated region
      $region57: #{basic_block_forward.1} parent=55 // pred_check
        %p7551 = pneg %p194
      $region58: #{basic_block_forward.1} parent=55 // pred_check_branch
        %7553 = sbr.rel (%p7551) target = $region60
      $region59: #{basic_block_forward.1} parent=55 // pred_region
        %p7554 = scmp.lt.s32.totalorder %s19, 1
        %s7555 = scalar_select %p7554, %s19, 1
        %s7556 = smul.addr %s7555, 41
        %s7557 = smul.addr %s7556, 8
        %s7558 = scalar_lea.vmem %s7, %s7557
      $region60: #{basic_block_forward.1} parent=55 // pred_fallthru
        _
    $region56: #{basic_block_forward.1} parent=5 // pred_fallthru
      _
  $region6: #{basic_block_forward.1} parent=0 // loop_footer
    %s17 = sadd.s32 1, %s13
  $region7: #{basic_block_forward.1} parent=0 // loop_footer_branch
    %12 = sbr.rel target = $region3
  $region8: #{basic_block_forward.1} parent=0 // loop_exit
    _

</llo_original>
